<compile_context>
chip_gen: v5e
topology: v5e:2x2
jax: 0.10.0
libtpu: 0.0.40
codegen_flags: <defaults>
</compile_context>

<pallas_src>
import jax
import jax.numpy as jnp
from jax.experimental import pallas as pl
from jax.experimental.pallas import tpu as pltpu

LANE = 128
_VMEM_LIMIT = 32 * 1024 * 1024          # <= ~48 MiB so also safe on v7x (64 MiB VMEM)


# ----------------------------------------------------------------------------------
# Small helpers
# ----------------------------------------------------------------------------------

def _round_up(x, m):
    return ((x + m - 1) // m) * m


def _cparams(*sem):
    return pltpu.CompilerParams(dimension_semantics=sem, vmem_limit_bytes=_VMEM_LIMIT)


def _pad_to(a, shape):
    """Zero-pad array `a` to `shape` (same rank)."""
    out = jnp.zeros(shape, a.dtype)
    return out.at[tuple(slice(0, s) for s in a.shape)].set(a)


def _bf16_dot(a, w_ref, b_ref):
    """bf16 MXU matmul with f32 accumulation + bias."""
    return jnp.dot(a.astype(jnp.bfloat16), w_ref[...],
                   preferred_element_type=jnp.float32) + b_ref[...]


def _ln_pad(x, g_ref, b_ref, eps, d_real):
    """LayerNorm over the lane axis where only the first d_real columns are real.
    Requires padded columns of x to be exactly zero (maintained by zero-padded weights)."""
    inv = 1.0 / float(d_real)
    mu = jnp.sum(x, axis=-1, keepdims=True) * inv
    ex2 = jnp.sum(x * x, axis=-1, keepdims=True) * inv
    var = ex2 - mu * mu
    return (x - mu) * jax.lax.rsqrt(var + eps) * g_ref[...] + b_ref[...]


# ----------------------------------------------------------------------------------
# Row-tiled linear kernel (subsampling GEMMs)
# ----------------------------------------------------------------------------------

def _make_linear_kernel(act):
    def kernel(x_ref, w_ref, b_ref, o_ref):
        y = _bf16_dot(x_ref[...], w_ref, b_ref)
        if act == "relu":
            y = jnp.maximum(y, 0.0)
        o_ref[...] = y
    return kernel


def linear(x, w, b, act=None, tile_rows=512):
    M, Din = x.shape
    Dout = w.shape[1]
    # Small M: one full-row block, grid=(1,) (no ragged / near-empty steps).
    tm = M if M <= tile_rows else (tile_rows // 8) * 8
    return pl.pallas_call(
        _make_linear_kernel(act),
        out_shape=jax.ShapeDtypeStruct((M, Dout), jnp.float32),
        grid=(pl.cdiv(M, tm),),
        in_specs=[pl.BlockSpec((tm, Din), lambda i: (i, 0)),
                  pl.BlockSpec(w.shape, lambda i: (0, 0)),
                  pl.BlockSpec(b.shape, lambda i: (0, 0))],
        out_specs=pl.BlockSpec((tm, Dout), lambda i: (i, 0)),
        compiler_params=_cparams("parallel"),
    )(x, w, b)


# ----------------------------------------------------------------------------------
# Fused Conformer block stack: ONE kernel, grid=(B, n_layers)
# ----------------------------------------------------------------------------------

def _make_block_stack_kernel(eps, heads, ksize, t_pad, t_real, dp, d_real):
    pad = (ksize - 1) // 2
    hdp = dp // heads                       # padded per-head width (real head dim first)
    scale = 1.0 / float(d_real // heads) ** 0.5

    def kernel(x_ref,
               f1g, f1b, f1w1, f1b1, f1w2, f1b2,                     # FFN-1
               ag, ab, wq, bq, wk, bk, wv, bv, wo, bo,               # MHSA
               cg, cb, wva, bva, wga, bga, wdw, bdw,                 # Conv module
               bng, bnb, bnm, bnv, wp2, bp2,
               f2g, f2b, f2w1, f2b1, f2w2, f2b2,                     # FFN-2
               lng, lnb,                                             # final LN
               o_ref):
        layer = pl.program_id(1)

        # o_ref is the VMEM-resident carry across the (arbitrary) layer axis.
        @pl.when(layer == 0)
        def _():
            o_ref[...] = x_ref[...]

        x = o_ref[...]                                               # (t_pad, dp) f32

        # ---- FFN 1 (half-step residual, SiLU) -------------------------------------
        h1 = _bf16_dot(_ln_pad(x, f1g, f1b, eps, d_real), f1w1, f1b1)
        h1 = h1 * jax.nn.sigmoid(h1)
        x = x + 0.5 * _bf16_dot(h1, f1w2, f1b2)

        # ---- MHSA ------------------------------------------------------------------
        y = _ln_pad(x, ag, ab, eps, d_real)
        q = _bf16_dot(y, wq, bq)
        k = _bf16_dot(y, wk, bk)
        v = _bf16_dot(y, wv, bv)
        key_idx = jax.lax.broadcasted_iota(jnp.int32, (t_pad, t_pad), 1)
        key_mask = jnp.where(key_idx < t_real, 0.0, -1e9)            # mask padded time rows
        ctxs = []
        for hh in range(heads):                                      # small static loop
            sl = slice(hh * hdp, (hh + 1) * hdp)
            qh = q[:, sl].astype(jnp.bfloat16)
            kh = k[:, sl].astype(jnp.bfloat16)
            vh = v[:, sl].astype(jnp.bfloat16)
            s = jax.lax.dot_general(qh, kh, (((1,), (1,)), ((), ())),
                                    preferred_element_type=jnp.float32) * scale
            s = s + key_mask
            s = s - jnp.max(s, axis=-1, keepdims=True)
            p = jnp.exp(s)
            p = p * pl.reciprocal(jnp.sum(p, axis=-1, keepdims=True), approx=True)
            ctxs.append(jnp.dot(p.astype(jnp.bfloat16), vh,
                                preferred_element_type=jnp.float32))  # (t_pad, hdp)
        ctx = jnp.concatenate(ctxs, axis=-1)                         # (t_pad, dp) lane concat
        x = x + _bf16_dot(ctx, wo, bo)                               # single output projection

        # ---- Convolution module ------------------------------------------------------
        y = _ln_pad(x, cg, cb, eps, d_real)
        val = _bf16_dot(y, wva, bva)                                 # GLU value
        gate = _bf16_dot(y, wga, bga)                                # GLU gate
        yg = val * jax.nn.sigmoid(gate)
        # depthwise conv over time: register-resident roll + edge mask (no scratch)
        t_idx = jax.lax.broadcasted_iota(jnp.int32, (t_pad, dp), 0)
        wdw_all = wdw[...]                                           # (K, dp) f32
        acc = jnp.zeros((t_pad, dp), jnp.float32) + bdw[...]
        for kk in range(ksize):
            off = kk - pad
            if off == 0:
                acc = acc + yg * wdw_all[kk:kk + 1, :]
            else:
                tap = pltpu.roll(yg, shift=(-off) % t_pad, axis=0)   # tap[t] = yg[(t+off)%t_pad]
                valid = jnp.logical_and(t_idx + off >= 0, t_idx + off < t_real)
                acc = acc + jnp.where(valid, tap, 0.0) * wdw_all[kk:kk + 1, :]
        # BatchNorm (inference, running stats) + SiLU
        ybn = (acc - bnm[...]) * jax.lax.rsqrt(bnv[...] + eps) * bng[...] + bnb[...]
        ybn = ybn * jax.nn.sigmoid(ybn)
        x = x + _bf16_dot(ybn, wp2, bp2)

        # ---- FFN 2 (half-step residual, SiLU) -----------------------------------------
        h2 = _bf16_dot(_ln_pad(x, f2g, f2b, eps, d_real), f2w1, f2b1)
        h2 = h2 * jax.nn.sigmoid(h2)
        x = x + 0.5 * _bf16_dot(h2, f2w2, f2b2)

        # ---- Final LayerNorm; write the carry back ---------------------------------------
        o_ref[...] = _ln_pad(x, lng, lnb, eps, d_real)

    return kernel


def conformer_blocks(h, stacked, n_layers, eps, heads, ksize, t_real, d_real):
    B, t_pad, dp = h.shape
    x_spec = pl.BlockSpec((None, t_pad, dp), lambda b, l: (b, 0, 0))
    p_specs = [pl.BlockSpec((None,) + p.shape[1:], lambda b, l: (l, 0, 0)) for p in stacked]
    return pl.pallas_call(
        _make_block_stack_kernel(eps, heads, ksize, t_pad, t_real, dp, d_real),
        out_shape=jax.ShapeDtypeStruct((B, t_pad, dp), jnp.float32),
        grid=(B, n_layers),
        in_specs=[x_spec] + p_specs,
        out_specs=pl.BlockSpec((None, t_pad, dp), lambda b, l: (b, 0, 0)),
        compiler_params=_cparams("parallel", "arbitrary"),
    )(h, *stacked)


# ----------------------------------------------------------------------------------
# Fused decoder head: (Linear -> ReLU -> LN) x N + log-softmax classifier
# ----------------------------------------------------------------------------------

def _make_decoder_kernel(eps, n_dec, hid_real):
    def kernel(*refs):
        x_ref, o_ref = refs[0], refs[-1]
        p = refs[1:-1]
        h = x_ref[...]
        for i in range(n_dec):
            w, b, g, be = p[4 * i:4 * i + 4]
            h = jnp.maximum(_bf16_dot(h, w, b), 0.0)
            h = _ln_pad(h, g, be, eps, hid_real)
        wc, bc = p[-2], p[-1]
        logits = _bf16_dot(h, wc, bc)                # padded vocab cols carry -1e9 bias (f32)
        z = logits - jnp.max(logits, axis=-1, keepdims=True)
        lse = jnp.log(jnp.sum(jnp.exp(z), axis=-1, keepdims=True))
        o_ref[...] = z - lse
    return kernel


def decoder_head(h, dec_params, cls_w, cls_b, eps, n_dec, hid_real, vp):
    B, t_pad, dp = h.shape
    params = []
    for layer in dec_params:
        params += [layer["w"], layer["b"], layer["g"], layer["be"]]
    params += [cls_w, cls_b]
    in_specs = [pl.BlockSpec((None, t_pad, dp), lambda b: (b, 0, 0))]
    in_specs += [pl.BlockSpec(p.shape, lambda b, n=p.ndim: (0,) * n) for p in params]
    return pl.pallas_call(
        _make_decoder_kernel(eps, n_dec, hid_real),
        out_shape=jax.ShapeDtypeStruct((B, t_pad, vp), jnp.float32),
        grid=(B,),
        in_specs=in_specs,
        out_specs=pl.BlockSpec((None, t_pad, vp), lambda b: (b, 0, 0)),
        compiler_params=_cparams("parallel"),
    )(h, *params)


# ----------------------------------------------------------------------------------
# Conv2d subsampling glue: channel-last im2col (free reshapes) + Pallas GEMMs
# ----------------------------------------------------------------------------------

def _im2col_cl(x, k, stride):
    """x: (B, H, W, C) channel-last -> (B, Ho, Wo, k*k*C), VALID padding."""
    B, H, W, C = x.shape
    Ho = (H - k) // stride + 1
    Wo = (W - k) // stride + 1
    cols = []
    for i in range(k):
        for j in range(k):
            cols.append(x[:, i:i + stride * (Ho - 1) + 1:stride,
                            j:j + stride * (Wo - 1) + 1:stride, :])
    p = jnp.stack(cols, axis=3)                       # (B, Ho, Wo, k*k, C)
    return p.reshape(B, Ho, Wo, k * k * C)


# ----------------------------------------------------------------------------------
# Parameters (deterministic synthetic init; padded to 128 lanes, matmul weights bf16)
# ----------------------------------------------------------------------------------

def init_params(key, cfg):
    d_real = cfg["encoder_dim"]
    dp = _round_up(d_real, LANE)
    h4 = 4 * d_real
    h4p = _round_up(h4, LANE)
    heads = cfg["heads"]
    hd_real = d_real // heads
    hdp = dp // heads
    K = cfg["kernel_size"]
    v_real = cfg["vocab_size"]
    vp = _round_up(v_real, LANE)
    n_mels = cfg["n_mel_channels"]
    hid_real = cfg["decoder_dim"]
    hid_p = _round_up(hid_real, LANE)

    keys = iter(jax.random.split(key, 512))

    def nrm(shape, scale=0.05):
        return scale * jax.random.normal(next(keys), shape, jnp.float32)

    def zeros(shape):
        return jnp.zeros(shape, jnp.float32)

    def ones_padded(real, padded):
        return _pad_to(jnp.ones((1, real), jnp.float32), (1, padded))

    # ---- Conv2d subsampling (channel-last layout; padded channel positions get zero rows)
    f1 = (n_mels - 3) // 2 + 1
    f2 = (f1 - 3) // 2 + 1
    sub = dict(
        w1=_pad_to(nrm((9, d_real)), (9, dp)).astype(jnp.bfloat16),
        b1=zeros((1, dp)),
        w2=_pad_to(nrm((9, d_real, d_real)), (9, dp, dp)).reshape(9 * dp, dp).astype(jnp.bfloat16),
        b2=zeros((1, dp)),
        # NOTE: channel-last flatten order (freq, channel); weights are self-consistent.
        wp=_pad_to(nrm((f2, d_real, d_real)), (f2, dp, dp)).reshape(f2 * dp, dp).astype(jnp.bfloat16),
        bp=zeros((1, dp)),
    )

    def qkv_w():           # per-head columns placed at padded 32-lane head slots
        return _pad_to(nrm((d_real, heads, hd_real)), (dp, heads, hdp)).reshape(dp, dp).astype(jnp.bfloat16)

    def out_w():           # per-head rows placed at padded 32-lane head slots
        return _pad_to(nrm((heads, hd_real, d_real)), (heads, hdp, dp)).reshape(dp, dp).astype(jnp.bfloat16)

    blocks = []
    for _ in range(cfg["encoder_n_layers"]):
        def ff():
            return (ones_padded(d_real, dp), zeros((1, dp)),
                    _pad_to(nrm((d_real, h4)), (dp, h4p)).astype(jnp.bfloat16), zeros((1, h4p)),
                    _pad_to(nrm((h4, d_real)), (h4p, dp)).astype(jnp.bfloat16), zeros((1, dp)))
        mhsa = (ones_padded(d_real, dp), zeros((1, dp)),
                qkv_w(), zeros((1, dp)),                   # Q
                qkv_w(), zeros((1, dp)),                   # K
                qkv_w(), zeros((1, dp)),                   # V
                out_w(), zeros((1, dp)))                   # O (bf16, single dot)
        conv = (ones_padded(d_real, dp), zeros((1, dp)),
                _pad_to(nrm((d_real, d_real)), (dp, dp)).astype(jnp.bfloat16), zeros((1, dp)),  # GLU value
                _pad_to(nrm((d_real, d_real)), (dp, dp)).astype(jnp.bfloat16), zeros((1, dp)),  # GLU gate
                _pad_to(nrm((K, d_real)), (K, dp)), zeros((1, dp)),                              # depthwise (f32)
                ones_padded(d_real, dp), zeros((1, dp)),                                         # BN gamma/beta
                zeros((1, dp)), jnp.ones((1, dp), jnp.float32),                                  # BN mean/var
                _pad_to(nrm((d_real, d_real)), (dp, dp)).astype(jnp.bfloat16), zeros((1, dp)))   # pointwise 2
        blocks.append(ff() + mhsa + conv + ff() + (ones_padded(d_real, dp), zeros((1, dp))))

    n_layers = cfg["encoder_n_layers"]
    stacked = [jnp.stack([blocks[l][i] for l in range(n_layers)], axis=0)
               for i in range(len(blocks[0]))]

    # ---- decoder head -------------------------------------------------------------
    dec = []
    in_p, in_r = dp, d_real
    for _ in range(cfg["decoder_n_layers"]):
        dec.append(dict(w=_pad_to(nrm((in_r, hid_real)), (in_p, hid_p)).astype(jnp.bfloat16),
                        b=zeros((1, hid_p)),
                        g=ones_padded(hid_real, hid_p),
                        be=zeros((1, hid_p))))
        in_p, in_r = hid_p, hid_real

    vmask = (jnp.arange(vp) < v_real)[None, :]
    cls_w = _pad_to(nrm((in_r, v_real)), (in_p, vp)).astype(jnp.bfloat16)
    cls_b = jnp.where(vmask, 0.0, -1e9).astype(jnp.float32)        # f32 so padded cols stay out

    return dict(sub=sub, blocks=stacked, dec=dec, cls_w=cls_w, cls_b=cls_b)


# ----------------------------------------------------------------------------------
# Forward pass
# ----------------------------------------------------------------------------------

def conformer_forward(params, x, lengths, cfg):
    B, n_mels, T = x.shape
    d_real = cfg["encoder_dim"]
    dp = _round_up(d_real, LANE)
    eps = cfg["eps"]
    heads = cfg["heads"]
    K = cfg["kernel_size"]
    v_real = cfg["vocab_size"]
    vp = _round_up(v_real, LANE)
    hid_real = cfg["decoder_dim"]

    # --- Conv2d subsampling: channel-last im2col + Pallas GEMMs ---------------------
    x_cl = x.transpose(0, 2, 1)[..., None]             # (B, T, n_mels, 1) channel-last
    p1 = _im2col_cl(x_cl, 3, 2)                        # (B, T1, F1, 9)
    _, T1, F1, C1 = p1.shape
    y1 = linear(p1.reshape(B * T1 * F1, C1), params["sub"]["w1"], params["sub"]["b1"], act="relu")
    y1 = y1.reshape(B, T1, F1, dp)                     # free reshape (channel-last)

    p2 = _im2col_cl(y1, 3, 2)                          # (B, T2, F2, 9*dp)
    _, T2, F2, C2 = p2.shape
    y2 = linear(p2.reshape(B * T2 * F2, C2), params["sub"]["w2"], params["sub"]["b2"], act="relu")
    y2 = y2.reshape(B * T2, F2 * dp)

    h = linear(y2, params["sub"]["wp"], params["sub"]["bp"]).reshape(B, T2, dp)

    if lengths is not None:
        lengths = (lengths - 3) // 2 + 1
        lengths = (lengths - 3) // 2 + 1

    # --- Fused Conformer block stack (one pallas_call) ------------------------------
    t_pad = _round_up(T2, 8)
    if t_pad != T2:
        h = jnp.pad(h, ((0, 0), (0, t_pad - T2), (0, 0)))
    h = conformer_blocks(h, params["blocks"], cfg["encoder_n_layers"],
                         eps, heads, K, T2, d_real)

    # --- Fused decoder head ----------------------------------------------------------
    logp = decoder_head(h, params["dec"], params["cls_w"], params["cls_b"],
                        eps, cfg["decoder_n_layers"], hid_real, vp)
    logp = logp[:, :T2, :v_real]

    if lengths is not None:
        return logp, lengths
    return logp


# ----------------------------------------------------------------------------------
# Main
# ----------------------------------------------------------------------------------

if __name__ == "__main__":
    cfg = dict(
        vocab_size=16,
        n_mel_channels=16,
        encoder_n_layers=2,
        encoder_dim=32,
        heads=4,
        kernel_size=7,
        decoder_n_layers=1,
        decoder_dim=64,
        eps=1e-5,
        dropout_rate=0.1,     # inference mode: dropout is identity
    )

    key = jax.random.PRNGKey(0)
    pkey, xkey = jax.random.split(key)
    params = init_params(pkey, cfg)

    B, T = 2, 32
    x = jax.random.normal(xkey, (B, cfg["n_mel_channels"], T), jnp.float32)
    lengths = jnp.array([32, 28], dtype=jnp.int32)

    fwd = jax.jit(lambda p, xx, ll: conformer_forward(p, xx, ll, cfg))
    out, out_lengths = fwd(params, x, lengths)
    jax.block_until_ready(out)
    jax.block_until_ready(out_lengths)

    assert out.shape == (B, 7, cfg["vocab_size"]), out.shape
    assert out_lengths.shape == (B,)
    print("KERNEL_OK")
</pallas_src>

<mosaic_0001>
module attributes {stable_mosaic.version = 11 : i64} {
  func.func @kernel(%arg0: i32, %arg1: memref<210x9xf32, #tpu.memory_space<vmem>>, %arg2: memref<9x128xbf16, #tpu.memory_space<vmem>>, %arg3: memref<1x128xf32, #tpu.memory_space<vmem>>, %arg4: memref<210x128xf32, #tpu.memory_space<vmem>>) attributes {dimension_semantics = [#tpu.dimension_semantics<parallel>], iteration_bounds = array<i64: 1>, scalar_prefetch = 0 : i64, scratch_operands = 0 : i64, tpu.core_type = #tpu.core_type<tc>, window_params = [{transform_indices = @transform_0, window_bounds = array<i64: 210, 9>}, {pipeline_mode = #tpu.pipeline_mode<synchronous>, transform_indices = @transform_1, window_bounds = array<i64: 9, 128>}, {pipeline_mode = #tpu.pipeline_mode<synchronous>, transform_indices = @transform_2, window_bounds = array<i64: 1, 128>}, {transform_indices = @transform_3, window_bounds = array<i64: 210, 128>}]} {
    %c0 = arith.constant 0 : index
    %c0_0 = arith.constant 0 : index
    %0 = vector.load %arg1[%c0, %c0_0] : memref<210x9xf32, #tpu.memory_space<vmem>>, vector<210x9xf32>
    %1 = arith.truncf %0 : vector<210x9xf32> to vector<210x9xbf16>
    %c0_1 = arith.constant 0 : index
    %c0_2 = arith.constant 0 : index
    %2 = vector.load %arg2[%c0_1, %c0_2] : memref<9x128xbf16, #tpu.memory_space<vmem>>, vector<9x128xbf16>
    %cst = arith.constant dense<0.000000e+00> : vector<210x128xf32>
    %3 = tpu.matmul %1, %2, %cst {dimension_numbers = #tpu.dot_dimension_numbers<[1], [0], [0], [1], [0, 0, 1, 1], [], []>} : vector<210x9xbf16>, vector<9x128xbf16>, vector<210x128xf32> -> vector<210x128xf32>
    %c0_3 = arith.constant 0 : index
    %c0_4 = arith.constant 0 : index
    %4 = vector.load %arg3[%c0_3, %c0_4] : memref<1x128xf32, #tpu.memory_space<vmem>>, vector<1x128xf32>
    %5 = vector.broadcast %4 : vector<1x128xf32> to vector<210x128xf32>
    %6 = arith.addf %3, %5 : vector<210x128xf32>
    %cst_5 = arith.constant 0.000000e+00 : f32
    %7 = vector.broadcast %cst_5 : f32 to vector<210x128xf32>
    %8 = arith.maximumf %6, %7 : vector<210x128xf32>
    %c0_6 = arith.constant 0 : index
    %c0_7 = arith.constant 0 : index
    %9 = vector.load %arg4[%c0_6, %c0_7] : memref<210x128xf32, #tpu.memory_space<vmem>>, vector<210x128xf32>
    tpu.vector_store %arg4[%c0_6, %c0_7], %8 {strides = array<i32>} : memref<210x128xf32, #tpu.memory_space<vmem>>, vector<210x128xf32>,
    return
  }
  func.func @transform_0(%arg0: i32) -> (i32, i32) {
    %c0_i32 = arith.constant 0 : i32
    %c0_i32_0 = arith.constant 0 : i32
    return %arg0, %c0_i32 : i32, i32
  }
  func.func @transform_1(%arg0: i32) -> (i32, i32) {
    %c0_i32 = arith.constant 0 : i32
    %c0_i32_0 = arith.constant 0 : i32
    %c0_i32_1 = arith.constant 0 : i32
    return %c0_i32, %c0_i32_0 : i32, i32
  }
  func.func @transform_2(%arg0: i32) -> (i32, i32) {
    %c0_i32 = arith.constant 0 : i32
    %c0_i32_0 = arith.constant 0 : i32
    %c0_i32_1 = arith.constant 0 : i32
    return %c0_i32, %c0_i32_0 : i32, i32
  }
  func.func @transform_3(%arg0: i32) -> (i32, i32) {
    %c0_i32 = arith.constant 0 : i32
    %c0_i32_0 = arith.constant 0 : i32
    return %arg0, %c0_i32 : i32, i32
  }
}

module attributes {stable_mosaic.version = 11 : i64} {
  func.func @kernel(%arg0: i32, %arg1: memref<42x1152xf32, #tpu.memory_space<vmem>>, %arg2: memref<1152x128xbf16, #tpu.memory_space<vmem>>, %arg3: memref<1x128xf32, #tpu.memory_space<vmem>>, %arg4: memref<42x128xf32, #tpu.memory_space<vmem>>) attributes {dimension_semantics = [#tpu.dimension_semantics<parallel>], iteration_bounds = array<i64: 1>, scalar_prefetch = 0 : i64, scratch_operands = 0 : i64, tpu.core_type = #tpu.core_type<tc>, window_params = [{transform_indices = @transform_0, window_bounds = array<i64: 42, 1152>}, {pipeline_mode = #tpu.pipeline_mode<synchronous>, transform_indices = @transform_1, window_bounds = array<i64: 1152, 128>}, {pipeline_mode = #tpu.pipeline_mode<synchronous>, transform_indices = @transform_2, window_bounds = array<i64: 1, 128>}, {transform_indices = @transform_3, window_bounds = array<i64: 42, 128>}]} {
    %c0 = arith.constant 0 : index
    %c0_0 = arith.constant 0 : index
    %0 = vector.load %arg1[%c0, %c0_0] : memref<42x1152xf32, #tpu.memory_space<vmem>>, vector<42x1152xf32>
    %1 = arith.truncf %0 : vector<42x1152xf32> to vector<42x1152xbf16>
    %c0_1 = arith.constant 0 : index
    %c0_2 = arith.constant 0 : index
    %2 = vector.load %arg2[%c0_1, %c0_2] : memref<1152x128xbf16, #tpu.memory_space<vmem>>, vector<1152x128xbf16>
    %cst = arith.constant dense<0.000000e+00> : vector<42x128xf32>
    %3 = tpu.matmul %1, %2, %cst {dimension_numbers = #tpu.dot_dimension_numbers<[1], [0], [0], [1], [0, 0, 1, 1], [], []>} : vector<42x1152xbf16>, vector<1152x128xbf16>, vector<42x128xf32> -> vector<42x128xf32>
    %c0_3 = arith.constant 0 : index
    %c0_4 = arith.constant 0 : index
    %4 = vector.load %arg3[%c0_3, %c0_4] : memref<1x128xf32, #tpu.memory_space<vmem>>, vector<1x128xf32>
    %5 = vector.broadcast %4 : vector<1x128xf32> to vector<42x128xf32>
    %6 = arith.addf %3, %5 : vector<42x128xf32>
    %cst_5 = arith.constant 0.000000e+00 : f32
    %7 = vector.broadcast %cst_5 : f32 to vector<42x128xf32>
    %8 = arith.maximumf %6, %7 : vector<42x128xf32>
    %c0_6 = arith.constant 0 : index
    %c0_7 = arith.constant 0 : index
    %9 = vector.load %arg4[%c0_6, %c0_7] : memref<42x128xf32, #tpu.memory_space<vmem>>, vector<42x128xf32>
    tpu.vector_store %arg4[%c0_6, %c0_7], %8 {strides = array<i32>} : memref<42x128xf32, #tpu.memory_space<vmem>>, vector<42x128xf32>,
    return
  }
  func.func @transform_0(%arg0: i32) -> (i32, i32) {
    %c0_i32 = arith.constant 0 : i32
    %c0_i32_0 = arith.constant 0 : i32
    return %arg0, %c0_i32 : i32, i32
  }
  func.func @transform_1(%arg0: i32) -> (i32, i32) {
    %c0_i32 = arith.constant 0 : i32
    %c0_i32_0 = arith.constant 0 : i32
    %c0_i32_1 = arith.constant 0 : i32
    return %c0_i32, %c0_i32_0 : i32, i32
  }
  func.func @transform_2(%arg0: i32) -> (i32, i32) {
    %c0_i32 = arith.constant 0 : i32
    %c0_i32_0 = arith.constant 0 : i32
    %c0_i32_1 = arith.constant 0 : i32
    return %c0_i32, %c0_i32_0 : i32, i32
  }
  func.func @transform_3(%arg0: i32) -> (i32, i32) {
    %c0_i32 = arith.constant 0 : i32
    %c0_i32_0 = arith.constant 0 : i32
    return %arg0, %c0_i32 : i32, i32
  }
}

module attributes {stable_mosaic.version = 11 : i64} {
  func.func @kernel(%arg0: i32, %arg1: memref<14x384xf32, #tpu.memory_space<vmem>>, %arg2: memref<384x128xbf16, #tpu.memory_space<vmem>>, %arg3: memref<1x128xf32, #tpu.memory_space<vmem>>, %arg4: memref<14x128xf32, #tpu.memory_space<vmem>>) attributes {dimension_semantics = [#tpu.dimension_semantics<parallel>], iteration_bounds = array<i64: 1>, scalar_prefetch = 0 : i64, scratch_operands = 0 : i64, tpu.core_type = #tpu.core_type<tc>, window_params = [{transform_indices = @transform_0, window_bounds = array<i64: 14, 384>}, {pipeline_mode = #tpu.pipeline_mode<synchronous>, transform_indices = @transform_1, window_bounds = array<i64: 384, 128>}, {pipeline_mode = #tpu.pipeline_mode<synchronous>, transform_indices = @transform_2, window_bounds = array<i64: 1, 128>}, {transform_indices = @transform_3, window_bounds = array<i64: 14, 128>}]} {
    %c0 = arith.constant 0 : index
    %c0_0 = arith.constant 0 : index
    %0 = vector.load %arg1[%c0, %c0_0] : memref<14x384xf32, #tpu.memory_space<vmem>>, vector<14x384xf32>
    %1 = arith.truncf %0 : vector<14x384xf32> to vector<14x384xbf16>
    %c0_1 = arith.constant 0 : index
    %c0_2 = arith.constant 0 : index
    %2 = vector.load %arg2[%c0_1, %c0_2] : memref<384x128xbf16, #tpu.memory_space<vmem>>, vector<384x128xbf16>
    %cst = arith.constant dense<0.000000e+00> : vector<14x128xf32>
    %3 = tpu.matmul %1, %2, %cst {dimension_numbers = #tpu.dot_dimension_numbers<[1], [0], [0], [1], [0, 0, 1, 1], [], []>} : vector<14x384xbf16>, vector<384x128xbf16>, vector<14x128xf32> -> vector<14x128xf32>
    %c0_3 = arith.constant 0 : index
    %c0_4 = arith.constant 0 : index
    %4 = vector.load %arg3[%c0_3, %c0_4] : memref<1x128xf32, #tpu.memory_space<vmem>>, vector<1x128xf32>
    %5 = vector.broadcast %4 : vector<1x128xf32> to vector<14x128xf32>
    %6 = arith.addf %3, %5 : vector<14x128xf32>
    %c0_5 = arith.constant 0 : index
    %c0_6 = arith.constant 0 : index
    %7 = vector.load %arg4[%c0_5, %c0_6] : memref<14x128xf32, #tpu.memory_space<vmem>>, vector<14x128xf32>
    tpu.vector_store %arg4[%c0_5, %c0_6], %6 {strides = array<i32>} : memref<14x128xf32, #tpu.memory_space<vmem>>, vector<14x128xf32>,
    return
  }
  func.func @transform_0(%arg0: i32) -> (i32, i32) {
    %c0_i32 = arith.constant 0 : i32
    %c0_i32_0 = arith.constant 0 : i32
    return %arg0, %c0_i32 : i32, i32
  }
  func.func @transform_1(%arg0: i32) -> (i32, i32) {
    %c0_i32 = arith.constant 0 : i32
    %c0_i32_0 = arith.constant 0 : i32
    %c0_i32_1 = arith.constant 0 : i32
    return %c0_i32, %c0_i32_0 : i32, i32
  }
  func.func @transform_2(%arg0: i32) -> (i32, i32) {
    %c0_i32 = arith.constant 0 : i32
    %c0_i32_0 = arith.constant 0 : i32
    %c0_i32_1 = arith.constant 0 : i32
    return %c0_i32, %c0_i32_0 : i32, i32
  }
  func.func @transform_3(%arg0: i32) -> (i32, i32) {
    %c0_i32 = arith.constant 0 : i32
    %c0_i32_0 = arith.constant 0 : i32
    return %arg0, %c0_i32 : i32, i32
  }
}

module attributes {stable_mosaic.version = 11 : i64} {
  func.func @kernel(%arg0: i32, %arg1: memref<1x8x128xf32, #tpu.memory_space<vmem>>, %arg2: memref<128x128xbf16, #tpu.memory_space<vmem>>, %arg3: memref<1x128xf32, #tpu.memory_space<vmem>>, %arg4: memref<1x128xf32, #tpu.memory_space<vmem>>, %arg5: memref<1x128xf32, #tpu.memory_space<vmem>>, %arg6: memref<128x128xbf16, #tpu.memory_space<vmem>>, %arg7: memref<1x128xf32, #tpu.memory_space<vmem>>, %arg8: memref<1x8x128xf32, #tpu.memory_space<vmem>>) attributes {dimension_semantics = [#tpu.dimension_semantics<parallel>], iteration_bounds = array<i64: 2>, scalar_prefetch = 0 : i64, scratch_operands = 0 : i64, tpu.core_type = #tpu.core_type<tc>, window_params = [{transform_indices = @transform_0, window_bounds = array<i64: 1, 8, 128>}, {pipeline_mode = #tpu.pipeline_mode<synchronous>, transform_indices = @transform_1, window_bounds = array<i64: 128, 128>}, {pipeline_mode = #tpu.pipeline_mode<synchronous>, transform_indices = @transform_2, window_bounds = array<i64: 1, 128>}, {pipeline_mode = #tpu.pipeline_mode<synchronous>, transform_indices = @transform_3, window_bounds = array<i64: 1, 128>}, {pipeline_mode = #tpu.pipeline_mode<synchronous>, transform_indices = @transform_4, window_bounds = array<i64: 1, 128>}, {pipeline_mode = #tpu.pipeline_mode<synchronous>, transform_indices = @transform_5, window_bounds = array<i64: 128, 128>}, {pipeline_mode = #tpu.pipeline_mode<synchronous>, transform_indices = @transform_6, window_bounds = array<i64: 1, 128>}, {transform_indices = @transform_7, window_bounds = array<i64: 1, 8, 128>}]} {
    %c0 = arith.constant 0 : index
    %c0_0 = arith.constant 0 : index
    %c0_1 = arith.constant 0 : index
    %0 = vector.load %arg1[%c0, %c0_0, %c0_1] : memref<1x8x128xf32, #tpu.memory_space<vmem>>, vector<1x8x128xf32>
    %1 = vector.shape_cast %0 : vector<1x8x128xf32> to vector<8x128xf32>
    %2 = arith.truncf %1 : vector<8x128xf32> to vector<8x128xbf16>
    %c0_2 = arith.constant 0 : index
    %c0_3 = arith.constant 0 : index
    %3 = vector.load %arg2[%c0_2, %c0_3] : memref<128x128xbf16, #tpu.memory_space<vmem>>, vector<128x128xbf16>
    %cst = arith.constant dense<0.000000e+00> : vector<8x128xf32>
    %4 = tpu.matmul %2, %3, %cst {dimension_numbers = #tpu.dot_dimension_numbers<[1], [0], [0], [1], [0, 0, 1, 1], [], []>} : vector<8x128xbf16>, vector<128x128xbf16>, vector<8x128xf32> -> vector<8x128xf32>
    %c0_4 = arith.constant 0 : index
    %c0_5 = arith.constant 0 : index
    %5 = vector.load %arg3[%c0_4, %c0_5] : memref<1x128xf32, #tpu.memory_space<vmem>>, vector<1x128xf32>
    %6 = vector.broadcast %5 : vector<1x128xf32> to vector<8x128xf32>
    %7 = arith.addf %4, %6 : vector<8x128xf32>
    %cst_6 = arith.constant 0.000000e+00 : f32
    %8 = vector.broadcast %cst_6 : f32 to vector<8x128xf32>
    %9 = arith.maximumf %7, %8 : vector<8x128xf32>
    %cst_7 = arith.constant dense<0.000000e+00> : vector<8xf32>
    %10 = vector.multi_reduction <add>, %9, %cst_7 [1] : vector<8x128xf32> to vector<8xf32>
    %11 = vector.shape_cast %10 : vector<8xf32> to vector<8x1xf32>
    %cst_8 = arith.constant 1.562500e-02 : f32
    %12 = vector.broadcast %cst_8 : f32 to vector<8x1xf32>
    %13 = arith.mulf %11, %12 : vector<8x1xf32>
    %14 = arith.mulf %9, %9 : vector<8x128xf32>
    %cst_9 = arith.constant dense<0.000000e+00> : vector<8xf32>
    %15 = vector.multi_reduction <add>, %14, %cst_9 [1] : vector<8x128xf32> to vector<8xf32>
    %16 = vector.shape_cast %15 : vector<8xf32> to vector<8x1xf32>
    %cst_10 = arith.constant 1.562500e-02 : f32
    %17 = vector.broadcast %cst_10 : f32 to vector<8x1xf32>
    %18 = arith.mulf %16, %17 : vector<8x1xf32>
    %19 = arith.mulf %13, %13 : vector<8x1xf32>
    %20 = arith.subf %18, %19 : vector<8x1xf32>
    %21 = vector.broadcast %13 : vector<8x1xf32> to vector<8x128xf32>
    %22 = arith.subf %9, %21 : vector<8x128xf32>
    %cst_11 = arith.constant 9.99999974E-6 : f32
    %23 = vector.broadcast %cst_11 : f32 to vector<8x1xf32>
    %24 = arith.addf %20, %23 : vector<8x1xf32>
    %25 = math.rsqrt %24 : vector<8x1xf32>
    %26 = vector.broadcast %25 : vector<8x1xf32> to vector<8x128xf32>
    %27 = arith.mulf %22, %26 : vector<8x128xf32>
    %c0_12 = arith.constant 0 : index
    %c0_13 = arith.constant 0 : index
    %28 = vector.load %arg4[%c0_12, %c0_13] : memref<1x128xf32, #tpu.memory_space<vmem>>, vector<1x128xf32>
    %29 = vector.broadcast %28 : vector<1x128xf32> to vector<8x128xf32>
    %30 = arith.mulf %27, %29 : vector<8x128xf32>
    %c0_14 = arith.constant 0 : index
    %c0_15 = arith.constant 0 : index
    %31 = vector.load %arg5[%c0_14, %c0_15] : memref<1x128xf32, #tpu.memory_space<vmem>>, vector<1x128xf32>
    %32 = vector.broadcast %31 : vector<1x128xf32> to vector<8x128xf32>
    %33 = arith.addf %30, %32 : vector<8x128xf32>
    %34 = arith.truncf %33 : vector<8x128xf32> to vector<8x128xbf16>
    %c0_16 = arith.constant 0 : index
    %c0_17 = arith.constant 0 : index
    %35 = vector.load %arg6[%c0_16, %c0_17] : memref<128x128xbf16, #tpu.memory_space<vmem>>, vector<128x128xbf16>
    %cst_18 = arith.constant dense<0.000000e+00> : vector<8x128xf32>
    %36 = tpu.matmul %34, %35, %cst_18 {dimension_numbers = #tpu.dot_dimension_numbers<[1], [0], [0], [1], [0, 0, 1, 1], [], []>} : vector<8x128xbf16>, vector<128x128xbf16>, vector<8x128xf32> -> vector<8x128xf32>
    %c0_19 = arith.constant 0 : index
    %c0_20 = arith.constant 0 : index
    %37 = vector.load %arg7[%c0_19, %c0_20] : memref<1x128xf32, #tpu.memory_space<vmem>>, vector<1x128xf32>
    %38 = vector.broadcast %37 : vector<1x128xf32> to vector<8x128xf32>
    %39 = arith.addf %36, %38 : vector<8x128xf32>
    %cst_21 = arith.constant dense<0xFF800000> : vector<8xf32>
    %40 = vector.multi_reduction <maximumf>, %39, %cst_21 [1] : vector<8x128xf32> to vector<8xf32>
    %41 = vector.shape_cast %40 : vector<8xf32> to vector<8x1xf32>
    %42 = vector.broadcast %41 : vector<8x1xf32> to vector<8x128xf32>
    %43 = arith.subf %39, %42 : vector<8x128xf32>
    %44 = math.exp %43 : vector<8x128xf32>
    %cst_22 = arith.constant dense<0.000000e+00> : vector<8xf32>
    %45 = vector.multi_reduction <add>, %44, %cst_22 [1] : vector<8x128xf32> to vector<8xf32>
    %46 = vector.shape_cast %45 : vector<8xf32> to vector<8x1xf32>
    %47 = math.log %46 : vector<8x1xf32>
    %48 = vector.broadcast %47 : vector<8x1xf32> to vector<8x128xf32>
    %49 = arith.subf %43, %48 : vector<8x128xf32>
    %c0_23 = arith.constant 0 : index
    %c0_24 = arith.constant 0 : index
    %c0_25 = arith.constant 0 : index
    %50 = vector.load %arg8[%c0_23, %c0_24, %c0_25] : memref<1x8x128xf32, #tpu.memory_space<vmem>>, vector<1x8x128xf32>
    %51 = vector.shape_cast %50 : vector<1x8x128xf32> to vector<8x128xf32>
    %52 = vector.shape_cast %49 : vector<8x128xf32> to vector<1x8x128xf32>
    tpu.vector_store %arg8[%c0_23, %c0_24, %c0_25], %52 {strides = array<i32>} : memref<1x8x128xf32, #tpu.memory_space<vmem>>, vector<1x8x128xf32>,
    return
  }
  func.func @transform_0(%arg0: i32) -> (i32, i32, i32) {
    %c0_i32 = arith.constant 0 : i32
    %c0_i32_0 = arith.constant 0 : i32
    %c0_i32_1 = arith.constant 0 : i32
    return %arg0, %c0_i32, %c0_i32_0 : i32, i32, i32
  }
  func.func @transform_1(%arg0: i32) -> (i32, i32) {
    %c0_i32 = arith.constant 0 : i32
    %c0_i32_0 = arith.constant 0 : i32
    %c0_i32_1 = arith.constant 0 : i32
    return %c0_i32, %c0_i32_0 : i32, i32
  }
  func.func @transform_2(%arg0: i32) -> (i32, i32) {
    %c0_i32 = arith.constant 0 : i32
    %c0_i32_0 = arith.constant 0 : i32
    %c0_i32_1 = arith.constant 0 : i32
    return %c0_i32, %c0_i32_0 : i32, i32
  }
  func.func @transform_3(%arg0: i32) -> (i32, i32) {
    %c0_i32 = arith.constant 0 : i32
    %c0_i32_0 = arith.constant 0 : i32
    %c0_i32_1 = arith.constant 0 : i32
    return %c0_i32, %c0_i32_0 : i32, i32
  }
  func.func @transform_4(%arg0: i32) -> (i32, i32) {
    %c0_i32 = arith.constant 0 : i32
    %c0_i32_0 = arith.constant 0 : i32
    %c0_i32_1 = arith.constant 0 : i32
    return %c0_i32, %c0_i32_0 : i32, i32
  }
  func.func @transform_5(%arg0: i32) -> (i32, i32) {
    %c0_i32 = arith.constant 0 : i32
    %c0_i32_0 = arith.constant 0 : i32
    %c0_i32_1 = arith.constant 0 : i32
    return %c0_i32, %c0_i32_0 : i32, i32
  }
  func.func @transform_6(%arg0: i32) -> (i32, i32) {
    %c0_i32 = arith.constant 0 : i32
    %c0_i32_0 = arith.constant 0 : i32
    %c0_i32_1 = arith.constant 0 : i32
    return %c0_i32, %c0_i32_0 : i32, i32
  }
  func.func @transform_7(%arg0: i32) -> (i32, i32, i32) {
    %c0_i32 = arith.constant 0 : i32
    %c0_i32_0 = arith.constant 0 : i32
    %c0_i32_1 = arith.constant 0 : i32
    return %arg0, %c0_i32, %c0_i32_0 : i32, i32, i32
  }
}

module attributes {stable_mosaic.version = 11 : i64} {
  func.func @kernel(%arg0: i32, %arg1: i32, %arg2: memref<1x8x128xf32, #tpu.memory_space<vmem>>, %arg3: memref<1x1x128xf32, #tpu.memory_space<vmem>>, %arg4: memref<1x1x128xf32, #tpu.memory_space<vmem>>, %arg5: memref<1x128x128xbf16, #tpu.memory_space<vmem>>, %arg6: memref<1x1x128xf32, #tpu.memory_space<vmem>>, %arg7: memref<1x128x128xbf16, #tpu.memory_space<vmem>>, %arg8: memref<1x1x128xf32, #tpu.memory_space<vmem>>, %arg9: memref<1x1x128xf32, #tpu.memory_space<vmem>>, %arg10: memref<1x1x128xf32, #tpu.memory_space<vmem>>, %arg11: memref<1x128x128xbf16, #tpu.memory_space<vmem>>, %arg12: memref<1x1x128xf32, #tpu.memory_space<vmem>>, %arg13: memref<1x128x128xbf16, #tpu.memory_space<vmem>>, %arg14: memref<1x1x128xf32, #tpu.memory_space<vmem>>, %arg15: memref<1x128x128xbf16, #tpu.memory_space<vmem>>, %arg16: memref<1x1x128xf32, #tpu.memory_space<vmem>>, %arg17: memref<1x128x128xbf16, #tpu.memory_space<vmem>>, %arg18: memref<1x1x128xf32, #tpu.memory_space<vmem>>, %arg19: memref<1x1x128xf32, #tpu.memory_space<vmem>>, %arg20: memref<1x1x128xf32, #tpu.memory_space<vmem>>, %arg21: memref<1x128x128xbf16, #tpu.memory_space<vmem>>, %arg22: memref<1x1x128xf32, #tpu.memory_space<vmem>>, %arg23: memref<1x128x128xbf16, #tpu.memory_space<vmem>>, %arg24: memref<1x1x128xf32, #tpu.memory_space<vmem>>, %arg25: memref<1x7x128xf32, #tpu.memory_space<vmem>>, %arg26: memref<1x1x128xf32, #tpu.memory_space<vmem>>, %arg27: memref<1x1x128xf32, #tpu.memory_space<vmem>>, %arg28: memref<1x1x128xf32, #tpu.memory_space<vmem>>, %arg29: memref<1x1x128xf32, #tpu.memory_space<vmem>>, %arg30: memref<1x1x128xf32, #tpu.memory_space<vmem>>, %arg31: memref<1x128x128xbf16, #tpu.memory_space<vmem>>, %arg32: memref<1x1x128xf32, #tpu.memory_space<vmem>>, %arg33: memref<1x1x128xf32, #tpu.memory_space<vmem>>, %arg34: memref<1x1x128xf32, #tpu.memory_space<vmem>>, %arg35: memref<1x128x128xbf16, #tpu.memory_space<vmem>>, %arg36: memref<1x1x128xf32, #tpu.memory_space<vmem>>, %arg37: memref<1x128x128xbf16, #tpu.memory_space<vmem>>, %arg38: memref<1x1x128xf32, #tpu.memory_space<vmem>>, %arg39: memref<1x1x128xf32, #tpu.memory_space<vmem>>, %arg40: memref<1x1x128xf32, #tpu.memory_space<vmem>>, %arg41: memref<1x8x128xf32, #tpu.memory_space<vmem>>) attributes {dimension_semantics = [#tpu.dimension_semantics<parallel>, #tpu.dimension_semantics<arbitrary>], iteration_bounds = array<i64: 2, 2>, scalar_prefetch = 0 : i64, scratch_operands = 0 : i64, tpu.core_type = #tpu.core_type<tc>, window_params = [{transform_indices = @transform_0, window_bounds = array<i64: 1, 8, 128>}, {transform_indices = @transform_1, window_bounds = array<i64: 1, 1, 128>}, {transform_indices = @transform_2, window_bounds = array<i64: 1, 1, 128>}, {transform_indices = @transform_3, window_bounds = array<i64: 1, 128, 128>}, {transform_indices = @transform_4, window_bounds = array<i64: 1, 1, 128>}, {transform_indices = @transform_5, window_bounds = array<i64: 1, 128, 128>}, {transform_indices = @transform_6, window_bounds = array<i64: 1, 1, 128>}, {transform_indices = @transform_7, window_bounds = array<i64: 1, 1, 128>}, {transform_indices = @transform_8, window_bounds = array<i64: 1, 1, 128>}, {transform_indices = @transform_9, window_bounds = array<i64: 1, 128, 128>}, {transform_indices = @transform_10, window_bounds = array<i64: 1, 1, 128>}, {transform_indices = @transform_11, window_bounds = array<i64: 1, 128, 128>}, {transform_indices = @transform_12, window_bounds = array<i64: 1, 1, 128>}, {transform_indices = @transform_13, window_bounds = array<i64: 1, 128, 128>}, {transform_indices = @transform_14, window_bounds = array<i64: 1, 1, 128>}, {transform_indices = @transform_15, window_bounds = array<i64: 1, 128, 128>}, {transform_indices = @transform_16, window_bounds = array<i64: 1, 1, 128>}, {transform_indices = @transform_17, window_bounds = array<i64: 1, 1, 128>}, {transform_indices = @transform_18, window_bounds = array<i64: 1, 1, 128>}, {transform_indices = @transform_19, window_bounds = array<i64: 1, 128, 128>}, {transform_indices = @transform_20, window_bounds = array<i64: 1, 1, 128>}, {transform_indices = @transform_21, window_bounds = array<i64: 1, 128, 128>}, {transform_indices = @transform_22, window_bounds = array<i64: 1, 1, 128>}, {transform_indices = @transform_23, window_bounds = array<i64: 1, 7, 128>}, {transform_indices = @transform_24, window_bounds = array<i64: 1, 1, 128>}, {transform_indices = @transform_25, window_bounds = array<i64: 1, 1, 128>}, {transform_indices = @transform_26, window_bounds = array<i64: 1, 1, 128>}, {transform_indices = @transform_27, window_bounds = array<i64: 1, 1, 128>}, {transform_indices = @transform_28, window_bounds = array<i64: 1, 1, 128>}, {transform_indices = @transform_29, window_bounds = array<i64: 1, 128, 128>}, {transform_indices = @transform_30, window_bounds = array<i64: 1, 1, 128>}, {transform_indices = @transform_31, window_bounds = array<i64: 1, 1, 128>}, {transform_indices = @transform_32, window_bounds = array<i64: 1, 1, 128>}, {transform_indices = @transform_33, window_bounds = array<i64: 1, 128, 128>}, {transform_indices = @transform_34, window_bounds = array<i64: 1, 1, 128>}, {transform_indices = @transform_35, window_bounds = array<i64: 1, 128, 128>}, {transform_indices = @transform_36, window_bounds = array<i64: 1, 1, 128>}, {transform_indices = @transform_37, window_bounds = array<i64: 1, 1, 128>}, {transform_indices = @transform_38, window_bounds = array<i64: 1, 1, 128>}, {transform_indices = @transform_39, window_bounds = array<i64: 1, 8, 128>}]} {
    %c0_i32 = arith.constant 0 : i32
    %0 = arith.cmpi eq, %arg1, %c0_i32 : i32
    %1 = arith.extui %0 : i1 to i32
    %c0_i32_0 = arith.constant 0 : i32
    %2 = arith.cmpi ne, %1, %c0_i32_0 : i32
    scf.if %2 {
      %c0_213 = arith.constant 0 : index
      %c0_214 = arith.constant 0 : index
      %c0_215 = arith.constant 0 : index
      %480 = vector.load %arg2[%c0_213, %c0_214, %c0_215] : memref<1x8x128xf32, #tpu.memory_space<vmem>>, vector<1x8x128xf32>
      %481 = vector.shape_cast %480 : vector<1x8x128xf32> to vector<8x128xf32>
      %c0_216 = arith.constant 0 : index
      %c0_217 = arith.constant 0 : index
      %c0_218 = arith.constant 0 : index
      %482 = vector.load %arg41[%c0_216, %c0_217, %c0_218] : memref<1x8x128xf32, #tpu.memory_space<vmem>>, vector<1x8x128xf32>
      %483 = vector.shape_cast %482 : vector<1x8x128xf32> to vector<8x128xf32>
      %484 = vector.shape_cast %481 : vector<8x128xf32> to vector<1x8x128xf32>
      tpu.vector_store %arg41[%c0_216, %c0_217, %c0_218], %484 {strides = array<i32>} : memref<1x8x128xf32, #tpu.memory_space<vmem>>, vector<1x8x128xf32>,
    } else {
    }
    %c0 = arith.constant 0 : index
    %c0_1 = arith.constant 0 : index
    %c0_2 = arith.constant 0 : index
    %3 = vector.load %arg41[%c0, %c0_1, %c0_2] : memref<1x8x128xf32, #tpu.memory_space<vmem>>, vector<1x8x128xf32>
    %4 = vector.shape_cast %3 : vector<1x8x128xf32> to vector<8x128xf32>
    %cst = arith.constant dense<0.000000e+00> : vector<8xf32>
    %5 = vector.multi_reduction <add>, %4, %cst [1] : vector<8x128xf32> to vector<8xf32>
    %6 = vector.shape_cast %5 : vector<8xf32> to vector<8x1xf32>
    %cst_3 = arith.constant 3.125000e-02 : f32
    %7 = vector.broadcast %cst_3 : f32 to vector<8x1xf32>
    %8 = arith.mulf %6, %7 : vector<8x1xf32>
    %9 = arith.mulf %4, %4 : vector<8x128xf32>
    %cst_4 = arith.constant dense<0.000000e+00> : vector<8xf32>
    %10 = vector.multi_reduction <add>, %9, %cst_4 [1] : vector<8x128xf32> to vector<8xf32>
    %11 = vector.shape_cast %10 : vector<8xf32> to vector<8x1xf32>
    %cst_5 = arith.constant 3.125000e-02 : f32
    %12 = vector.broadcast %cst_5 : f32 to vector<8x1xf32>
    %13 = arith.mulf %11, %12 : vector<8x1xf32>
    %14 = arith.mulf %8, %8 : vector<8x1xf32>
    %15 = arith.subf %13, %14 : vector<8x1xf32>
    %16 = vector.broadcast %8 : vector<8x1xf32> to vector<8x128xf32>
    %17 = arith.subf %4, %16 : vector<8x128xf32>
    %cst_6 = arith.constant 9.99999974E-6 : f32
    %18 = vector.broadcast %cst_6 : f32 to vector<8x1xf32>
    %19 = arith.addf %15, %18 : vector<8x1xf32>
    %20 = math.rsqrt %19 : vector<8x1xf32>
    %21 = vector.broadcast %20 : vector<8x1xf32> to vector<8x128xf32>
    %22 = arith.mulf %17, %21 : vector<8x128xf32>
    %c0_7 = arith.constant 0 : index
    %c0_8 = arith.constant 0 : index
    %c0_9 = arith.constant 0 : index
    %23 = vector.load %arg3[%c0_7, %c0_8, %c0_9] : memref<1x1x128xf32, #tpu.memory_space<vmem>>, vector<1x1x128xf32>
    %24 = vector.shape_cast %23 : vector<1x1x128xf32> to vector<1x128xf32>
    %25 = vector.broadcast %24 : vector<1x128xf32> to vector<8x128xf32>
    %26 = arith.mulf %22, %25 : vector<8x128xf32>
    %c0_10 = arith.constant 0 : index
    %c0_11 = arith.constant 0 : index
    %c0_12 = arith.constant 0 : index
    %27 = vector.load %arg4[%c0_10, %c0_11, %c0_12] : memref<1x1x128xf32, #tpu.memory_space<vmem>>, vector<1x1x128xf32>
    %28 = vector.shape_cast %27 : vector<1x1x128xf32> to vector<1x128xf32>
    %29 = vector.broadcast %28 : vector<1x128xf32> to vector<8x128xf32>
    %30 = arith.addf %26, %29 : vector<8x128xf32>
    %31 = arith.truncf %30 : vector<8x128xf32> to vector<8x128xbf16>
    %c0_13 = arith.constant 0 : index
    %c0_14 = arith.constant 0 : index
    %c0_15 = arith.constant 0 : index
    %32 = vector.load %arg5[%c0_13, %c0_14, %c0_15] : memref<1x128x128xbf16, #tpu.memory_space<vmem>>, vector<1x128x128xbf16>
    %33 = vector.shape_cast %32 : vector<1x128x128xbf16> to vector<128x128xbf16>
    %cst_16 = arith.constant dense<0.000000e+00> : vector<8x128xf32>
    %34 = tpu.matmul %31, %33, %cst_16 {dimension_numbers = #tpu.dot_dimension_numbers<[1], [0], [0], [1], [0, 0, 1, 1], [], []>} : vector<8x128xbf16>, vector<128x128xbf16>, vector<8x128xf32> -> vector<8x128xf32>
    %c0_17 = arith.constant 0 : index
    %c0_18 = arith.constant 0 : index
    %c0_19 = arith.constant 0 : index
    %35 = vector.load %arg6[%c0_17, %c0_18, %c0_19] : memref<1x1x128xf32, #tpu.memory_space<vmem>>, vector<1x1x128xf32>
    %36 = vector.shape_cast %35 : vector<1x1x128xf32> to vector<1x128xf32>
    %37 = vector.broadcast %36 : vector<1x128xf32> to vector<8x128xf32>
    %38 = arith.addf %34, %37 : vector<8x128xf32>
    %39 = arith.negf %38 : vector<8x128xf32>
    %40 = math.exp %39 : vector<8x128xf32>
    %cst_20 = arith.constant 1.000000e+00 : f32
    %41 = vector.broadcast %cst_20 : f32 to vector<8x128xf32>
    %42 = arith.addf %41, %40 : vector<8x128xf32>
    %43 = arith.divf %41, %42 : vector<8x128xf32>
    %44 = arith.mulf %38, %43 : vector<8x128xf32>
    %45 = arith.truncf %44 : vector<8x128xf32> to vector<8x128xbf16>
    %c0_21 = arith.constant 0 : index
    %c0_22 = arith.constant 0 : index
    %c0_23 = arith.constant 0 : index
    %46 = vector.load %arg7[%c0_21, %c0_22, %c0_23] : memref<1x128x128xbf16, #tpu.memory_space<vmem>>, vector<1x128x128xbf16>
    %47 = vector.shape_cast %46 : vector<1x128x128xbf16> to vector<128x128xbf16>
    %cst_24 = arith.constant dense<0.000000e+00> : vector<8x128xf32>
    %48 = tpu.matmul %45, %47, %cst_24 {dimension_numbers = #tpu.dot_dimension_numbers<[1], [0], [0], [1], [0, 0, 1, 1], [], []>} : vector<8x128xbf16>, vector<128x128xbf16>, vector<8x128xf32> -> vector<8x128xf32>
    %c0_25 = arith.constant 0 : index
    %c0_26 = arith.constant 0 : index
    %c0_27 = arith.constant 0 : index
    %49 = vector.load %arg8[%c0_25, %c0_26, %c0_27] : memref<1x1x128xf32, #tpu.memory_space<vmem>>, vector<1x1x128xf32>
    %50 = vector.shape_cast %49 : vector<1x1x128xf32> to vector<1x128xf32>
    %51 = vector.broadcast %50 : vector<1x128xf32> to vector<8x128xf32>
    %52 = arith.addf %48, %51 : vector<8x128xf32>
    %cst_28 = arith.constant 5.000000e-01 : f32
    %53 = vector.broadcast %cst_28 : f32 to vector<8x128xf32>
    %54 = arith.mulf %53, %52 : vector<8x128xf32>
    %55 = arith.addf %4, %54 : vector<8x128xf32>
    %cst_29 = arith.constant dense<0.000000e+00> : vector<8xf32>
    %56 = vector.multi_reduction <add>, %55, %cst_29 [1] : vector<8x128xf32> to vector<8xf32>
    %57 = vector.shape_cast %56 : vector<8xf32> to vector<8x1xf32>
    %cst_30 = arith.constant 3.125000e-02 : f32
    %58 = vector.broadcast %cst_30 : f32 to vector<8x1xf32>
    %59 = arith.mulf %57, %58 : vector<8x1xf32>
    %60 = arith.mulf %55, %55 : vector<8x128xf32>
    %cst_31 = arith.constant dense<0.000000e+00> : vector<8xf32>
    %61 = vector.multi_reduction <add>, %60, %cst_31 [1] : vector<8x128xf32> to vector<8xf32>
    %62 = vector.shape_cast %61 : vector<8xf32> to vector<8x1xf32>
    %cst_32 = arith.constant 3.125000e-02 : f32
    %63 = vector.broadcast %cst_32 : f32 to vector<8x1xf32>
    %64 = arith.mulf %62, %63 : vector<8x1xf32>
    %65 = arith.mulf %59, %59 : vector<8x1xf32>
    %66 = arith.subf %64, %65 : vector<8x1xf32>
    %67 = vector.broadcast %59 : vector<8x1xf32> to vector<8x128xf32>
    %68 = arith.subf %55, %67 : vector<8x128xf32>
    %cst_33 = arith.constant 9.99999974E-6 : f32
    %69 = vector.broadcast %cst_33 : f32 to vector<8x1xf32>
    %70 = arith.addf %66, %69 : vector<8x1xf32>
    %71 = math.rsqrt %70 : vector<8x1xf32>
    %72 = vector.broadcast %71 : vector<8x1xf32> to vector<8x128xf32>
    %73 = arith.mulf %68, %72 : vector<8x128xf32>
    %c0_34 = arith.constant 0 : index
    %c0_35 = arith.constant 0 : index
    %c0_36 = arith.constant 0 : index
    %74 = vector.load %arg9[%c0_34, %c0_35, %c0_36] : memref<1x1x128xf32, #tpu.memory_space<vmem>>, vector<1x1x128xf32>
    %75 = vector.shape_cast %74 : vector<1x1x128xf32> to vector<1x128xf32>
    %76 = vector.broadcast %75 : vector<1x128xf32> to vector<8x128xf32>
    %77 = arith.mulf %73, %76 : vector<8x128xf32>
    %c0_37 = arith.constant 0 : index
    %c0_38 = arith.constant 0 : index
    %c0_39 = arith.constant 0 : index
    %78 = vector.load %arg10[%c0_37, %c0_38, %c0_39] : memref<1x1x128xf32, #tpu.memory_space<vmem>>, vector<1x1x128xf32>
    %79 = vector.shape_cast %78 : vector<1x1x128xf32> to vector<1x128xf32>
    %80 = vector.broadcast %79 : vector<1x128xf32> to vector<8x128xf32>
    %81 = arith.addf %77, %80 : vector<8x128xf32>
    %82 = arith.truncf %81 : vector<8x128xf32> to vector<8x128xbf16>
    %c0_40 = arith.constant 0 : index
    %c0_41 = arith.constant 0 : index
    %c0_42 = arith.constant 0 : index
    %83 = vector.load %arg11[%c0_40, %c0_41, %c0_42] : memref<1x128x128xbf16, #tpu.memory_space<vmem>>, vector<1x128x128xbf16>
    %84 = vector.shape_cast %83 : vector<1x128x128xbf16> to vector<128x128xbf16>
    %cst_43 = arith.constant dense<0.000000e+00> : vector<8x128xf32>
    %85 = tpu.matmul %82, %84, %cst_43 {dimension_numbers = #tpu.dot_dimension_numbers<[1], [0], [0], [1], [0, 0, 1, 1], [], []>} : vector<8x128xbf16>, vector<128x128xbf16>, vector<8x128xf32> -> vector<8x128xf32>
    %c0_44 = arith.constant 0 : index
    %c0_45 = arith.constant 0 : index
    %c0_46 = arith.constant 0 : index
    %86 = vector.load %arg12[%c0_44, %c0_45, %c0_46] : memref<1x1x128xf32, #tpu.memory_space<vmem>>, vector<1x1x128xf32>
    %87 = vector.shape_cast %86 : vector<1x1x128xf32> to vector<1x128xf32>
    %88 = vector.broadcast %87 : vector<1x128xf32> to vector<8x128xf32>
    %89 = arith.addf %85, %88 : vector<8x128xf32>
    %90 = arith.truncf %81 : vector<8x128xf32> to vector<8x128xbf16>
    %c0_47 = arith.constant 0 : index
    %c0_48 = arith.constant 0 : index
    %c0_49 = arith.constant 0 : index
    %91 = vector.load %arg13[%c0_47, %c0_48, %c0_49] : memref<1x128x128xbf16, #tpu.memory_space<vmem>>, vector<1x128x128xbf16>
    %92 = vector.shape_cast %91 : vector<1x128x128xbf16> to vector<128x128xbf16>
    %cst_50 = arith.constant dense<0.000000e+00> : vector<8x128xf32>
    %93 = tpu.matmul %90, %92, %cst_50 {dimension_numbers = #tpu.dot_dimension_numbers<[1], [0], [0], [1], [0, 0, 1, 1], [], []>} : vector<8x128xbf16>, vector<128x128xbf16>, vector<8x128xf32> -> vector<8x128xf32>
    %c0_51 = arith.constant 0 : index
    %c0_52 = arith.constant 0 : index
    %c0_53 = arith.constant 0 : index
    %94 = vector.load %arg14[%c0_51, %c0_52, %c0_53] : memref<1x1x128xf32, #tpu.memory_space<vmem>>, vector<1x1x128xf32>
    %95 = vector.shape_cast %94 : vector<1x1x128xf32> to vector<1x128xf32>
    %96 = vector.broadcast %95 : vector<1x128xf32> to vector<8x128xf32>
    %97 = arith.addf %93, %96 : vector<8x128xf32>
    %98 = arith.truncf %81 : vector<8x128xf32> to vector<8x128xbf16>
    %c0_54 = arith.constant 0 : index
    %c0_55 = arith.constant 0 : index
    %c0_56 = arith.constant 0 : index
    %99 = vector.load %arg15[%c0_54, %c0_55, %c0_56] : memref<1x128x128xbf16, #tpu.memory_space<vmem>>, vector<1x128x128xbf16>
    %100 = vector.shape_cast %99 : vector<1x128x128xbf16> to vector<128x128xbf16>
    %cst_57 = arith.constant dense<0.000000e+00> : vector<8x128xf32>
    %101 = tpu.matmul %98, %100, %cst_57 {dimension_numbers = #tpu.dot_dimension_numbers<[1], [0], [0], [1], [0, 0, 1, 1], [], []>} : vector<8x128xbf16>, vector<128x128xbf16>, vector<8x128xf32> -> vector<8x128xf32>
    %c0_58 = arith.constant 0 : index
    %c0_59 = arith.constant 0 : index
    %c0_60 = arith.constant 0 : index
    %102 = vector.load %arg16[%c0_58, %c0_59, %c0_60] : memref<1x1x128xf32, #tpu.memory_space<vmem>>, vector<1x1x128xf32>
    %103 = vector.shape_cast %102 : vector<1x1x128xf32> to vector<1x128xf32>
    %104 = vector.broadcast %103 : vector<1x128xf32> to vector<8x128xf32>
    %105 = arith.addf %101, %104 : vector<8x128xf32>
    %106 = tpu.iota {dimensions = array<i32: 1>} : vector<8x8xi32>
    %c7_i32 = arith.constant 7 : i32
    %107 = vector.broadcast %c7_i32 : i32 to vector<8x8xi32>
    %108 = arith.cmpi slt, %106, %107 : vector<8x8xi32>
    %cst_61 = arith.constant 0.000000e+00 : f32
    %cst_62 = arith.constant -1.000000e+09 : f32
    %109 = vector.broadcast %cst_61 : f32 to vector<8x8xf32>
    %110 = vector.broadcast %cst_62 : f32 to vector<8x8xf32>
    %111 = arith.select %108, %109, %110 : vector<8x8xi1>, vector<8x8xf32>
    %112 = vector.extract_strided_slice %89 {offsets = [0, 0], sizes = [8, 32], strides = [1, 1]} : vector<8x128xf32> to vector<8x32xf32>
    %113 = arith.truncf %112 : vector<8x32xf32> to vector<8x32xbf16>
    %114 = vector.extract_strided_slice %97 {offsets = [0, 0], sizes = [8, 32], strides = [1, 1]} : vector<8x128xf32> to vector<8x32xf32>
    %115 = arith.truncf %114 : vector<8x32xf32> to vector<8x32xbf16>
    %116 = vector.extract_strided_slice %105 {offsets = [0, 0], sizes = [8, 32], strides = [1, 1]} : vector<8x128xf32> to vector<8x32xf32>
    %117 = arith.truncf %116 : vector<8x32xf32> to vector<8x32xbf16>
    %cst_63 = arith.constant dense<0.000000e+00> : vector<8x8xf32>
    %118 = tpu.matmul %113, %115, %cst_63 {dimension_numbers = #tpu.dot_dimension_numbers<[1], [1], [0], [0], [0, 0, 1, 0], [], []>} : vector<8x32xbf16>, vector<8x32xbf16>, vector<8x8xf32> -> vector<8x8xf32>
    %cst_64 = arith.constant 0.353553385 : f32
    %119 = vector.broadcast %cst_64 : f32 to vector<8x8xf32>
    %120 = arith.mulf %118, %119 : vector<8x8xf32>
    %121 = arith.addf %120, %111 : vector<8x8xf32>
    %cst_65 = arith.constant dense<0xFF800000> : vector<8xf32>
    %122 = vector.multi_reduction <maximumf>, %121, %cst_65 [1] : vector<8x8xf32> to vector<8xf32>
    %123 = vector.shape_cast %122 : vector<8xf32> to vector<8x1xf32>
    %124 = vector.broadcast %123 : vector<8x1xf32> to vector<8x8xf32>
    %125 = arith.subf %121, %124 : vector<8x8xf32>
    %126 = math.exp %125 : vector<8x8xf32>
    %cst_66 = arith.constant dense<0.000000e+00> : vector<8xf32>
    %127 = vector.multi_reduction <add>, %126, %cst_66 [1] : vector<8x8xf32> to vector<8xf32>
    %128 = vector.shape_cast %127 : vector<8xf32> to vector<8x1xf32>
    %129 = tpu.reciprocal %128 {approx = true} : vector<8x1xf32> -> vector<8x1xf32>
    %130 = vector.broadcast %129 : vector<8x1xf32> to vector<8x8xf32>
    %131 = arith.mulf %126, %130 : vector<8x8xf32>
    %132 = arith.truncf %131 : vector<8x8xf32> to vector<8x8xbf16>
    %cst_67 = arith.constant dense<0.000000e+00> : vector<8x32xf32>
    %133 = tpu.matmul %132, %117, %cst_67 {dimension_numbers = #tpu.dot_dimension_numbers<[1], [0], [0], [1], [0, 0, 1, 1], [], []>} : vector<8x8xbf16>, vector<8x32xbf16>, vector<8x32xf32> -> vector<8x32xf32>
    %134 = vector.extract_strided_slice %89 {offsets = [0, 32], sizes = [8, 32], strides = [1, 1]} : vector<8x128xf32> to vector<8x32xf32>
    %135 = arith.truncf %134 : vector<8x32xf32> to vector<8x32xbf16>
    %136 = vector.extract_strided_slice %97 {offsets = [0, 32], sizes = [8, 32], strides = [1, 1]} : vector<8x128xf32> to vector<8x32xf32>
    %137 = arith.truncf %136 : vector<8x32xf32> to vector<8x32xbf16>
    %138 = vector.extract_strided_slice %105 {offsets = [0, 32], sizes = [8, 32], strides = [1, 1]} : vector<8x128xf32> to vector<8x32xf32>
    %139 = arith.truncf %138 : vector<8x32xf32> to vector<8x32xbf16>
    %cst_68 = arith.constant dense<0.000000e+00> : vector<8x8xf32>
    %140 = tpu.matmul %135, %137, %cst_68 {dimension_numbers = #tpu.dot_dimension_numbers<[1], [1], [0], [0], [0, 0, 1, 0], [], []>} : vector<8x32xbf16>, vector<8x32xbf16>, vector<8x8xf32> -> vector<8x8xf32>
    %cst_69 = arith.constant 0.353553385 : f32
    %141 = vector.broadcast %cst_69 : f32 to vector<8x8xf32>
    %142 = arith.mulf %140, %141 : vector<8x8xf32>
    %143 = arith.addf %142, %111 : vector<8x8xf32>
    %cst_70 = arith.constant dense<0xFF800000> : vector<8xf32>
    %144 = vector.multi_reduction <maximumf>, %143, %cst_70 [1] : vector<8x8xf32> to vector<8xf32>
    %145 = vector.shape_cast %144 : vector<8xf32> to vector<8x1xf32>
    %146 = vector.broadcast %145 : vector<8x1xf32> to vector<8x8xf32>
    %147 = arith.subf %143, %146 : vector<8x8xf32>
    %148 = math.exp %147 : vector<8x8xf32>
    %cst_71 = arith.constant dense<0.000000e+00> : vector<8xf32>
    %149 = vector.multi_reduction <add>, %148, %cst_71 [1] : vector<8x8xf32> to vector<8xf32>
    %150 = vector.shape_cast %149 : vector<8xf32> to vector<8x1xf32>
    %151 = tpu.reciprocal %150 {approx = true} : vector<8x1xf32> -> vector<8x1xf32>
    %152 = vector.broadcast %151 : vector<8x1xf32> to vector<8x8xf32>
    %153 = arith.mulf %148, %152 : vector<8x8xf32>
    %154 = arith.truncf %153 : vector<8x8xf32> to vector<8x8xbf16>
    %cst_72 = arith.constant dense<0.000000e+00> : vector<8x32xf32>
    %155 = tpu.matmul %154, %139, %cst_72 {dimension_numbers = #tpu.dot_dimension_numbers<[1], [0], [0], [1], [0, 0, 1, 1], [], []>} : vector<8x8xbf16>, vector<8x32xbf16>, vector<8x32xf32> -> vector<8x32xf32>
    %156 = vector.extract_strided_slice %89 {offsets = [0, 64], sizes = [8, 32], strides = [1, 1]} : vector<8x128xf32> to vector<8x32xf32>
    %157 = arith.truncf %156 : vector<8x32xf32> to vector<8x32xbf16>
    %158 = vector.extract_strided_slice %97 {offsets = [0, 64], sizes = [8, 32], strides = [1, 1]} : vector<8x128xf32> to vector<8x32xf32>
    %159 = arith.truncf %158 : vector<8x32xf32> to vector<8x32xbf16>
    %160 = vector.extract_strided_slice %105 {offsets = [0, 64], sizes = [8, 32], strides = [1, 1]} : vector<8x128xf32> to vector<8x32xf32>
    %161 = arith.truncf %160 : vector<8x32xf32> to vector<8x32xbf16>
    %cst_73 = arith.constant dense<0.000000e+00> : vector<8x8xf32>
    %162 = tpu.matmul %157, %159, %cst_73 {dimension_numbers = #tpu.dot_dimension_numbers<[1], [1], [0], [0], [0, 0, 1, 0], [], []>} : vector<8x32xbf16>, vector<8x32xbf16>, vector<8x8xf32> -> vector<8x8xf32>
    %cst_74 = arith.constant 0.353553385 : f32
    %163 = vector.broadcast %cst_74 : f32 to vector<8x8xf32>
    %164 = arith.mulf %162, %163 : vector<8x8xf32>
    %165 = arith.addf %164, %111 : vector<8x8xf32>
    %cst_75 = arith.constant dense<0xFF800000> : vector<8xf32>
    %166 = vector.multi_reduction <maximumf>, %165, %cst_75 [1] : vector<8x8xf32> to vector<8xf32>
    %167 = vector.shape_cast %166 : vector<8xf32> to vector<8x1xf32>
    %168 = vector.broadcast %167 : vector<8x1xf32> to vector<8x8xf32>
    %169 = arith.subf %165, %168 : vector<8x8xf32>
    %170 = math.exp %169 : vector<8x8xf32>
    %cst_76 = arith.constant dense<0.000000e+00> : vector<8xf32>
    %171 = vector.multi_reduction <add>, %170, %cst_76 [1] : vector<8x8xf32> to vector<8xf32>
    %172 = vector.shape_cast %171 : vector<8xf32> to vector<8x1xf32>
    %173 = tpu.reciprocal %172 {approx = true} : vector<8x1xf32> -> vector<8x1xf32>
    %174 = vector.broadcast %173 : vector<8x1xf32> to vector<8x8xf32>
    %175 = arith.mulf %170, %174 : vector<8x8xf32>
    %176 = arith.truncf %175 : vector<8x8xf32> to vector<8x8xbf16>
    %cst_77 = arith.constant dense<0.000000e+00> : vector<8x32xf32>
    %177 = tpu.matmul %176, %161, %cst_77 {dimension_numbers = #tpu.dot_dimension_numbers<[1], [0], [0], [1], [0, 0, 1, 1], [], []>} : vector<8x8xbf16>, vector<8x32xbf16>, vector<8x32xf32> -> vector<8x32xf32>
    %178 = vector.extract_strided_slice %89 {offsets = [0, 96], sizes = [8, 32], strides = [1, 1]} : vector<8x128xf32> to vector<8x32xf32>
    %179 = arith.truncf %178 : vector<8x32xf32> to vector<8x32xbf16>
    %180 = vector.extract_strided_slice %97 {offsets = [0, 96], sizes = [8, 32], strides = [1, 1]} : vector<8x128xf32> to vector<8x32xf32>
    %181 = arith.truncf %180 : vector<8x32xf32> to vector<8x32xbf16>
    %182 = vector.extract_strided_slice %105 {offsets = [0, 96], sizes = [8, 32], strides = [1, 1]} : vector<8x128xf32> to vector<8x32xf32>
    %183 = arith.truncf %182 : vector<8x32xf32> to vector<8x32xbf16>
    %cst_78 = arith.constant dense<0.000000e+00> : vector<8x8xf32>
    %184 = tpu.matmul %179, %181, %cst_78 {dimension_numbers = #tpu.dot_dimension_numbers<[1], [1], [0], [0], [0, 0, 1, 0], [], []>} : vector<8x32xbf16>, vector<8x32xbf16>, vector<8x8xf32> -> vector<8x8xf32>
    %cst_79 = arith.constant 0.353553385 : f32
    %185 = vector.broadcast %cst_79 : f32 to vector<8x8xf32>
    %186 = arith.mulf %184, %185 : vector<8x8xf32>
    %187 = arith.addf %186, %111 : vector<8x8xf32>
    %cst_80 = arith.constant dense<0xFF800000> : vector<8xf32>
    %188 = vector.multi_reduction <maximumf>, %187, %cst_80 [1] : vector<8x8xf32> to vector<8xf32>
    %189 = vector.shape_cast %188 : vector<8xf32> to vector<8x1xf32>
    %190 = vector.broadcast %189 : vector<8x1xf32> to vector<8x8xf32>
    %191 = arith.subf %187, %190 : vector<8x8xf32>
    %192 = math.exp %191 : vector<8x8xf32>
    %cst_81 = arith.constant dense<0.000000e+00> : vector<8xf32>
    %193 = vector.multi_reduction <add>, %192, %cst_81 [1] : vector<8x8xf32> to vector<8xf32>
    %194 = vector.shape_cast %193 : vector<8xf32> to vector<8x1xf32>
    %195 = tpu.reciprocal %194 {approx = true} : vector<8x1xf32> -> vector<8x1xf32>
    %196 = vector.broadcast %195 : vector<8x1xf32> to vector<8x8xf32>
    %197 = arith.mulf %192, %196 : vector<8x8xf32>
    %198 = arith.truncf %197 : vector<8x8xf32> to vector<8x8xbf16>
    %cst_82 = arith.constant dense<0.000000e+00> : vector<8x32xf32>
    %199 = tpu.matmul %198, %183, %cst_82 {dimension_numbers = #tpu.dot_dimension_numbers<[1], [0], [0], [1], [0, 0, 1, 1], [], []>} : vector<8x8xbf16>, vector<8x32xbf16>, vector<8x32xf32> -> vector<8x32xf32>
    %200 = tpu.concatenate %133, %155, %177, %199 in 1 : vector<8x32xf32>, vector<8x32xf32>, vector<8x32xf32>, vector<8x32xf32> -> vector<8x128xf32>
    %201 = arith.truncf %200 : vector<8x128xf32> to vector<8x128xbf16>
    %c0_83 = arith.constant 0 : index
    %c0_84 = arith.constant 0 : index
    %c0_85 = arith.constant 0 : index
    %202 = vector.load %arg17[%c0_83, %c0_84, %c0_85] : memref<1x128x128xbf16, #tpu.memory_space<vmem>>, vector<1x128x128xbf16>
    %203 = vector.shape_cast %202 : vector<1x128x128xbf16> to vector<128x128xbf16>
    %cst_86 = arith.constant dense<0.000000e+00> : vector<8x128xf32>
    %204 = tpu.matmul %201, %203, %cst_86 {dimension_numbers = #tpu.dot_dimension_numbers<[1], [0], [0], [1], [0, 0, 1, 1], [], []>} : vector<8x128xbf16>, vector<128x128xbf16>, vector<8x128xf32> -> vector<8x128xf32>
    %c0_87 = arith.constant 0 : index
    %c0_88 = arith.constant 0 : index
    %c0_89 = arith.constant 0 : index
    %205 = vector.load %arg18[%c0_87, %c0_88, %c0_89] : memref<1x1x128xf32, #tpu.memory_space<vmem>>, vector<1x1x128xf32>
    %206 = vector.shape_cast %205 : vector<1x1x128xf32> to vector<1x128xf32>
    %207 = vector.broadcast %206 : vector<1x128xf32> to vector<8x128xf32>
    %208 = arith.addf %204, %207 : vector<8x128xf32>
    %209 = arith.addf %55, %208 : vector<8x128xf32>
    %cst_90 = arith.constant dense<0.000000e+00> : vector<8xf32>
    %210 = vector.multi_reduction <add>, %209, %cst_90 [1] : vector<8x128xf32> to vector<8xf32>
    %211 = vector.shape_cast %210 : vector<8xf32> to vector<8x1xf32>
    %cst_91 = arith.constant 3.125000e-02 : f32
    %212 = vector.broadcast %cst_91 : f32 to vector<8x1xf32>
    %213 = arith.mulf %211, %212 : vector<8x1xf32>
    %214 = arith.mulf %209, %209 : vector<8x128xf32>
    %cst_92 = arith.constant dense<0.000000e+00> : vector<8xf32>
    %215 = vector.multi_reduction <add>, %214, %cst_92 [1] : vector<8x128xf32> to vector<8xf32>
    %216 = vector.shape_cast %215 : vector<8xf32> to vector<8x1xf32>
    %cst_93 = arith.constant 3.125000e-02 : f32
    %217 = vector.broadcast %cst_93 : f32 to vector<8x1xf32>
    %218 = arith.mulf %216, %217 : vector<8x1xf32>
    %219 = arith.mulf %213, %213 : vector<8x1xf32>
    %220 = arith.subf %218, %219 : vector<8x1xf32>
    %221 = vector.broadcast %213 : vector<8x1xf32> to vector<8x128xf32>
    %222 = arith.subf %209, %221 : vector<8x128xf32>
    %cst_94 = arith.constant 9.99999974E-6 : f32
    %223 = vector.broadcast %cst_94 : f32 to vector<8x1xf32>
    %224 = arith.addf %220, %223 : vector<8x1xf32>
    %225 = math.rsqrt %224 : vector<8x1xf32>
    %226 = vector.broadcast %225 : vector<8x1xf32> to vector<8x128xf32>
    %227 = arith.mulf %222, %226 : vector<8x128xf32>
    %c0_95 = arith.constant 0 : index
    %c0_96 = arith.constant 0 : index
    %c0_97 = arith.constant 0 : index
    %228 = vector.load %arg19[%c0_95, %c0_96, %c0_97] : memref<1x1x128xf32, #tpu.memory_space<vmem>>, vector<1x1x128xf32>
    %229 = vector.shape_cast %228 : vector<1x1x128xf32> to vector<1x128xf32>
    %230 = vector.broadcast %229 : vector<1x128xf32> to vector<8x128xf32>
    %231 = arith.mulf %227, %230 : vector<8x128xf32>
    %c0_98 = arith.constant 0 : index
    %c0_99 = arith.constant 0 : index
    %c0_100 = arith.constant 0 : index
    %232 = vector.load %arg20[%c0_98, %c0_99, %c0_100] : memref<1x1x128xf32, #tpu.memory_space<vmem>>, vector<1x1x128xf32>
    %233 = vector.shape_cast %232 : vector<1x1x128xf32> to vector<1x128xf32>
    %234 = vector.broadcast %233 : vector<1x128xf32> to vector<8x128xf32>
    %235 = arith.addf %231, %234 : vector<8x128xf32>
    %236 = arith.truncf %235 : vector<8x128xf32> to vector<8x128xbf16>
    %c0_101 = arith.constant 0 : index
    %c0_102 = arith.constant 0 : index
    %c0_103 = arith.constant 0 : index
    %237 = vector.load %arg21[%c0_101, %c0_102, %c0_103] : memref<1x128x128xbf16, #tpu.memory_space<vmem>>, vector<1x128x128xbf16>
    %238 = vector.shape_cast %237 : vector<1x128x128xbf16> to vector<128x128xbf16>
    %cst_104 = arith.constant dense<0.000000e+00> : vector<8x128xf32>
    %239 = tpu.matmul %236, %238, %cst_104 {dimension_numbers = #tpu.dot_dimension_numbers<[1], [0], [0], [1], [0, 0, 1, 1], [], []>} : vector<8x128xbf16>, vector<128x128xbf16>, vector<8x128xf32> -> vector<8x128xf32>
    %c0_105 = arith.constant 0 : index
    %c0_106 = arith.constant 0 : index
    %c0_107 = arith.constant 0 : index
    %240 = vector.load %arg22[%c0_105, %c0_106, %c0_107] : memref<1x1x128xf32, #tpu.memory_space<vmem>>, vector<1x1x128xf32>
    %241 = vector.shape_cast %240 : vector<1x1x128xf32> to vector<1x128xf32>
    %242 = vector.broadcast %241 : vector<1x128xf32> to vector<8x128xf32>
    %243 = arith.addf %239, %242 : vector<8x128xf32>
    %244 = arith.truncf %235 : vector<8x128xf32> to vector<8x128xbf16>
    %c0_108 = arith.constant 0 : index
    %c0_109 = arith.constant 0 : index
    %c0_110 = arith.constant 0 : index
    %245 = vector.load %arg23[%c0_108, %c0_109, %c0_110] : memref<1x128x128xbf16, #tpu.memory_space<vmem>>, vector<1x128x128xbf16>
    %246 = vector.shape_cast %245 : vector<1x128x128xbf16> to vector<128x128xbf16>
    %cst_111 = arith.constant dense<0.000000e+00> : vector<8x128xf32>
    %247 = tpu.matmul %244, %246, %cst_111 {dimension_numbers = #tpu.dot_dimension_numbers<[1], [0], [0], [1], [0, 0, 1, 1], [], []>} : vector<8x128xbf16>, vector<128x128xbf16>, vector<8x128xf32> -> vector<8x128xf32>
    %c0_112 = arith.constant 0 : index
    %c0_113 = arith.constant 0 : index
    %c0_114 = arith.constant 0 : index
    %248 = vector.load %arg24[%c0_112, %c0_113, %c0_114] : memref<1x1x128xf32, #tpu.memory_space<vmem>>, vector<1x1x128xf32>
    %249 = vector.shape_cast %248 : vector<1x1x128xf32> to vector<1x128xf32>
    %250 = vector.broadcast %249 : vector<1x128xf32> to vector<8x128xf32>
    %251 = arith.addf %247, %250 : vector<8x128xf32>
    %252 = arith.negf %251 : vector<8x128xf32>
    %253 = math.exp %252 : vector<8x128xf32>
    %cst_115 = arith.constant 1.000000e+00 : f32
    %254 = vector.broadcast %cst_115 : f32 to vector<8x128xf32>
    %255 = arith.addf %254, %253 : vector<8x128xf32>
    %256 = arith.divf %254, %255 : vector<8x128xf32>
    %257 = arith.mulf %243, %256 : vector<8x128xf32>
    %258 = tpu.iota {dimensions = array<i32: 0>} : vector<8x128xi32>
    %c0_116 = arith.constant 0 : index
    %c0_117 = arith.constant 0 : index
    %c0_118 = arith.constant 0 : index
    %259 = vector.load %arg25[%c0_116, %c0_117, %c0_118] : memref<1x7x128xf32, #tpu.memory_space<vmem>>, vector<1x7x128xf32>
    %260 = vector.shape_cast %259 : vector<1x7x128xf32> to vector<7x128xf32>
    %cst_119 = arith.constant 0.000000e+00 : f32
    %261 = vector.broadcast %cst_119 : f32 to vector<8x128xf32>
    %c0_120 = arith.constant 0 : index
    %c0_121 = arith.constant 0 : index
    %c0_122 = arith.constant 0 : index
    %262 = vector.load %arg26[%c0_120, %c0_121, %c0_122] : memref<1x1x128xf32, #tpu.memory_space<vmem>>, vector<1x1x128xf32>
    %263 = vector.shape_cast %262 : vector<1x1x128xf32> to vector<1x128xf32>
    %264 = vector.broadcast %263 : vector<1x128xf32> to vector<8x128xf32>
    %265 = arith.addf %261, %264 : vector<8x128xf32>
    %c3_i32 = arith.constant 3 : i32
    %266 = tpu.dynamic_rotate %257 by %c3_i32 dim 0 : vector<8x128xf32>, i32 -> vector<8x128xf32>
    %c-3_i32 = arith.constant -3 : i32
    %267 = vector.broadcast %c-3_i32 : i32 to vector<8x128xi32>
    %268 = arith.addi %258, %267 : vector<8x128xi32>
    %c0_i32_123 = arith.constant 0 : i32
    %269 = vector.broadcast %c0_i32_123 : i32 to vector<8x128xi32>
    %270 = arith.cmpi sge, %268, %269 : vector<8x128xi32>
    %c-3_i32_124 = arith.constant -3 : i32
    %271 = vector.broadcast %c-3_i32_124 : i32 to vector<8x128xi32>
    %272 = arith.addi %258, %271 : vector<8x128xi32>
    %c7_i32_125 = arith.constant 7 : i32
    %273 = vector.broadcast %c7_i32_125 : i32 to vector<8x128xi32>
    %274 = arith.cmpi slt, %272, %273 : vector<8x128xi32>
    %275 = arith.andi %270, %274 : vector<8x128xi1>
    %cst_126 = arith.constant 0.000000e+00 : f32
    %276 = vector.broadcast %cst_126 : f32 to vector<8x128xf32>
    %277 = arith.select %275, %266, %276 : vector<8x128xi1>, vector<8x128xf32>
    %278 = vector.extract_strided_slice %260 {offsets = [0, 0], sizes = [1, 128], strides = [1, 1]} : vector<7x128xf32> to vector<1x128xf32>
    %279 = vector.broadcast %278 : vector<1x128xf32> to vector<8x128xf32>
    %280 = arith.mulf %277, %279 : vector<8x128xf32>
    %281 = arith.addf %265, %280 : vector<8x128xf32>
    %c2_i32 = arith.constant 2 : i32
    %282 = tpu.dynamic_rotate %257 by %c2_i32 dim 0 : vector<8x128xf32>, i32 -> vector<8x128xf32>
    %c-2_i32 = arith.constant -2 : i32
    %283 = vector.broadcast %c-2_i32 : i32 to vector<8x128xi32>
    %284 = arith.addi %258, %283 : vector<8x128xi32>
    %c0_i32_127 = arith.constant 0 : i32
    %285 = vector.broadcast %c0_i32_127 : i32 to vector<8x128xi32>
    %286 = arith.cmpi sge, %284, %285 : vector<8x128xi32>
    %c-2_i32_128 = arith.constant -2 : i32
    %287 = vector.broadcast %c-2_i32_128 : i32 to vector<8x128xi32>
    %288 = arith.addi %258, %287 : vector<8x128xi32>
    %c7_i32_129 = arith.constant 7 : i32
    %289 = vector.broadcast %c7_i32_129 : i32 to vector<8x128xi32>
    %290 = arith.cmpi slt, %288, %289 : vector<8x128xi32>
    %291 = arith.andi %286, %290 : vector<8x128xi1>
    %cst_130 = arith.constant 0.000000e+00 : f32
    %292 = vector.broadcast %cst_130 : f32 to vector<8x128xf32>
    %293 = arith.select %291, %282, %292 : vector<8x128xi1>, vector<8x128xf32>
    %294 = vector.extract_strided_slice %260 {offsets = [1, 0], sizes = [1, 128], strides = [1, 1]} : vector<7x128xf32> to vector<1x128xf32>
    %295 = vector.broadcast %294 : vector<1x128xf32> to vector<8x128xf32>
    %296 = arith.mulf %293, %295 : vector<8x128xf32>
    %297 = arith.addf %281, %296 : vector<8x128xf32>
    %c1_i32 = arith.constant 1 : i32
    %298 = tpu.dynamic_rotate %257 by %c1_i32 dim 0 : vector<8x128xf32>, i32 -> vector<8x128xf32>
    %c-1_i32 = arith.constant -1 : i32
    %299 = vector.broadcast %c-1_i32 : i32 to vector<8x128xi32>
    %300 = arith.addi %258, %299 : vector<8x128xi32>
    %c0_i32_131 = arith.constant 0 : i32
    %301 = vector.broadcast %c0_i32_131 : i32 to vector<8x128xi32>
    %302 = arith.cmpi sge, %300, %301 : vector<8x128xi32>
    %c-1_i32_132 = arith.constant -1 : i32
    %303 = vector.broadcast %c-1_i32_132 : i32 to vector<8x128xi32>
    %304 = arith.addi %258, %303 : vector<8x128xi32>
    %c7_i32_133 = arith.constant 7 : i32
    %305 = vector.broadcast %c7_i32_133 : i32 to vector<8x128xi32>
    %306 = arith.cmpi slt, %304, %305 : vector<8x128xi32>
    %307 = arith.andi %302, %306 : vector<8x128xi1>
    %cst_134 = arith.constant 0.000000e+00 : f32
    %308 = vector.broadcast %cst_134 : f32 to vector<8x128xf32>
    %309 = arith.select %307, %298, %308 : vector<8x128xi1>, vector<8x128xf32>
    %310 = vector.extract_strided_slice %260 {offsets = [2, 0], sizes = [1, 128], strides = [1, 1]} : vector<7x128xf32> to vector<1x128xf32>
    %311 = vector.broadcast %310 : vector<1x128xf32> to vector<8x128xf32>
    %312 = arith.mulf %309, %311 : vector<8x128xf32>
    %313 = arith.addf %297, %312 : vector<8x128xf32>
    %314 = vector.extract_strided_slice %260 {offsets = [3, 0], sizes = [1, 128], strides = [1, 1]} : vector<7x128xf32> to vector<1x128xf32>
    %315 = vector.broadcast %314 : vector<1x128xf32> to vector<8x128xf32>
    %316 = arith.mulf %257, %315 : vector<8x128xf32>
    %317 = arith.addf %313, %316 : vector<8x128xf32>
    %c7_i32_135 = arith.constant 7 : i32
    %318 = tpu.dynamic_rotate %257 by %c7_i32_135 dim 0 : vector<8x128xf32>, i32 -> vector<8x128xf32>
    %c1_i32_136 = arith.constant 1 : i32
    %319 = vector.broadcast %c1_i32_136 : i32 to vector<8x128xi32>
    %320 = arith.addi %258, %319 : vector<8x128xi32>
    %c0_i32_137 = arith.constant 0 : i32
    %321 = vector.broadcast %c0_i32_137 : i32 to vector<8x128xi32>
    %322 = arith.cmpi sge, %320, %321 : vector<8x128xi32>
    %c1_i32_138 = arith.constant 1 : i32
    %323 = vector.broadcast %c1_i32_138 : i32 to vector<8x128xi32>
    %324 = arith.addi %258, %323 : vector<8x128xi32>
    %c7_i32_139 = arith.constant 7 : i32
    %325 = vector.broadcast %c7_i32_139 : i32 to vector<8x128xi32>
    %326 = arith.cmpi slt, %324, %325 : vector<8x128xi32>
    %327 = arith.andi %322, %326 : vector<8x128xi1>
    %cst_140 = arith.constant 0.000000e+00 : f32
    %328 = vector.broadcast %cst_140 : f32 to vector<8x128xf32>
    %329 = arith.select %327, %318, %328 : vector<8x128xi1>, vector<8x128xf32>
    %330 = vector.extract_strided_slice %260 {offsets = [4, 0], sizes = [1, 128], strides = [1, 1]} : vector<7x128xf32> to vector<1x128xf32>
    %331 = vector.broadcast %330 : vector<1x128xf32> to vector<8x128xf32>
    %332 = arith.mulf %329, %331 : vector<8x128xf32>
    %333 = arith.addf %317, %332 : vector<8x128xf32>
    %c6_i32 = arith.constant 6 : i32
    %334 = tpu.dynamic_rotate %257 by %c6_i32 dim 0 : vector<8x128xf32>, i32 -> vector<8x128xf32>
    %c2_i32_141 = arith.constant 2 : i32
    %335 = vector.broadcast %c2_i32_141 : i32 to vector<8x128xi32>
    %336 = arith.addi %258, %335 : vector<8x128xi32>
    %c0_i32_142 = arith.constant 0 : i32
    %337 = vector.broadcast %c0_i32_142 : i32 to vector<8x128xi32>
    %338 = arith.cmpi sge, %336, %337 : vector<8x128xi32>
    %c2_i32_143 = arith.constant 2 : i32
    %339 = vector.broadcast %c2_i32_143 : i32 to vector<8x128xi32>
    %340 = arith.addi %258, %339 : vector<8x128xi32>
    %c7_i32_144 = arith.constant 7 : i32
    %341 = vector.broadcast %c7_i32_144 : i32 to vector<8x128xi32>
    %342 = arith.cmpi slt, %340, %341 : vector<8x128xi32>
    %343 = arith.andi %338, %342 : vector<8x128xi1>
    %cst_145 = arith.constant 0.000000e+00 : f32
    %344 = vector.broadcast %cst_145 : f32 to vector<8x128xf32>
    %345 = arith.select %343, %334, %344 : vector<8x128xi1>, vector<8x128xf32>
    %346 = vector.extract_strided_slice %260 {offsets = [5, 0], sizes = [1, 128], strides = [1, 1]} : vector<7x128xf32> to vector<1x128xf32>
    %347 = vector.broadcast %346 : vector<1x128xf32> to vector<8x128xf32>
    %348 = arith.mulf %345, %347 : vector<8x128xf32>
    %349 = arith.addf %333, %348 : vector<8x128xf32>
    %c5_i32 = arith.constant 5 : i32
    %350 = tpu.dynamic_rotate %257 by %c5_i32 dim 0 : vector<8x128xf32>, i32 -> vector<8x128xf32>
    %c3_i32_146 = arith.constant 3 : i32
    %351 = vector.broadcast %c3_i32_146 : i32 to vector<8x128xi32>
    %352 = arith.addi %258, %351 : vector<8x128xi32>
    %c0_i32_147 = arith.constant 0 : i32
    %353 = vector.broadcast %c0_i32_147 : i32 to vector<8x128xi32>
    %354 = arith.cmpi sge, %352, %353 : vector<8x128xi32>
    %c3_i32_148 = arith.constant 3 : i32
    %355 = vector.broadcast %c3_i32_148 : i32 to vector<8x128xi32>
    %356 = arith.addi %258, %355 : vector<8x128xi32>
    %c7_i32_149 = arith.constant 7 : i32
    %357 = vector.broadcast %c7_i32_149 : i32 to vector<8x128xi32>
    %358 = arith.cmpi slt, %356, %357 : vector<8x128xi32>
    %359 = arith.andi %354, %358 : vector<8x128xi1>
    %cst_150 = arith.constant 0.000000e+00 : f32
    %360 = vector.broadcast %cst_150 : f32 to vector<8x128xf32>
    %361 = arith.select %359, %350, %360 : vector<8x128xi1>, vector<8x128xf32>
    %362 = vector.extract_strided_slice %260 {offsets = [6, 0], sizes = [1, 128], strides = [1, 1]} : vector<7x128xf32> to vector<1x128xf32>
    %363 = vector.broadcast %362 : vector<1x128xf32> to vector<8x128xf32>
    %364 = arith.mulf %361, %363 : vector<8x128xf32>
    %365 = arith.addf %349, %364 : vector<8x128xf32>
    %c0_151 = arith.constant 0 : index
    %c0_152 = arith.constant 0 : index
    %c0_153 = arith.constant 0 : index
    %366 = vector.load %arg29[%c0_151, %c0_152, %c0_153] : memref<1x1x128xf32, #tpu.memory_space<vmem>>, vector<1x1x128xf32>
    %367 = vector.shape_cast %366 : vector<1x1x128xf32> to vector<1x128xf32>
    %368 = vector.broadcast %367 : vector<1x128xf32> to vector<8x128xf32>
    %369 = arith.subf %365, %368 : vector<8x128xf32>
    %c0_154 = arith.constant 0 : index
    %c0_155 = arith.constant 0 : index
    %c0_156 = arith.constant 0 : index
    %370 = vector.load %arg30[%c0_154, %c0_155, %c0_156] : memref<1x1x128xf32, #tpu.memory_space<vmem>>, vector<1x1x128xf32>
    %371 = vector.shape_cast %370 : vector<1x1x128xf32> to vector<1x128xf32>
    %cst_157 = arith.constant 9.99999974E-6 : f32
    %372 = vector.broadcast %cst_157 : f32 to vector<1x128xf32>
    %373 = arith.addf %371, %372 : vector<1x128xf32>
    %374 = math.rsqrt %373 : vector<1x128xf32>
    %375 = vector.broadcast %374 : vector<1x128xf32> to vector<8x128xf32>
    %376 = arith.mulf %369, %375 : vector<8x128xf32>
    %c0_158 = arith.constant 0 : index
    %c0_159 = arith.constant 0 : index
    %c0_160 = arith.constant 0 : index
    %377 = vector.load %arg27[%c0_158, %c0_159, %c0_160] : memref<1x1x128xf32, #tpu.memory_space<vmem>>, vector<1x1x128xf32>
    %378 = vector.shape_cast %377 : vector<1x1x128xf32> to vector<1x128xf32>
    %379 = vector.broadcast %378 : vector<1x128xf32> to vector<8x128xf32>
    %380 = arith.mulf %376, %379 : vector<8x128xf32>
    %c0_161 = arith.constant 0 : index
    %c0_162 = arith.constant 0 : index
    %c0_163 = arith.constant 0 : index
    %381 = vector.load %arg28[%c0_161, %c0_162, %c0_163] : memref<1x1x128xf32, #tpu.memory_space<vmem>>, vector<1x1x128xf32>
    %382 = vector.shape_cast %381 : vector<1x1x128xf32> to vector<1x128xf32>
    %383 = vector.broadcast %382 : vector<1x128xf32> to vector<8x128xf32>
    %384 = arith.addf %380, %383 : vector<8x128xf32>
    %385 = arith.negf %384 : vector<8x128xf32>
    %386 = math.exp %385 : vector<8x128xf32>
    %cst_164 = arith.constant 1.000000e+00 : f32
    %387 = vector.broadcast %cst_164 : f32 to vector<8x128xf32>
    %388 = arith.addf %387, %386 : vector<8x128xf32>
    %389 = arith.divf %387, %388 : vector<8x128xf32>
    %390 = arith.mulf %384, %389 : vector<8x128xf32>
    %391 = arith.truncf %390 : vector<8x128xf32> to vector<8x128xbf16>
    %c0_165 = arith.constant 0 : index
    %c0_166 = arith.constant 0 : index
    %c0_167 = arith.constant 0 : index
    %392 = vector.load %arg31[%c0_165, %c0_166, %c0_167] : memref<1x128x128xbf16, #tpu.memory_space<vmem>>, vector<1x128x128xbf16>
    %393 = vector.shape_cast %392 : vector<1x128x128xbf16> to vector<128x128xbf16>
    %cst_168 = arith.constant dense<0.000000e+00> : vector<8x128xf32>
    %394 = tpu.matmul %391, %393, %cst_168 {dimension_numbers = #tpu.dot_dimension_numbers<[1], [0], [0], [1], [0, 0, 1, 1], [], []>} : vector<8x128xbf16>, vector<128x128xbf16>, vector<8x128xf32> -> vector<8x128xf32>
    %c0_169 = arith.constant 0 : index
    %c0_170 = arith.constant 0 : index
    %c0_171 = arith.constant 0 : index
    %395 = vector.load %arg32[%c0_169, %c0_170, %c0_171] : memref<1x1x128xf32, #tpu.memory_space<vmem>>, vector<1x1x128xf32>
    %396 = vector.shape_cast %395 : vector<1x1x128xf32> to vector<1x128xf32>
    %397 = vector.broadcast %396 : vector<1x128xf32> to vector<8x128xf32>
    %398 = arith.addf %394, %397 : vector<8x128xf32>
    %399 = arith.addf %209, %398 : vector<8x128xf32>
    %cst_172 = arith.constant dense<0.000000e+00> : vector<8xf32>
    %400 = vector.multi_reduction <add>, %399, %cst_172 [1] : vector<8x128xf32> to vector<8xf32>
    %401 = vector.shape_cast %400 : vector<8xf32> to vector<8x1xf32>
    %cst_173 = arith.constant 3.125000e-02 : f32
    %402 = vector.broadcast %cst_173 : f32 to vector<8x1xf32>
    %403 = arith.mulf %401, %402 : vector<8x1xf32>
    %404 = arith.mulf %399, %399 : vector<8x128xf32>
    %cst_174 = arith.constant dense<0.000000e+00> : vector<8xf32>
    %405 = vector.multi_reduction <add>, %404, %cst_174 [1] : vector<8x128xf32> to vector<8xf32>
    %406 = vector.shape_cast %405 : vector<8xf32> to vector<8x1xf32>
    %cst_175 = arith.constant 3.125000e-02 : f32
    %407 = vector.broadcast %cst_175 : f32 to vector<8x1xf32>
    %408 = arith.mulf %406, %407 : vector<8x1xf32>
    %409 = arith.mulf %403, %403 : vector<8x1xf32>
    %410 = arith.subf %408, %409 : vector<8x1xf32>
    %411 = vector.broadcast %403 : vector<8x1xf32> to vector<8x128xf32>
    %412 = arith.subf %399, %411 : vector<8x128xf32>
    %cst_176 = arith.constant 9.99999974E-6 : f32
    %413 = vector.broadcast %cst_176 : f32 to vector<8x1xf32>
    %414 = arith.addf %410, %413 : vector<8x1xf32>
    %415 = math.rsqrt %414 : vector<8x1xf32>
    %416 = vector.broadcast %415 : vector<8x1xf32> to vector<8x128xf32>
    %417 = arith.mulf %412, %416 : vector<8x128xf32>
    %c0_177 = arith.constant 0 : index
    %c0_178 = arith.constant 0 : index
    %c0_179 = arith.constant 0 : index
    %418 = vector.load %arg33[%c0_177, %c0_178, %c0_179] : memref<1x1x128xf32, #tpu.memory_space<vmem>>, vector<1x1x128xf32>
    %419 = vector.shape_cast %418 : vector<1x1x128xf32> to vector<1x128xf32>
    %420 = vector.broadcast %419 : vector<1x128xf32> to vector<8x128xf32>
    %421 = arith.mulf %417, %420 : vector<8x128xf32>
    %c0_180 = arith.constant 0 : index
    %c0_181 = arith.constant 0 : index
    %c0_182 = arith.constant 0 : index
    %422 = vector.load %arg34[%c0_180, %c0_181, %c0_182] : memref<1x1x128xf32, #tpu.memory_space<vmem>>, vector<1x1x128xf32>
    %423 = vector.shape_cast %422 : vector<1x1x128xf32> to vector<1x128xf32>
    %424 = vector.broadcast %423 : vector<1x128xf32> to vector<8x128xf32>
    %425 = arith.addf %421, %424 : vector<8x128xf32>
    %426 = arith.truncf %425 : vector<8x128xf32> to vector<8x128xbf16>
    %c0_183 = arith.constant 0 : index
    %c0_184 = arith.constant 0 : index
    %c0_185 = arith.constant 0 : index
    %427 = vector.load %arg35[%c0_183, %c0_184, %c0_185] : memref<1x128x128xbf16, #tpu.memory_space<vmem>>, vector<1x128x128xbf16>
    %428 = vector.shape_cast %427 : vector<1x128x128xbf16> to vector<128x128xbf16>
    %cst_186 = arith.constant dense<0.000000e+00> : vector<8x128xf32>
    %429 = tpu.matmul %426, %428, %cst_186 {dimension_numbers = #tpu.dot_dimension_numbers<[1], [0], [0], [1], [0, 0, 1, 1], [], []>} : vector<8x128xbf16>, vector<128x128xbf16>, vector<8x128xf32> -> vector<8x128xf32>
    %c0_187 = arith.constant 0 : index
    %c0_188 = arith.constant 0 : index
    %c0_189 = arith.constant 0 : index
    %430 = vector.load %arg36[%c0_187, %c0_188, %c0_189] : memref<1x1x128xf32, #tpu.memory_space<vmem>>, vector<1x1x128xf32>
    %431 = vector.shape_cast %430 : vector<1x1x128xf32> to vector<1x128xf32>
    %432 = vector.broadcast %431 : vector<1x128xf32> to vector<8x128xf32>
    %433 = arith.addf %429, %432 : vector<8x128xf32>
    %434 = arith.negf %433 : vector<8x128xf32>
    %435 = math.exp %434 : vector<8x128xf32>
    %cst_190 = arith.constant 1.000000e+00 : f32
    %436 = vector.broadcast %cst_190 : f32 to vector<8x128xf32>
    %437 = arith.addf %436, %435 : vector<8x128xf32>
    %438 = arith.divf %436, %437 : vector<8x128xf32>
    %439 = arith.mulf %433, %438 : vector<8x128xf32>
    %440 = arith.truncf %439 : vector<8x128xf32> to vector<8x128xbf16>
    %c0_191 = arith.constant 0 : index
    %c0_192 = arith.constant 0 : index
    %c0_193 = arith.constant 0 : index
    %441 = vector.load %arg37[%c0_191, %c0_192, %c0_193] : memref<1x128x128xbf16, #tpu.memory_space<vmem>>, vector<1x128x128xbf16>
    %442 = vector.shape_cast %441 : vector<1x128x128xbf16> to vector<128x128xbf16>
    %cst_194 = arith.constant dense<0.000000e+00> : vector<8x128xf32>
    %443 = tpu.matmul %440, %442, %cst_194 {dimension_numbers = #tpu.dot_dimension_numbers<[1], [0], [0], [1], [0, 0, 1, 1], [], []>} : vector<8x128xbf16>, vector<128x128xbf16>, vector<8x128xf32> -> vector<8x128xf32>
    %c0_195 = arith.constant 0 : index
    %c0_196 = arith.constant 0 : index
    %c0_197 = arith.constant 0 : index
    %444 = vector.load %arg38[%c0_195, %c0_196, %c0_197] : memref<1x1x128xf32, #tpu.memory_space<vmem>>, vector<1x1x128xf32>
    %445 = vector.shape_cast %444 : vector<1x1x128xf32> to vector<1x128xf32>
    %446 = vector.broadcast %445 : vector<1x128xf32> to vector<8x128xf32>
    %447 = arith.addf %443, %446 : vector<8x128xf32>
    %cst_198 = arith.constant 5.000000e-01 : f32
    %448 = vector.broadcast %cst_198 : f32 to vector<8x128xf32>
    %449 = arith.mulf %448, %447 : vector<8x128xf32>
    %450 = arith.addf %399, %449 : vector<8x128xf32>
    %cst_199 = arith.constant dense<0.000000e+00> : vector<8xf32>
    %451 = vector.multi_reduction <add>, %450, %cst_199 [1] : vector<8x128xf32> to vector<8xf32>
    %452 = vector.shape_cast %451 : vector<8xf32> to vector<8x1xf32>
    %cst_200 = arith.constant 3.125000e-02 : f32
    %453 = vector.broadcast %cst_200 : f32 to vector<8x1xf32>
    %454 = arith.mulf %452, %453 : vector<8x1xf32>
    %455 = arith.mulf %450, %450 : vector<8x128xf32>
    %cst_201 = arith.constant dense<0.000000e+00> : vector<8xf32>
    %456 = vector.multi_reduction <add>, %455, %cst_201 [1] : vector<8x128xf32> to vector<8xf32>
    %457 = vector.shape_cast %456 : vector<8xf32> to vector<8x1xf32>
    %cst_202 = arith.constant 3.125000e-02 : f32
    %458 = vector.broadcast %cst_202 : f32 to vector<8x1xf32>
    %459 = arith.mulf %457, %458 : vector<8x1xf32>
    %460 = arith.mulf %454, %454 : vector<8x1xf32>
    %461 = arith.subf %459, %460 : vector<8x1xf32>
    %462 = vector.broadcast %454 : vector<8x1xf32> to vector<8x128xf32>
    %463 = arith.subf %450, %462 : vector<8x128xf32>
    %cst_203 = arith.constant 9.99999974E-6 : f32
    %464 = vector.broadcast %cst_203 : f32 to vector<8x1xf32>
    %465 = arith.addf %461, %464 : vector<8x1xf32>
    %466 = math.rsqrt %465 : vector<8x1xf32>
    %467 = vector.broadcast %466 : vector<8x1xf32> to vector<8x128xf32>
    %468 = arith.mulf %463, %467 : vector<8x128xf32>
    %c0_204 = arith.constant 0 : index
    %c0_205 = arith.constant 0 : index
    %c0_206 = arith.constant 0 : index
    %469 = vector.load %arg39[%c0_204, %c0_205, %c0_206] : memref<1x1x128xf32, #tpu.memory_space<vmem>>, vector<1x1x128xf32>
    %470 = vector.shape_cast %469 : vector<1x1x128xf32> to vector<1x128xf32>
    %471 = vector.broadcast %470 : vector<1x128xf32> to vector<8x128xf32>
    %472 = arith.mulf %468, %471 : vector<8x128xf32>
    %c0_207 = arith.constant 0 : index
    %c0_208 = arith.constant 0 : index
    %c0_209 = arith.constant 0 : index
    %473 = vector.load %arg40[%c0_207, %c0_208, %c0_209] : memref<1x1x128xf32, #tpu.memory_space<vmem>>, vector<1x1x128xf32>
    %474 = vector.shape_cast %473 : vector<1x1x128xf32> to vector<1x128xf32>
    %475 = vector.broadcast %474 : vector<1x128xf32> to vector<8x128xf32>
    %476 = arith.addf %472, %475 : vector<8x128xf32>
    %c0_210 = arith.constant 0 : index
    %c0_211 = arith.constant 0 : index
    %c0_212 = arith.constant 0 : index
    %477 = vector.load %arg41[%c0_210, %c0_211, %c0_212] : memref<1x8x128xf32, #tpu.memory_space<vmem>>, vector<1x8x128xf32>
    %478 = vector.shape_cast %477 : vector<1x8x128xf32> to vector<8x128xf32>
    %479 = vector.shape_cast %476 : vector<8x128xf32> to vector<1x8x128xf32>
    tpu.vector_store %arg41[%c0_210, %c0_211, %c0_212], %479 {strides = array<i32>} : memref<1x8x128xf32, #tpu.memory_space<vmem>>, vector<1x8x128xf32>,
    return
  }
  func.func @transform_0(%arg0: i32, %arg1: i32) -> (i32, i32, i32) {
    %c0_i32 = arith.constant 0 : i32
    %c0_i32_0 = arith.constant 0 : i32
    %c0_i32_1 = arith.constant 0 : i32
    return %arg0, %c0_i32, %c0_i32_0 : i32, i32, i32
  }
  func.func @transform_1(%arg0: i32, %arg1: i32) -> (i32, i32, i32) {
    %c0_i32 = arith.constant 0 : i32
    %c0_i32_0 = arith.constant 0 : i32
    %c0_i32_1 = arith.constant 0 : i32
    return %arg1, %c0_i32, %c0_i32_0 : i32, i32, i32
  }
  func.func @transform_2(%arg0: i32, %arg1: i32) -> (i32, i32, i32) {
    %c0_i32 = arith.constant 0 : i32
    %c0_i32_0 = arith.constant 0 : i32
    %c0_i32_1 = arith.constant 0 : i32
    return %arg1, %c0_i32, %c0_i32_0 : i32, i32, i32
  }
  func.func @transform_3(%arg0: i32, %arg1: i32) -> (i32, i32, i32) {
    %c0_i32 = arith.constant 0 : i32
    %c0_i32_0 = arith.constant 0 : i32
    %c0_i32_1 = arith.constant 0 : i32
    return %arg1, %c0_i32, %c0_i32_0 : i32, i32, i32
  }
  func.func @transform_4(%arg0: i32, %arg1: i32) -> (i32, i32, i32) {
    %c0_i32 = arith.constant 0 : i32
    %c0_i32_0 = arith.constant 0 : i32
    %c0_i32_1 = arith.constant 0 : i32
    return %arg1, %c0_i32, %c0_i32_0 : i32, i32, i32
  }
  func.func @transform_5(%arg0: i32, %arg1: i32) -> (i32, i32, i32) {
    %c0_i32 = arith.constant 0 : i32
    %c0_i32_0 = arith.constant 0 : i32
    %c0_i32_1 = arith.constant 0 : i32
    return %arg1, %c0_i32, %c0_i32_0 : i32, i32, i32
  }
  func.func @transform_6(%arg0: i32, %arg1: i32) -> (i32, i32, i32) {
    %c0_i32 = arith.constant 0 : i32
    %c0_i32_0 = arith.constant 0 : i32
    %c0_i32_1 = arith.constant 0 : i32
    return %arg1, %c0_i32, %c0_i32_0 : i32, i32, i32
  }
  func.func @transform_7(%arg0: i32, %arg1: i32) -> (i32, i32, i32) {
    %c0_i32 = arith.constant 0 : i32
    %c0_i32_0 = arith.constant 0 : i32
    %c0_i32_1 = arith.constant 0 : i32
    return %arg1, %c0_i32, %c0_i32_0 : i32, i32, i32
  }
  func.func @transform_8(%arg0: i32, %arg1: i32) -> (i32, i32, i32) {
    %c0_i32 = arith.constant 0 : i32
    %c0_i32_0 = arith.constant 0 : i32
    %c0_i32_1 = arith.constant 0 : i32
    return %arg1, %c0_i32, %c0_i32_0 : i32, i32, i32
  }
  func.func @transform_9(%arg0: i32, %arg1: i32) -> (i32, i32, i32) {
    %c0_i32 = arith.constant 0 : i32
    %c0_i32_0 = arith.constant 0 : i32
    %c0_i32_1 = arith.constant 0 : i32
    return %arg1, %c0_i32, %c0_i32_0 : i32, i32, i32
  }
  func.func @transform_10(%arg0: i32, %arg1: i32) -> (i32, i32, i32) {
    %c0_i32 = arith.constant 0 : i32
    %c0_i32_0 = arith.constant 0 : i32
    %c0_i32_1 = arith.constant 0 : i32
    return %arg1, %c0_i32, %c0_i32_0 : i32, i32, i32
  }
  func.func @transform_11(%arg0: i32, %arg1: i32) -> (i32, i32, i32) {
    %c0_i32 = arith.constant 0 : i32
    %c0_i32_0 = arith.constant 0 : i32
    %c0_i32_1 = arith.constant 0 : i32
    return %arg1, %c0_i32, %c0_i32_0 : i32, i32, i32
  }
  func.func @transform_12(%arg0: i32, %arg1: i32) -> (i32, i32, i32) {
    %c0_i32 = arith.constant 0 : i32
    %c0_i32_0 = arith.constant 0 : i32
    %c0_i32_1 = arith.constant 0 : i32
    return %arg1, %c0_i32, %c0_i32_0 : i32, i32, i32
  }
  func.func @transform_13(%arg0: i32, %arg1: i32) -> (i32, i32, i32) {
    %c0_i32 = arith.constant 0 : i32
    %c0_i32_0 = arith.constant 0 : i32
    %c0_i32_1 = arith.constant 0 : i32
    return %arg1, %c0_i32, %c0_i32_0 : i32, i32, i32
  }
  func.func @transform_14(%arg0: i32, %arg1: i32) -> (i32, i32, i32) {
    %c0_i32 = arith.constant 0 : i32
    %c0_i32_0 = arith.constant 0 : i32
    %c0_i32_1 = arith.constant 0 : i32
    return %arg1, %c0_i32, %c0_i32_0 : i32, i32, i32
  }
  func.func @transform_15(%arg0: i32, %arg1: i32) -> (i32, i32, i32) {
    %c0_i32 = arith.constant 0 : i32
    %c0_i32_0 = arith.constant 0 : i32
    %c0_i32_1 = arith.constant 0 : i32
    return %arg1, %c0_i32, %c0_i32_0 : i32, i32, i32
  }
  func.func @transform_16(%arg0: i32, %arg1: i32) -> (i32, i32, i32) {
    %c0_i32 = arith.constant 0 : i32
    %c0_i32_0 = arith.constant 0 : i32
    %c0_i32_1 = arith.constant 0 : i32
    return %arg1, %c0_i32, %c0_i32_0 : i32, i32, i32
  }
  func.func @transform_17(%arg0: i32, %arg1: i32) -> (i32, i32, i32) {
    %c0_i32 = arith.constant 0 : i32
    %c0_i32_0 = arith.constant 0 : i32
    %c0_i32_1 = arith.constant 0 : i32
    return %arg1, %c0_i32, %c0_i32_0 : i32, i32, i32
  }
  func.func @transform_18(%arg0: i32, %arg1: i32) -> (i32, i32, i32) {
    %c0_i32 = arith.constant 0 : i32
    %c0_i32_0 = arith.constant 0 : i32
    %c0_i32_1 = arith.constant 0 : i32
    return %arg1, %c0_i32, %c0_i32_0 : i32, i32, i32
  }
  func.func @transform_19(%arg0: i32, %arg1: i32) -> (i32, i32, i32) {
    %c0_i32 = arith.constant 0 : i32
    %c0_i32_0 = arith.constant 0 : i32
    %c0_i32_1 = arith.constant 0 : i32
    return %arg1, %c0_i32, %c0_i32_0 : i32, i32, i32
  }
  func.func @transform_20(%arg0: i32, %arg1: i32) -> (i32, i32, i32) {
    %c0_i32 = arith.constant 0 : i32
    %c0_i32_0 = arith.constant 0 : i32
    %c0_i32_1 = arith.constant 0 : i32
    return %arg1, %c0_i32, %c0_i32_0 : i32, i32, i32
  }
  func.func @transform_21(%arg0: i32, %arg1: i32) -> (i32, i32, i32) {
    %c0_i32 = arith.constant 0 : i32
    %c0_i32_0 = arith.constant 0 : i32
    %c0_i32_1 = arith.constant 0 : i32
    return %arg1, %c0_i32, %c0_i32_0 : i32, i32, i32
  }
  func.func @transform_22(%arg0: i32, %arg1: i32) -> (i32, i32, i32) {
    %c0_i32 = arith.constant 0 : i32
    %c0_i32_0 = arith.constant 0 : i32
    %c0_i32_1 = arith.constant 0 : i32
    return %arg1, %c0_i32, %c0_i32_0 : i32, i32, i32
  }
  func.func @transform_23(%arg0: i32, %arg1: i32) -> (i32, i32, i32) {
    %c0_i32 = arith.constant 0 : i32
    %c0_i32_0 = arith.constant 0 : i32
    %c0_i32_1 = arith.constant 0 : i32
    return %arg1, %c0_i32, %c0_i32_0 : i32, i32, i32
  }
  func.func @transform_24(%arg0: i32, %arg1: i32) -> (i32, i32, i32) {
    %c0_i32 = arith.constant 0 : i32
    %c0_i32_0 = arith.constant 0 : i32
    %c0_i32_1 = arith.constant 0 : i32
    return %arg1, %c0_i32, %c0_i32_0 : i32, i32, i32
  }
  func.func @transform_25(%arg0: i32, %arg1: i32) -> (i32, i32, i32) {
    %c0_i32 = arith.constant 0 : i32
    %c0_i32_0 = arith.constant 0 : i32
    %c0_i32_1 = arith.constant 0 : i32
    return %arg1, %c0_i32, %c0_i32_0 : i32, i32, i32
  }
  func.func @transform_26(%arg0: i32, %arg1: i32) -> (i32, i32, i32) {
    %c0_i32 = arith.constant 0 : i32
    %c0_i32_0 = arith.constant 0 : i32
    %c0_i32_1 = arith.constant 0 : i32
    return %arg1, %c0_i32, %c0_i32_0 : i32, i32, i32
  }
  func.func @transform_27(%arg0: i32, %arg1: i32) -> (i32, i32, i32) {
    %c0_i32 = arith.constant 0 : i32
    %c0_i32_0 = arith.constant 0 : i32
    %c0_i32_1 = arith.constant 0 : i32
    return %arg1, %c0_i32, %c0_i32_0 : i32, i32, i32
  }
  func.func @transform_28(%arg0: i32, %arg1: i32) -> (i32, i32, i32) {
    %c0_i32 = arith.constant 0 : i32
    %c0_i32_0 = arith.constant 0 : i32
    %c0_i32_1 = arith.constant 0 : i32
    return %arg1, %c0_i32, %c0_i32_0 : i32, i32, i32
  }
  func.func @transform_29(%arg0: i32, %arg1: i32) -> (i32, i32, i32) {
    %c0_i32 = arith.constant 0 : i32
    %c0_i32_0 = arith.constant 0 : i32
    %c0_i32_1 = arith.constant 0 : i32
    return %arg1, %c0_i32, %c0_i32_0 : i32, i32, i32
  }
  func.func @transform_30(%arg0: i32, %arg1: i32) -> (i32, i32, i32) {
    %c0_i32 = arith.constant 0 : i32
    %c0_i32_0 = arith.constant 0 : i32
    %c0_i32_1 = arith.constant 0 : i32
    return %arg1, %c0_i32, %c0_i32_0 : i32, i32, i32
  }
  func.func @transform_31(%arg0: i32, %arg1: i32) -> (i32, i32, i32) {
    %c0_i32 = arith.constant 0 : i32
    %c0_i32_0 = arith.constant 0 : i32
    %c0_i32_1 = arith.constant 0 : i32
    return %arg1, %c0_i32, %c0_i32_0 : i32, i32, i32
  }
  func.func @transform_32(%arg0: i32, %arg1: i32) -> (i32, i32, i32) {
    %c0_i32 = arith.constant 0 : i32
    %c0_i32_0 = arith.constant 0 : i32
    %c0_i32_1 = arith.constant 0 : i32
    return %arg1, %c0_i32, %c0_i32_0 : i32, i32, i32
  }
  func.func @transform_33(%arg0: i32, %arg1: i32) -> (i32, i32, i32) {
    %c0_i32 = arith.constant 0 : i32
    %c0_i32_0 = arith.constant 0 : i32
    %c0_i32_1 = arith.constant 0 : i32
    return %arg1, %c0_i32, %c0_i32_0 : i32, i32, i32
  }
  func.func @transform_34(%arg0: i32, %arg1: i32) -> (i32, i32, i32) {
    %c0_i32 = arith.constant 0 : i32
    %c0_i32_0 = arith.constant 0 : i32
    %c0_i32_1 = arith.constant 0 : i32
    return %arg1, %c0_i32, %c0_i32_0 : i32, i32, i32
  }
  func.func @transform_35(%arg0: i32, %arg1: i32) -> (i32, i32, i32) {
    %c0_i32 = arith.constant 0 : i32
    %c0_i32_0 = arith.constant 0 : i32
    %c0_i32_1 = arith.constant 0 : i32
    return %arg1, %c0_i32, %c0_i32_0 : i32, i32, i32
  }
  func.func @transform_36(%arg0: i32, %arg1: i32) -> (i32, i32, i32) {
    %c0_i32 = arith.constant 0 : i32
    %c0_i32_0 = arith.constant 0 : i32
    %c0_i32_1 = arith.constant 0 : i32
    return %arg1, %c0_i32, %c0_i32_0 : i32, i32, i32
  }
  func.func @transform_37(%arg0: i32, %arg1: i32) -> (i32, i32, i32) {
    %c0_i32 = arith.constant 0 : i32
    %c0_i32_0 = arith.constant 0 : i32
    %c0_i32_1 = arith.constant 0 : i32
    return %arg1, %c0_i32, %c0_i32_0 : i32, i32, i32
  }
  func.func @transform_38(%arg0: i32, %arg1: i32) -> (i32, i32, i32) {
    %c0_i32 = arith.constant 0 : i32
    %c0_i32_0 = arith.constant 0 : i32
    %c0_i32_1 = arith.constant 0 : i32
    return %arg1, %c0_i32, %c0_i32_0 : i32, i32, i32
  }
  func.func @transform_39(%arg0: i32, %arg1: i32) -> (i32, i32, i32) {
    %c0_i32 = arith.constant 0 : i32
    %c0_i32_0 = arith.constant 0 : i32
    %c0_i32_1 = arith.constant 0 : i32
    return %arg0, %c0_i32, %c0_i32_0 : i32, i32, i32
  }
}

</mosaic_0001>

<llo_original>
// kernel: _lambda_.5
$region0: #{_lambda_.5}
  #allocation0 [shape = 'u32[]', space=smem, size = 0x4, offset = 0x4, fixed_abs, tag = 'smem constant byte address 0x4 - core index']
  #allocation1 [shape = 'u32[72,128]{1,0:T(1,128)}', space=vmem, size = 0x9000, scoped, tag = 'internal scratch']
  %s0 = inlined_call_operand.vmem [shape: f32[210,9], index: 0, kind: input, shape index: {}]
  %s1 = inlined_call_operand.vmem [shape: bf16[9,128], index: 1, kind: input, shape index: {}]
  %s2 = inlined_call_operand.vmem [shape: f32[1,128], index: 2, kind: input, shape index: {}]
  %s3 = inlined_call_operand.vmem [shape: f32[210,128], index: 3, kind: output, shape index: {}]
  %s4 = sld [smem:[#allocation0]]
  $region22: #{_lambda_.5} parent=0
    _
  %s6 = ssub.s32 1, %s4
  %s7 = scalar_select 0, %s6, %s4
  // Predicated region
  $region2: #{_lambda_.5} parent=0 // pred_check
    _
  $region3: #{_lambda_.5} parent=0 // pred_check_branch
    %9 = sbr.rel (0) target = $region5
  $region4: #{_lambda_.5} parent=0 // pred_region
    _
  $region5: #{_lambda_.5} parent=0 // pred_fallthru
    _
  // Predicated region
  $region6: #{_lambda_.5} parent=0 // pred_check
    _
  $region7: #{_lambda_.5} parent=0 // pred_check_branch
    %11 = sbr.rel (0) target = $region9
  $region8: #{_lambda_.5} parent=0 // pred_region
    _
  $region9: #{_lambda_.5} parent=0 // pred_fallthru
    _
  // Predicated region
  $region10: #{_lambda_.5} parent=0 // pred_check
    _
  $region11: #{_lambda_.5} parent=0 // pred_check_branch
    %13 = sbr.rel (0) target = $region13
  $region12: #{_lambda_.5} parent=0 // pred_region
    _
  $region13: #{_lambda_.5} parent=0 // pred_fallthru
    _
  %v15 = vld [vmem:[%s0] sm:$0xff]
  %v16 = vld [vmem:[%s0 + $0x8] sm:$0xff]
  %v17 = vld [vmem:[%s0 + $0x10] sm:$0xff]
  %v18 = vld [vmem:[%s0 + $0x18] sm:$0xff]
  %v19 = vld [vmem:[%s0 + $0x20] sm:$0xff]
  %v20 = vld [vmem:[%s0 + $0x28] sm:$0xff]
  %v21 = vld [vmem:[%s0 + $0x30] sm:$0xff]
  %v22 = vld [vmem:[%s0 + $0x38] sm:$0xff]
  %v23 = vld [vmem:[%s0 + $0x40] sm:$0xff]
  %v24 = vld [vmem:[%s0 + $0x48] sm:$0xff]
  %v25 = vld [vmem:[%s0 + $0x50] sm:$0xff]
  %v26 = vld [vmem:[%s0 + $0x58] sm:$0xff]
  %v27 = vld [vmem:[%s0 + $0x60] sm:$0xff]
  %v28 = vld [vmem:[%s0 + $0x68] sm:$0xff]
  %v29 = vld [vmem:[%s0 + $0x70] sm:$0xff]
  %v30 = vld [vmem:[%s0 + $0x78] sm:$0xff]
  %v31 = vld [vmem:[%s0 + $0x80] sm:$0xff]
  %v32 = vld [vmem:[%s0 + $0x88] sm:$0xff]
  %v33 = vld [vmem:[%s0 + $0x90] sm:$0xff]
  %v34 = vld [vmem:[%s0 + $0x98] sm:$0xff]
  %v35 = vld [vmem:[%s0 + $0xa0] sm:$0xff]
  %v36 = vld [vmem:[%s0 + $0xa8] sm:$0xff]
  %v37 = vld [vmem:[%s0 + $0xb0] sm:$0xff]
  %v38 = vld [vmem:[%s0 + $0xb8] sm:$0xff]
  %v39 = vld [vmem:[%s0 + $0xc0] sm:$0xff]
  %v40 = vld [vmem:[%s0 + $0xc8] sm:$0xff]
  %v41 = vld [vmem:[%s0 + $0xd0] sm:$0x3]
  %v42 = vpack.c.bf16 %v16, %v15
  %v43 = vpack.c.bf16 %v18, %v17
  %v44 = vpack.c.bf16 %v20, %v19
  %v45 = vpack.c.bf16 %v22, %v21
  %v46 = vpack.c.bf16 %v24, %v23
  %v47 = vpack.c.bf16 %v26, %v25
  %v48 = vpack.c.bf16 %v28, %v27
  %v49 = vpack.c.bf16 %v30, %v29
  %v50 = vpack.c.bf16 %v32, %v31
  %v51 = vpack.c.bf16 %v34, %v33
  %v52 = vpack.c.bf16 %v36, %v35
  %v53 = vpack.c.bf16 %v38, %v37
  %v54 = vpack.c.bf16 %v40, %v39
  %v55 = vpack.c.bf16 %v41, %v41
  %v56 = vld [vmem:[%s1] sm:$0xf]
  %v57 = vld [vmem:[%s1 + $0x4] sm:$0x1]
  %v58 = vld [vmem:[%s2] sm:$0x1]
  %v60 = vperm.slane %v58, 0
  %v64 = vunpack.c.l.b16 %v56
  %v65 = vunpack.c.l.b16 %v57
  %v66 = vpack.c.b16 %v65, %v64
  %vm67 = vcmask 72704
  %v69 = vsel %vm67, %v42, 0
  %v72 = vsel %vm67, %v43, 0
  %v75 = vsel %vm67, %v44, 0
  %v78 = vsel %vm67, %v45, 0
  %v81 = vsel %vm67, %v46, 0
  %v84 = vsel %vm67, %v47, 0
  %v87 = vsel %vm67, %v48, 0
  %v90 = vsel %vm67, %v49, 0
  %v93 = vsel %vm67, %v50, 0
  %v96 = vsel %vm67, %v51, 0
  %v99 = vsel %vm67, %v52, 0
  %v102 = vsel %vm67, %v53, 0
  %v105 = vsel %vm67, %v54, 0
  %v108 = vsel %vm67, %v55, 0
  %vm110 = vcmask 1043456
  %vm111 = vcmask 1044480
  %v112 = vsel %vm110, 4294967295, 65535
  %v113 = vsel %vm111, %v112, 0
  %v115 = vand.u32 %v66, %v113
  %117 = vmatpush.bf16.msra.mxu0 0
  %118 = vmatpush.bf16.msra.mxu0 0
  %119 = vmatpush.bf16.msra.mxu0 0
  %120 = vmatpush.bf16.msra.mxu0 0
  %121 = vmatpush.bf16.msra.mxu0 0
  %122 = vmatpush.bf16.msra.mxu0 0
  %123 = vmatpush.bf16.msra.mxu0 0
  %124 = vmatpush.bf16.msra.mxu0 %v115
  %125 = vmatmul.bf16.gmra.mxu0 %v69
  %v126 = vpop.f32.mrf.mxu0
  %v127 = vadd.f32 %v60, %v126
  %v128 = vpop.f32.mrf.mxu0
  %v129 = vadd.f32 %v60, %v128
  %130 = vmatmul.bf16.gmra.mxu0 %v72
  %v131 = vpop.f32.mrf.mxu0
  %v132 = vadd.f32 %v60, %v131
  %v133 = vpop.f32.mrf.mxu0
  %v134 = vadd.f32 %v60, %v133
  %135 = vmatmul.bf16.gmra.mxu0 %v75
  %v136 = vpop.f32.mrf.mxu0
  %v137 = vadd.f32 %v60, %v136
  %v138 = vpop.f32.mrf.mxu0
  %v139 = vadd.f32 %v60, %v138
  %140 = vmatmul.bf16.gmra.mxu0 %v78
  %v141 = vpop.f32.mrf.mxu0
  %v142 = vadd.f32 %v60, %v141
  %v143 = vpop.f32.mrf.mxu0
  %v144 = vadd.f32 %v60, %v143
  %145 = vmatmul.bf16.gmra.mxu0 %v81
  %v146 = vpop.f32.mrf.mxu0
  %v147 = vadd.f32 %v60, %v146
  %v148 = vpop.f32.mrf.mxu0
  %v149 = vadd.f32 %v60, %v148
  %150 = vmatmul.bf16.gmra.mxu0 %v84
  %v151 = vpop.f32.mrf.mxu0
  %v152 = vadd.f32 %v60, %v151
  %v153 = vpop.f32.mrf.mxu0
  %v154 = vadd.f32 %v60, %v153
  %155 = vmatmul.bf16.gmra.mxu0 %v87
  %v156 = vpop.f32.mrf.mxu0
  %v157 = vadd.f32 %v60, %v156
  %v158 = vpop.f32.mrf.mxu0
  %v159 = vadd.f32 %v60, %v158
  %160 = vmatmul.bf16.gmra.mxu0 %v90
  %v161 = vpop.f32.mrf.mxu0
  %v162 = vadd.f32 %v60, %v161
  %v163 = vpop.f32.mrf.mxu0
  %v164 = vadd.f32 %v60, %v163
  %165 = vmatmul.bf16.gmra.mxu0 %v93
  %v166 = vpop.f32.mrf.mxu0
  %v167 = vadd.f32 %v60, %v166
  %v168 = vpop.f32.mrf.mxu0
  %v169 = vadd.f32 %v60, %v168
  %170 = vmatmul.bf16.gmra.mxu0 %v96
  %v171 = vpop.f32.mrf.mxu0
  %v172 = vadd.f32 %v60, %v171
  %v173 = vpop.f32.mrf.mxu0
  %v174 = vadd.f32 %v60, %v173
  %175 = vmatmul.bf16.gmra.mxu0 %v99
  %v176 = vpop.f32.mrf.mxu0
  %v177 = vadd.f32 %v60, %v176
  %v178 = vpop.f32.mrf.mxu0
  %v179 = vadd.f32 %v60, %v178
  %180 = vmatmul.bf16.gmra.mxu0 %v102
  %v181 = vpop.f32.mrf.mxu0
  %v182 = vadd.f32 %v60, %v181
  %v183 = vpop.f32.mrf.mxu0
  %v184 = vadd.f32 %v60, %v183
  %185 = vmatmul.bf16.gmra.mxu0 %v105
  %v186 = vpop.f32.mrf.mxu0
  %v187 = vadd.f32 %v60, %v186
  %v188 = vpop.f32.mrf.mxu0
  %v189 = vadd.f32 %v60, %v188
  %190 = vmatmul.bf16.gmra.mxu0 %v108
  %v191 = vpop.f32.mrf.mxu0
  %v192 = vadd.f32 %v60, %v191
  %v193 = vpop.f32.mrf.mxu0
  %194 = vdwg.mxu0
  %v195 = vmax.f32 %v127, 0.0
  %v196 = vmax.f32 %v129, 0.0
  %v197 = vmax.f32 %v132, 0.0
  %v198 = vmax.f32 %v134, 0.0
  %v199 = vmax.f32 %v137, 0.0
  %v200 = vmax.f32 %v139, 0.0
  %v201 = vmax.f32 %v142, 0.0
  %v202 = vmax.f32 %v144, 0.0
  %v203 = vmax.f32 %v147, 0.0
  %v204 = vmax.f32 %v149, 0.0
  %v205 = vmax.f32 %v152, 0.0
  %v206 = vmax.f32 %v154, 0.0
  %v207 = vmax.f32 %v157, 0.0
  %v208 = vmax.f32 %v159, 0.0
  %v209 = vmax.f32 %v162, 0.0
  %v210 = vmax.f32 %v164, 0.0
  %v211 = vmax.f32 %v167, 0.0
  %v212 = vmax.f32 %v169, 0.0
  %v213 = vmax.f32 %v172, 0.0
  %v214 = vmax.f32 %v174, 0.0
  %v215 = vmax.f32 %v177, 0.0
  %v216 = vmax.f32 %v179, 0.0
  %v217 = vmax.f32 %v182, 0.0
  %v218 = vmax.f32 %v184, 0.0
  %v219 = vmax.f32 %v187, 0.0
  %v220 = vmax.f32 %v189, 0.0
  %v221 = vmax.f32 %v192, 0.0
  %222 = vst [vmem:[%s3] sm:$0xff] %v195
  %223 = vst [vmem:[%s3 + $0x8] sm:$0xff] %v196
  %224 = vst [vmem:[%s3 + $0x10] sm:$0xff] %v197
  %225 = vst [vmem:[%s3 + $0x18] sm:$0xff] %v198
  %226 = vst [vmem:[%s3 + $0x20] sm:$0xff] %v199
  %227 = vst [vmem:[%s3 + $0x28] sm:$0xff] %v200
  %228 = vst [vmem:[%s3 + $0x30] sm:$0xff] %v201
  %229 = vst [vmem:[%s3 + $0x38] sm:$0xff] %v202
  %230 = vst [vmem:[%s3 + $0x40] sm:$0xff] %v203
  %231 = vst [vmem:[%s3 + $0x48] sm:$0xff] %v204
  %232 = vst [vmem:[%s3 + $0x50] sm:$0xff] %v205
  %233 = vst [vmem:[%s3 + $0x58] sm:$0xff] %v206
  %234 = vst [vmem:[%s3 + $0x60] sm:$0xff] %v207
  %235 = vst [vmem:[%s3 + $0x68] sm:$0xff] %v208
  %236 = vst [vmem:[%s3 + $0x70] sm:$0xff] %v209
  %237 = vst [vmem:[%s3 + $0x78] sm:$0xff] %v210
  %238 = vst [vmem:[%s3 + $0x80] sm:$0xff] %v211
  %239 = vst [vmem:[%s3 + $0x88] sm:$0xff] %v212
  %240 = vst [vmem:[%s3 + $0x90] sm:$0xff] %v213
  %241 = vst [vmem:[%s3 + $0x98] sm:$0xff] %v214
  %242 = vst [vmem:[%s3 + $0xa0] sm:$0xff] %v215
  %243 = vst [vmem:[%s3 + $0xa8] sm:$0xff] %v216
  %244 = vst [vmem:[%s3 + $0xb0] sm:$0xff] %v217
  %245 = vst [vmem:[%s3 + $0xb8] sm:$0xff] %v218
  %246 = vst [vmem:[%s3 + $0xc0] sm:$0xff] %v219
  %247 = vst [vmem:[%s3 + $0xc8] sm:$0xff] %v220
  %248 = vst [vmem:[%s3 + $0xd0] sm:$0x3] %v221
  // Predicated region
  $region14: #{_lambda_.5} parent=0 // pred_check
    _
  $region15: #{_lambda_.5} parent=0 // pred_check_branch
    %250 = sbr.rel (0) target = $region17
  $region16: #{_lambda_.5} parent=0 // pred_region
    _
  $region17: #{_lambda_.5} parent=0 // pred_fallthru
    _
  // Predicated region
  $region18: #{_lambda_.5} parent=0 // pred_check
    _
  $region19: #{_lambda_.5} parent=0 // pred_check_branch
    %252 = sbr.rel (0) target = $region21
  $region20: #{_lambda_.5} parent=0 // pred_region
    _
  $region21: #{_lambda_.5} parent=0 // pred_fallthru
    _

// kernel: _lambda_.7
$region0: #{_lambda_.7}
  #allocation0 [shape = 'u32[]', space=smem, size = 0x4, offset = 0x4, fixed_abs, tag = 'smem constant byte address 0x4 - core index']
  #allocation1 [shape = 'u32[72,128]{1,0:T(1,128)}', space=vmem, size = 0x9000, scoped, tag = 'internal scratch']
  %s0 = inlined_call_operand.vmem [shape: f32[14,384], index: 0, kind: input, shape index: {}]
  %s1 = inlined_call_operand.vmem [shape: bf16[384,128], index: 1, kind: input, shape index: {}]
  %s2 = inlined_call_operand.vmem [shape: f32[1,128], index: 2, kind: input, shape index: {}]
  %s3 = inlined_call_operand.vmem [shape: f32[14,128], index: 3, kind: output, shape index: {}]
  %s4 = sld [smem:[#allocation0]]
  $region22: #{_lambda_.7} parent=0
    _
  %s6 = ssub.s32 1, %s4
  %s7 = scalar_select 0, %s6, %s4
  // Predicated region
  $region2: #{_lambda_.7} parent=0 // pred_check
    _
  $region3: #{_lambda_.7} parent=0 // pred_check_branch
    %9 = sbr.rel (0) target = $region5
  $region4: #{_lambda_.7} parent=0 // pred_region
    _
  $region5: #{_lambda_.7} parent=0 // pred_fallthru
    _
  // Predicated region
  $region6: #{_lambda_.7} parent=0 // pred_check
    _
  $region7: #{_lambda_.7} parent=0 // pred_check_branch
    %11 = sbr.rel (0) target = $region9
  $region8: #{_lambda_.7} parent=0 // pred_region
    _
  $region9: #{_lambda_.7} parent=0 // pred_fallthru
    _
  // Predicated region
  $region10: #{_lambda_.7} parent=0 // pred_check
    _
  $region11: #{_lambda_.7} parent=0 // pred_check_branch
    %13 = sbr.rel (0) target = $region13
  $region12: #{_lambda_.7} parent=0 // pred_region
    _
  $region13: #{_lambda_.7} parent=0 // pred_fallthru
    _
  %v14 = vld [vmem:[%s0] sm:$0xff]
  %v15 = vld [vmem:[%s0 + $0x8] sm:$0xff]
  %v16 = vld [vmem:[%s0 + $0x10] sm:$0xff]
  %v17 = vld [vmem:[%s0 + $0x18] sm:$0x3f]
  %v18 = vld [vmem:[%s0 + $0x20] sm:$0x3f]
  %v19 = vld [vmem:[%s0 + $0x28] sm:$0x3f]
  %v20 = vpack.c.bf16 %v17, %v14
  %v21 = vpack.c.bf16 %v18, %v15
  %v22 = vpack.c.bf16 %v19, %v16
  %v23 = vld [vmem:[%s1] sm:$0xf]
  %v24 = vld [vmem:[%s1 + $0x4] sm:$0xf]
  %v25 = vld [vmem:[%s1 + $0x8] sm:$0xf]
  %v26 = vld [vmem:[%s1 + $0xc] sm:$0xf]
  %v27 = vld [vmem:[%s1 + $0x10] sm:$0xf]
  %v28 = vld [vmem:[%s1 + $0x14] sm:$0xf]
  %v29 = vld [vmem:[%s1 + $0x18] sm:$0xf]
  %v30 = vld [vmem:[%s1 + $0x1c] sm:$0xf]
  %v31 = vld [vmem:[%s1 + $0x20] sm:$0xf]
  %v32 = vld [vmem:[%s1 + $0x24] sm:$0xf]
  %v33 = vld [vmem:[%s1 + $0x28] sm:$0xf]
  %v34 = vld [vmem:[%s1 + $0x2c] sm:$0xf]
  %v35 = vld [vmem:[%s1 + $0x30] sm:$0xf]
  %v36 = vld [vmem:[%s1 + $0x34] sm:$0xf]
  %v37 = vld [vmem:[%s1 + $0x38] sm:$0xf]
  %v38 = vld [vmem:[%s1 + $0x3c] sm:$0xf]
  %v39 = vld [vmem:[%s1 + $0x40] sm:$0xf]
  %v40 = vld [vmem:[%s1 + $0x44] sm:$0xf]
  %v41 = vld [vmem:[%s1 + $0x48] sm:$0xf]
  %v42 = vld [vmem:[%s1 + $0x4c] sm:$0xf]
  %v43 = vld [vmem:[%s1 + $0x50] sm:$0xf]
  %v44 = vld [vmem:[%s1 + $0x54] sm:$0xf]
  %v45 = vld [vmem:[%s1 + $0x58] sm:$0xf]
  %v46 = vld [vmem:[%s1 + $0x5c] sm:$0xf]
  %v47 = vld [vmem:[%s1 + $0x60] sm:$0xf]
  %v48 = vld [vmem:[%s1 + $0x64] sm:$0xf]
  %v49 = vld [vmem:[%s1 + $0x68] sm:$0xf]
  %v50 = vld [vmem:[%s1 + $0x6c] sm:$0xf]
  %v51 = vld [vmem:[%s1 + $0x70] sm:$0xf]
  %v52 = vld [vmem:[%s1 + $0x74] sm:$0xf]
  %v53 = vld [vmem:[%s1 + $0x78] sm:$0xf]
  %v54 = vld [vmem:[%s1 + $0x7c] sm:$0xf]
  %v55 = vld [vmem:[%s1 + $0x80] sm:$0xf]
  %v56 = vld [vmem:[%s1 + $0x84] sm:$0xf]
  %v57 = vld [vmem:[%s1 + $0x88] sm:$0xf]
  %v58 = vld [vmem:[%s1 + $0x8c] sm:$0xf]
  %v59 = vld [vmem:[%s1 + $0x90] sm:$0xf]
  %v60 = vld [vmem:[%s1 + $0x94] sm:$0xf]
  %v61 = vld [vmem:[%s1 + $0x98] sm:$0xf]
  %v62 = vld [vmem:[%s1 + $0x9c] sm:$0xf]
  %v63 = vld [vmem:[%s1 + $0xa0] sm:$0xf]
  %v64 = vld [vmem:[%s1 + $0xa4] sm:$0xf]
  %v65 = vld [vmem:[%s1 + $0xa8] sm:$0xf]
  %v66 = vld [vmem:[%s1 + $0xac] sm:$0xf]
  %v67 = vld [vmem:[%s1 + $0xb0] sm:$0xf]
  %v68 = vld [vmem:[%s1 + $0xb4] sm:$0xf]
  %v69 = vld [vmem:[%s1 + $0xb8] sm:$0xf]
  %v70 = vld [vmem:[%s1 + $0xbc] sm:$0xf]
  %v71 = vld [vmem:[%s2] sm:$0x1]
  %v73 = vperm.slane %v71, 0
  %v123 = vunpack.c.l.b16 %v23
  %v124 = vunpack.c.l.b16 %v24
  %v125 = vunpack.c.l.b16 %v25
  %v126 = vunpack.c.l.b16 %v26
  %v127 = vunpack.c.l.b16 %v27
  %v128 = vunpack.c.l.b16 %v28
  %v129 = vunpack.c.l.b16 %v29
  %v130 = vunpack.c.l.b16 %v30
  %v131 = vunpack.c.l.b16 %v31
  %v132 = vunpack.c.l.b16 %v32
  %v133 = vunpack.c.l.b16 %v33
  %v134 = vunpack.c.l.b16 %v34
  %v135 = vunpack.c.l.b16 %v35
  %v136 = vunpack.c.l.b16 %v36
  %v137 = vunpack.c.l.b16 %v37
  %v138 = vunpack.c.l.b16 %v38
  %v139 = vunpack.c.l.b16 %v39
  %v140 = vunpack.c.l.b16 %v40
  %v141 = vunpack.c.l.b16 %v41
  %v142 = vunpack.c.l.b16 %v42
  %v143 = vunpack.c.l.b16 %v43
  %v144 = vunpack.c.l.b16 %v44
  %v145 = vunpack.c.l.b16 %v45
  %v146 = vunpack.c.l.b16 %v46
  %v147 = vunpack.c.l.b16 %v47
  %v148 = vunpack.c.l.b16 %v48
  %v149 = vunpack.c.l.b16 %v49
  %v150 = vunpack.c.l.b16 %v50
  %v151 = vunpack.c.l.b16 %v51
  %v152 = vunpack.c.l.b16 %v52
  %v153 = vunpack.c.l.b16 %v53
  %v154 = vunpack.c.l.b16 %v54
  %v155 = vunpack.c.l.b16 %v55
  %v156 = vunpack.c.l.b16 %v56
  %v157 = vunpack.c.l.b16 %v57
  %v158 = vunpack.c.l.b16 %v58
  %v159 = vunpack.c.l.b16 %v59
  %v160 = vunpack.c.l.b16 %v60
  %v161 = vunpack.c.l.b16 %v61
  %v162 = vunpack.c.l.b16 %v62
  %v163 = vunpack.c.l.b16 %v63
  %v164 = vunpack.c.l.b16 %v64
  %v165 = vunpack.c.l.b16 %v65
  %v166 = vunpack.c.l.b16 %v66
  %v167 = vunpack.c.l.b16 %v67
  %v168 = vunpack.c.l.b16 %v68
  %v169 = vunpack.c.l.b16 %v69
  %v170 = vunpack.c.l.b16 %v70
  %v171 = vpack.c.b16 %v124, %v123
  %v172 = vpack.c.b16 %v126, %v125
  %v173 = vpack.c.b16 %v128, %v127
  %v174 = vpack.c.b16 %v130, %v129
  %v175 = vpack.c.b16 %v132, %v131
  %v176 = vpack.c.b16 %v134, %v133
  %v177 = vpack.c.b16 %v136, %v135
  %v178 = vpack.c.b16 %v138, %v137
  %v179 = vpack.c.b16 %v140, %v139
  %v180 = vpack.c.b16 %v142, %v141
  %v181 = vpack.c.b16 %v144, %v143
  %v182 = vpack.c.b16 %v146, %v145
  %v183 = vpack.c.b16 %v148, %v147
  %v184 = vpack.c.b16 %v150, %v149
  %v185 = vpack.c.b16 %v152, %v151
  %v186 = vpack.c.b16 %v154, %v153
  %v187 = vpack.c.b16 %v156, %v155
  %v188 = vpack.c.b16 %v158, %v157
  %v189 = vpack.c.b16 %v160, %v159
  %v190 = vpack.c.b16 %v162, %v161
  %v191 = vpack.c.b16 %v164, %v163
  %v192 = vpack.c.b16 %v166, %v165
  %v193 = vpack.c.b16 %v168, %v167
  %v194 = vpack.c.b16 %v170, %v169
  %219 = vmatpush.bf16.msra.mxu0 %v178
  %220 = vmatpush.bf16.msra.mxu0 %v177
  %221 = vmatpush.bf16.msra.mxu0 %v176
  %222 = vmatpush.bf16.msra.mxu0 %v175
  %223 = vmatpush.bf16.msra.mxu0 %v174
  %224 = vmatpush.bf16.msra.mxu0 %v173
  %225 = vmatpush.bf16.msra.mxu0 %v172
  %226 = vmatpush.bf16.msra.mxu0 %v171
  %227 = vmatmul.bf16.gmra.mxu0 %v20
  %v228 = vpop.f32.mrf.mxu0
  %v229 = vadd.f32 %v73, %v228
  %v230 = vpop.f32.mrf.mxu0
  %v231 = vadd.f32 %v73, %v230
  %232 = vdwg.mxu0
  %233 = vmatpush.bf16.msra.mxu0 %v186
  %234 = vmatpush.bf16.msra.mxu0 %v185
  %235 = vmatpush.bf16.msra.mxu0 %v184
  %236 = vmatpush.bf16.msra.mxu0 %v183
  %237 = vmatpush.bf16.msra.mxu0 %v182
  %238 = vmatpush.bf16.msra.mxu0 %v181
  %239 = vmatpush.bf16.msra.mxu0 %v180
  %240 = vmatpush.bf16.msra.mxu0 %v179
  %241 = vmatmul.bf16.gmra.mxu0 %v21
  %v242 = vpop.f32.mrf.mxu0
  %v243 = vadd.f32 %v229, %v242
  %v244 = vpop.f32.mrf.mxu0
  %v245 = vadd.f32 %v231, %v244
  %246 = vdwg.mxu0
  %247 = vmatpush.bf16.msra.mxu0 %v194
  %248 = vmatpush.bf16.msra.mxu0 %v193
  %249 = vmatpush.bf16.msra.mxu0 %v192
  %250 = vmatpush.bf16.msra.mxu0 %v191
  %251 = vmatpush.bf16.msra.mxu0 %v190
  %252 = vmatpush.bf16.msra.mxu0 %v189
  %253 = vmatpush.bf16.msra.mxu0 %v188
  %254 = vmatpush.bf16.msra.mxu0 %v187
  %255 = vmatmul.bf16.gmra.mxu0 %v22
  %v256 = vpop.f32.mrf.mxu0
  %v257 = vadd.f32 %v243, %v256
  %v258 = vpop.f32.mrf.mxu0
  %v259 = vadd.f32 %v245, %v258
  %260 = vdwg.mxu0
  %261 = vst [vmem:[%s3] sm:$0xff] %v257
  %262 = vst [vmem:[%s3 + $0x8] sm:$0x3f] %v259
  // Predicated region
  $region14: #{_lambda_.7} parent=0 // pred_check
    _
  $region15: #{_lambda_.7} parent=0 // pred_check_branch
    %264 = sbr.rel (0) target = $region17
  $region16: #{_lambda_.7} parent=0 // pred_region
    _
  $region17: #{_lambda_.7} parent=0 // pred_fallthru
    _
  // Predicated region
  $region18: #{_lambda_.7} parent=0 // pred_check
    _
  $region19: #{_lambda_.7} parent=0 // pred_check_branch
    %266 = sbr.rel (0) target = $region21
  $region20: #{_lambda_.7} parent=0 // pred_region
    _
  $region21: #{_lambda_.7} parent=0 // pred_fallthru
    _

// kernel: _lambda_.6
$region0: #{_lambda_.6}
  #allocation0 [shape = 'u32[]', space=smem, size = 0x4, offset = 0x4, fixed_abs, tag = 'smem constant byte address 0x4 - core index']
  #allocation1 [shape = 'u32[72,128]{1,0:T(1,128)}', space=vmem, size = 0x9000, scoped, tag = 'internal scratch']
  %s0 = inlined_call_operand.vmem [shape: f32[42,1152], index: 0, kind: input, shape index: {}]
  %s1 = inlined_call_operand.vmem [shape: bf16[1152,128], index: 1, kind: input, shape index: {}]
  %s2 = inlined_call_operand.vmem [shape: f32[1,128], index: 2, kind: input, shape index: {}]
  %s3 = inlined_call_operand.vmem [shape: f32[42,128], index: 3, kind: output, shape index: {}]
  %s4 = sld [smem:[#allocation0]]
  $region22: #{_lambda_.6} parent=0
    _
  %s6 = ssub.s32 1, %s4
  %s7 = scalar_select 0, %s6, %s4
  // Predicated region
  $region2: #{_lambda_.6} parent=0 // pred_check
    _
  $region3: #{_lambda_.6} parent=0 // pred_check_branch
    %9 = sbr.rel (0) target = $region5
  $region4: #{_lambda_.6} parent=0 // pred_region
    _
  $region5: #{_lambda_.6} parent=0 // pred_fallthru
    _
  // Predicated region
  $region6: #{_lambda_.6} parent=0 // pred_check
    _
  $region7: #{_lambda_.6} parent=0 // pred_check_branch
    %11 = sbr.rel (0) target = $region9
  $region8: #{_lambda_.6} parent=0 // pred_region
    _
  $region9: #{_lambda_.6} parent=0 // pred_fallthru
    _
  // Predicated region
  $region10: #{_lambda_.6} parent=0 // pred_check
    _
  $region11: #{_lambda_.6} parent=0 // pred_check_branch
    %13 = sbr.rel (0) target = $region13
  $region12: #{_lambda_.6} parent=0 // pred_region
    _
  $region13: #{_lambda_.6} parent=0 // pred_fallthru
    _
  %v14 = vld [vmem:[%s0] sm:$0xff]
  %v15 = vld [vmem:[%s0 + $0x8] sm:$0xff]
  %v16 = vld [vmem:[%s0 + $0x10] sm:$0xff]
  %v17 = vld [vmem:[%s0 + $0x18] sm:$0xff]
  %v18 = vld [vmem:[%s0 + $0x20] sm:$0xff]
  %v19 = vld [vmem:[%s0 + $0x28] sm:$0xff]
  %v20 = vld [vmem:[%s0 + $0x30] sm:$0xff]
  %v21 = vld [vmem:[%s0 + $0x38] sm:$0xff]
  %v22 = vld [vmem:[%s0 + $0x40] sm:$0xff]
  %v23 = vld [vmem:[%s0 + $0x48] sm:$0xff]
  %v24 = vld [vmem:[%s0 + $0x50] sm:$0xff]
  %v25 = vld [vmem:[%s0 + $0x58] sm:$0xff]
  %v26 = vld [vmem:[%s0 + $0x60] sm:$0xff]
  %v27 = vld [vmem:[%s0 + $0x68] sm:$0xff]
  %v28 = vld [vmem:[%s0 + $0x70] sm:$0xff]
  %v29 = vld [vmem:[%s0 + $0x78] sm:$0xff]
  %v30 = vld [vmem:[%s0 + $0x80] sm:$0xff]
  %v31 = vld [vmem:[%s0 + $0x88] sm:$0xff]
  %v32 = vld [vmem:[%s0 + $0x90] sm:$0xff]
  %v33 = vld [vmem:[%s0 + $0x98] sm:$0xff]
  %v34 = vld [vmem:[%s0 + $0xa0] sm:$0xff]
  %v35 = vld [vmem:[%s0 + $0xa8] sm:$0xff]
  %v36 = vld [vmem:[%s0 + $0xb0] sm:$0xff]
  %v37 = vld [vmem:[%s0 + $0xb8] sm:$0xff]
  %v38 = vld [vmem:[%s0 + $0xc0] sm:$0xff]
  %v39 = vld [vmem:[%s0 + $0xc8] sm:$0xff]
  %v40 = vld [vmem:[%s0 + $0xd0] sm:$0xff]
  %v41 = vld [vmem:[%s0 + $0xd8] sm:$0xff]
  %v42 = vld [vmem:[%s0 + $0xe0] sm:$0xff]
  %v43 = vld [vmem:[%s0 + $0xe8] sm:$0xff]
  %v44 = vld [vmem:[%s0 + $0xf0] sm:$0xff]
  %v45 = vld [vmem:[%s0 + $0xf8] sm:$0xff]
  %v46 = vld [vmem:[%s0 + $0x100] sm:$0xff]
  %v47 = vld [vmem:[%s0 + $0x108] sm:$0xff]
  %v48 = vld [vmem:[%s0 + $0x110] sm:$0xff]
  %v49 = vld [vmem:[%s0 + $0x118] sm:$0xff]
  %v50 = vld [vmem:[%s0 + $0x120] sm:$0xff]
  %v51 = vld [vmem:[%s0 + $0x128] sm:$0xff]
  %v52 = vld [vmem:[%s0 + $0x130] sm:$0xff]
  %v53 = vld [vmem:[%s0 + $0x138] sm:$0xff]
  %v54 = vld [vmem:[%s0 + $0x140] sm:$0xff]
  %v55 = vld [vmem:[%s0 + $0x148] sm:$0xff]
  %v56 = vld [vmem:[%s0 + $0x150] sm:$0xff]
  %v57 = vld [vmem:[%s0 + $0x158] sm:$0xff]
  %v58 = vld [vmem:[%s0 + $0x160] sm:$0xff]
  %v59 = vld [vmem:[%s0 + $0x168] sm:$0x3]
  %v60 = vld [vmem:[%s0 + $0x170] sm:$0x3]
  %v61 = vld [vmem:[%s0 + $0x178] sm:$0x3]
  %v62 = vld [vmem:[%s0 + $0x180] sm:$0x3]
  %v63 = vld [vmem:[%s0 + $0x188] sm:$0x3]
  %v64 = vld [vmem:[%s0 + $0x190] sm:$0x3]
  %v65 = vld [vmem:[%s0 + $0x198] sm:$0x3]
  %v66 = vld [vmem:[%s0 + $0x1a0] sm:$0x3]
  %v67 = vld [vmem:[%s0 + $0x1a8] sm:$0x3]
  %v68 = vpack.c.bf16 %v23, %v14
  %v69 = vpack.c.bf16 %v24, %v15
  %v70 = vpack.c.bf16 %v25, %v16
  %v71 = vpack.c.bf16 %v26, %v17
  %v72 = vpack.c.bf16 %v27, %v18
  %v73 = vpack.c.bf16 %v28, %v19
  %v74 = vpack.c.bf16 %v29, %v20
  %v75 = vpack.c.bf16 %v30, %v21
  %v76 = vpack.c.bf16 %v31, %v22
  %v77 = vpack.c.bf16 %v41, %v32
  %v78 = vpack.c.bf16 %v42, %v33
  %v79 = vpack.c.bf16 %v43, %v34
  %v80 = vpack.c.bf16 %v44, %v35
  %v81 = vpack.c.bf16 %v45, %v36
  %v82 = vpack.c.bf16 %v46, %v37
  %v83 = vpack.c.bf16 %v47, %v38
  %v84 = vpack.c.bf16 %v48, %v39
  %v85 = vpack.c.bf16 %v49, %v40
  %v86 = vpack.c.bf16 %v59, %v50
  %v87 = vpack.c.bf16 %v60, %v51
  %v88 = vpack.c.bf16 %v61, %v52
  %v89 = vpack.c.bf16 %v62, %v53
  %v90 = vpack.c.bf16 %v63, %v54
  %v91 = vpack.c.bf16 %v64, %v55
  %v92 = vpack.c.bf16 %v65, %v56
  %v93 = vpack.c.bf16 %v66, %v57
  %v94 = vpack.c.bf16 %v67, %v58
  %v95 = vld [vmem:[%s1] sm:$0xf]
  %v96 = vld [vmem:[%s1 + $0x4] sm:$0xf]
  %v97 = vld [vmem:[%s1 + $0x8] sm:$0xf]
  %v98 = vld [vmem:[%s1 + $0xc] sm:$0xf]
  %v99 = vld [vmem:[%s1 + $0x10] sm:$0xf]
  %v100 = vld [vmem:[%s1 + $0x14] sm:$0xf]
  %v101 = vld [vmem:[%s1 + $0x18] sm:$0xf]
  %v102 = vld [vmem:[%s1 + $0x1c] sm:$0xf]
  %v103 = vld [vmem:[%s1 + $0x20] sm:$0xf]
  %v104 = vld [vmem:[%s1 + $0x24] sm:$0xf]
  %v105 = vld [vmem:[%s1 + $0x28] sm:$0xf]
  %v106 = vld [vmem:[%s1 + $0x2c] sm:$0xf]
  %v107 = vld [vmem:[%s1 + $0x30] sm:$0xf]
  %v108 = vld [vmem:[%s1 + $0x34] sm:$0xf]
  %v109 = vld [vmem:[%s1 + $0x38] sm:$0xf]
  %v110 = vld [vmem:[%s1 + $0x3c] sm:$0xf]
  %v111 = vld [vmem:[%s1 + $0x40] sm:$0xf]
  %v112 = vld [vmem:[%s1 + $0x44] sm:$0xf]
  %v113 = vld [vmem:[%s1 + $0x48] sm:$0xf]
  %v114 = vld [vmem:[%s1 + $0x4c] sm:$0xf]
  %v115 = vld [vmem:[%s1 + $0x50] sm:$0xf]
  %v116 = vld [vmem:[%s1 + $0x54] sm:$0xf]
  %v117 = vld [vmem:[%s1 + $0x58] sm:$0xf]
  %v118 = vld [vmem:[%s1 + $0x5c] sm:$0xf]
  %v119 = vld [vmem:[%s1 + $0x60] sm:$0xf]
  %v120 = vld [vmem:[%s1 + $0x64] sm:$0xf]
  %v121 = vld [vmem:[%s1 + $0x68] sm:$0xf]
  %v122 = vld [vmem:[%s1 + $0x6c] sm:$0xf]
  %v123 = vld [vmem:[%s1 + $0x70] sm:$0xf]
  %v124 = vld [vmem:[%s1 + $0x74] sm:$0xf]
  %v125 = vld [vmem:[%s1 + $0x78] sm:$0xf]
  %v126 = vld [vmem:[%s1 + $0x7c] sm:$0xf]
  %v127 = vld [vmem:[%s1 + $0x80] sm:$0xf]
  %v128 = vld [vmem:[%s1 + $0x84] sm:$0xf]
  %v129 = vld [vmem:[%s1 + $0x88] sm:$0xf]
  %v130 = vld [vmem:[%s1 + $0x8c] sm:$0xf]
  %v131 = vld [vmem:[%s1 + $0x90] sm:$0xf]
  %v132 = vld [vmem:[%s1 + $0x94] sm:$0xf]
  %v133 = vld [vmem:[%s1 + $0x98] sm:$0xf]
  %v134 = vld [vmem:[%s1 + $0x9c] sm:$0xf]
  %v135 = vld [vmem:[%s1 + $0xa0] sm:$0xf]
  %v136 = vld [vmem:[%s1 + $0xa4] sm:$0xf]
  %v137 = vld [vmem:[%s1 + $0xa8] sm:$0xf]
  %v138 = vld [vmem:[%s1 + $0xac] sm:$0xf]
  %v139 = vld [vmem:[%s1 + $0xb0] sm:$0xf]
  %v140 = vld [vmem:[%s1 + $0xb4] sm:$0xf]
  %v141 = vld [vmem:[%s1 + $0xb8] sm:$0xf]
  %v142 = vld [vmem:[%s1 + $0xbc] sm:$0xf]
  %v143 = vld [vmem:[%s1 + $0xc0] sm:$0xf]
  %v144 = vld [vmem:[%s1 + $0xc4] sm:$0xf]
  %v145 = vld [vmem:[%s1 + $0xc8] sm:$0xf]
  %v146 = vld [vmem:[%s1 + $0xcc] sm:$0xf]
  %v147 = vld [vmem:[%s1 + $0xd0] sm:$0xf]
  %v148 = vld [vmem:[%s1 + $0xd4] sm:$0xf]
  %v149 = vld [vmem:[%s1 + $0xd8] sm:$0xf]
  %v150 = vld [vmem:[%s1 + $0xdc] sm:$0xf]
  %v151 = vld [vmem:[%s1 + $0xe0] sm:$0xf]
  %v152 = vld [vmem:[%s1 + $0xe4] sm:$0xf]
  %v153 = vld [vmem:[%s1 + $0xe8] sm:$0xf]
  %v154 = vld [vmem:[%s1 + $0xec] sm:$0xf]
  %v155 = vld [vmem:[%s1 + $0xf0] sm:$0xf]
  %v156 = vld [vmem:[%s1 + $0xf4] sm:$0xf]
  %v157 = vld [vmem:[%s1 + $0xf8] sm:$0xf]
  %v158 = vld [vmem:[%s1 + $0xfc] sm:$0xf]
  %v159 = vld [vmem:[%s1 + $0x100] sm:$0xf]
  %v160 = vld [vmem:[%s1 + $0x104] sm:$0xf]
  %v161 = vld [vmem:[%s1 + $0x108] sm:$0xf]
  %v162 = vld [vmem:[%s1 + $0x10c] sm:$0xf]
  %v163 = vld [vmem:[%s1 + $0x110] sm:$0xf]
  %v164 = vld [vmem:[%s1 + $0x114] sm:$0xf]
  %v165 = vld [vmem:[%s1 + $0x118] sm:$0xf]
  %v166 = vld [vmem:[%s1 + $0x11c] sm:$0xf]
  %v167 = vld [vmem:[%s1 + $0x120] sm:$0xf]
  %v168 = vld [vmem:[%s1 + $0x124] sm:$0xf]
  %v169 = vld [vmem:[%s1 + $0x128] sm:$0xf]
  %v170 = vld [vmem:[%s1 + $0x12c] sm:$0xf]
  %v171 = vld [vmem:[%s1 + $0x130] sm:$0xf]
  %v172 = vld [vmem:[%s1 + $0x134] sm:$0xf]
  %v173 = vld [vmem:[%s1 + $0x138] sm:$0xf]
  %v174 = vld [vmem:[%s1 + $0x13c] sm:$0xf]
  %v175 = vld [vmem:[%s1 + $0x140] sm:$0xf]
  %v176 = vld [vmem:[%s1 + $0x144] sm:$0xf]
  %v177 = vld [vmem:[%s1 + $0x148] sm:$0xf]
  %v178 = vld [vmem:[%s1 + $0x14c] sm:$0xf]
  %v179 = vld [vmem:[%s1 + $0x150] sm:$0xf]
  %v180 = vld [vmem:[%s1 + $0x154] sm:$0xf]
  %v181 = vld [vmem:[%s1 + $0x158] sm:$0xf]
  %v182 = vld [vmem:[%s1 + $0x15c] sm:$0xf]
  %v183 = vld [vmem:[%s1 + $0x160] sm:$0xf]
  %v184 = vld [vmem:[%s1 + $0x164] sm:$0xf]
  %v185 = vld [vmem:[%s1 + $0x168] sm:$0xf]
  %v186 = vld [vmem:[%s1 + $0x16c] sm:$0xf]
  %v187 = vld [vmem:[%s1 + $0x170] sm:$0xf]
  %v188 = vld [vmem:[%s1 + $0x174] sm:$0xf]
  %v189 = vld [vmem:[%s1 + $0x178] sm:$0xf]
  %v190 = vld [vmem:[%s1 + $0x17c] sm:$0xf]
  %v191 = vld [vmem:[%s1 + $0x180] sm:$0xf]
  %v192 = vld [vmem:[%s1 + $0x184] sm:$0xf]
  %v193 = vld [vmem:[%s1 + $0x188] sm:$0xf]
  %v194 = vld [vmem:[%s1 + $0x18c] sm:$0xf]
  %v195 = vld [vmem:[%s1 + $0x190] sm:$0xf]
  %v196 = vld [vmem:[%s1 + $0x194] sm:$0xf]
  %v197 = vld [vmem:[%s1 + $0x198] sm:$0xf]
  %v198 = vld [vmem:[%s1 + $0x19c] sm:$0xf]
  %v199 = vld [vmem:[%s1 + $0x1a0] sm:$0xf]
  %v200 = vld [vmem:[%s1 + $0x1a4] sm:$0xf]
  %v201 = vld [vmem:[%s1 + $0x1a8] sm:$0xf]
  %v202 = vld [vmem:[%s1 + $0x1ac] sm:$0xf]
  %v203 = vld [vmem:[%s1 + $0x1b0] sm:$0xf]
  %v204 = vld [vmem:[%s1 + $0x1b4] sm:$0xf]
  %v205 = vld [vmem:[%s1 + $0x1b8] sm:$0xf]
  %v206 = vld [vmem:[%s1 + $0x1bc] sm:$0xf]
  %v207 = vld [vmem:[%s1 + $0x1c0] sm:$0xf]
  %v208 = vld [vmem:[%s1 + $0x1c4] sm:$0xf]
  %v209 = vld [vmem:[%s1 + $0x1c8] sm:$0xf]
  %v210 = vld [vmem:[%s1 + $0x1cc] sm:$0xf]
  %v211 = vld [vmem:[%s1 + $0x1d0] sm:$0xf]
  %v212 = vld [vmem:[%s1 + $0x1d4] sm:$0xf]
  %v213 = vld [vmem:[%s1 + $0x1d8] sm:$0xf]
  %v214 = vld [vmem:[%s1 + $0x1dc] sm:$0xf]
  %v215 = vld [vmem:[%s1 + $0x1e0] sm:$0xf]
  %v216 = vld [vmem:[%s1 + $0x1e4] sm:$0xf]
  %v217 = vld [vmem:[%s1 + $0x1e8] sm:$0xf]
  %v218 = vld [vmem:[%s1 + $0x1ec] sm:$0xf]
  %v219 = vld [vmem:[%s1 + $0x1f0] sm:$0xf]
  %v220 = vld [vmem:[%s1 + $0x1f4] sm:$0xf]
  %v221 = vld [vmem:[%s1 + $0x1f8] sm:$0xf]
  %v222 = vld [vmem:[%s1 + $0x1fc] sm:$0xf]
  %v223 = vld [vmem:[%s1 + $0x200] sm:$0xf]
  %v224 = vld [vmem:[%s1 + $0x204] sm:$0xf]
  %v225 = vld [vmem:[%s1 + $0x208] sm:$0xf]
  %v226 = vld [vmem:[%s1 + $0x20c] sm:$0xf]
  %v227 = vld [vmem:[%s1 + $0x210] sm:$0xf]
  %v228 = vld [vmem:[%s1 + $0x214] sm:$0xf]
  %v229 = vld [vmem:[%s1 + $0x218] sm:$0xf]
  %v230 = vld [vmem:[%s1 + $0x21c] sm:$0xf]
  %v231 = vld [vmem:[%s1 + $0x220] sm:$0xf]
  %v232 = vld [vmem:[%s1 + $0x224] sm:$0xf]
  %v233 = vld [vmem:[%s1 + $0x228] sm:$0xf]
  %v234 = vld [vmem:[%s1 + $0x22c] sm:$0xf]
  %v235 = vld [vmem:[%s1 + $0x230] sm:$0xf]
  %v236 = vld [vmem:[%s1 + $0x234] sm:$0xf]
  %v237 = vld [vmem:[%s1 + $0x238] sm:$0xf]
  %v238 = vld [vmem:[%s1 + $0x23c] sm:$0xf]
  %v239 = vld [vmem:[%s2] sm:$0x1]
  %v241 = vperm.slane %v239, 0
  %v387 = vunpack.c.l.b16 %v95
  %v388 = vunpack.c.l.b16 %v96
  %v389 = vunpack.c.l.b16 %v97
  %v390 = vunpack.c.l.b16 %v98
  %v391 = vunpack.c.l.b16 %v99
  %v392 = vunpack.c.l.b16 %v100
  %v393 = vunpack.c.l.b16 %v101
  %v394 = vunpack.c.l.b16 %v102
  %v395 = vunpack.c.l.b16 %v103
  %v396 = vunpack.c.l.b16 %v104
  %v397 = vunpack.c.l.b16 %v105
  %v398 = vunpack.c.l.b16 %v106
  %v399 = vunpack.c.l.b16 %v107
  %v400 = vunpack.c.l.b16 %v108
  %v401 = vunpack.c.l.b16 %v109
  %v402 = vunpack.c.l.b16 %v110
  %v403 = vunpack.c.l.b16 %v111
  %v404 = vunpack.c.l.b16 %v112
  %v405 = vunpack.c.l.b16 %v113
  %v406 = vunpack.c.l.b16 %v114
  %v407 = vunpack.c.l.b16 %v115
  %v408 = vunpack.c.l.b16 %v116
  %v409 = vunpack.c.l.b16 %v117
  %v410 = vunpack.c.l.b16 %v118
  %v411 = vunpack.c.l.b16 %v119
  %v412 = vunpack.c.l.b16 %v120
  %v413 = vunpack.c.l.b16 %v121
  %v414 = vunpack.c.l.b16 %v122
  %v415 = vunpack.c.l.b16 %v123
  %v416 = vunpack.c.l.b16 %v124
  %v417 = vunpack.c.l.b16 %v125
  %v418 = vunpack.c.l.b16 %v126
  %v419 = vunpack.c.l.b16 %v127
  %v420 = vunpack.c.l.b16 %v128
  %v421 = vunpack.c.l.b16 %v129
  %v422 = vunpack.c.l.b16 %v130
  %v423 = vunpack.c.l.b16 %v131
  %v424 = vunpack.c.l.b16 %v132
  %v425 = vunpack.c.l.b16 %v133
  %v426 = vunpack.c.l.b16 %v134
  %v427 = vunpack.c.l.b16 %v135
  %v428 = vunpack.c.l.b16 %v136
  %v429 = vunpack.c.l.b16 %v137
  %v430 = vunpack.c.l.b16 %v138
  %v431 = vunpack.c.l.b16 %v139
  %v432 = vunpack.c.l.b16 %v140
  %v433 = vunpack.c.l.b16 %v141
  %v434 = vunpack.c.l.b16 %v142
  %v435 = vunpack.c.l.b16 %v143
  %v436 = vunpack.c.l.b16 %v144
  %v437 = vunpack.c.l.b16 %v145
  %v438 = vunpack.c.l.b16 %v146
  %v439 = vunpack.c.l.b16 %v147
  %v440 = vunpack.c.l.b16 %v148
  %v441 = vunpack.c.l.b16 %v149
  %v442 = vunpack.c.l.b16 %v150
  %v443 = vunpack.c.l.b16 %v151
  %v444 = vunpack.c.l.b16 %v152
  %v445 = vunpack.c.l.b16 %v153
  %v446 = vunpack.c.l.b16 %v154
  %v447 = vunpack.c.l.b16 %v155
  %v448 = vunpack.c.l.b16 %v156
  %v449 = vunpack.c.l.b16 %v157
  %v450 = vunpack.c.l.b16 %v158
  %v451 = vunpack.c.l.b16 %v159
  %v452 = vunpack.c.l.b16 %v160
  %v453 = vunpack.c.l.b16 %v161
  %v454 = vunpack.c.l.b16 %v162
  %v455 = vunpack.c.l.b16 %v163
  %v456 = vunpack.c.l.b16 %v164
  %v457 = vunpack.c.l.b16 %v165
  %v458 = vunpack.c.l.b16 %v166
  %v459 = vunpack.c.l.b16 %v167
  %v460 = vunpack.c.l.b16 %v168
  %v461 = vunpack.c.l.b16 %v169
  %v462 = vunpack.c.l.b16 %v170
  %v463 = vunpack.c.l.b16 %v171
  %v464 = vunpack.c.l.b16 %v172
  %v465 = vunpack.c.l.b16 %v173
  %v466 = vunpack.c.l.b16 %v174
  %v467 = vunpack.c.l.b16 %v175
  %v468 = vunpack.c.l.b16 %v176
  %v469 = vunpack.c.l.b16 %v177
  %v470 = vunpack.c.l.b16 %v178
  %v471 = vunpack.c.l.b16 %v179
  %v472 = vunpack.c.l.b16 %v180
  %v473 = vunpack.c.l.b16 %v181
  %v474 = vunpack.c.l.b16 %v182
  %v475 = vunpack.c.l.b16 %v183
  %v476 = vunpack.c.l.b16 %v184
  %v477 = vunpack.c.l.b16 %v185
  %v478 = vunpack.c.l.b16 %v186
  %v479 = vunpack.c.l.b16 %v187
  %v480 = vunpack.c.l.b16 %v188
  %v481 = vunpack.c.l.b16 %v189
  %v482 = vunpack.c.l.b16 %v190
  %v483 = vunpack.c.l.b16 %v191
  %v484 = vunpack.c.l.b16 %v192
  %v485 = vunpack.c.l.b16 %v193
  %v486 = vunpack.c.l.b16 %v194
  %v487 = vunpack.c.l.b16 %v195
  %v488 = vunpack.c.l.b16 %v196
  %v489 = vunpack.c.l.b16 %v197
  %v490 = vunpack.c.l.b16 %v198
  %v491 = vunpack.c.l.b16 %v199
  %v492 = vunpack.c.l.b16 %v200
  %v493 = vunpack.c.l.b16 %v201
  %v494 = vunpack.c.l.b16 %v202
  %v495 = vunpack.c.l.b16 %v203
  %v496 = vunpack.c.l.b16 %v204
  %v497 = vunpack.c.l.b16 %v205
  %v498 = vunpack.c.l.b16 %v206
  %v499 = vunpack.c.l.b16 %v207
  %v500 = vunpack.c.l.b16 %v208
  %v501 = vunpack.c.l.b16 %v209
  %v502 = vunpack.c.l.b16 %v210
  %v503 = vunpack.c.l.b16 %v211
  %v504 = vunpack.c.l.b16 %v212
  %v505 = vunpack.c.l.b16 %v213
  %v506 = vunpack.c.l.b16 %v214
  %v507 = vunpack.c.l.b16 %v215
  %v508 = vunpack.c.l.b16 %v216
  %v509 = vunpack.c.l.b16 %v217
  %v510 = vunpack.c.l.b16 %v218
  %v511 = vunpack.c.l.b16 %v219
  %v512 = vunpack.c.l.b16 %v220
  %v513 = vunpack.c.l.b16 %v221
  %v514 = vunpack.c.l.b16 %v222
  %v515 = vunpack.c.l.b16 %v223
  %v516 = vunpack.c.l.b16 %v224
  %v517 = vunpack.c.l.b16 %v225
  %v518 = vunpack.c.l.b16 %v226
  %v519 = vunpack.c.l.b16 %v227
  %v520 = vunpack.c.l.b16 %v228
  %v521 = vunpack.c.l.b16 %v229
  %v522 = vunpack.c.l.b16 %v230
  %v523 = vunpack.c.l.b16 %v231
  %v524 = vunpack.c.l.b16 %v232
  %v525 = vunpack.c.l.b16 %v233
  %v526 = vunpack.c.l.b16 %v234
  %v527 = vunpack.c.l.b16 %v235
  %v528 = vunpack.c.l.b16 %v236
  %v529 = vunpack.c.l.b16 %v237
  %v530 = vunpack.c.l.b16 %v238
  %v531 = vpack.c.b16 %v388, %v387
  %v532 = vpack.c.b16 %v390, %v389
  %v533 = vpack.c.b16 %v392, %v391
  %v534 = vpack.c.b16 %v394, %v393
  %v535 = vpack.c.b16 %v396, %v395
  %v536 = vpack.c.b16 %v398, %v397
  %v537 = vpack.c.b16 %v400, %v399
  %v538 = vpack.c.b16 %v402, %v401
  %v539 = vpack.c.b16 %v404, %v403
  %v540 = vpack.c.b16 %v406, %v405
  %v541 = vpack.c.b16 %v408, %v407
  %v542 = vpack.c.b16 %v410, %v409
  %v543 = vpack.c.b16 %v412, %v411
  %v544 = vpack.c.b16 %v414, %v413
  %v545 = vpack.c.b16 %v416, %v415
  %v546 = vpack.c.b16 %v418, %v417
  %v547 = vpack.c.b16 %v420, %v419
  %v548 = vpack.c.b16 %v422, %v421
  %v549 = vpack.c.b16 %v424, %v423
  %v550 = vpack.c.b16 %v426, %v425
  %v551 = vpack.c.b16 %v428, %v427
  %v552 = vpack.c.b16 %v430, %v429
  %v553 = vpack.c.b16 %v432, %v431
  %v554 = vpack.c.b16 %v434, %v433
  %v555 = vpack.c.b16 %v436, %v435
  %v556 = vpack.c.b16 %v438, %v437
  %v557 = vpack.c.b16 %v440, %v439
  %v558 = vpack.c.b16 %v442, %v441
  %v559 = vpack.c.b16 %v444, %v443
  %v560 = vpack.c.b16 %v446, %v445
  %v561 = vpack.c.b16 %v448, %v447
  %v562 = vpack.c.b16 %v450, %v449
  %v563 = vpack.c.b16 %v452, %v451
  %v564 = vpack.c.b16 %v454, %v453
  %v565 = vpack.c.b16 %v456, %v455
  %v566 = vpack.c.b16 %v458, %v457
  %v567 = vpack.c.b16 %v460, %v459
  %v568 = vpack.c.b16 %v462, %v461
  %v569 = vpack.c.b16 %v464, %v463
  %v570 = vpack.c.b16 %v466, %v465
  %v571 = vpack.c.b16 %v468, %v467
  %v572 = vpack.c.b16 %v470, %v469
  %v573 = vpack.c.b16 %v472, %v471
  %v574 = vpack.c.b16 %v474, %v473
  %v575 = vpack.c.b16 %v476, %v475
  %v576 = vpack.c.b16 %v478, %v477
  %v577 = vpack.c.b16 %v480, %v479
  %v578 = vpack.c.b16 %v482, %v481
  %v579 = vpack.c.b16 %v484, %v483
  %v580 = vpack.c.b16 %v486, %v485
  %v581 = vpack.c.b16 %v488, %v487
  %v582 = vpack.c.b16 %v490, %v489
  %v583 = vpack.c.b16 %v492, %v491
  %v584 = vpack.c.b16 %v494, %v493
  %v585 = vpack.c.b16 %v496, %v495
  %v586 = vpack.c.b16 %v498, %v497
  %v587 = vpack.c.b16 %v500, %v499
  %v588 = vpack.c.b16 %v502, %v501
  %v589 = vpack.c.b16 %v504, %v503
  %v590 = vpack.c.b16 %v506, %v505
  %v591 = vpack.c.b16 %v508, %v507
  %v592 = vpack.c.b16 %v510, %v509
  %v593 = vpack.c.b16 %v512, %v511
  %v594 = vpack.c.b16 %v514, %v513
  %v595 = vpack.c.b16 %v516, %v515
  %v596 = vpack.c.b16 %v518, %v517
  %v597 = vpack.c.b16 %v520, %v519
  %v598 = vpack.c.b16 %v522, %v521
  %v599 = vpack.c.b16 %v524, %v523
  %v600 = vpack.c.b16 %v526, %v525
  %v601 = vpack.c.b16 %v528, %v527
  %v602 = vpack.c.b16 %v530, %v529
  %675 = vmatpush.bf16.msra.mxu0 %v538
  %676 = vmatpush.bf16.msra.mxu0 %v537
  %677 = vmatpush.bf16.msra.mxu0 %v536
  %678 = vmatpush.bf16.msra.mxu0 %v535
  %679 = vmatpush.bf16.msra.mxu0 %v534
  %680 = vmatpush.bf16.msra.mxu0 %v533
  %681 = vmatpush.bf16.msra.mxu0 %v532
  %682 = vmatpush.bf16.msra.mxu0 %v531
  %683 = vmatmul.bf16.gmra.mxu0 %v68
  %v684 = vpop.f32.mrf.mxu0
  %v685 = vadd.f32 %v241, %v684
  %v686 = vpop.f32.mrf.mxu0
  %v687 = vadd.f32 %v241, %v686
  %688 = vmatmul.bf16.gmra.mxu0 %v77
  %v689 = vpop.f32.mrf.mxu0
  %v690 = vadd.f32 %v241, %v689
  %v691 = vpop.f32.mrf.mxu0
  %v692 = vadd.f32 %v241, %v691
  %693 = vmatmul.bf16.gmra.mxu0 %v86
  %v694 = vpop.f32.mrf.mxu0
  %v695 = vadd.f32 %v241, %v694
  %v696 = vpop.f32.mrf.mxu0
  %v697 = vadd.f32 %v241, %v696
  %698 = vdwg.mxu0
  %699 = vmatpush.bf16.msra.mxu0 %v546
  %700 = vmatpush.bf16.msra.mxu0 %v545
  %701 = vmatpush.bf16.msra.mxu0 %v544
  %702 = vmatpush.bf16.msra.mxu0 %v543
  %703 = vmatpush.bf16.msra.mxu0 %v542
  %704 = vmatpush.bf16.msra.mxu0 %v541
  %705 = vmatpush.bf16.msra.mxu0 %v540
  %706 = vmatpush.bf16.msra.mxu0 %v539
  %707 = vmatmul.bf16.gmra.mxu0 %v69
  %v708 = vpop.f32.mrf.mxu0
  %v709 = vadd.f32 %v685, %v708
  %v710 = vpop.f32.mrf.mxu0
  %v711 = vadd.f32 %v687, %v710
  %712 = vmatmul.bf16.gmra.mxu0 %v78
  %v713 = vpop.f32.mrf.mxu0
  %v714 = vadd.f32 %v690, %v713
  %v715 = vpop.f32.mrf.mxu0
  %v716 = vadd.f32 %v692, %v715
  %717 = vmatmul.bf16.gmra.mxu0 %v87
  %v718 = vpop.f32.mrf.mxu0
  %v719 = vadd.f32 %v695, %v718
  %v720 = vpop.f32.mrf.mxu0
  %v721 = vadd.f32 %v697, %v720
  %722 = vdwg.mxu0
  %723 = vmatpush.bf16.msra.mxu0 %v554
  %724 = vmatpush.bf16.msra.mxu0 %v553
  %725 = vmatpush.bf16.msra.mxu0 %v552
  %726 = vmatpush.bf16.msra.mxu0 %v551
  %727 = vmatpush.bf16.msra.mxu0 %v550
  %728 = vmatpush.bf16.msra.mxu0 %v549
  %729 = vmatpush.bf16.msra.mxu0 %v548
  %730 = vmatpush.bf16.msra.mxu0 %v547
  %731 = vmatmul.bf16.gmra.mxu0 %v70
  %v732 = vpop.f32.mrf.mxu0
  %v733 = vadd.f32 %v709, %v732
  %v734 = vpop.f32.mrf.mxu0
  %v735 = vadd.f32 %v711, %v734
  %736 = vmatmul.bf16.gmra.mxu0 %v79
  %v737 = vpop.f32.mrf.mxu0
  %v738 = vadd.f32 %v714, %v737
  %v739 = vpop.f32.mrf.mxu0
  %v740 = vadd.f32 %v716, %v739
  %741 = vmatmul.bf16.gmra.mxu0 %v88
  %v742 = vpop.f32.mrf.mxu0
  %v743 = vadd.f32 %v719, %v742
  %v744 = vpop.f32.mrf.mxu0
  %v745 = vadd.f32 %v721, %v744
  %746 = vdwg.mxu0
  %747 = vmatpush.bf16.msra.mxu0 %v562
  %748 = vmatpush.bf16.msra.mxu0 %v561
  %749 = vmatpush.bf16.msra.mxu0 %v560
  %750 = vmatpush.bf16.msra.mxu0 %v559
  %751 = vmatpush.bf16.msra.mxu0 %v558
  %752 = vmatpush.bf16.msra.mxu0 %v557
  %753 = vmatpush.bf16.msra.mxu0 %v556
  %754 = vmatpush.bf16.msra.mxu0 %v555
  %755 = vmatmul.bf16.gmra.mxu0 %v71
  %v756 = vpop.f32.mrf.mxu0
  %v757 = vadd.f32 %v733, %v756
  %v758 = vpop.f32.mrf.mxu0
  %v759 = vadd.f32 %v735, %v758
  %760 = vmatmul.bf16.gmra.mxu0 %v80
  %v761 = vpop.f32.mrf.mxu0
  %v762 = vadd.f32 %v738, %v761
  %v763 = vpop.f32.mrf.mxu0
  %v764 = vadd.f32 %v740, %v763
  %765 = vmatmul.bf16.gmra.mxu0 %v89
  %v766 = vpop.f32.mrf.mxu0
  %v767 = vadd.f32 %v743, %v766
  %v768 = vpop.f32.mrf.mxu0
  %v769 = vadd.f32 %v745, %v768
  %770 = vdwg.mxu0
  %771 = vmatpush.bf16.msra.mxu0 %v570
  %772 = vmatpush.bf16.msra.mxu0 %v569
  %773 = vmatpush.bf16.msra.mxu0 %v568
  %774 = vmatpush.bf16.msra.mxu0 %v567
  %775 = vmatpush.bf16.msra.mxu0 %v566
  %776 = vmatpush.bf16.msra.mxu0 %v565
  %777 = vmatpush.bf16.msra.mxu0 %v564
  %778 = vmatpush.bf16.msra.mxu0 %v563
  %779 = vmatmul.bf16.gmra.mxu0 %v72
  %v780 = vpop.f32.mrf.mxu0
  %v781 = vadd.f32 %v757, %v780
  %v782 = vpop.f32.mrf.mxu0
  %v783 = vadd.f32 %v759, %v782
  %784 = vmatmul.bf16.gmra.mxu0 %v81
  %v785 = vpop.f32.mrf.mxu0
  %v786 = vadd.f32 %v762, %v785
  %v787 = vpop.f32.mrf.mxu0
  %v788 = vadd.f32 %v764, %v787
  %789 = vmatmul.bf16.gmra.mxu0 %v90
  %v790 = vpop.f32.mrf.mxu0
  %v791 = vadd.f32 %v767, %v790
  %v792 = vpop.f32.mrf.mxu0
  %v793 = vadd.f32 %v769, %v792
  %794 = vdwg.mxu0
  %795 = vmatpush.bf16.msra.mxu0 %v578
  %796 = vmatpush.bf16.msra.mxu0 %v577
  %797 = vmatpush.bf16.msra.mxu0 %v576
  %798 = vmatpush.bf16.msra.mxu0 %v575
  %799 = vmatpush.bf16.msra.mxu0 %v574
  %800 = vmatpush.bf16.msra.mxu0 %v573
  %801 = vmatpush.bf16.msra.mxu0 %v572
  %802 = vmatpush.bf16.msra.mxu0 %v571
  %803 = vmatmul.bf16.gmra.mxu0 %v73
  %v804 = vpop.f32.mrf.mxu0
  %v805 = vadd.f32 %v781, %v804
  %v806 = vpop.f32.mrf.mxu0
  %v807 = vadd.f32 %v783, %v806
  %808 = vmatmul.bf16.gmra.mxu0 %v82
  %v809 = vpop.f32.mrf.mxu0
  %v810 = vadd.f32 %v786, %v809
  %v811 = vpop.f32.mrf.mxu0
  %v812 = vadd.f32 %v788, %v811
  %813 = vmatmul.bf16.gmra.mxu0 %v91
  %v814 = vpop.f32.mrf.mxu0
  %v815 = vadd.f32 %v791, %v814
  %v816 = vpop.f32.mrf.mxu0
  %v817 = vadd.f32 %v793, %v816
  %818 = vdwg.mxu0
  %819 = vmatpush.bf16.msra.mxu0 %v586
  %820 = vmatpush.bf16.msra.mxu0 %v585
  %821 = vmatpush.bf16.msra.mxu0 %v584
  %822 = vmatpush.bf16.msra.mxu0 %v583
  %823 = vmatpush.bf16.msra.mxu0 %v582
  %824 = vmatpush.bf16.msra.mxu0 %v581
  %825 = vmatpush.bf16.msra.mxu0 %v580
  %826 = vmatpush.bf16.msra.mxu0 %v579
  %827 = vmatmul.bf16.gmra.mxu0 %v74
  %v828 = vpop.f32.mrf.mxu0
  %v829 = vadd.f32 %v805, %v828
  %v830 = vpop.f32.mrf.mxu0
  %v831 = vadd.f32 %v807, %v830
  %832 = vmatmul.bf16.gmra.mxu0 %v83
  %v833 = vpop.f32.mrf.mxu0
  %v834 = vadd.f32 %v810, %v833
  %v835 = vpop.f32.mrf.mxu0
  %v836 = vadd.f32 %v812, %v835
  %837 = vmatmul.bf16.gmra.mxu0 %v92
  %v838 = vpop.f32.mrf.mxu0
  %v839 = vadd.f32 %v815, %v838
  %v840 = vpop.f32.mrf.mxu0
  %v841 = vadd.f32 %v817, %v840
  %842 = vdwg.mxu0
  %843 = vmatpush.bf16.msra.mxu0 %v594
  %844 = vmatpush.bf16.msra.mxu0 %v593
  %845 = vmatpush.bf16.msra.mxu0 %v592
  %846 = vmatpush.bf16.msra.mxu0 %v591
  %847 = vmatpush.bf16.msra.mxu0 %v590
  %848 = vmatpush.bf16.msra.mxu0 %v589
  %849 = vmatpush.bf16.msra.mxu0 %v588
  %850 = vmatpush.bf16.msra.mxu0 %v587
  %851 = vmatmul.bf16.gmra.mxu0 %v75
  %v852 = vpop.f32.mrf.mxu0
  %v853 = vadd.f32 %v829, %v852
  %v854 = vpop.f32.mrf.mxu0
  %v855 = vadd.f32 %v831, %v854
  %856 = vmatmul.bf16.gmra.mxu0 %v84
  %v857 = vpop.f32.mrf.mxu0
  %v858 = vadd.f32 %v834, %v857
  %v859 = vpop.f32.mrf.mxu0
  %v860 = vadd.f32 %v836, %v859
  %861 = vmatmul.bf16.gmra.mxu0 %v93
  %v862 = vpop.f32.mrf.mxu0
  %v863 = vadd.f32 %v839, %v862
  %v864 = vpop.f32.mrf.mxu0
  %v865 = vadd.f32 %v841, %v864
  %866 = vdwg.mxu0
  %867 = vmatpush.bf16.msra.mxu0 %v602
  %868 = vmatpush.bf16.msra.mxu0 %v601
  %869 = vmatpush.bf16.msra.mxu0 %v600
  %870 = vmatpush.bf16.msra.mxu0 %v599
  %871 = vmatpush.bf16.msra.mxu0 %v598
  %872 = vmatpush.bf16.msra.mxu0 %v597
  %873 = vmatpush.bf16.msra.mxu0 %v596
  %874 = vmatpush.bf16.msra.mxu0 %v595
  %875 = vmatmul.bf16.gmra.mxu0 %v76
  %v876 = vpop.f32.mrf.mxu0
  %v877 = vadd.f32 %v853, %v876
  %v878 = vpop.f32.mrf.mxu0
  %v879 = vadd.f32 %v855, %v878
  %880 = vmatmul.bf16.gmra.mxu0 %v85
  %v881 = vpop.f32.mrf.mxu0
  %v882 = vadd.f32 %v858, %v881
  %v883 = vpop.f32.mrf.mxu0
  %v884 = vadd.f32 %v860, %v883
  %885 = vmatmul.bf16.gmra.mxu0 %v94
  %v886 = vpop.f32.mrf.mxu0
  %v887 = vadd.f32 %v863, %v886
  %v888 = vpop.f32.mrf.mxu0
  %v889 = vadd.f32 %v865, %v888
  %890 = vdwg.mxu0
  %v891 = vmax.f32 %v877, 0.0
  %v892 = vmax.f32 %v879, 0.0
  %v893 = vmax.f32 %v882, 0.0
  %v894 = vmax.f32 %v884, 0.0
  %v895 = vmax.f32 %v887, 0.0
  %v896 = vmax.f32 %v889, 0.0
  %897 = vst [vmem:[%s3] sm:$0xff] %v891
  %898 = vst [vmem:[%s3 + $0x8] sm:$0xff] %v892
  %899 = vst [vmem:[%s3 + $0x10] sm:$0xff] %v893
  %900 = vst [vmem:[%s3 + $0x18] sm:$0xff] %v894
  %901 = vst [vmem:[%s3 + $0x20] sm:$0xff] %v895
  %902 = vst [vmem:[%s3 + $0x28] sm:$0x3] %v896
  // Predicated region
  $region14: #{_lambda_.6} parent=0 // pred_check
    _
  $region15: #{_lambda_.6} parent=0 // pred_check_branch
    %904 = sbr.rel (0) target = $region17
  $region16: #{_lambda_.6} parent=0 // pred_region
    _
  $region17: #{_lambda_.6} parent=0 // pred_fallthru
    _
  // Predicated region
  $region18: #{_lambda_.6} parent=0 // pred_check
    _
  $region19: #{_lambda_.6} parent=0 // pred_check_branch
    %906 = sbr.rel (0) target = $region21
  $region20: #{_lambda_.6} parent=0 // pred_region
    _
  $region21: #{_lambda_.6} parent=0 // pred_fallthru
    _

// kernel: _lambda_.9
$region0: #{_lambda_.9}
  #allocation0 [shape = 'u32[]', space=smem, size = 0x4, offset = 0x4, fixed_abs, tag = 'smem constant byte address 0x4 - core index']
  #allocation1 [shape = 'u32[72,128]{1,0:T(1,128)}', space=vmem, size = 0x9000, scoped, tag = 'internal scratch']
  %s0 = inlined_call_operand.vmem [shape: f32[2,8,128], index: 0, kind: input, shape index: {}]
  %s1 = inlined_call_operand.vmem [shape: bf16[128,128], index: 1, kind: input, shape index: {}]
  %s2 = inlined_call_operand.hbm [shape: f32[1,128], index: 2, kind: input, shape index: {}]
  %s3 = inlined_call_operand.hbm [shape: f32[1,128], index: 3, kind: input, shape index: {}]
  %s4 = inlined_call_operand.hbm [shape: f32[1,128], index: 4, kind: input, shape index: {}]
  %s5 = inlined_call_operand.vmem [shape: bf16[128,128], index: 5, kind: input, shape index: {}]
  %s6 = inlined_call_operand.hbm [shape: f32[1,128], index: 6, kind: input, shape index: {}]
  %s7 = inlined_call_operand.vmem [shape: f32[2,8,128], index: 7, kind: output, shape index: {}]
  %s8 = sld [smem:[#allocation0]]
  $region77: #{_lambda_.9} parent=0
    _
  %s10 = ssub.s32 1, %s8
  %s11 = scalar_select 0, %s10, %s8
  $region1: #{_lambda_.9} parent=0
    #allocation2 [shape = 'u8[512]{0}', space=vmem, size = 0x400, scoped, tag = 'input window, operand 2, single buffered']
    #allocation3 [shape = 's32[2]{0}', space=sflag, size = 0x8, scoped, tag = 'scoped memory for _lambda_.9']
    #allocation4 [shape = 'u8[512]{0}', space=vmem, size = 0x400, scoped, tag = 'input window, operand 3, single buffered']
    #allocation5 [shape = 's32[1]{0}', space=sflag, size = 0x4, scoped, tag = 'scoped memory for _lambda_.9']
    #allocation6 [shape = 'u8[512]{0}', space=vmem, size = 0x400, scoped, tag = 'input window, operand 4, single buffered']
    #allocation7 [shape = 'u8[512]{0}', space=vmem, size = 0x400, scoped, tag = 'input window, operand 6, single buffered']
    #allocation8 [shape = 's32[1]{0}', space=sflag, size = 0x4, scoped, tag = 'scoped memory for _lambda_.9']
    %12 = vsyncpa [#allocation3], 0
    %13 = vsyncpa [#allocation5], 0
    %14 = vsyncpa [#allocation8], 0
    loop: start=0, step=1, limit=4
    $region2: #{_lambda_.9} parent=1 // loop_pre_header
      _
    $region3: #{_lambda_.9} parent=1 // loop_header
      %s16 = sphi 0, %s20
      %p17 = scmp.ge.s32.totalorder %s16, 4
      %s26 = sphi 0, %s28
      %s29 = sphi 0, %s26
      %s30 = sphi 0, %s29
      %s46 = sphi 0, %s30
      %s50 = sphi 0, %s50
      %s52 = sphi 0, %s50
      %s53 = sphi 0, %s52
      %s67 = sphi 0, %s53
      %s71 = sphi 0, %s71
      %s73 = sphi 0, %s71
      %s74 = sphi 0, %s73
      %s88 = sphi 0, %s74
      %s92 = sphi 0, %s92
      %s94 = sphi 0, %s92
      %s95 = sphi 0, %s94
      %s109 = sphi 0, %s95
      %s113 = sphi 0, %s113
      %s115 = sphi 0, %s113
      %s116 = sphi 0, %s115
      %s130 = sphi 0, %s116
      %s134 = sphi 0, %s134
      %s136 = sphi 0, %s134
      %s137 = sphi 0, %s136
      %s151 = sphi 0, %s137
      %s155 = sphi 0, %s155
      %s157 = sphi 0, %s155
      %s158 = sphi 0, %s157
      %s172 = sphi 0, %s158
      %s178 = sphi 0, %s180
      %s181 = sphi 0, %s178
      %s182 = sphi 0, %s181
      %s198 = sphi 0, %s182
    $region4: #{_lambda_.9} parent=1 // loop_header_branch
      %19 = sbr.rel (%p17) target = $region8
    $region5: #{_lambda_.9} parent=1 // loop_body
      %s21 = ssub.s32 %s16, 1
      %s22 = ssub.s32 %s16, 2
      %s23 = sadd.s32 %s16, 1
      %s24 = ssub.s32 %s16, %s23
      %p25 = scmp.eq.s32.totalorder %s24, 0
      %s27 = sadd.s32 %s26, 1
      %s28 = scalar_select %p25, %s26, %s27
      %p31 = pneg %p25
      %p32 = scmp.eq.s32.totalorder %s16, 1
      %p33 = por %p31, %p32
      %p34 = scmp.ne.s32.totalorder %s26, %s29
      %p35 = scmp.eq.s32.totalorder %s16, 0
      %p36 = por %p34, %p35
      %p37 = scmp.ne.s32.totalorder %s26, %s29
      %p38 = scmp.eq.s32.totalorder %s21, 1
      %p39 = por %p37, %p38
      %p40 = scmp.ne.s32.totalorder %s29, %s30
      %p41 = scmp.eq.s32.totalorder %s21, 0
      %p42 = por %p40, %p41
      %p43 = scmp.ne.s32.totalorder %s29, %s30
      %p44 = scmp.eq.s32.totalorder %s22, 1
      %p45 = por %p43, %p44
      %p47 = scmp.ne.s32.totalorder %s30, %s46
      %p48 = scmp.eq.s32.totalorder %s22, 0
      %p49 = por %p47, %p48
      %s51 = sadd.s32 %s50, 1
      %p54 = scmp.eq.s32.totalorder %s16, 1
      %p55 = scmp.ne.s32.totalorder %s50, %s52
      %p56 = scmp.eq.s32.totalorder %s16, 0
      %p57 = por %p55, %p56
      %p58 = scmp.ne.s32.totalorder %s50, %s52
      %p59 = scmp.eq.s32.totalorder %s21, 1
      %p60 = por %p58, %p59
      %p61 = scmp.ne.s32.totalorder %s52, %s53
      %p62 = scmp.eq.s32.totalorder %s21, 0
      %p63 = por %p61, %p62
      %p64 = scmp.ne.s32.totalorder %s52, %s53
      %p65 = scmp.eq.s32.totalorder %s22, 1
      %p66 = por %p64, %p65
      %p68 = scmp.ne.s32.totalorder %s53, %s67
      %p69 = scmp.eq.s32.totalorder %s22, 0
      %p70 = por %p68, %p69
      %s72 = sadd.s32 %s71, 1
      %p75 = scmp.eq.s32.totalorder %s16, 1
      %p76 = scmp.ne.s32.totalorder %s71, %s73
      %p77 = scmp.eq.s32.totalorder %s16, 0
      %p78 = por %p76, %p77
      %p79 = scmp.ne.s32.totalorder %s71, %s73
      %p80 = scmp.eq.s32.totalorder %s21, 1
      %p81 = por %p79, %p80
      %p82 = scmp.ne.s32.totalorder %s73, %s74
      %p83 = scmp.eq.s32.totalorder %s21, 0
      %p84 = por %p82, %p83
      %p85 = scmp.ne.s32.totalorder %s73, %s74
      %p86 = scmp.eq.s32.totalorder %s22, 1
      %p87 = por %p85, %p86
      %p89 = scmp.ne.s32.totalorder %s74, %s88
      %p90 = scmp.eq.s32.totalorder %s22, 0
      %p91 = por %p89, %p90
      %s93 = sadd.s32 %s92, 1
      %p96 = scmp.eq.s32.totalorder %s16, 1
      %p97 = scmp.ne.s32.totalorder %s92, %s94
      %p98 = scmp.eq.s32.totalorder %s16, 0
      %p99 = por %p97, %p98
      %p100 = scmp.ne.s32.totalorder %s92, %s94
      %p101 = scmp.eq.s32.totalorder %s21, 1
      %p102 = por %p100, %p101
      %p103 = scmp.ne.s32.totalorder %s94, %s95
      %p104 = scmp.eq.s32.totalorder %s21, 0
      %p105 = por %p103, %p104
      %p106 = scmp.ne.s32.totalorder %s94, %s95
      %p107 = scmp.eq.s32.totalorder %s22, 1
      %p108 = por %p106, %p107
      %p110 = scmp.ne.s32.totalorder %s95, %s109
      %p111 = scmp.eq.s32.totalorder %s22, 0
      %p112 = por %p110, %p111
      %s114 = sadd.s32 %s113, 1
      %p117 = scmp.eq.s32.totalorder %s16, 1
      %p118 = scmp.ne.s32.totalorder %s113, %s115
      %p119 = scmp.eq.s32.totalorder %s16, 0
      %p120 = por %p118, %p119
      %p121 = scmp.ne.s32.totalorder %s113, %s115
      %p122 = scmp.eq.s32.totalorder %s21, 1
      %p123 = por %p121, %p122
      %p124 = scmp.ne.s32.totalorder %s115, %s116
      %p125 = scmp.eq.s32.totalorder %s21, 0
      %p126 = por %p124, %p125
      %p127 = scmp.ne.s32.totalorder %s115, %s116
      %p128 = scmp.eq.s32.totalorder %s22, 1
      %p129 = por %p127, %p128
      %p131 = scmp.ne.s32.totalorder %s116, %s130
      %p132 = scmp.eq.s32.totalorder %s22, 0
      %p133 = por %p131, %p132
      %s135 = sadd.s32 %s134, 1
      %p138 = scmp.eq.s32.totalorder %s16, 1
      %p139 = scmp.ne.s32.totalorder %s134, %s136
      %p140 = scmp.eq.s32.totalorder %s16, 0
      %p141 = por %p139, %p140
      %p142 = scmp.ne.s32.totalorder %s134, %s136
      %p143 = scmp.eq.s32.totalorder %s21, 1
      %p144 = por %p142, %p143
      %p145 = scmp.ne.s32.totalorder %s136, %s137
      %p146 = scmp.eq.s32.totalorder %s21, 0
      %p147 = por %p145, %p146
      %p148 = scmp.ne.s32.totalorder %s136, %s137
      %p149 = scmp.eq.s32.totalorder %s22, 1
      %p150 = por %p148, %p149
      %p152 = scmp.ne.s32.totalorder %s137, %s151
      %p153 = scmp.eq.s32.totalorder %s22, 0
      %p154 = por %p152, %p153
      %s156 = sadd.s32 %s155, 1
      %p159 = scmp.eq.s32.totalorder %s16, 1
      %p160 = scmp.ne.s32.totalorder %s155, %s157
      %p161 = scmp.eq.s32.totalorder %s16, 0
      %p162 = por %p160, %p161
      %p163 = scmp.ne.s32.totalorder %s155, %s157
      %p164 = scmp.eq.s32.totalorder %s21, 1
      %p165 = por %p163, %p164
      %p166 = scmp.ne.s32.totalorder %s157, %s158
      %p167 = scmp.eq.s32.totalorder %s21, 0
      %p168 = por %p166, %p167
      %p169 = scmp.ne.s32.totalorder %s157, %s158
      %p170 = scmp.eq.s32.totalorder %s22, 1
      %p171 = por %p169, %p170
      %p173 = scmp.ne.s32.totalorder %s158, %s172
      %p174 = scmp.eq.s32.totalorder %s22, 0
      %p175 = por %p173, %p174
      %s176 = ssub.s32 %s16, %s23
      %p177 = scmp.eq.s32.totalorder %s176, 0
      %s179 = sadd.s32 %s178, 1
      %s180 = scalar_select %p177, %s178, %s179
      %p183 = pneg %p177
      %p184 = scmp.eq.s32.totalorder %s16, 1
      %p185 = por %p183, %p184
      %p186 = scmp.ne.s32.totalorder %s178, %s181
      %p187 = scmp.eq.s32.totalorder %s16, 0
      %p188 = por %p186, %p187
      %p189 = scmp.ne.s32.totalorder %s178, %s181
      %p190 = scmp.eq.s32.totalorder %s21, 1
      %p191 = por %p189, %p190
      %p192 = scmp.ne.s32.totalorder %s181, %s182
      %p193 = scmp.eq.s32.totalorder %s21, 0
      %p194 = por %p192, %p193
      %p195 = scmp.ne.s32.totalorder %s181, %s182
      %p196 = scmp.eq.s32.totalorder %s22, 1
      %p197 = por %p195, %p196
      %p199 = scmp.ne.s32.totalorder %s182, %s198
      %p200 = scmp.eq.s32.totalorder %s22, 0
      %p201 = por %p199, %p200
      %p202 = scmp.le.s32.totalorder 1, %s16
      %p203 = scmp.lt.s32.totalorder %s16, 3
      %p204 = pnand %p202, %p203
      %p205 = pneg %p204
      // Predicated region
      $region9: #{_lambda_.9} parent=5 // pred_check
        _
      $region10: #{_lambda_.9} parent=5 // pred_check_branch
        %207 = sbr.rel (%p204) target = $region12
      $region11: #{_lambda_.9} parent=5 // pred_region
        %s208 = ssub.s32 %s16, 1
        // Predicated region
        $region13: #{_lambda_.9} parent=11 // pred_check
          %p209 = pneg %p63
        $region14: #{_lambda_.9} parent=11 // pred_check_branch
          %211 = sbr.rel (%p209) target = $region16
        $region15: #{_lambda_.9} parent=11 // pred_region
          _
        $region16: #{_lambda_.9} parent=11 // pred_fallthru
          _
        // Predicated region
        $region17: #{_lambda_.9} parent=11 // pred_check
          %p212 = pneg %p84
        $region18: #{_lambda_.9} parent=11 // pred_check_branch
          %214 = sbr.rel (%p212) target = $region20
        $region19: #{_lambda_.9} parent=11 // pred_region
          %216 = vsyncadd [#allocation3], 0
          %s218 = sshll.u32 %s2, 4
          %s219 = int_to_ptr.hbm [resolvable:$true] %s218
          %s220 = sshll.u32 [#allocation2], 4
          %s221 = int_to_ptr.vmem [resolvable:$true] %s220
          %223 = dma.hbm_to_vmem [thread:$0]  %s219, 16, %s221, [#allocation3]
        $region20: #{_lambda_.9} parent=11 // pred_fallthru
          _
        // Predicated region
        $region21: #{_lambda_.9} parent=11 // pred_check
          %p224 = pneg %p105
        $region22: #{_lambda_.9} parent=11 // pred_check_branch
          %226 = sbr.rel (%p224) target = $region24
        $region23: #{_lambda_.9} parent=11 // pred_region
          %228 = vsyncadd [#allocation5], 0
          %s230 = sshll.u32 %s3, 4
          %s231 = int_to_ptr.hbm [resolvable:$true] %s230
          %s232 = sshll.u32 [#allocation4], 4
          %s233 = int_to_ptr.vmem [resolvable:$true] %s232
          %235 = dma.hbm_to_vmem [thread:$0]  %s231, 16, %s233, [#allocation5]
        $region24: #{_lambda_.9} parent=11 // pred_fallthru
          _
        // Predicated region
        $region25: #{_lambda_.9} parent=11 // pred_check
          %p236 = pneg %p126
        $region26: #{_lambda_.9} parent=11 // pred_check_branch
          %238 = sbr.rel (%p236) target = $region28
        $region27: #{_lambda_.9} parent=11 // pred_region
          %240 = vsyncadd [#allocation5], 0
          %s242 = sshll.u32 %s4, 4
          %s243 = int_to_ptr.hbm [resolvable:$true] %s242
          %s244 = sshll.u32 [#allocation6], 4
          %s245 = int_to_ptr.vmem [resolvable:$true] %s244
          %247 = dma.hbm_to_vmem [thread:$0]  %s243, 16, %s245, [#allocation5]
        $region28: #{_lambda_.9} parent=11 // pred_fallthru
          _
        // Predicated region
        $region29: #{_lambda_.9} parent=11 // pred_check
          %p248 = pneg %p147
        $region30: #{_lambda_.9} parent=11 // pred_check_branch
          %250 = sbr.rel (%p248) target = $region32
        $region31: #{_lambda_.9} parent=11 // pred_region
          _
        $region32: #{_lambda_.9} parent=11 // pred_fallthru
          _
        // Predicated region
        $region33: #{_lambda_.9} parent=11 // pred_check
          %p251 = pneg %p168
        $region34: #{_lambda_.9} parent=11 // pred_check_branch
          %253 = sbr.rel (%p251) target = $region36
        $region35: #{_lambda_.9} parent=11 // pred_region
          %255 = vsyncadd [#allocation8], 0
          %s257 = sshll.u32 %s6, 4
          %s258 = int_to_ptr.hbm [resolvable:$true] %s257
          %s259 = sshll.u32 [#allocation7], 4
          %s260 = int_to_ptr.vmem [resolvable:$true] %s259
          %262 = dma.hbm_to_vmem [thread:$0]  %s258, 16, %s260, [#allocation8]
        $region36: #{_lambda_.9} parent=11 // pred_fallthru
          _
      $region12: #{_lambda_.9} parent=5 // pred_fallthru
        _
      %p263 = scmp.lt.s32.totalorder %s16, 2
      // Predicated region
      $region37: #{_lambda_.9} parent=5 // pred_check
        %p264 = pneg %p263
      $region38: #{_lambda_.9} parent=5 // pred_check_branch
        %266 = sbr.rel (%p264) target = $region40
      $region39: #{_lambda_.9} parent=5 // pred_region
        // Predicated region
        $region41: #{_lambda_.9} parent=39 // pred_check
          %p267 = pneg %p36
        $region42: #{_lambda_.9} parent=39 // pred_check_branch
          %269 = sbr.rel (%p267) target = $region44
        $region43: #{_lambda_.9} parent=39 // pred_region
          %p270 = scmp.lt.s32.totalorder %s16, 1
          %s271 = scalar_select %p270, %s16, 1
          %s272 = smul.addr %s271, 8
          %s273 = scalar_lea.vmem %s0, %s272
        $region44: #{_lambda_.9} parent=39 // pred_fallthru
          _
      $region40: #{_lambda_.9} parent=5 // pred_fallthru
        _
      %p274 = scmp.le.s32.totalorder 1, %s16
      %p275 = scmp.lt.s32.totalorder %s16, 3
      %p276 = pnand %p274, %p275
      %p277 = pneg %p276
      // Predicated region
      $region45: #{_lambda_.9} parent=5 // pred_check
        _
      $region46: #{_lambda_.9} parent=5 // pred_check_branch
        %279 = sbr.rel (%p276) target = $region48
      $region47: #{_lambda_.9} parent=5 // pred_region
        %s280 = ssub.s32 %s16, 1
        // Predicated region
        $region49: #{_lambda_.9} parent=47 // pred_check
          %p281 = pneg %p84
        $region50: #{_lambda_.9} parent=47 // pred_check_branch
          %283 = sbr.rel (%p281) target = $region52
        $region51: #{_lambda_.9} parent=47 // pred_region
          %285 = dma.done [#allocation3], 16
        $region52: #{_lambda_.9} parent=47 // pred_fallthru
          _
        // Predicated region
        $region53: #{_lambda_.9} parent=47 // pred_check
          %p286 = pneg %p105
        $region54: #{_lambda_.9} parent=47 // pred_check_branch
          %288 = sbr.rel (%p286) target = $region56
        $region55: #{_lambda_.9} parent=47 // pred_region
          %290 = dma.done [#allocation5], 16
        $region56: #{_lambda_.9} parent=47 // pred_fallthru
          _
        // Predicated region
        $region57: #{_lambda_.9} parent=47 // pred_check
          %p291 = pneg %p126
        $region58: #{_lambda_.9} parent=47 // pred_check_branch
          %293 = sbr.rel (%p291) target = $region60
        $region59: #{_lambda_.9} parent=47 // pred_region
          %295 = dma.done [#allocation5], 16
        $region60: #{_lambda_.9} parent=47 // pred_fallthru
          _
        // Predicated region
        $region61: #{_lambda_.9} parent=47 // pred_check
          %p296 = pneg %p168
        $region62: #{_lambda_.9} parent=47 // pred_check_branch
          %298 = sbr.rel (%p296) target = $region64
        $region63: #{_lambda_.9} parent=47 // pred_region
          %300 = dma.done [#allocation8], 16
        $region64: #{_lambda_.9} parent=47 // pred_fallthru
          _
        %p301 = scmp.lt.s32.totalorder %s21, 1
        %s302 = scalar_select %p301, %s21, 1
        %s303 = smul.addr %s302, 8
        %s304 = scalar_lea.vmem %s0, %s303
        %p305 = pneg %p42
        %p306 = pneg %p39
        %p307 = pneg %p63
        %p308 = pneg %p60
        %p309 = pneg %p84
        %p310 = pneg %p81
        %p311 = pneg %p105
        %p312 = pneg %p102
        %p313 = pneg %p126
        %p314 = pneg %p123
        %p315 = pneg %p147
        %p316 = pneg %p144
        %p317 = pneg %p168
        %p318 = pneg %p165
        %p319 = pneg %p194
        %p320 = pneg %p191
        %p321 = scmp.lt.s32.totalorder %s21, 1
        %s322 = scalar_select %p321, %s21, 1
        %s323 = smul.addr %s322, 8
        %s324 = scalar_lea.vmem %s7, %s323
        %p325 = scmp.lt.s32.totalorder %s21, 1
        %s326 = scalar_select %p325, %s21, 1
        %s327 = smul.addr %s326, 8
        %s328 = scalar_lea.vmem %s0, %s327
        %p329 = scmp.lt.s32.totalorder %s21, 1
        %s330 = scalar_select %p329, %s21, 1
        %s331 = smul.addr %s330, 8
        %s332 = scalar_lea.vmem %s7, %s331
        %v333 = vld [vmem:[%s328] sm:$0xff]
        %v334 = vpack.c.bf16 %v333, %v333
        %v335 = vld [vmem:[%s1] sm:$0xf]
        %v336 = vld [vmem:[%s1 + $0x4] sm:$0xf]
        %v337 = vld [vmem:[%s1 + $0x8] sm:$0xf]
        %v338 = vld [vmem:[%s1 + $0xc] sm:$0xf]
        %v339 = vld [vmem:[%s1 + $0x10] sm:$0xf]
        %v340 = vld [vmem:[%s1 + $0x14] sm:$0xf]
        %v341 = vld [vmem:[%s1 + $0x18] sm:$0xf]
        %v342 = vld [vmem:[%s1 + $0x1c] sm:$0xf]
        %v343 = vld [vmem:[%s1 + $0x20] sm:$0xf]
        %v344 = vld [vmem:[%s1 + $0x24] sm:$0xf]
        %v345 = vld [vmem:[%s1 + $0x28] sm:$0xf]
        %v346 = vld [vmem:[%s1 + $0x2c] sm:$0xf]
        %v347 = vld [vmem:[%s1 + $0x30] sm:$0xf]
        %v348 = vld [vmem:[%s1 + $0x34] sm:$0xf]
        %v349 = vld [vmem:[%s1 + $0x38] sm:$0xf]
        %v350 = vld [vmem:[%s1 + $0x3c] sm:$0xf]
        %v351 = vld [vmem:[#allocation2] sm:$0x1]
        %v353 = vperm.slane %v351, 0
        %v371 = vunpack.c.l.b16 %v335
        %v372 = vunpack.c.l.b16 %v336
        %v373 = vunpack.c.l.b16 %v337
        %v374 = vunpack.c.l.b16 %v338
        %v375 = vunpack.c.l.b16 %v339
        %v376 = vunpack.c.l.b16 %v340
        %v377 = vunpack.c.l.b16 %v341
        %v378 = vunpack.c.l.b16 %v342
        %v379 = vunpack.c.l.b16 %v343
        %v380 = vunpack.c.l.b16 %v344
        %v381 = vunpack.c.l.b16 %v345
        %v382 = vunpack.c.l.b16 %v346
        %v383 = vunpack.c.l.b16 %v347
        %v384 = vunpack.c.l.b16 %v348
        %v385 = vunpack.c.l.b16 %v349
        %v386 = vunpack.c.l.b16 %v350
        %v387 = vpack.c.b16 %v372, %v371
        %v388 = vpack.c.b16 %v374, %v373
        %v389 = vpack.c.b16 %v376, %v375
        %v390 = vpack.c.b16 %v378, %v377
        %v391 = vpack.c.b16 %v380, %v379
        %v392 = vpack.c.b16 %v382, %v381
        %v393 = vpack.c.b16 %v384, %v383
        %v394 = vpack.c.b16 %v386, %v385
        %403 = vmatpush.bf16.msra.mxu0 %v394
        %404 = vmatpush.bf16.msra.mxu0 %v393
        %405 = vmatpush.bf16.msra.mxu0 %v392
        %406 = vmatpush.bf16.msra.mxu0 %v391
        %407 = vmatpush.bf16.msra.mxu0 %v390
        %408 = vmatpush.bf16.msra.mxu0 %v389
        %409 = vmatpush.bf16.msra.mxu0 %v388
        %410 = vmatpush.bf16.msra.mxu0 %v387
        %411 = vmatmul.bf16.gmra.mxu0 %v334
        %v412 = vpop.f32.mrf.mxu0
        %v413 = vadd.f32 %v353, %v412
        %v414 = vpop.f32.mrf.mxu0
        %415 = vdwg.mxu0
        %v416 = vmax.f32 %v413, 0.0
        %417 = vadd.xlane.f32.xlu0 %v416
        %v418 = vpop.xlane.xlu0 %417
        %v419 = vmul.f32 %v418, 0.015625
        %v420 = vmul.f32 %v416, %v416
        %421 = vadd.xlane.f32.xlu0 %v420
        %v422 = vpop.xlane.xlu0 %421
        %v423 = vmul.f32 %v422, 0.015625
        %v424 = vmul.f32 %v419, %v419
        %v425 = vsub.f32 %v423, %v424
        %v426 = vsub.f32 %v416, %v419
        %v427 = vadd.f32 %v425, 1e-05
        %v428 = vrsqrt.pop %v427
        %v429 = vmul.f32 %v428, %v427
        %v430 = vmul.f32 %v429, %v428
        %v431 = vmul.f32 0.5, %v430
        %v432 = vsub.f32 1.5, %v431
        %v433 = vmul.f32 %v428, %v432
        %vm434 = vweird.f32 %v427
        %vm435 = vweird.f32 %v428
        %vm436 = vmor %vm434, %vm435
        %v437 = vsel %vm436, %v428, %v433
        %v438 = vmul.f32 %v426, %v437
        %v439 = vld [vmem:[#allocation4] sm:$0x1]
        %v441 = vperm.slane %v439, 0
        %v443 = vmul.f32 %v438, %v441
        %v444 = vld [vmem:[#allocation6] sm:$0x1]
        %v446 = vperm.slane %v444, 0
        %v448 = vadd.f32 %v443, %v446
        %v449 = vpack.c.bf16 %v448, %v448
        %v450 = vld [vmem:[%s5] sm:$0xf]
        %v451 = vld [vmem:[%s5 + $0x4] sm:$0xf]
        %v452 = vld [vmem:[%s5 + $0x8] sm:$0xf]
        %v453 = vld [vmem:[%s5 + $0xc] sm:$0xf]
        %v454 = vld [vmem:[%s5 + $0x10] sm:$0xf]
        %v455 = vld [vmem:[%s5 + $0x14] sm:$0xf]
        %v456 = vld [vmem:[%s5 + $0x18] sm:$0xf]
        %v457 = vld [vmem:[%s5 + $0x1c] sm:$0xf]
        %v458 = vld [vmem:[%s5 + $0x20] sm:$0xf]
        %v459 = vld [vmem:[%s5 + $0x24] sm:$0xf]
        %v460 = vld [vmem:[%s5 + $0x28] sm:$0xf]
        %v461 = vld [vmem:[%s5 + $0x2c] sm:$0xf]
        %v462 = vld [vmem:[%s5 + $0x30] sm:$0xf]
        %v463 = vld [vmem:[%s5 + $0x34] sm:$0xf]
        %v464 = vld [vmem:[%s5 + $0x38] sm:$0xf]
        %v465 = vld [vmem:[%s5 + $0x3c] sm:$0xf]
        %v466 = vld [vmem:[#allocation7] sm:$0x1]
        %v468 = vperm.slane %v466, 0
        %v486 = vunpack.c.l.b16 %v450
        %v487 = vunpack.c.l.b16 %v451
        %v488 = vunpack.c.l.b16 %v452
        %v489 = vunpack.c.l.b16 %v453
        %v490 = vunpack.c.l.b16 %v454
        %v491 = vunpack.c.l.b16 %v455
        %v492 = vunpack.c.l.b16 %v456
        %v493 = vunpack.c.l.b16 %v457
        %v494 = vunpack.c.l.b16 %v458
        %v495 = vunpack.c.l.b16 %v459
        %v496 = vunpack.c.l.b16 %v460
        %v497 = vunpack.c.l.b16 %v461
        %v498 = vunpack.c.l.b16 %v462
        %v499 = vunpack.c.l.b16 %v463
        %v500 = vunpack.c.l.b16 %v464
        %v501 = vunpack.c.l.b16 %v465
        %v502 = vpack.c.b16 %v487, %v486
        %v503 = vpack.c.b16 %v489, %v488
        %v504 = vpack.c.b16 %v491, %v490
        %v505 = vpack.c.b16 %v493, %v492
        %v506 = vpack.c.b16 %v495, %v494
        %v507 = vpack.c.b16 %v497, %v496
        %v508 = vpack.c.b16 %v499, %v498
        %v509 = vpack.c.b16 %v501, %v500
        %518 = vmatpush.bf16.msra.mxu0 %v509
        %519 = vmatpush.bf16.msra.mxu0 %v508
        %520 = vmatpush.bf16.msra.mxu0 %v507
        %521 = vmatpush.bf16.msra.mxu0 %v506
        %522 = vmatpush.bf16.msra.mxu0 %v505
        %523 = vmatpush.bf16.msra.mxu0 %v504
        %524 = vmatpush.bf16.msra.mxu0 %v503
        %525 = vmatpush.bf16.msra.mxu0 %v502
        %526 = vmatmul.bf16.gmra.mxu0 %v449
        %v527 = vpop.f32.mrf.mxu0
        %v528 = vadd.f32 %v468, %v527
        %v529 = vpop.f32.mrf.mxu0
        %530 = vdwg.mxu0
        %531 = vmax.xlane.f32.xlu0 %v528
        %v532 = vpop.xlane.xlu0 %531
        %v533 = vsub.f32 %v528, %v532
        %v534 = vmul.f32 %v533, 1.442695
        %v535 = vpow.pop %v534
        %536 = vadd.xlane.f32.xlu0 %v535
        %v537 = vpop.xlane.xlu0 %536
        %v538 = vlog2.pop %v537
        %v539 = vmul.f32 %v538, 0.6931472
        %v540 = vsub.f32 %v533, %v539
        %541 = vst [vmem:[%s332] sm:$0xff] %v540
        %p542 = scmp.lt.s32.totalorder %s21, 1
        %s543 = scalar_select %p542, %s21, 1
        %s544 = smul.addr %s543, 8
        %s545 = scalar_lea.vmem %s7, %s544
        // Predicated region
        $region65: #{_lambda_.9} parent=47 // pred_check
          %p546 = pneg %p191
        $region66: #{_lambda_.9} parent=47 // pred_check_branch
          %548 = sbr.rel (%p546) target = $region68
        $region67: #{_lambda_.9} parent=47 // pred_region
          _
        $region68: #{_lambda_.9} parent=47 // pred_fallthru
          _
      $region48: #{_lambda_.9} parent=5 // pred_fallthru
        _
      %p549 = scmp.le.s32.totalorder 2, %s16
      // Predicated region
      $region69: #{_lambda_.9} parent=5 // pred_check
        %p550 = pneg %p549
      $region70: #{_lambda_.9} parent=5 // pred_check_branch
        %552 = sbr.rel (%p550) target = $region72
      $region71: #{_lambda_.9} parent=5 // pred_region
        %s553 = ssub.s32 %s16, 2
        // Predicated region
        $region73: #{_lambda_.9} parent=71 // pred_check
          %p554 = pneg %p197
        $region74: #{_lambda_.9} parent=71 // pred_check_branch
          %556 = sbr.rel (%p554) target = $region76
        $region75: #{_lambda_.9} parent=71 // pred_region
          %p557 = scmp.lt.s32.totalorder %s22, 1
          %s558 = scalar_select %p557, %s22, 1
          %s559 = smul.addr %s558, 8
          %s560 = scalar_lea.vmem %s7, %s559
        $region76: #{_lambda_.9} parent=71 // pred_fallthru
          _
      $region72: #{_lambda_.9} parent=5 // pred_fallthru
        _
    $region6: #{_lambda_.9} parent=1 // loop_footer
      %s20 = sadd.s32 1, %s16
    $region7: #{_lambda_.9} parent=1 // loop_footer_branch
      %15 = sbr.rel target = $region3
    $region8: #{_lambda_.9} parent=1 // loop_exit
      _
    %561 = vsyncpa [#allocation3], 1
    %s562 = scalar_lea.sflag [#allocation3], 1
    %563 = vsyncpa %s562, 1
    %564 = vsyncpa [#allocation5], 1
    %565 = vsyncpa [#allocation8], 1

// kernel: _lambda_.8
$region0: #{_lambda_.8}
  #allocation0 [shape = 'u32[]', space=smem, size = 0x4, offset = 0x4, fixed_abs, tag = 'smem constant byte address 0x4 - core index']
  #allocation1 [shape = 'u32[72,128]{1,0:T(1,128)}', space=vmem, size = 0x9000, scoped, tag = 'internal scratch']
  %s0 = inlined_call_operand.smem [shape: u32[40], index: -1, kind: input, shape index: {}]
  %s1 = sld [smem:[%s0]]
  %s2 = scalar_lea.smem %s0, 1
  %s3 = sld [smem:[%s2]]
  %s4 = scalar_lea.smem %s0, 2
  %s5 = sld [smem:[%s4]]
  %s6 = scalar_lea.smem %s0, 3
  %s7 = sld [smem:[%s6]]
  %s8 = scalar_lea.smem %s0, 4
  %s9 = sld [smem:[%s8]]
  %s10 = scalar_lea.smem %s0, 5
  %s11 = sld [smem:[%s10]]
  %s12 = scalar_lea.smem %s0, 6
  %s13 = sld [smem:[%s12]]
  %s14 = scalar_lea.smem %s0, 7
  %s15 = sld [smem:[%s14]]
  %s16 = scalar_lea.smem %s0, 8
  %s17 = sld [smem:[%s16]]
  %s18 = scalar_lea.smem %s0, 9
  %s19 = sld [smem:[%s18]]
  %s20 = scalar_lea.smem %s0, 10
  %s21 = sld [smem:[%s20]]
  %s22 = scalar_lea.smem %s0, 11
  %s23 = sld [smem:[%s22]]
  %s24 = scalar_lea.smem %s0, 12
  %s25 = sld [smem:[%s24]]
  %s26 = scalar_lea.smem %s0, 13
  %s27 = sld [smem:[%s26]]
  %s28 = scalar_lea.smem %s0, 14
  %s29 = sld [smem:[%s28]]
  %s30 = scalar_lea.smem %s0, 15
  %s31 = sld [smem:[%s30]]
  %s32 = scalar_lea.smem %s0, 16
  %s33 = sld [smem:[%s32]]
  %s34 = scalar_lea.smem %s0, 17
  %s35 = sld [smem:[%s34]]
  %s36 = scalar_lea.smem %s0, 18
  %s37 = sld [smem:[%s36]]
  %s38 = scalar_lea.smem %s0, 19
  %s39 = sld [smem:[%s38]]
  %s40 = scalar_lea.smem %s0, 20
  %s41 = sld [smem:[%s40]]
  %s42 = scalar_lea.smem %s0, 21
  %s43 = sld [smem:[%s42]]
  %s44 = scalar_lea.smem %s0, 22
  %s45 = sld [smem:[%s44]]
  %s46 = scalar_lea.smem %s0, 23
  %s47 = sld [smem:[%s46]]
  %s48 = scalar_lea.smem %s0, 24
  %s49 = sld [smem:[%s48]]
  %s50 = scalar_lea.smem %s0, 25
  %s51 = sld [smem:[%s50]]
  %s52 = scalar_lea.smem %s0, 26
  %s53 = sld [smem:[%s52]]
  %s54 = scalar_lea.smem %s0, 27
  %s55 = sld [smem:[%s54]]
  %s56 = scalar_lea.smem %s0, 28
  %s57 = sld [smem:[%s56]]
  %s58 = scalar_lea.smem %s0, 29
  %s59 = sld [smem:[%s58]]
  %s60 = scalar_lea.smem %s0, 30
  %s61 = sld [smem:[%s60]]
  %s62 = scalar_lea.smem %s0, 31
  %s63 = sld [smem:[%s62]]
  %s64 = scalar_lea.smem %s0, 32
  %s65 = sld [smem:[%s64]]
  %s66 = scalar_lea.smem %s0, 33
  %s67 = sld [smem:[%s66]]
  %s68 = scalar_lea.smem %s0, 34
  %s69 = sld [smem:[%s68]]
  %s70 = scalar_lea.smem %s0, 35
  %s71 = sld [smem:[%s70]]
  %s72 = scalar_lea.smem %s0, 36
  %s73 = sld [smem:[%s72]]
  %s74 = scalar_lea.smem %s0, 37
  %s75 = sld [smem:[%s74]]
  %s76 = scalar_lea.smem %s0, 38
  %s77 = sld [smem:[%s76]]
  %s78 = scalar_lea.smem %s0, 39
  %s79 = sld [smem:[%s78]]
  %s80 = sld [smem:[#allocation0]]
  $region201: #{_lambda_.8} parent=0
    _
  %s82 = ssub.s32 1, %s80
  %s83 = scalar_select 0, %s82, %s80
  $region1: #{_lambda_.8} parent=0
    #allocation2 [shape = 'u8[1024]{0}', space=vmem, size = 0x400, scoped, tag = 'input window, operand 37']
    #allocation3 [shape = 's32[2]{0}', space=sflag, size = 0x8, scoped, tag = 'scoped memory for _lambda_.8']
    #allocation4 [shape = 'u8[1024]{0}', space=vmem, size = 0x400, scoped, tag = 'input window, operand 38']
    #allocation5 [shape = 's32[2]{0}', space=sflag, size = 0x8, scoped, tag = 'scoped memory for _lambda_.8']
    %84 = vsyncpa [#allocation3], 0
    %s85 = scalar_lea.sflag [#allocation3], 1
    %86 = vsyncpa %s85, 0
    %87 = vsyncpa [#allocation5], 0
    %s88 = scalar_lea.sflag [#allocation5], 1
    %89 = vsyncpa %s88, 0
    loop: start=0, step=1, limit=6
    $region2: #{_lambda_.8} parent=1 // loop_pre_header
      _
    $region3: #{_lambda_.8} parent=1 // loop_header
      %s91 = sphi 0, %s95
      %p92 = scmp.ge.s32.totalorder %s91, 6
      %s98 = sphi 0, %s110
      %s99 = sphi 0, %s106
      %s100 = sphi 0, %s98
      %s101 = sphi 0, %s99
      %s102 = sphi 0, %s100
      %s103 = sphi 0, %s101
      %s113 = sphi 0, %s115
      %s116 = sphi 0, %s113
      %s117 = sphi 0, %s116
      %s133 = sphi 0, %s117
      %s139 = sphi 0, %s141
      %s142 = sphi 0, %s139
      %s143 = sphi 0, %s142
      %s159 = sphi 0, %s143
      %s165 = sphi 0, %s167
      %s168 = sphi 0, %s165
      %s169 = sphi 0, %s168
      %s185 = sphi 0, %s169
      %s191 = sphi 0, %s193
      %s194 = sphi 0, %s191
      %s195 = sphi 0, %s194
      %s211 = sphi 0, %s195
      %s217 = sphi 0, %s219
      %s220 = sphi 0, %s217
      %s221 = sphi 0, %s220
      %s237 = sphi 0, %s221
      %s243 = sphi 0, %s245
      %s246 = sphi 0, %s243
      %s247 = sphi 0, %s246
      %s263 = sphi 0, %s247
      %s269 = sphi 0, %s271
      %s272 = sphi 0, %s269
      %s273 = sphi 0, %s272
      %s289 = sphi 0, %s273
      %s295 = sphi 0, %s297
      %s298 = sphi 0, %s295
      %s299 = sphi 0, %s298
      %s315 = sphi 0, %s299
      %s321 = sphi 0, %s323
      %s324 = sphi 0, %s321
      %s325 = sphi 0, %s324
      %s341 = sphi 0, %s325
      %s347 = sphi 0, %s349
      %s350 = sphi 0, %s347
      %s351 = sphi 0, %s350
      %s367 = sphi 0, %s351
      %s373 = sphi 0, %s375
      %s376 = sphi 0, %s373
      %s377 = sphi 0, %s376
      %s393 = sphi 0, %s377
      %s399 = sphi 0, %s401
      %s402 = sphi 0, %s399
      %s403 = sphi 0, %s402
      %s419 = sphi 0, %s403
      %s425 = sphi 0, %s427
      %s428 = sphi 0, %s425
      %s429 = sphi 0, %s428
      %s445 = sphi 0, %s429
      %s451 = sphi 0, %s453
      %s454 = sphi 0, %s451
      %s455 = sphi 0, %s454
      %s471 = sphi 0, %s455
      %s477 = sphi 0, %s479
      %s480 = sphi 0, %s477
      %s481 = sphi 0, %s480
      %s497 = sphi 0, %s481
      %s503 = sphi 0, %s505
      %s506 = sphi 0, %s503
      %s507 = sphi 0, %s506
      %s523 = sphi 0, %s507
      %s529 = sphi 0, %s531
      %s532 = sphi 0, %s529
      %s533 = sphi 0, %s532
      %s549 = sphi 0, %s533
      %s555 = sphi 0, %s557
      %s558 = sphi 0, %s555
      %s559 = sphi 0, %s558
      %s575 = sphi 0, %s559
      %s581 = sphi 0, %s583
      %s584 = sphi 0, %s581
      %s585 = sphi 0, %s584
      %s601 = sphi 0, %s585
      %s607 = sphi 0, %s609
      %s610 = sphi 0, %s607
      %s611 = sphi 0, %s610
      %s627 = sphi 0, %s611
      %s633 = sphi 0, %s635
      %s636 = sphi 0, %s633
      %s637 = sphi 0, %s636
      %s653 = sphi 0, %s637
      %s659 = sphi 0, %s661
      %s662 = sphi 0, %s659
      %s663 = sphi 0, %s662
      %s679 = sphi 0, %s663
      %s685 = sphi 0, %s687
      %s688 = sphi 0, %s685
      %s689 = sphi 0, %s688
      %s705 = sphi 0, %s689
      %s711 = sphi 0, %s713
      %s714 = sphi 0, %s711
      %s715 = sphi 0, %s714
      %s731 = sphi 0, %s715
      %s737 = sphi 0, %s739
      %s740 = sphi 0, %s737
      %s741 = sphi 0, %s740
      %s757 = sphi 0, %s741
      %s763 = sphi 0, %s765
      %s766 = sphi 0, %s763
      %s767 = sphi 0, %s766
      %s783 = sphi 0, %s767
      %s789 = sphi 0, %s791
      %s792 = sphi 0, %s789
      %s793 = sphi 0, %s792
      %s809 = sphi 0, %s793
      %s815 = sphi 0, %s817
      %s818 = sphi 0, %s815
      %s819 = sphi 0, %s818
      %s835 = sphi 0, %s819
      %s841 = sphi 0, %s843
      %s844 = sphi 0, %s841
      %s845 = sphi 0, %s844
      %s861 = sphi 0, %s845
      %s867 = sphi 0, %s869
      %s870 = sphi 0, %s867
      %s871 = sphi 0, %s870
      %s887 = sphi 0, %s871
      %s893 = sphi 0, %s895
      %s896 = sphi 0, %s893
      %s897 = sphi 0, %s896
      %s913 = sphi 0, %s897
      %s919 = sphi 0, %s921
      %s922 = sphi 0, %s919
      %s923 = sphi 0, %s922
      %s939 = sphi 0, %s923
      %s945 = sphi 0, %s947
      %s948 = sphi 0, %s945
      %s949 = sphi 0, %s948
      %s965 = sphi 0, %s949
      %s971 = sphi 0, %s973
      %s974 = sphi 0, %s971
      %s975 = sphi 0, %s974
      %s991 = sphi 0, %s975
      %s997 = sphi 0, %s999
      %s1000 = sphi 0, %s997
      %s1001 = sphi 0, %s1000
      %s1017 = sphi 0, %s1001
      %s1023 = sphi 0, %s1025
      %s1026 = sphi 0, %s1023
      %s1027 = sphi 0, %s1026
      %s1043 = sphi 0, %s1027
      %s1049 = sphi 0, %s1051
      %s1052 = sphi 0, %s1049
      %s1053 = sphi 0, %s1052
      %s1069 = sphi 0, %s1053
      %s1075 = sphi 0, %s1077
      %s1078 = sphi 0, %s1075
      %s1079 = sphi 0, %s1078
      %s1095 = sphi 0, %s1079
      %s1101 = sphi 0, %s1103
      %s1104 = sphi 0, %s1101
      %s1105 = sphi 0, %s1104
      %s1121 = sphi 0, %s1105
      %s1127 = sphi 0, %s1129
      %s1130 = sphi 0, %s1127
      %s1131 = sphi 0, %s1130
      %s1147 = sphi 0, %s1131
    $region4: #{_lambda_.8} parent=1 // loop_header_branch
      %94 = sbr.rel (%p92) target = $region8
    $region5: #{_lambda_.8} parent=1 // loop_body
      %s96 = ssub.s32 %s91, 1
      %s97 = ssub.s32 %s91, 2
      %s104 = sadd.s32 1, %s99
      %p105 = scmp.ge.s32.totalorder %s104, 2
      %s106 = scalar_select %p105, 0, %s104
      %s107 = sadd.s32 1, %s98
      %s108 = scalar_select %p105, %s107, %s98
      %p109 = scmp.ge.s32.totalorder %s108, 2
      %s110 = scalar_select %p109, 0, %s108
      %s111 = ssub.s32 %s98, %s110
      %p112 = scmp.eq.s32.totalorder %s111, 0
      %s114 = sadd.s32 %s113, 1
      %s115 = scalar_select %p112, %s113, %s114
      %p118 = pneg %p112
      %p119 = scmp.eq.s32.totalorder %s91, 3
      %p120 = por %p118, %p119
      %p121 = scmp.ne.s32.totalorder %s113, %s116
      %p122 = scmp.eq.s32.totalorder %s91, 0
      %p123 = por %p121, %p122
      %p124 = scmp.ne.s32.totalorder %s113, %s116
      %p125 = scmp.eq.s32.totalorder %s96, 3
      %p126 = por %p124, %p125
      %p127 = scmp.ne.s32.totalorder %s116, %s117
      %p128 = scmp.eq.s32.totalorder %s96, 0
      %p129 = por %p127, %p128
      %p130 = scmp.ne.s32.totalorder %s116, %s117
      %p131 = scmp.eq.s32.totalorder %s97, 3
      %p132 = por %p130, %p131
      %p134 = scmp.ne.s32.totalorder %s117, %s133
      %p135 = scmp.eq.s32.totalorder %s97, 0
      %p136 = por %p134, %p135
      %s137 = ssub.s32 %s99, %s106
      %p138 = scmp.eq.s32.totalorder %s137, 0
      %s140 = sadd.s32 %s139, 1
      %s141 = scalar_select %p138, %s139, %s140
      %p144 = pneg %p138
      %p145 = scmp.eq.s32.totalorder %s91, 3
      %p146 = por %p144, %p145
      %p147 = scmp.ne.s32.totalorder %s139, %s142
      %p148 = scmp.eq.s32.totalorder %s91, 0
      %p149 = por %p147, %p148
      %p150 = scmp.ne.s32.totalorder %s139, %s142
      %p151 = scmp.eq.s32.totalorder %s96, 3
      %p152 = por %p150, %p151
      %p153 = scmp.ne.s32.totalorder %s142, %s143
      %p154 = scmp.eq.s32.totalorder %s96, 0
      %p155 = por %p153, %p154
      %p156 = scmp.ne.s32.totalorder %s142, %s143
      %p157 = scmp.eq.s32.totalorder %s97, 3
      %p158 = por %p156, %p157
      %p160 = scmp.ne.s32.totalorder %s143, %s159
      %p161 = scmp.eq.s32.totalorder %s97, 0
      %p162 = por %p160, %p161
      %s163 = ssub.s32 %s99, %s106
      %p164 = scmp.eq.s32.totalorder %s163, 0
      %s166 = sadd.s32 %s165, 1
      %s167 = scalar_select %p164, %s165, %s166
      %p170 = pneg %p164
      %p171 = scmp.eq.s32.totalorder %s91, 3
      %p172 = por %p170, %p171
      %p173 = scmp.ne.s32.totalorder %s165, %s168
      %p174 = scmp.eq.s32.totalorder %s91, 0
      %p175 = por %p173, %p174
      %p176 = scmp.ne.s32.totalorder %s165, %s168
      %p177 = scmp.eq.s32.totalorder %s96, 3
      %p178 = por %p176, %p177
      %p179 = scmp.ne.s32.totalorder %s168, %s169
      %p180 = scmp.eq.s32.totalorder %s96, 0
      %p181 = por %p179, %p180
      %p182 = scmp.ne.s32.totalorder %s168, %s169
      %p183 = scmp.eq.s32.totalorder %s97, 3
      %p184 = por %p182, %p183
      %p186 = scmp.ne.s32.totalorder %s169, %s185
      %p187 = scmp.eq.s32.totalorder %s97, 0
      %p188 = por %p186, %p187
      %s189 = ssub.s32 %s99, %s106
      %p190 = scmp.eq.s32.totalorder %s189, 0
      %s192 = sadd.s32 %s191, 1
      %s193 = scalar_select %p190, %s191, %s192
      %p196 = pneg %p190
      %p197 = scmp.eq.s32.totalorder %s91, 3
      %p198 = por %p196, %p197
      %p199 = scmp.ne.s32.totalorder %s191, %s194
      %p200 = scmp.eq.s32.totalorder %s91, 0
      %p201 = por %p199, %p200
      %p202 = scmp.ne.s32.totalorder %s191, %s194
      %p203 = scmp.eq.s32.totalorder %s96, 3
      %p204 = por %p202, %p203
      %p205 = scmp.ne.s32.totalorder %s194, %s195
      %p206 = scmp.eq.s32.totalorder %s96, 0
      %p207 = por %p205, %p206
      %p208 = scmp.ne.s32.totalorder %s194, %s195
      %p209 = scmp.eq.s32.totalorder %s97, 3
      %p210 = por %p208, %p209
      %p212 = scmp.ne.s32.totalorder %s195, %s211
      %p213 = scmp.eq.s32.totalorder %s97, 0
      %p214 = por %p212, %p213
      %s215 = ssub.s32 %s99, %s106
      %p216 = scmp.eq.s32.totalorder %s215, 0
      %s218 = sadd.s32 %s217, 1
      %s219 = scalar_select %p216, %s217, %s218
      %p222 = pneg %p216
      %p223 = scmp.eq.s32.totalorder %s91, 3
      %p224 = por %p222, %p223
      %p225 = scmp.ne.s32.totalorder %s217, %s220
      %p226 = scmp.eq.s32.totalorder %s91, 0
      %p227 = por %p225, %p226
      %p228 = scmp.ne.s32.totalorder %s217, %s220
      %p229 = scmp.eq.s32.totalorder %s96, 3
      %p230 = por %p228, %p229
      %p231 = scmp.ne.s32.totalorder %s220, %s221
      %p232 = scmp.eq.s32.totalorder %s96, 0
      %p233 = por %p231, %p232
      %p234 = scmp.ne.s32.totalorder %s220, %s221
      %p235 = scmp.eq.s32.totalorder %s97, 3
      %p236 = por %p234, %p235
      %p238 = scmp.ne.s32.totalorder %s221, %s237
      %p239 = scmp.eq.s32.totalorder %s97, 0
      %p240 = por %p238, %p239
      %s241 = ssub.s32 %s99, %s106
      %p242 = scmp.eq.s32.totalorder %s241, 0
      %s244 = sadd.s32 %s243, 1
      %s245 = scalar_select %p242, %s243, %s244
      %p248 = pneg %p242
      %p249 = scmp.eq.s32.totalorder %s91, 3
      %p250 = por %p248, %p249
      %p251 = scmp.ne.s32.totalorder %s243, %s246
      %p252 = scmp.eq.s32.totalorder %s91, 0
      %p253 = por %p251, %p252
      %p254 = scmp.ne.s32.totalorder %s243, %s246
      %p255 = scmp.eq.s32.totalorder %s96, 3
      %p256 = por %p254, %p255
      %p257 = scmp.ne.s32.totalorder %s246, %s247
      %p258 = scmp.eq.s32.totalorder %s96, 0
      %p259 = por %p257, %p258
      %p260 = scmp.ne.s32.totalorder %s246, %s247
      %p261 = scmp.eq.s32.totalorder %s97, 3
      %p262 = por %p260, %p261
      %p264 = scmp.ne.s32.totalorder %s247, %s263
      %p265 = scmp.eq.s32.totalorder %s97, 0
      %p266 = por %p264, %p265
      %s267 = ssub.s32 %s99, %s106
      %p268 = scmp.eq.s32.totalorder %s267, 0
      %s270 = sadd.s32 %s269, 1
      %s271 = scalar_select %p268, %s269, %s270
      %p274 = pneg %p268
      %p275 = scmp.eq.s32.totalorder %s91, 3
      %p276 = por %p274, %p275
      %p277 = scmp.ne.s32.totalorder %s269, %s272
      %p278 = scmp.eq.s32.totalorder %s91, 0
      %p279 = por %p277, %p278
      %p280 = scmp.ne.s32.totalorder %s269, %s272
      %p281 = scmp.eq.s32.totalorder %s96, 3
      %p282 = por %p280, %p281
      %p283 = scmp.ne.s32.totalorder %s272, %s273
      %p284 = scmp.eq.s32.totalorder %s96, 0
      %p285 = por %p283, %p284
      %p286 = scmp.ne.s32.totalorder %s272, %s273
      %p287 = scmp.eq.s32.totalorder %s97, 3
      %p288 = por %p286, %p287
      %p290 = scmp.ne.s32.totalorder %s273, %s289
      %p291 = scmp.eq.s32.totalorder %s97, 0
      %p292 = por %p290, %p291
      %s293 = ssub.s32 %s99, %s106
      %p294 = scmp.eq.s32.totalorder %s293, 0
      %s296 = sadd.s32 %s295, 1
      %s297 = scalar_select %p294, %s295, %s296
      %p300 = pneg %p294
      %p301 = scmp.eq.s32.totalorder %s91, 3
      %p302 = por %p300, %p301
      %p303 = scmp.ne.s32.totalorder %s295, %s298
      %p304 = scmp.eq.s32.totalorder %s91, 0
      %p305 = por %p303, %p304
      %p306 = scmp.ne.s32.totalorder %s295, %s298
      %p307 = scmp.eq.s32.totalorder %s96, 3
      %p308 = por %p306, %p307
      %p309 = scmp.ne.s32.totalorder %s298, %s299
      %p310 = scmp.eq.s32.totalorder %s96, 0
      %p311 = por %p309, %p310
      %p312 = scmp.ne.s32.totalorder %s298, %s299
      %p313 = scmp.eq.s32.totalorder %s97, 3
      %p314 = por %p312, %p313
      %p316 = scmp.ne.s32.totalorder %s299, %s315
      %p317 = scmp.eq.s32.totalorder %s97, 0
      %p318 = por %p316, %p317
      %s319 = ssub.s32 %s99, %s106
      %p320 = scmp.eq.s32.totalorder %s319, 0
      %s322 = sadd.s32 %s321, 1
      %s323 = scalar_select %p320, %s321, %s322
      %p326 = pneg %p320
      %p327 = scmp.eq.s32.totalorder %s91, 3
      %p328 = por %p326, %p327
      %p329 = scmp.ne.s32.totalorder %s321, %s324
      %p330 = scmp.eq.s32.totalorder %s91, 0
      %p331 = por %p329, %p330
      %p332 = scmp.ne.s32.totalorder %s321, %s324
      %p333 = scmp.eq.s32.totalorder %s96, 3
      %p334 = por %p332, %p333
      %p335 = scmp.ne.s32.totalorder %s324, %s325
      %p336 = scmp.eq.s32.totalorder %s96, 0
      %p337 = por %p335, %p336
      %p338 = scmp.ne.s32.totalorder %s324, %s325
      %p339 = scmp.eq.s32.totalorder %s97, 3
      %p340 = por %p338, %p339
      %p342 = scmp.ne.s32.totalorder %s325, %s341
      %p343 = scmp.eq.s32.totalorder %s97, 0
      %p344 = por %p342, %p343
      %s345 = ssub.s32 %s99, %s106
      %p346 = scmp.eq.s32.totalorder %s345, 0
      %s348 = sadd.s32 %s347, 1
      %s349 = scalar_select %p346, %s347, %s348
      %p352 = pneg %p346
      %p353 = scmp.eq.s32.totalorder %s91, 3
      %p354 = por %p352, %p353
      %p355 = scmp.ne.s32.totalorder %s347, %s350
      %p356 = scmp.eq.s32.totalorder %s91, 0
      %p357 = por %p355, %p356
      %p358 = scmp.ne.s32.totalorder %s347, %s350
      %p359 = scmp.eq.s32.totalorder %s96, 3
      %p360 = por %p358, %p359
      %p361 = scmp.ne.s32.totalorder %s350, %s351
      %p362 = scmp.eq.s32.totalorder %s96, 0
      %p363 = por %p361, %p362
      %p364 = scmp.ne.s32.totalorder %s350, %s351
      %p365 = scmp.eq.s32.totalorder %s97, 3
      %p366 = por %p364, %p365
      %p368 = scmp.ne.s32.totalorder %s351, %s367
      %p369 = scmp.eq.s32.totalorder %s97, 0
      %p370 = por %p368, %p369
      %s371 = ssub.s32 %s99, %s106
      %p372 = scmp.eq.s32.totalorder %s371, 0
      %s374 = sadd.s32 %s373, 1
      %s375 = scalar_select %p372, %s373, %s374
      %p378 = pneg %p372
      %p379 = scmp.eq.s32.totalorder %s91, 3
      %p380 = por %p378, %p379
      %p381 = scmp.ne.s32.totalorder %s373, %s376
      %p382 = scmp.eq.s32.totalorder %s91, 0
      %p383 = por %p381, %p382
      %p384 = scmp.ne.s32.totalorder %s373, %s376
      %p385 = scmp.eq.s32.totalorder %s96, 3
      %p386 = por %p384, %p385
      %p387 = scmp.ne.s32.totalorder %s376, %s377
      %p388 = scmp.eq.s32.totalorder %s96, 0
      %p389 = por %p387, %p388
      %p390 = scmp.ne.s32.totalorder %s376, %s377
      %p391 = scmp.eq.s32.totalorder %s97, 3
      %p392 = por %p390, %p391
      %p394 = scmp.ne.s32.totalorder %s377, %s393
      %p395 = scmp.eq.s32.totalorder %s97, 0
      %p396 = por %p394, %p395
      %s397 = ssub.s32 %s99, %s106
      %p398 = scmp.eq.s32.totalorder %s397, 0
      %s400 = sadd.s32 %s399, 1
      %s401 = scalar_select %p398, %s399, %s400
      %p404 = pneg %p398
      %p405 = scmp.eq.s32.totalorder %s91, 3
      %p406 = por %p404, %p405
      %p407 = scmp.ne.s32.totalorder %s399, %s402
      %p408 = scmp.eq.s32.totalorder %s91, 0
      %p409 = por %p407, %p408
      %p410 = scmp.ne.s32.totalorder %s399, %s402
      %p411 = scmp.eq.s32.totalorder %s96, 3
      %p412 = por %p410, %p411
      %p413 = scmp.ne.s32.totalorder %s402, %s403
      %p414 = scmp.eq.s32.totalorder %s96, 0
      %p415 = por %p413, %p414
      %p416 = scmp.ne.s32.totalorder %s402, %s403
      %p417 = scmp.eq.s32.totalorder %s97, 3
      %p418 = por %p416, %p417
      %p420 = scmp.ne.s32.totalorder %s403, %s419
      %p421 = scmp.eq.s32.totalorder %s97, 0
      %p422 = por %p420, %p421
      %s423 = ssub.s32 %s99, %s106
      %p424 = scmp.eq.s32.totalorder %s423, 0
      %s426 = sadd.s32 %s425, 1
      %s427 = scalar_select %p424, %s425, %s426
      %p430 = pneg %p424
      %p431 = scmp.eq.s32.totalorder %s91, 3
      %p432 = por %p430, %p431
      %p433 = scmp.ne.s32.totalorder %s425, %s428
      %p434 = scmp.eq.s32.totalorder %s91, 0
      %p435 = por %p433, %p434
      %p436 = scmp.ne.s32.totalorder %s425, %s428
      %p437 = scmp.eq.s32.totalorder %s96, 3
      %p438 = por %p436, %p437
      %p439 = scmp.ne.s32.totalorder %s428, %s429
      %p440 = scmp.eq.s32.totalorder %s96, 0
      %p441 = por %p439, %p440
      %p442 = scmp.ne.s32.totalorder %s428, %s429
      %p443 = scmp.eq.s32.totalorder %s97, 3
      %p444 = por %p442, %p443
      %p446 = scmp.ne.s32.totalorder %s429, %s445
      %p447 = scmp.eq.s32.totalorder %s97, 0
      %p448 = por %p446, %p447
      %s449 = ssub.s32 %s99, %s106
      %p450 = scmp.eq.s32.totalorder %s449, 0
      %s452 = sadd.s32 %s451, 1
      %s453 = scalar_select %p450, %s451, %s452
      %p456 = pneg %p450
      %p457 = scmp.eq.s32.totalorder %s91, 3
      %p458 = por %p456, %p457
      %p459 = scmp.ne.s32.totalorder %s451, %s454
      %p460 = scmp.eq.s32.totalorder %s91, 0
      %p461 = por %p459, %p460
      %p462 = scmp.ne.s32.totalorder %s451, %s454
      %p463 = scmp.eq.s32.totalorder %s96, 3
      %p464 = por %p462, %p463
      %p465 = scmp.ne.s32.totalorder %s454, %s455
      %p466 = scmp.eq.s32.totalorder %s96, 0
      %p467 = por %p465, %p466
      %p468 = scmp.ne.s32.totalorder %s454, %s455
      %p469 = scmp.eq.s32.totalorder %s97, 3
      %p470 = por %p468, %p469
      %p472 = scmp.ne.s32.totalorder %s455, %s471
      %p473 = scmp.eq.s32.totalorder %s97, 0
      %p474 = por %p472, %p473
      %s475 = ssub.s32 %s99, %s106
      %p476 = scmp.eq.s32.totalorder %s475, 0
      %s478 = sadd.s32 %s477, 1
      %s479 = scalar_select %p476, %s477, %s478
      %p482 = pneg %p476
      %p483 = scmp.eq.s32.totalorder %s91, 3
      %p484 = por %p482, %p483
      %p485 = scmp.ne.s32.totalorder %s477, %s480
      %p486 = scmp.eq.s32.totalorder %s91, 0
      %p487 = por %p485, %p486
      %p488 = scmp.ne.s32.totalorder %s477, %s480
      %p489 = scmp.eq.s32.totalorder %s96, 3
      %p490 = por %p488, %p489
      %p491 = scmp.ne.s32.totalorder %s480, %s481
      %p492 = scmp.eq.s32.totalorder %s96, 0
      %p493 = por %p491, %p492
      %p494 = scmp.ne.s32.totalorder %s480, %s481
      %p495 = scmp.eq.s32.totalorder %s97, 3
      %p496 = por %p494, %p495
      %p498 = scmp.ne.s32.totalorder %s481, %s497
      %p499 = scmp.eq.s32.totalorder %s97, 0
      %p500 = por %p498, %p499
      %s501 = ssub.s32 %s99, %s106
      %p502 = scmp.eq.s32.totalorder %s501, 0
      %s504 = sadd.s32 %s503, 1
      %s505 = scalar_select %p502, %s503, %s504
      %p508 = pneg %p502
      %p509 = scmp.eq.s32.totalorder %s91, 3
      %p510 = por %p508, %p509
      %p511 = scmp.ne.s32.totalorder %s503, %s506
      %p512 = scmp.eq.s32.totalorder %s91, 0
      %p513 = por %p511, %p512
      %p514 = scmp.ne.s32.totalorder %s503, %s506
      %p515 = scmp.eq.s32.totalorder %s96, 3
      %p516 = por %p514, %p515
      %p517 = scmp.ne.s32.totalorder %s506, %s507
      %p518 = scmp.eq.s32.totalorder %s96, 0
      %p519 = por %p517, %p518
      %p520 = scmp.ne.s32.totalorder %s506, %s507
      %p521 = scmp.eq.s32.totalorder %s97, 3
      %p522 = por %p520, %p521
      %p524 = scmp.ne.s32.totalorder %s507, %s523
      %p525 = scmp.eq.s32.totalorder %s97, 0
      %p526 = por %p524, %p525
      %s527 = ssub.s32 %s99, %s106
      %p528 = scmp.eq.s32.totalorder %s527, 0
      %s530 = sadd.s32 %s529, 1
      %s531 = scalar_select %p528, %s529, %s530
      %p534 = pneg %p528
      %p535 = scmp.eq.s32.totalorder %s91, 3
      %p536 = por %p534, %p535
      %p537 = scmp.ne.s32.totalorder %s529, %s532
      %p538 = scmp.eq.s32.totalorder %s91, 0
      %p539 = por %p537, %p538
      %p540 = scmp.ne.s32.totalorder %s529, %s532
      %p541 = scmp.eq.s32.totalorder %s96, 3
      %p542 = por %p540, %p541
      %p543 = scmp.ne.s32.totalorder %s532, %s533
      %p544 = scmp.eq.s32.totalorder %s96, 0
      %p545 = por %p543, %p544
      %p546 = scmp.ne.s32.totalorder %s532, %s533
      %p547 = scmp.eq.s32.totalorder %s97, 3
      %p548 = por %p546, %p547
      %p550 = scmp.ne.s32.totalorder %s533, %s549
      %p551 = scmp.eq.s32.totalorder %s97, 0
      %p552 = por %p550, %p551
      %s553 = ssub.s32 %s99, %s106
      %p554 = scmp.eq.s32.totalorder %s553, 0
      %s556 = sadd.s32 %s555, 1
      %s557 = scalar_select %p554, %s555, %s556
      %p560 = pneg %p554
      %p561 = scmp.eq.s32.totalorder %s91, 3
      %p562 = por %p560, %p561
      %p563 = scmp.ne.s32.totalorder %s555, %s558
      %p564 = scmp.eq.s32.totalorder %s91, 0
      %p565 = por %p563, %p564
      %p566 = scmp.ne.s32.totalorder %s555, %s558
      %p567 = scmp.eq.s32.totalorder %s96, 3
      %p568 = por %p566, %p567
      %p569 = scmp.ne.s32.totalorder %s558, %s559
      %p570 = scmp.eq.s32.totalorder %s96, 0
      %p571 = por %p569, %p570
      %p572 = scmp.ne.s32.totalorder %s558, %s559
      %p573 = scmp.eq.s32.totalorder %s97, 3
      %p574 = por %p572, %p573
      %p576 = scmp.ne.s32.totalorder %s559, %s575
      %p577 = scmp.eq.s32.totalorder %s97, 0
      %p578 = por %p576, %p577
      %s579 = ssub.s32 %s99, %s106
      %p580 = scmp.eq.s32.totalorder %s579, 0
      %s582 = sadd.s32 %s581, 1
      %s583 = scalar_select %p580, %s581, %s582
      %p586 = pneg %p580
      %p587 = scmp.eq.s32.totalorder %s91, 3
      %p588 = por %p586, %p587
      %p589 = scmp.ne.s32.totalorder %s581, %s584
      %p590 = scmp.eq.s32.totalorder %s91, 0
      %p591 = por %p589, %p590
      %p592 = scmp.ne.s32.totalorder %s581, %s584
      %p593 = scmp.eq.s32.totalorder %s96, 3
      %p594 = por %p592, %p593
      %p595 = scmp.ne.s32.totalorder %s584, %s585
      %p596 = scmp.eq.s32.totalorder %s96, 0
      %p597 = por %p595, %p596
      %p598 = scmp.ne.s32.totalorder %s584, %s585
      %p599 = scmp.eq.s32.totalorder %s97, 3
      %p600 = por %p598, %p599
      %p602 = scmp.ne.s32.totalorder %s585, %s601
      %p603 = scmp.eq.s32.totalorder %s97, 0
      %p604 = por %p602, %p603
      %s605 = ssub.s32 %s99, %s106
      %p606 = scmp.eq.s32.totalorder %s605, 0
      %s608 = sadd.s32 %s607, 1
      %s609 = scalar_select %p606, %s607, %s608
      %p612 = pneg %p606
      %p613 = scmp.eq.s32.totalorder %s91, 3
      %p614 = por %p612, %p613
      %p615 = scmp.ne.s32.totalorder %s607, %s610
      %p616 = scmp.eq.s32.totalorder %s91, 0
      %p617 = por %p615, %p616
      %p618 = scmp.ne.s32.totalorder %s607, %s610
      %p619 = scmp.eq.s32.totalorder %s96, 3
      %p620 = por %p618, %p619
      %p621 = scmp.ne.s32.totalorder %s610, %s611
      %p622 = scmp.eq.s32.totalorder %s96, 0
      %p623 = por %p621, %p622
      %p624 = scmp.ne.s32.totalorder %s610, %s611
      %p625 = scmp.eq.s32.totalorder %s97, 3
      %p626 = por %p624, %p625
      %p628 = scmp.ne.s32.totalorder %s611, %s627
      %p629 = scmp.eq.s32.totalorder %s97, 0
      %p630 = por %p628, %p629
      %s631 = ssub.s32 %s99, %s106
      %p632 = scmp.eq.s32.totalorder %s631, 0
      %s634 = sadd.s32 %s633, 1
      %s635 = scalar_select %p632, %s633, %s634
      %p638 = pneg %p632
      %p639 = scmp.eq.s32.totalorder %s91, 3
      %p640 = por %p638, %p639
      %p641 = scmp.ne.s32.totalorder %s633, %s636
      %p642 = scmp.eq.s32.totalorder %s91, 0
      %p643 = por %p641, %p642
      %p644 = scmp.ne.s32.totalorder %s633, %s636
      %p645 = scmp.eq.s32.totalorder %s96, 3
      %p646 = por %p644, %p645
      %p647 = scmp.ne.s32.totalorder %s636, %s637
      %p648 = scmp.eq.s32.totalorder %s96, 0
      %p649 = por %p647, %p648
      %p650 = scmp.ne.s32.totalorder %s636, %s637
      %p651 = scmp.eq.s32.totalorder %s97, 3
      %p652 = por %p650, %p651
      %p654 = scmp.ne.s32.totalorder %s637, %s653
      %p655 = scmp.eq.s32.totalorder %s97, 0
      %p656 = por %p654, %p655
      %s657 = ssub.s32 %s99, %s106
      %p658 = scmp.eq.s32.totalorder %s657, 0
      %s660 = sadd.s32 %s659, 1
      %s661 = scalar_select %p658, %s659, %s660
      %p664 = pneg %p658
      %p665 = scmp.eq.s32.totalorder %s91, 3
      %p666 = por %p664, %p665
      %p667 = scmp.ne.s32.totalorder %s659, %s662
      %p668 = scmp.eq.s32.totalorder %s91, 0
      %p669 = por %p667, %p668
      %p670 = scmp.ne.s32.totalorder %s659, %s662
      %p671 = scmp.eq.s32.totalorder %s96, 3
      %p672 = por %p670, %p671
      %p673 = scmp.ne.s32.totalorder %s662, %s663
      %p674 = scmp.eq.s32.totalorder %s96, 0
      %p675 = por %p673, %p674
      %p676 = scmp.ne.s32.totalorder %s662, %s663
      %p677 = scmp.eq.s32.totalorder %s97, 3
      %p678 = por %p676, %p677
      %p680 = scmp.ne.s32.totalorder %s663, %s679
      %p681 = scmp.eq.s32.totalorder %s97, 0
      %p682 = por %p680, %p681
      %s683 = ssub.s32 %s99, %s106
      %p684 = scmp.eq.s32.totalorder %s683, 0
      %s686 = sadd.s32 %s685, 1
      %s687 = scalar_select %p684, %s685, %s686
      %p690 = pneg %p684
      %p691 = scmp.eq.s32.totalorder %s91, 3
      %p692 = por %p690, %p691
      %p693 = scmp.ne.s32.totalorder %s685, %s688
      %p694 = scmp.eq.s32.totalorder %s91, 0
      %p695 = por %p693, %p694
      %p696 = scmp.ne.s32.totalorder %s685, %s688
      %p697 = scmp.eq.s32.totalorder %s96, 3
      %p698 = por %p696, %p697
      %p699 = scmp.ne.s32.totalorder %s688, %s689
      %p700 = scmp.eq.s32.totalorder %s96, 0
      %p701 = por %p699, %p700
      %p702 = scmp.ne.s32.totalorder %s688, %s689
      %p703 = scmp.eq.s32.totalorder %s97, 3
      %p704 = por %p702, %p703
      %p706 = scmp.ne.s32.totalorder %s689, %s705
      %p707 = scmp.eq.s32.totalorder %s97, 0
      %p708 = por %p706, %p707
      %s709 = ssub.s32 %s99, %s106
      %p710 = scmp.eq.s32.totalorder %s709, 0
      %s712 = sadd.s32 %s711, 1
      %s713 = scalar_select %p710, %s711, %s712
      %p716 = pneg %p710
      %p717 = scmp.eq.s32.totalorder %s91, 3
      %p718 = por %p716, %p717
      %p719 = scmp.ne.s32.totalorder %s711, %s714
      %p720 = scmp.eq.s32.totalorder %s91, 0
      %p721 = por %p719, %p720
      %p722 = scmp.ne.s32.totalorder %s711, %s714
      %p723 = scmp.eq.s32.totalorder %s96, 3
      %p724 = por %p722, %p723
      %p725 = scmp.ne.s32.totalorder %s714, %s715
      %p726 = scmp.eq.s32.totalorder %s96, 0
      %p727 = por %p725, %p726
      %p728 = scmp.ne.s32.totalorder %s714, %s715
      %p729 = scmp.eq.s32.totalorder %s97, 3
      %p730 = por %p728, %p729
      %p732 = scmp.ne.s32.totalorder %s715, %s731
      %p733 = scmp.eq.s32.totalorder %s97, 0
      %p734 = por %p732, %p733
      %s735 = ssub.s32 %s99, %s106
      %p736 = scmp.eq.s32.totalorder %s735, 0
      %s738 = sadd.s32 %s737, 1
      %s739 = scalar_select %p736, %s737, %s738
      %p742 = pneg %p736
      %p743 = scmp.eq.s32.totalorder %s91, 3
      %p744 = por %p742, %p743
      %p745 = scmp.ne.s32.totalorder %s737, %s740
      %p746 = scmp.eq.s32.totalorder %s91, 0
      %p747 = por %p745, %p746
      %p748 = scmp.ne.s32.totalorder %s737, %s740
      %p749 = scmp.eq.s32.totalorder %s96, 3
      %p750 = por %p748, %p749
      %p751 = scmp.ne.s32.totalorder %s740, %s741
      %p752 = scmp.eq.s32.totalorder %s96, 0
      %p753 = por %p751, %p752
      %p754 = scmp.ne.s32.totalorder %s740, %s741
      %p755 = scmp.eq.s32.totalorder %s97, 3
      %p756 = por %p754, %p755
      %p758 = scmp.ne.s32.totalorder %s741, %s757
      %p759 = scmp.eq.s32.totalorder %s97, 0
      %p760 = por %p758, %p759
      %s761 = ssub.s32 %s99, %s106
      %p762 = scmp.eq.s32.totalorder %s761, 0
      %s764 = sadd.s32 %s763, 1
      %s765 = scalar_select %p762, %s763, %s764
      %p768 = pneg %p762
      %p769 = scmp.eq.s32.totalorder %s91, 3
      %p770 = por %p768, %p769
      %p771 = scmp.ne.s32.totalorder %s763, %s766
      %p772 = scmp.eq.s32.totalorder %s91, 0
      %p773 = por %p771, %p772
      %p774 = scmp.ne.s32.totalorder %s763, %s766
      %p775 = scmp.eq.s32.totalorder %s96, 3
      %p776 = por %p774, %p775
      %p777 = scmp.ne.s32.totalorder %s766, %s767
      %p778 = scmp.eq.s32.totalorder %s96, 0
      %p779 = por %p777, %p778
      %p780 = scmp.ne.s32.totalorder %s766, %s767
      %p781 = scmp.eq.s32.totalorder %s97, 3
      %p782 = por %p780, %p781
      %p784 = scmp.ne.s32.totalorder %s767, %s783
      %p785 = scmp.eq.s32.totalorder %s97, 0
      %p786 = por %p784, %p785
      %s787 = ssub.s32 %s99, %s106
      %p788 = scmp.eq.s32.totalorder %s787, 0
      %s790 = sadd.s32 %s789, 1
      %s791 = scalar_select %p788, %s789, %s790
      %p794 = pneg %p788
      %p795 = scmp.eq.s32.totalorder %s91, 3
      %p796 = por %p794, %p795
      %p797 = scmp.ne.s32.totalorder %s789, %s792
      %p798 = scmp.eq.s32.totalorder %s91, 0
      %p799 = por %p797, %p798
      %p800 = scmp.ne.s32.totalorder %s789, %s792
      %p801 = scmp.eq.s32.totalorder %s96, 3
      %p802 = por %p800, %p801
      %p803 = scmp.ne.s32.totalorder %s792, %s793
      %p804 = scmp.eq.s32.totalorder %s96, 0
      %p805 = por %p803, %p804
      %p806 = scmp.ne.s32.totalorder %s792, %s793
      %p807 = scmp.eq.s32.totalorder %s97, 3
      %p808 = por %p806, %p807
      %p810 = scmp.ne.s32.totalorder %s793, %s809
      %p811 = scmp.eq.s32.totalorder %s97, 0
      %p812 = por %p810, %p811
      %s813 = ssub.s32 %s99, %s106
      %p814 = scmp.eq.s32.totalorder %s813, 0
      %s816 = sadd.s32 %s815, 1
      %s817 = scalar_select %p814, %s815, %s816
      %p820 = pneg %p814
      %p821 = scmp.eq.s32.totalorder %s91, 3
      %p822 = por %p820, %p821
      %p823 = scmp.ne.s32.totalorder %s815, %s818
      %p824 = scmp.eq.s32.totalorder %s91, 0
      %p825 = por %p823, %p824
      %p826 = scmp.ne.s32.totalorder %s815, %s818
      %p827 = scmp.eq.s32.totalorder %s96, 3
      %p828 = por %p826, %p827
      %p829 = scmp.ne.s32.totalorder %s818, %s819
      %p830 = scmp.eq.s32.totalorder %s96, 0
      %p831 = por %p829, %p830
      %p832 = scmp.ne.s32.totalorder %s818, %s819
      %p833 = scmp.eq.s32.totalorder %s97, 3
      %p834 = por %p832, %p833
      %p836 = scmp.ne.s32.totalorder %s819, %s835
      %p837 = scmp.eq.s32.totalorder %s97, 0
      %p838 = por %p836, %p837
      %s839 = ssub.s32 %s99, %s106
      %p840 = scmp.eq.s32.totalorder %s839, 0
      %s842 = sadd.s32 %s841, 1
      %s843 = scalar_select %p840, %s841, %s842
      %p846 = pneg %p840
      %p847 = scmp.eq.s32.totalorder %s91, 3
      %p848 = por %p846, %p847
      %p849 = scmp.ne.s32.totalorder %s841, %s844
      %p850 = scmp.eq.s32.totalorder %s91, 0
      %p851 = por %p849, %p850
      %p852 = scmp.ne.s32.totalorder %s841, %s844
      %p853 = scmp.eq.s32.totalorder %s96, 3
      %p854 = por %p852, %p853
      %p855 = scmp.ne.s32.totalorder %s844, %s845
      %p856 = scmp.eq.s32.totalorder %s96, 0
      %p857 = por %p855, %p856
      %p858 = scmp.ne.s32.totalorder %s844, %s845
      %p859 = scmp.eq.s32.totalorder %s97, 3
      %p860 = por %p858, %p859
      %p862 = scmp.ne.s32.totalorder %s845, %s861
      %p863 = scmp.eq.s32.totalorder %s97, 0
      %p864 = por %p862, %p863
      %s865 = ssub.s32 %s99, %s106
      %p866 = scmp.eq.s32.totalorder %s865, 0
      %s868 = sadd.s32 %s867, 1
      %s869 = scalar_select %p866, %s867, %s868
      %p872 = pneg %p866
      %p873 = scmp.eq.s32.totalorder %s91, 3
      %p874 = por %p872, %p873
      %p875 = scmp.ne.s32.totalorder %s867, %s870
      %p876 = scmp.eq.s32.totalorder %s91, 0
      %p877 = por %p875, %p876
      %p878 = scmp.ne.s32.totalorder %s867, %s870
      %p879 = scmp.eq.s32.totalorder %s96, 3
      %p880 = por %p878, %p879
      %p881 = scmp.ne.s32.totalorder %s870, %s871
      %p882 = scmp.eq.s32.totalorder %s96, 0
      %p883 = por %p881, %p882
      %p884 = scmp.ne.s32.totalorder %s870, %s871
      %p885 = scmp.eq.s32.totalorder %s97, 3
      %p886 = por %p884, %p885
      %p888 = scmp.ne.s32.totalorder %s871, %s887
      %p889 = scmp.eq.s32.totalorder %s97, 0
      %p890 = por %p888, %p889
      %s891 = ssub.s32 %s99, %s106
      %p892 = scmp.eq.s32.totalorder %s891, 0
      %s894 = sadd.s32 %s893, 1
      %s895 = scalar_select %p892, %s893, %s894
      %p898 = pneg %p892
      %p899 = scmp.eq.s32.totalorder %s91, 3
      %p900 = por %p898, %p899
      %p901 = scmp.ne.s32.totalorder %s893, %s896
      %p902 = scmp.eq.s32.totalorder %s91, 0
      %p903 = por %p901, %p902
      %p904 = scmp.ne.s32.totalorder %s893, %s896
      %p905 = scmp.eq.s32.totalorder %s96, 3
      %p906 = por %p904, %p905
      %p907 = scmp.ne.s32.totalorder %s896, %s897
      %p908 = scmp.eq.s32.totalorder %s96, 0
      %p909 = por %p907, %p908
      %p910 = scmp.ne.s32.totalorder %s896, %s897
      %p911 = scmp.eq.s32.totalorder %s97, 3
      %p912 = por %p910, %p911
      %p914 = scmp.ne.s32.totalorder %s897, %s913
      %p915 = scmp.eq.s32.totalorder %s97, 0
      %p916 = por %p914, %p915
      %s917 = ssub.s32 %s99, %s106
      %p918 = scmp.eq.s32.totalorder %s917, 0
      %s920 = sadd.s32 %s919, 1
      %s921 = scalar_select %p918, %s919, %s920
      %p924 = pneg %p918
      %p925 = scmp.eq.s32.totalorder %s91, 3
      %p926 = por %p924, %p925
      %p927 = scmp.ne.s32.totalorder %s919, %s922
      %p928 = scmp.eq.s32.totalorder %s91, 0
      %p929 = por %p927, %p928
      %p930 = scmp.ne.s32.totalorder %s919, %s922
      %p931 = scmp.eq.s32.totalorder %s96, 3
      %p932 = por %p930, %p931
      %p933 = scmp.ne.s32.totalorder %s922, %s923
      %p934 = scmp.eq.s32.totalorder %s96, 0
      %p935 = por %p933, %p934
      %p936 = scmp.ne.s32.totalorder %s922, %s923
      %p937 = scmp.eq.s32.totalorder %s97, 3
      %p938 = por %p936, %p937
      %p940 = scmp.ne.s32.totalorder %s923, %s939
      %p941 = scmp.eq.s32.totalorder %s97, 0
      %p942 = por %p940, %p941
      %s943 = ssub.s32 %s99, %s106
      %p944 = scmp.eq.s32.totalorder %s943, 0
      %s946 = sadd.s32 %s945, 1
      %s947 = scalar_select %p944, %s945, %s946
      %p950 = pneg %p944
      %p951 = scmp.eq.s32.totalorder %s91, 3
      %p952 = por %p950, %p951
      %p953 = scmp.ne.s32.totalorder %s945, %s948
      %p954 = scmp.eq.s32.totalorder %s91, 0
      %p955 = por %p953, %p954
      %p956 = scmp.ne.s32.totalorder %s945, %s948
      %p957 = scmp.eq.s32.totalorder %s96, 3
      %p958 = por %p956, %p957
      %p959 = scmp.ne.s32.totalorder %s948, %s949
      %p960 = scmp.eq.s32.totalorder %s96, 0
      %p961 = por %p959, %p960
      %p962 = scmp.ne.s32.totalorder %s948, %s949
      %p963 = scmp.eq.s32.totalorder %s97, 3
      %p964 = por %p962, %p963
      %p966 = scmp.ne.s32.totalorder %s949, %s965
      %p967 = scmp.eq.s32.totalorder %s97, 0
      %p968 = por %p966, %p967
      %s969 = ssub.s32 %s99, %s106
      %p970 = scmp.eq.s32.totalorder %s969, 0
      %s972 = sadd.s32 %s971, 1
      %s973 = scalar_select %p970, %s971, %s972
      %p976 = pneg %p970
      %p977 = scmp.eq.s32.totalorder %s91, 3
      %p978 = por %p976, %p977
      %p979 = scmp.ne.s32.totalorder %s971, %s974
      %p980 = scmp.eq.s32.totalorder %s91, 0
      %p981 = por %p979, %p980
      %p982 = scmp.ne.s32.totalorder %s971, %s974
      %p983 = scmp.eq.s32.totalorder %s96, 3
      %p984 = por %p982, %p983
      %p985 = scmp.ne.s32.totalorder %s974, %s975
      %p986 = scmp.eq.s32.totalorder %s96, 0
      %p987 = por %p985, %p986
      %p988 = scmp.ne.s32.totalorder %s974, %s975
      %p989 = scmp.eq.s32.totalorder %s97, 3
      %p990 = por %p988, %p989
      %p992 = scmp.ne.s32.totalorder %s975, %s991
      %p993 = scmp.eq.s32.totalorder %s97, 0
      %p994 = por %p992, %p993
      %s995 = ssub.s32 %s99, %s106
      %p996 = scmp.eq.s32.totalorder %s995, 0
      %s998 = sadd.s32 %s997, 1
      %s999 = scalar_select %p996, %s997, %s998
      %p1002 = pneg %p996
      %p1003 = scmp.eq.s32.totalorder %s91, 3
      %p1004 = por %p1002, %p1003
      %p1005 = scmp.ne.s32.totalorder %s997, %s1000
      %p1006 = scmp.eq.s32.totalorder %s91, 0
      %p1007 = por %p1005, %p1006
      %p1008 = scmp.ne.s32.totalorder %s997, %s1000
      %p1009 = scmp.eq.s32.totalorder %s96, 3
      %p1010 = por %p1008, %p1009
      %p1011 = scmp.ne.s32.totalorder %s1000, %s1001
      %p1012 = scmp.eq.s32.totalorder %s96, 0
      %p1013 = por %p1011, %p1012
      %p1014 = scmp.ne.s32.totalorder %s1000, %s1001
      %p1015 = scmp.eq.s32.totalorder %s97, 3
      %p1016 = por %p1014, %p1015
      %p1018 = scmp.ne.s32.totalorder %s1001, %s1017
      %p1019 = scmp.eq.s32.totalorder %s97, 0
      %p1020 = por %p1018, %p1019
      %s1021 = ssub.s32 %s99, %s106
      %p1022 = scmp.eq.s32.totalorder %s1021, 0
      %s1024 = sadd.s32 %s1023, 1
      %s1025 = scalar_select %p1022, %s1023, %s1024
      %p1028 = pneg %p1022
      %p1029 = scmp.eq.s32.totalorder %s91, 3
      %p1030 = por %p1028, %p1029
      %p1031 = scmp.ne.s32.totalorder %s1023, %s1026
      %p1032 = scmp.eq.s32.totalorder %s91, 0
      %p1033 = por %p1031, %p1032
      %p1034 = scmp.ne.s32.totalorder %s1023, %s1026
      %p1035 = scmp.eq.s32.totalorder %s96, 3
      %p1036 = por %p1034, %p1035
      %p1037 = scmp.ne.s32.totalorder %s1026, %s1027
      %p1038 = scmp.eq.s32.totalorder %s96, 0
      %p1039 = por %p1037, %p1038
      %p1040 = scmp.ne.s32.totalorder %s1026, %s1027
      %p1041 = scmp.eq.s32.totalorder %s97, 3
      %p1042 = por %p1040, %p1041
      %p1044 = scmp.ne.s32.totalorder %s1027, %s1043
      %p1045 = scmp.eq.s32.totalorder %s97, 0
      %p1046 = por %p1044, %p1045
      %s1047 = ssub.s32 %s99, %s106
      %p1048 = scmp.eq.s32.totalorder %s1047, 0
      %s1050 = sadd.s32 %s1049, 1
      %s1051 = scalar_select %p1048, %s1049, %s1050
      %p1054 = pneg %p1048
      %p1055 = scmp.eq.s32.totalorder %s91, 3
      %p1056 = por %p1054, %p1055
      %p1057 = scmp.ne.s32.totalorder %s1049, %s1052
      %p1058 = scmp.eq.s32.totalorder %s91, 0
      %p1059 = por %p1057, %p1058
      %p1060 = scmp.ne.s32.totalorder %s1049, %s1052
      %p1061 = scmp.eq.s32.totalorder %s96, 3
      %p1062 = por %p1060, %p1061
      %p1063 = scmp.ne.s32.totalorder %s1052, %s1053
      %p1064 = scmp.eq.s32.totalorder %s96, 0
      %p1065 = por %p1063, %p1064
      %p1066 = scmp.ne.s32.totalorder %s1052, %s1053
      %p1067 = scmp.eq.s32.totalorder %s97, 3
      %p1068 = por %p1066, %p1067
      %p1070 = scmp.ne.s32.totalorder %s1053, %s1069
      %p1071 = scmp.eq.s32.totalorder %s97, 0
      %p1072 = por %p1070, %p1071
      %s1073 = ssub.s32 %s99, %s106
      %p1074 = scmp.eq.s32.totalorder %s1073, 0
      %s1076 = sadd.s32 %s1075, 1
      %s1077 = scalar_select %p1074, %s1075, %s1076
      %p1080 = pneg %p1074
      %p1081 = scmp.eq.s32.totalorder %s91, 3
      %p1082 = por %p1080, %p1081
      %p1083 = scmp.ne.s32.totalorder %s1075, %s1078
      %p1084 = scmp.eq.s32.totalorder %s91, 0
      %p1085 = por %p1083, %p1084
      %p1086 = scmp.ne.s32.totalorder %s1075, %s1078
      %p1087 = scmp.eq.s32.totalorder %s96, 3
      %p1088 = por %p1086, %p1087
      %p1089 = scmp.ne.s32.totalorder %s1078, %s1079
      %p1090 = scmp.eq.s32.totalorder %s96, 0
      %p1091 = por %p1089, %p1090
      %p1092 = scmp.ne.s32.totalorder %s1078, %s1079
      %p1093 = scmp.eq.s32.totalorder %s97, 3
      %p1094 = por %p1092, %p1093
      %p1096 = scmp.ne.s32.totalorder %s1079, %s1095
      %p1097 = scmp.eq.s32.totalorder %s97, 0
      %p1098 = por %p1096, %p1097
      %s1099 = ssub.s32 %s99, %s106
      %p1100 = scmp.eq.s32.totalorder %s1099, 0
      %s1102 = sadd.s32 %s1101, 1
      %s1103 = scalar_select %p1100, %s1101, %s1102
      %p1106 = pneg %p1100
      %p1107 = scmp.eq.s32.totalorder %s91, 3
      %p1108 = por %p1106, %p1107
      %p1109 = scmp.ne.s32.totalorder %s1101, %s1104
      %p1110 = scmp.eq.s32.totalorder %s91, 0
      %p1111 = por %p1109, %p1110
      %p1112 = scmp.ne.s32.totalorder %s1101, %s1104
      %p1113 = scmp.eq.s32.totalorder %s96, 3
      %p1114 = por %p1112, %p1113
      %p1115 = scmp.ne.s32.totalorder %s1104, %s1105
      %p1116 = scmp.eq.s32.totalorder %s96, 0
      %p1117 = por %p1115, %p1116
      %p1118 = scmp.ne.s32.totalorder %s1104, %s1105
      %p1119 = scmp.eq.s32.totalorder %s97, 3
      %p1120 = por %p1118, %p1119
      %p1122 = scmp.ne.s32.totalorder %s1105, %s1121
      %p1123 = scmp.eq.s32.totalorder %s97, 0
      %p1124 = por %p1122, %p1123
      %s1125 = ssub.s32 %s98, %s110
      %p1126 = scmp.eq.s32.totalorder %s1125, 0
      %s1128 = sadd.s32 %s1127, 1
      %s1129 = scalar_select %p1126, %s1127, %s1128
      %p1132 = pneg %p1126
      %p1133 = scmp.eq.s32.totalorder %s91, 3
      %p1134 = por %p1132, %p1133
      %p1135 = scmp.ne.s32.totalorder %s1127, %s1130
      %p1136 = scmp.eq.s32.totalorder %s91, 0
      %p1137 = por %p1135, %p1136
      %p1138 = scmp.ne.s32.totalorder %s1127, %s1130
      %p1139 = scmp.eq.s32.totalorder %s96, 3
      %p1140 = por %p1138, %p1139
      %p1141 = scmp.ne.s32.totalorder %s1130, %s1131
      %p1142 = scmp.eq.s32.totalorder %s96, 0
      %p1143 = por %p1141, %p1142
      %p1144 = scmp.ne.s32.totalorder %s1130, %s1131
      %p1145 = scmp.eq.s32.totalorder %s97, 3
      %p1146 = por %p1144, %p1145
      %p1148 = scmp.ne.s32.totalorder %s1131, %s1147
      %p1149 = scmp.eq.s32.totalorder %s97, 0
      %p1150 = por %p1148, %p1149
      %p1151 = scmp.le.s32.totalorder 1, %s91
      %p1152 = scmp.lt.s32.totalorder %s91, 5
      %p1153 = pnand %p1151, %p1152
      %p1154 = pneg %p1153
      // Predicated region
      $region9: #{_lambda_.8} parent=5 // pred_check
        _
      $region10: #{_lambda_.8} parent=5 // pred_check_branch
        %1156 = sbr.rel (%p1153) target = $region12
      $region11: #{_lambda_.8} parent=5 // pred_region
        %s1157 = ssub.s32 %s91, 1
      $region12: #{_lambda_.8} parent=5 // pred_fallthru
        _
      %p1158 = scmp.lt.s32.totalorder %s91, 4
      // Predicated region
      $region13: #{_lambda_.8} parent=5 // pred_check
        %p1159 = pneg %p1158
      $region14: #{_lambda_.8} parent=5 // pred_check_branch
        %1161 = sbr.rel (%p1159) target = $region16
      $region15: #{_lambda_.8} parent=5 // pred_region
        // Predicated region
        $region17: #{_lambda_.8} parent=15 // pred_check
          %p1162 = pneg %p123
        $region18: #{_lambda_.8} parent=15 // pred_check_branch
          %1164 = sbr.rel (%p1162) target = $region20
        $region19: #{_lambda_.8} parent=15 // pred_region
          %p1165 = scmp.lt.s32.totalorder %s98, 1
          %s1166 = scalar_select %p1165, %s98, 1
          %s1167 = smul.addr %s1166, 8
          %s1168 = scalar_lea.vmem %s1, %s1167
        $region20: #{_lambda_.8} parent=15 // pred_fallthru
          _
        // Predicated region
        $region21: #{_lambda_.8} parent=15 // pred_check
          %p1169 = pneg %p149
        $region22: #{_lambda_.8} parent=15 // pred_check_branch
          %1171 = sbr.rel (%p1169) target = $region24
        $region23: #{_lambda_.8} parent=15 // pred_region
          %p1172 = scmp.lt.s32.totalorder %s99, 1
          %s1173 = scalar_select %p1172, %s99, 1
          %s1174 = scalar_lea.vmem %s3, %s1173
        $region24: #{_lambda_.8} parent=15 // pred_fallthru
          _
        // Predicated region
        $region25: #{_lambda_.8} parent=15 // pred_check
          %p1175 = pneg %p175
        $region26: #{_lambda_.8} parent=15 // pred_check_branch
          %1177 = sbr.rel (%p1175) target = $region28
        $region27: #{_lambda_.8} parent=15 // pred_region
          %p1178 = scmp.lt.s32.totalorder %s99, 1
          %s1179 = scalar_select %p1178, %s99, 1
          %s1180 = scalar_lea.vmem %s5, %s1179
        $region28: #{_lambda_.8} parent=15 // pred_fallthru
          _
        // Predicated region
        $region29: #{_lambda_.8} parent=15 // pred_check
          %p1181 = pneg %p201
        $region30: #{_lambda_.8} parent=15 // pred_check_branch
          %1183 = sbr.rel (%p1181) target = $region32
        $region31: #{_lambda_.8} parent=15 // pred_region
          %p1184 = scmp.lt.s32.totalorder %s99, 1
          %s1185 = scalar_select %p1184, %s99, 1
          %s1186 = smul.addr %s1185, 16
          %s1187 = smul.addr %s1186, 4
          %s1188 = scalar_lea.vmem %s7, %s1187
        $region32: #{_lambda_.8} parent=15 // pred_fallthru
          _
        // Predicated region
        $region33: #{_lambda_.8} parent=15 // pred_check
          %p1189 = pneg %p227
        $region34: #{_lambda_.8} parent=15 // pred_check_branch
          %1191 = sbr.rel (%p1189) target = $region36
        $region35: #{_lambda_.8} parent=15 // pred_region
          %p1192 = scmp.lt.s32.totalorder %s99, 1
          %s1193 = scalar_select %p1192, %s99, 1
          %s1194 = scalar_lea.vmem %s9, %s1193
        $region36: #{_lambda_.8} parent=15 // pred_fallthru
          _
        // Predicated region
        $region37: #{_lambda_.8} parent=15 // pred_check
          %p1195 = pneg %p253
        $region38: #{_lambda_.8} parent=15 // pred_check_branch
          %1197 = sbr.rel (%p1195) target = $region40
        $region39: #{_lambda_.8} parent=15 // pred_region
          %p1198 = scmp.lt.s32.totalorder %s99, 1
          %s1199 = scalar_select %p1198, %s99, 1
          %s1200 = smul.addr %s1199, 16
          %s1201 = smul.addr %s1200, 4
          %s1202 = scalar_lea.vmem %s11, %s1201
        $region40: #{_lambda_.8} parent=15 // pred_fallthru
          _
        // Predicated region
        $region41: #{_lambda_.8} parent=15 // pred_check
          %p1203 = pneg %p279
        $region42: #{_lambda_.8} parent=15 // pred_check_branch
          %1205 = sbr.rel (%p1203) target = $region44
        $region43: #{_lambda_.8} parent=15 // pred_region
          %p1206 = scmp.lt.s32.totalorder %s99, 1
          %s1207 = scalar_select %p1206, %s99, 1
          %s1208 = scalar_lea.vmem %s13, %s1207
        $region44: #{_lambda_.8} parent=15 // pred_fallthru
          _
        // Predicated region
        $region45: #{_lambda_.8} parent=15 // pred_check
          %p1209 = pneg %p305
        $region46: #{_lambda_.8} parent=15 // pred_check_branch
          %1211 = sbr.rel (%p1209) target = $region48
        $region47: #{_lambda_.8} parent=15 // pred_region
          %p1212 = scmp.lt.s32.totalorder %s99, 1
          %s1213 = scalar_select %p1212, %s99, 1
          %s1214 = scalar_lea.vmem %s15, %s1213
        $region48: #{_lambda_.8} parent=15 // pred_fallthru
          _
        // Predicated region
        $region49: #{_lambda_.8} parent=15 // pred_check
          %p1215 = pneg %p331
        $region50: #{_lambda_.8} parent=15 // pred_check_branch
          %1217 = sbr.rel (%p1215) target = $region52
        $region51: #{_lambda_.8} parent=15 // pred_region
          %p1218 = scmp.lt.s32.totalorder %s99, 1
          %s1219 = scalar_select %p1218, %s99, 1
          %s1220 = scalar_lea.vmem %s17, %s1219
        $region52: #{_lambda_.8} parent=15 // pred_fallthru
          _
        // Predicated region
        $region53: #{_lambda_.8} parent=15 // pred_check
          %p1221 = pneg %p357
        $region54: #{_lambda_.8} parent=15 // pred_check_branch
          %1223 = sbr.rel (%p1221) target = $region56
        $region55: #{_lambda_.8} parent=15 // pred_region
          %p1224 = scmp.lt.s32.totalorder %s99, 1
          %s1225 = scalar_select %p1224, %s99, 1
          %s1226 = smul.addr %s1225, 16
          %s1227 = smul.addr %s1226, 4
          %s1228 = scalar_lea.vmem %s19, %s1227
        $region56: #{_lambda_.8} parent=15 // pred_fallthru
          _
        // Predicated region
        $region57: #{_lambda_.8} parent=15 // pred_check
          %p1229 = pneg %p383
        $region58: #{_lambda_.8} parent=15 // pred_check_branch
          %1231 = sbr.rel (%p1229) target = $region60
        $region59: #{_lambda_.8} parent=15 // pred_region
          %p1232 = scmp.lt.s32.totalorder %s99, 1
          %s1233 = scalar_select %p1232, %s99, 1
          %s1234 = scalar_lea.vmem %s21, %s1233
        $region60: #{_lambda_.8} parent=15 // pred_fallthru
          _
        // Predicated region
        $region61: #{_lambda_.8} parent=15 // pred_check
          %p1235 = pneg %p409
        $region62: #{_lambda_.8} parent=15 // pred_check_branch
          %1237 = sbr.rel (%p1235) target = $region64
        $region63: #{_lambda_.8} parent=15 // pred_region
          %p1238 = scmp.lt.s32.totalorder %s99, 1
          %s1239 = scalar_select %p1238, %s99, 1
          %s1240 = smul.addr %s1239, 16
          %s1241 = smul.addr %s1240, 4
          %s1242 = scalar_lea.vmem %s23, %s1241
        $region64: #{_lambda_.8} parent=15 // pred_fallthru
          _
        // Predicated region
        $region65: #{_lambda_.8} parent=15 // pred_check
          %p1243 = pneg %p435
        $region66: #{_lambda_.8} parent=15 // pred_check_branch
          %1245 = sbr.rel (%p1243) target = $region68
        $region67: #{_lambda_.8} parent=15 // pred_region
          %p1246 = scmp.lt.s32.totalorder %s99, 1
          %s1247 = scalar_select %p1246, %s99, 1
          %s1248 = scalar_lea.vmem %s25, %s1247
        $region68: #{_lambda_.8} parent=15 // pred_fallthru
          _
        // Predicated region
        $region69: #{_lambda_.8} parent=15 // pred_check
          %p1249 = pneg %p461
        $region70: #{_lambda_.8} parent=15 // pred_check_branch
          %1251 = sbr.rel (%p1249) target = $region72
        $region71: #{_lambda_.8} parent=15 // pred_region
          %p1252 = scmp.lt.s32.totalorder %s99, 1
          %s1253 = scalar_select %p1252, %s99, 1
          %s1254 = smul.addr %s1253, 16
          %s1255 = smul.addr %s1254, 4
          %s1256 = scalar_lea.vmem %s27, %s1255
        $region72: #{_lambda_.8} parent=15 // pred_fallthru
          _
        // Predicated region
        $region73: #{_lambda_.8} parent=15 // pred_check
          %p1257 = pneg %p487
        $region74: #{_lambda_.8} parent=15 // pred_check_branch
          %1259 = sbr.rel (%p1257) target = $region76
        $region75: #{_lambda_.8} parent=15 // pred_region
          %p1260 = scmp.lt.s32.totalorder %s99, 1
          %s1261 = scalar_select %p1260, %s99, 1
          %s1262 = scalar_lea.vmem %s29, %s1261
        $region76: #{_lambda_.8} parent=15 // pred_fallthru
          _
        // Predicated region
        $region77: #{_lambda_.8} parent=15 // pred_check
          %p1263 = pneg %p513
        $region78: #{_lambda_.8} parent=15 // pred_check_branch
          %1265 = sbr.rel (%p1263) target = $region80
        $region79: #{_lambda_.8} parent=15 // pred_region
          %p1266 = scmp.lt.s32.totalorder %s99, 1
          %s1267 = scalar_select %p1266, %s99, 1
          %s1268 = smul.addr %s1267, 16
          %s1269 = smul.addr %s1268, 4
          %s1270 = scalar_lea.vmem %s31, %s1269
        $region80: #{_lambda_.8} parent=15 // pred_fallthru
          _
        // Predicated region
        $region81: #{_lambda_.8} parent=15 // pred_check
          %p1271 = pneg %p539
        $region82: #{_lambda_.8} parent=15 // pred_check_branch
          %1273 = sbr.rel (%p1271) target = $region84
        $region83: #{_lambda_.8} parent=15 // pred_region
          %p1274 = scmp.lt.s32.totalorder %s99, 1
          %s1275 = scalar_select %p1274, %s99, 1
          %s1276 = scalar_lea.vmem %s33, %s1275
        $region84: #{_lambda_.8} parent=15 // pred_fallthru
          _
        // Predicated region
        $region85: #{_lambda_.8} parent=15 // pred_check
          %p1277 = pneg %p565
        $region86: #{_lambda_.8} parent=15 // pred_check_branch
          %1279 = sbr.rel (%p1277) target = $region88
        $region87: #{_lambda_.8} parent=15 // pred_region
          %p1280 = scmp.lt.s32.totalorder %s99, 1
          %s1281 = scalar_select %p1280, %s99, 1
          %s1282 = scalar_lea.vmem %s35, %s1281
        $region88: #{_lambda_.8} parent=15 // pred_fallthru
          _
        // Predicated region
        $region89: #{_lambda_.8} parent=15 // pred_check
          %p1283 = pneg %p591
        $region90: #{_lambda_.8} parent=15 // pred_check_branch
          %1285 = sbr.rel (%p1283) target = $region92
        $region91: #{_lambda_.8} parent=15 // pred_region
          %p1286 = scmp.lt.s32.totalorder %s99, 1
          %s1287 = scalar_select %p1286, %s99, 1
          %s1288 = scalar_lea.vmem %s37, %s1287
        $region92: #{_lambda_.8} parent=15 // pred_fallthru
          _
        // Predicated region
        $region93: #{_lambda_.8} parent=15 // pred_check
          %p1289 = pneg %p617
        $region94: #{_lambda_.8} parent=15 // pred_check_branch
          %1291 = sbr.rel (%p1289) target = $region96
        $region95: #{_lambda_.8} parent=15 // pred_region
          %p1292 = scmp.lt.s32.totalorder %s99, 1
          %s1293 = scalar_select %p1292, %s99, 1
          %s1294 = smul.addr %s1293, 16
          %s1295 = smul.addr %s1294, 4
          %s1296 = scalar_lea.vmem %s39, %s1295
        $region96: #{_lambda_.8} parent=15 // pred_fallthru
          _
        // Predicated region
        $region97: #{_lambda_.8} parent=15 // pred_check
          %p1297 = pneg %p643
        $region98: #{_lambda_.8} parent=15 // pred_check_branch
          %1299 = sbr.rel (%p1297) target = $region100
        $region99: #{_lambda_.8} parent=15 // pred_region
          %p1300 = scmp.lt.s32.totalorder %s99, 1
          %s1301 = scalar_select %p1300, %s99, 1
          %s1302 = scalar_lea.vmem %s41, %s1301
        $region100: #{_lambda_.8} parent=15 // pred_fallthru
          _
        // Predicated region
        $region101: #{_lambda_.8} parent=15 // pred_check
          %p1303 = pneg %p669
        $region102: #{_lambda_.8} parent=15 // pred_check_branch
          %1305 = sbr.rel (%p1303) target = $region104
        $region103: #{_lambda_.8} parent=15 // pred_region
          %p1306 = scmp.lt.s32.totalorder %s99, 1
          %s1307 = scalar_select %p1306, %s99, 1
          %s1308 = smul.addr %s1307, 16
          %s1309 = smul.addr %s1308, 4
          %s1310 = scalar_lea.vmem %s43, %s1309
        $region104: #{_lambda_.8} parent=15 // pred_fallthru
          _
        // Predicated region
        $region105: #{_lambda_.8} parent=15 // pred_check
          %p1311 = pneg %p695
        $region106: #{_lambda_.8} parent=15 // pred_check_branch
          %1313 = sbr.rel (%p1311) target = $region108
        $region107: #{_lambda_.8} parent=15 // pred_region
          %p1314 = scmp.lt.s32.totalorder %s99, 1
          %s1315 = scalar_select %p1314, %s99, 1
          %s1316 = scalar_lea.vmem %s45, %s1315
        $region108: #{_lambda_.8} parent=15 // pred_fallthru
          _
        // Predicated region
        $region109: #{_lambda_.8} parent=15 // pred_check
          %p1317 = pneg %p721
        $region110: #{_lambda_.8} parent=15 // pred_check_branch
          %1319 = sbr.rel (%p1317) target = $region112
        $region111: #{_lambda_.8} parent=15 // pred_region
          %p1320 = scmp.lt.s32.totalorder %s99, 1
          %s1321 = scalar_select %p1320, %s99, 1
          %s1322 = smul.addr %s1321, 8
          %s1323 = scalar_lea.vmem %s47, %s1322
        $region112: #{_lambda_.8} parent=15 // pred_fallthru
          _
        // Predicated region
        $region113: #{_lambda_.8} parent=15 // pred_check
          %p1324 = pneg %p747
        $region114: #{_lambda_.8} parent=15 // pred_check_branch
          %1326 = sbr.rel (%p1324) target = $region116
        $region115: #{_lambda_.8} parent=15 // pred_region
          %p1327 = scmp.lt.s32.totalorder %s99, 1
          %s1328 = scalar_select %p1327, %s99, 1
          %s1329 = scalar_lea.vmem %s49, %s1328
        $region116: #{_lambda_.8} parent=15 // pred_fallthru
          _
        // Predicated region
        $region117: #{_lambda_.8} parent=15 // pred_check
          %p1330 = pneg %p773
        $region118: #{_lambda_.8} parent=15 // pred_check_branch
          %1332 = sbr.rel (%p1330) target = $region120
        $region119: #{_lambda_.8} parent=15 // pred_region
          %p1333 = scmp.lt.s32.totalorder %s99, 1
          %s1334 = scalar_select %p1333, %s99, 1
          %s1335 = scalar_lea.vmem %s51, %s1334
        $region120: #{_lambda_.8} parent=15 // pred_fallthru
          _
        // Predicated region
        $region121: #{_lambda_.8} parent=15 // pred_check
          %p1336 = pneg %p799
        $region122: #{_lambda_.8} parent=15 // pred_check_branch
          %1338 = sbr.rel (%p1336) target = $region124
        $region123: #{_lambda_.8} parent=15 // pred_region
          %p1339 = scmp.lt.s32.totalorder %s99, 1
          %s1340 = scalar_select %p1339, %s99, 1
          %s1341 = scalar_lea.vmem %s53, %s1340
        $region124: #{_lambda_.8} parent=15 // pred_fallthru
          _
        // Predicated region
        $region125: #{_lambda_.8} parent=15 // pred_check
          %p1342 = pneg %p825
        $region126: #{_lambda_.8} parent=15 // pred_check_branch
          %1344 = sbr.rel (%p1342) target = $region128
        $region127: #{_lambda_.8} parent=15 // pred_region
          %p1345 = scmp.lt.s32.totalorder %s99, 1
          %s1346 = scalar_select %p1345, %s99, 1
          %s1347 = scalar_lea.vmem %s55, %s1346
        $region128: #{_lambda_.8} parent=15 // pred_fallthru
          _
        // Predicated region
        $region129: #{_lambda_.8} parent=15 // pred_check
          %p1348 = pneg %p851
        $region130: #{_lambda_.8} parent=15 // pred_check_branch
          %1350 = sbr.rel (%p1348) target = $region132
        $region131: #{_lambda_.8} parent=15 // pred_region
          %p1351 = scmp.lt.s32.totalorder %s99, 1
          %s1352 = scalar_select %p1351, %s99, 1
          %s1353 = scalar_lea.vmem %s57, %s1352
        $region132: #{_lambda_.8} parent=15 // pred_fallthru
          _
        // Predicated region
        $region133: #{_lambda_.8} parent=15 // pred_check
          %p1354 = pneg %p877
        $region134: #{_lambda_.8} parent=15 // pred_check_branch
          %1356 = sbr.rel (%p1354) target = $region136
        $region135: #{_lambda_.8} parent=15 // pred_region
          %p1357 = scmp.lt.s32.totalorder %s99, 1
          %s1358 = scalar_select %p1357, %s99, 1
          %s1359 = smul.addr %s1358, 16
          %s1360 = smul.addr %s1359, 4
          %s1361 = scalar_lea.vmem %s59, %s1360
        $region136: #{_lambda_.8} parent=15 // pred_fallthru
          _
        // Predicated region
        $region137: #{_lambda_.8} parent=15 // pred_check
          %p1362 = pneg %p903
        $region138: #{_lambda_.8} parent=15 // pred_check_branch
          %1364 = sbr.rel (%p1362) target = $region140
        $region139: #{_lambda_.8} parent=15 // pred_region
          %p1365 = scmp.lt.s32.totalorder %s99, 1
          %s1366 = scalar_select %p1365, %s99, 1
          %s1367 = scalar_lea.vmem %s61, %s1366
        $region140: #{_lambda_.8} parent=15 // pred_fallthru
          _
        // Predicated region
        $region141: #{_lambda_.8} parent=15 // pred_check
          %p1368 = pneg %p929
        $region142: #{_lambda_.8} parent=15 // pred_check_branch
          %1370 = sbr.rel (%p1368) target = $region144
        $region143: #{_lambda_.8} parent=15 // pred_region
          %p1371 = scmp.lt.s32.totalorder %s99, 1
          %s1372 = scalar_select %p1371, %s99, 1
          %s1373 = scalar_lea.vmem %s63, %s1372
        $region144: #{_lambda_.8} parent=15 // pred_fallthru
          _
        // Predicated region
        $region145: #{_lambda_.8} parent=15 // pred_check
          %p1374 = pneg %p955
        $region146: #{_lambda_.8} parent=15 // pred_check_branch
          %1376 = sbr.rel (%p1374) target = $region148
        $region147: #{_lambda_.8} parent=15 // pred_region
          %p1377 = scmp.lt.s32.totalorder %s99, 1
          %s1378 = scalar_select %p1377, %s99, 1
          %s1379 = scalar_lea.vmem %s65, %s1378
        $region148: #{_lambda_.8} parent=15 // pred_fallthru
          _
        // Predicated region
        $region149: #{_lambda_.8} parent=15 // pred_check
          %p1380 = pneg %p981
        $region150: #{_lambda_.8} parent=15 // pred_check_branch
          %1382 = sbr.rel (%p1380) target = $region152
        $region151: #{_lambda_.8} parent=15 // pred_region
          %p1383 = scmp.lt.s32.totalorder %s99, 1
          %s1384 = scalar_select %p1383, %s99, 1
          %s1385 = smul.addr %s1384, 16
          %s1386 = smul.addr %s1385, 4
          %s1387 = scalar_lea.vmem %s67, %s1386
        $region152: #{_lambda_.8} parent=15 // pred_fallthru
          _
        // Predicated region
        $region153: #{_lambda_.8} parent=15 // pred_check
          %p1388 = pneg %p1007
        $region154: #{_lambda_.8} parent=15 // pred_check_branch
          %1390 = sbr.rel (%p1388) target = $region156
        $region155: #{_lambda_.8} parent=15 // pred_region
          %p1391 = scmp.lt.s32.totalorder %s99, 1
          %s1392 = scalar_select %p1391, %s99, 1
          %s1393 = scalar_lea.vmem %s69, %s1392
        $region156: #{_lambda_.8} parent=15 // pred_fallthru
          _
        // Predicated region
        $region157: #{_lambda_.8} parent=15 // pred_check
          %p1394 = pneg %p1033
        $region158: #{_lambda_.8} parent=15 // pred_check_branch
          %1396 = sbr.rel (%p1394) target = $region160
        $region159: #{_lambda_.8} parent=15 // pred_region
          %p1397 = scmp.lt.s32.totalorder %s99, 1
          %s1398 = scalar_select %p1397, %s99, 1
          %s1399 = smul.addr %s1398, 16
          %s1400 = smul.addr %s1399, 4
          %s1401 = scalar_lea.vmem %s71, %s1400
        $region160: #{_lambda_.8} parent=15 // pred_fallthru
          _
        // Predicated region
        $region161: #{_lambda_.8} parent=15 // pred_check
          %p1402 = pneg %p1059
        $region162: #{_lambda_.8} parent=15 // pred_check_branch
          %1404 = sbr.rel (%p1402) target = $region164
        $region163: #{_lambda_.8} parent=15 // pred_region
          %p1405 = scmp.lt.s32.totalorder %s99, 1
          %s1406 = scalar_select %p1405, %s99, 1
          %s1407 = scalar_lea.vmem %s73, %s1406
        $region164: #{_lambda_.8} parent=15 // pred_fallthru
          _
        // Predicated region
        $region165: #{_lambda_.8} parent=15 // pred_check
          %p1408 = pneg %p1085
        $region166: #{_lambda_.8} parent=15 // pred_check_branch
          %1410 = sbr.rel (%p1408) target = $region168
        $region167: #{_lambda_.8} parent=15 // pred_region
          %s1411 = sand.u32 %s1075, 1
          %s1412 = scalar_lea.sflag [#allocation3], %s1411
          %s1413 = sand.u32 %s1075, 1
          %s1414 = scalar_lea.vmem [#allocation2], %s1413
          %1416 = vsyncadd %s1412, 0
          %s1417 = scalar_lea.hbm %s75, %s99
          %s1419 = sshll.u32 %s1417, 4
          %s1420 = int_to_ptr.hbm [resolvable:$true] %s1419
          %s1421 = sshll.u32 %s1414, 4
          %s1422 = int_to_ptr.vmem [resolvable:$true] %s1421
          %1424 = dma.hbm_to_vmem [thread:$0]  %s1420, 16, %s1422, %s1412
        $region168: #{_lambda_.8} parent=15 // pred_fallthru
          _
        // Predicated region
        $region169: #{_lambda_.8} parent=15 // pred_check
          %p1425 = pneg %p1111
        $region170: #{_lambda_.8} parent=15 // pred_check_branch
          %1427 = sbr.rel (%p1425) target = $region172
        $region171: #{_lambda_.8} parent=15 // pred_region
          %s1428 = sand.u32 %s1101, 1
          %s1429 = scalar_lea.sflag [#allocation5], %s1428
          %s1430 = sand.u32 %s1101, 1
          %s1431 = scalar_lea.vmem [#allocation4], %s1430
          %1433 = vsyncadd %s1429, 0
          %s1434 = scalar_lea.hbm %s77, %s99
          %s1436 = sshll.u32 %s1434, 4
          %s1437 = int_to_ptr.hbm [resolvable:$true] %s1436
          %s1438 = sshll.u32 %s1431, 4
          %s1439 = int_to_ptr.vmem [resolvable:$true] %s1438
          %1441 = dma.hbm_to_vmem [thread:$0]  %s1437, 16, %s1439, %s1429
        $region172: #{_lambda_.8} parent=15 // pred_fallthru
          _
      $region16: #{_lambda_.8} parent=5 // pred_fallthru
        _
      %p1442 = scmp.le.s32.totalorder 1, %s91
      %p1443 = scmp.lt.s32.totalorder %s91, 5
      %p1444 = pnand %p1442, %p1443
      %p1445 = pneg %p1444
      // Predicated region
      $region173: #{_lambda_.8} parent=5 // pred_check
        _
      $region174: #{_lambda_.8} parent=5 // pred_check_branch
        %1447 = sbr.rel (%p1444) target = $region176
      $region175: #{_lambda_.8} parent=5 // pred_region
        %s1448 = ssub.s32 %s91, 1
        %s1449 = sand.u32 %s1078, 1
        %s1450 = scalar_lea.sflag [#allocation3], %s1449
        %s1451 = sand.u32 %s1078, 1
        %s1452 = scalar_lea.vmem [#allocation2], %s1451
        // Predicated region
        $region177: #{_lambda_.8} parent=175 // pred_check
          %p1453 = pneg %p1091
        $region178: #{_lambda_.8} parent=175 // pred_check_branch
          %1455 = sbr.rel (%p1453) target = $region180
        $region179: #{_lambda_.8} parent=175 // pred_region
          %1457 = dma.done %s1450, 16
        $region180: #{_lambda_.8} parent=175 // pred_fallthru
          _
        %s1458 = sand.u32 %s1104, 1
        %s1459 = scalar_lea.sflag [#allocation5], %s1458
        %s1460 = sand.u32 %s1104, 1
        %s1461 = scalar_lea.vmem [#allocation4], %s1460
        // Predicated region
        $region181: #{_lambda_.8} parent=175 // pred_check
          %p1462 = pneg %p1117
        $region182: #{_lambda_.8} parent=175 // pred_check_branch
          %1464 = sbr.rel (%p1462) target = $region184
        $region183: #{_lambda_.8} parent=175 // pred_region
          %1466 = dma.done %s1459, 16
        $region184: #{_lambda_.8} parent=175 // pred_fallthru
          _
        %p1467 = scmp.lt.s32.totalorder %s100, 1
        %s1468 = scalar_select %p1467, %s100, 1
        %s1469 = smul.addr %s1468, 8
        %s1470 = scalar_lea.vmem %s1, %s1469
        %p1471 = pneg %p129
        %p1472 = pneg %p126
        %p1473 = scmp.lt.s32.totalorder %s101, 1
        %s1474 = scalar_select %p1473, %s101, 1
        %s1475 = scalar_lea.vmem %s3, %s1474
        %p1476 = pneg %p155
        %p1477 = pneg %p152
        %p1478 = scmp.lt.s32.totalorder %s101, 1
        %s1479 = scalar_select %p1478, %s101, 1
        %s1480 = scalar_lea.vmem %s5, %s1479
        %p1481 = pneg %p181
        %p1482 = pneg %p178
        %p1483 = scmp.lt.s32.totalorder %s101, 1
        %s1484 = scalar_select %p1483, %s101, 1
        %s1485 = smul.addr %s1484, 16
        %s1486 = smul.addr %s1485, 4
        %s1487 = scalar_lea.vmem %s7, %s1486
        %p1488 = pneg %p207
        %p1489 = pneg %p204
        %p1490 = scmp.lt.s32.totalorder %s101, 1
        %s1491 = scalar_select %p1490, %s101, 1
        %s1492 = scalar_lea.vmem %s9, %s1491
        %p1493 = pneg %p233
        %p1494 = pneg %p230
        %p1495 = scmp.lt.s32.totalorder %s101, 1
        %s1496 = scalar_select %p1495, %s101, 1
        %s1497 = smul.addr %s1496, 16
        %s1498 = smul.addr %s1497, 4
        %s1499 = scalar_lea.vmem %s11, %s1498
        %p1500 = pneg %p259
        %p1501 = pneg %p256
        %p1502 = scmp.lt.s32.totalorder %s101, 1
        %s1503 = scalar_select %p1502, %s101, 1
        %s1504 = scalar_lea.vmem %s13, %s1503
        %p1505 = pneg %p285
        %p1506 = pneg %p282
        %p1507 = scmp.lt.s32.totalorder %s101, 1
        %s1508 = scalar_select %p1507, %s101, 1
        %s1509 = scalar_lea.vmem %s15, %s1508
        %p1510 = pneg %p311
        %p1511 = pneg %p308
        %p1512 = scmp.lt.s32.totalorder %s101, 1
        %s1513 = scalar_select %p1512, %s101, 1
        %s1514 = scalar_lea.vmem %s17, %s1513
        %p1515 = pneg %p337
        %p1516 = pneg %p334
        %p1517 = scmp.lt.s32.totalorder %s101, 1
        %s1518 = scalar_select %p1517, %s101, 1
        %s1519 = smul.addr %s1518, 16
        %s1520 = smul.addr %s1519, 4
        %s1521 = scalar_lea.vmem %s19, %s1520
        %p1522 = pneg %p363
        %p1523 = pneg %p360
        %p1524 = scmp.lt.s32.totalorder %s101, 1
        %s1525 = scalar_select %p1524, %s101, 1
        %s1526 = scalar_lea.vmem %s21, %s1525
        %p1527 = pneg %p389
        %p1528 = pneg %p386
        %p1529 = scmp.lt.s32.totalorder %s101, 1
        %s1530 = scalar_select %p1529, %s101, 1
        %s1531 = smul.addr %s1530, 16
        %s1532 = smul.addr %s1531, 4
        %s1533 = scalar_lea.vmem %s23, %s1532
        %p1534 = pneg %p415
        %p1535 = pneg %p412
        %p1536 = scmp.lt.s32.totalorder %s101, 1
        %s1537 = scalar_select %p1536, %s101, 1
        %s1538 = scalar_lea.vmem %s25, %s1537
        %p1539 = pneg %p441
        %p1540 = pneg %p438
        %p1541 = scmp.lt.s32.totalorder %s101, 1
        %s1542 = scalar_select %p1541, %s101, 1
        %s1543 = smul.addr %s1542, 16
        %s1544 = smul.addr %s1543, 4
        %s1545 = scalar_lea.vmem %s27, %s1544
        %p1546 = pneg %p467
        %p1547 = pneg %p464
        %p1548 = scmp.lt.s32.totalorder %s101, 1
        %s1549 = scalar_select %p1548, %s101, 1
        %s1550 = scalar_lea.vmem %s29, %s1549
        %p1551 = pneg %p493
        %p1552 = pneg %p490
        %p1553 = scmp.lt.s32.totalorder %s101, 1
        %s1554 = scalar_select %p1553, %s101, 1
        %s1555 = smul.addr %s1554, 16
        %s1556 = smul.addr %s1555, 4
        %s1557 = scalar_lea.vmem %s31, %s1556
        %p1558 = pneg %p519
        %p1559 = pneg %p516
        %p1560 = scmp.lt.s32.totalorder %s101, 1
        %s1561 = scalar_select %p1560, %s101, 1
        %s1562 = scalar_lea.vmem %s33, %s1561
        %p1563 = pneg %p545
        %p1564 = pneg %p542
        %p1565 = scmp.lt.s32.totalorder %s101, 1
        %s1566 = scalar_select %p1565, %s101, 1
        %s1567 = scalar_lea.vmem %s35, %s1566
        %p1568 = pneg %p571
        %p1569 = pneg %p568
        %p1570 = scmp.lt.s32.totalorder %s101, 1
        %s1571 = scalar_select %p1570, %s101, 1
        %s1572 = scalar_lea.vmem %s37, %s1571
        %p1573 = pneg %p597
        %p1574 = pneg %p594
        %p1575 = scmp.lt.s32.totalorder %s101, 1
        %s1576 = scalar_select %p1575, %s101, 1
        %s1577 = smul.addr %s1576, 16
        %s1578 = smul.addr %s1577, 4
        %s1579 = scalar_lea.vmem %s39, %s1578
        %p1580 = pneg %p623
        %p1581 = pneg %p620
        %p1582 = scmp.lt.s32.totalorder %s101, 1
        %s1583 = scalar_select %p1582, %s101, 1
        %s1584 = scalar_lea.vmem %s41, %s1583
        %p1585 = pneg %p649
        %p1586 = pneg %p646
        %p1587 = scmp.lt.s32.totalorder %s101, 1
        %s1588 = scalar_select %p1587, %s101, 1
        %s1589 = smul.addr %s1588, 16
        %s1590 = smul.addr %s1589, 4
        %s1591 = scalar_lea.vmem %s43, %s1590
        %p1592 = pneg %p675
        %p1593 = pneg %p672
        %p1594 = scmp.lt.s32.totalorder %s101, 1
        %s1595 = scalar_select %p1594, %s101, 1
        %s1596 = scalar_lea.vmem %s45, %s1595
        %p1597 = pneg %p701
        %p1598 = pneg %p698
        %p1599 = scmp.lt.s32.totalorder %s101, 1
        %s1600 = scalar_select %p1599, %s101, 1
        %s1601 = smul.addr %s1600, 8
        %s1602 = scalar_lea.vmem %s47, %s1601
        %p1603 = pneg %p727
        %p1604 = pneg %p724
        %p1605 = scmp.lt.s32.totalorder %s101, 1
        %s1606 = scalar_select %p1605, %s101, 1
        %s1607 = scalar_lea.vmem %s49, %s1606
        %p1608 = pneg %p753
        %p1609 = pneg %p750
        %p1610 = scmp.lt.s32.totalorder %s101, 1
        %s1611 = scalar_select %p1610, %s101, 1
        %s1612 = scalar_lea.vmem %s51, %s1611
        %p1613 = pneg %p779
        %p1614 = pneg %p776
        %p1615 = scmp.lt.s32.totalorder %s101, 1
        %s1616 = scalar_select %p1615, %s101, 1
        %s1617 = scalar_lea.vmem %s53, %s1616
        %p1618 = pneg %p805
        %p1619 = pneg %p802
        %p1620 = scmp.lt.s32.totalorder %s101, 1
        %s1621 = scalar_select %p1620, %s101, 1
        %s1622 = scalar_lea.vmem %s55, %s1621
        %p1623 = pneg %p831
        %p1624 = pneg %p828
        %p1625 = scmp.lt.s32.totalorder %s101, 1
        %s1626 = scalar_select %p1625, %s101, 1
        %s1627 = scalar_lea.vmem %s57, %s1626
        %p1628 = pneg %p857
        %p1629 = pneg %p854
        %p1630 = scmp.lt.s32.totalorder %s101, 1
        %s1631 = scalar_select %p1630, %s101, 1
        %s1632 = smul.addr %s1631, 16
        %s1633 = smul.addr %s1632, 4
        %s1634 = scalar_lea.vmem %s59, %s1633
        %p1635 = pneg %p883
        %p1636 = pneg %p880
        %p1637 = scmp.lt.s32.totalorder %s101, 1
        %s1638 = scalar_select %p1637, %s101, 1
        %s1639 = scalar_lea.vmem %s61, %s1638
        %p1640 = pneg %p909
        %p1641 = pneg %p906
        %p1642 = scmp.lt.s32.totalorder %s101, 1
        %s1643 = scalar_select %p1642, %s101, 1
        %s1644 = scalar_lea.vmem %s63, %s1643
        %p1645 = pneg %p935
        %p1646 = pneg %p932
        %p1647 = scmp.lt.s32.totalorder %s101, 1
        %s1648 = scalar_select %p1647, %s101, 1
        %s1649 = scalar_lea.vmem %s65, %s1648
        %p1650 = pneg %p961
        %p1651 = pneg %p958
        %p1652 = scmp.lt.s32.totalorder %s101, 1
        %s1653 = scalar_select %p1652, %s101, 1
        %s1654 = smul.addr %s1653, 16
        %s1655 = smul.addr %s1654, 4
        %s1656 = scalar_lea.vmem %s67, %s1655
        %p1657 = pneg %p987
        %p1658 = pneg %p984
        %p1659 = scmp.lt.s32.totalorder %s101, 1
        %s1660 = scalar_select %p1659, %s101, 1
        %s1661 = scalar_lea.vmem %s69, %s1660
        %p1662 = pneg %p1013
        %p1663 = pneg %p1010
        %p1664 = scmp.lt.s32.totalorder %s101, 1
        %s1665 = scalar_select %p1664, %s101, 1
        %s1666 = smul.addr %s1665, 16
        %s1667 = smul.addr %s1666, 4
        %s1668 = scalar_lea.vmem %s71, %s1667
        %p1669 = pneg %p1039
        %p1670 = pneg %p1036
        %p1671 = scmp.lt.s32.totalorder %s101, 1
        %s1672 = scalar_select %p1671, %s101, 1
        %s1673 = scalar_lea.vmem %s73, %s1672
        %p1674 = pneg %p1065
        %p1675 = pneg %p1062
        %s1676 = sand.u32 %s1078, 1
        %s1677 = scalar_lea.sflag [#allocation3], %s1676
        %s1678 = sand.u32 %s1078, 1
        %s1679 = scalar_lea.vmem [#allocation2], %s1678
        %p1680 = pneg %p1091
        %p1681 = pneg %p1088
        %s1682 = sand.u32 %s1104, 1
        %s1683 = scalar_lea.sflag [#allocation5], %s1682
        %s1684 = sand.u32 %s1104, 1
        %s1685 = scalar_lea.vmem [#allocation4], %s1684
        %p1686 = pneg %p1117
        %p1687 = pneg %p1114
        %p1688 = pneg %p1143
        %p1689 = pneg %p1140
        %p1690 = scmp.lt.s32.totalorder %s100, 1
        %s1691 = scalar_select %p1690, %s100, 1
        %s1692 = smul.addr %s1691, 8
        %s1693 = scalar_lea.vmem %s79, %s1692
        %p1694 = scmp.lt.s32.totalorder %s100, 1
        %s1695 = scalar_select %p1694, %s100, 1
        %s1696 = smul.addr %s1695, 8
        %s1697 = scalar_lea.vmem %s1, %s1696
        %p1698 = scmp.lt.s32.totalorder %s101, 1
        %s1699 = scalar_select %p1698, %s101, 1
        %s1700 = scalar_lea.vmem %s3, %s1699
        %p1701 = scmp.lt.s32.totalorder %s101, 1
        %s1702 = scalar_select %p1701, %s101, 1
        %s1703 = scalar_lea.vmem %s5, %s1702
        %p1704 = scmp.lt.s32.totalorder %s101, 1
        %s1705 = scalar_select %p1704, %s101, 1
        %s1706 = smul.addr %s1705, 16
        %s1707 = smul.addr %s1706, 4
        %s1708 = scalar_lea.vmem %s7, %s1707
        %p1709 = scmp.lt.s32.totalorder %s101, 1
        %s1710 = scalar_select %p1709, %s101, 1
        %s1711 = scalar_lea.vmem %s9, %s1710
        %p1712 = scmp.lt.s32.totalorder %s101, 1
        %s1713 = scalar_select %p1712, %s101, 1
        %s1714 = smul.addr %s1713, 16
        %s1715 = smul.addr %s1714, 4
        %s1716 = scalar_lea.vmem %s11, %s1715
        %p1717 = scmp.lt.s32.totalorder %s101, 1
        %s1718 = scalar_select %p1717, %s101, 1
        %s1719 = scalar_lea.vmem %s13, %s1718
        %p1720 = scmp.lt.s32.totalorder %s101, 1
        %s1721 = scalar_select %p1720, %s101, 1
        %s1722 = scalar_lea.vmem %s15, %s1721
        %p1723 = scmp.lt.s32.totalorder %s101, 1
        %s1724 = scalar_select %p1723, %s101, 1
        %s1725 = scalar_lea.vmem %s17, %s1724
        %p1726 = scmp.lt.s32.totalorder %s101, 1
        %s1727 = scalar_select %p1726, %s101, 1
        %s1728 = smul.addr %s1727, 16
        %s1729 = smul.addr %s1728, 4
        %s1730 = scalar_lea.vmem %s19, %s1729
        %p1731 = scmp.lt.s32.totalorder %s101, 1
        %s1732 = scalar_select %p1731, %s101, 1
        %s1733 = scalar_lea.vmem %s21, %s1732
        %p1734 = scmp.lt.s32.totalorder %s101, 1
        %s1735 = scalar_select %p1734, %s101, 1
        %s1736 = smul.addr %s1735, 16
        %s1737 = smul.addr %s1736, 4
        %s1738 = scalar_lea.vmem %s23, %s1737
        %p1739 = scmp.lt.s32.totalorder %s101, 1
        %s1740 = scalar_select %p1739, %s101, 1
        %s1741 = scalar_lea.vmem %s25, %s1740
        %p1742 = scmp.lt.s32.totalorder %s101, 1
        %s1743 = scalar_select %p1742, %s101, 1
        %s1744 = smul.addr %s1743, 16
        %s1745 = smul.addr %s1744, 4
        %s1746 = scalar_lea.vmem %s27, %s1745
        %p1747 = scmp.lt.s32.totalorder %s101, 1
        %s1748 = scalar_select %p1747, %s101, 1
        %s1749 = scalar_lea.vmem %s29, %s1748
        %p1750 = scmp.lt.s32.totalorder %s101, 1
        %s1751 = scalar_select %p1750, %s101, 1
        %s1752 = smul.addr %s1751, 16
        %s1753 = smul.addr %s1752, 4
        %s1754 = scalar_lea.vmem %s31, %s1753
        %p1755 = scmp.lt.s32.totalorder %s101, 1
        %s1756 = scalar_select %p1755, %s101, 1
        %s1757 = scalar_lea.vmem %s33, %s1756
        %p1758 = scmp.lt.s32.totalorder %s101, 1
        %s1759 = scalar_select %p1758, %s101, 1
        %s1760 = scalar_lea.vmem %s35, %s1759
        %p1761 = scmp.lt.s32.totalorder %s101, 1
        %s1762 = scalar_select %p1761, %s101, 1
        %s1763 = scalar_lea.vmem %s37, %s1762
        %p1764 = scmp.lt.s32.totalorder %s101, 1
        %s1765 = scalar_select %p1764, %s101, 1
        %s1766 = smul.addr %s1765, 16
        %s1767 = smul.addr %s1766, 4
        %s1768 = scalar_lea.vmem %s39, %s1767
        %p1769 = scmp.lt.s32.totalorder %s101, 1
        %s1770 = scalar_select %p1769, %s101, 1
        %s1771 = scalar_lea.vmem %s41, %s1770
        %p1772 = scmp.lt.s32.totalorder %s101, 1
        %s1773 = scalar_select %p1772, %s101, 1
        %s1774 = smul.addr %s1773, 16
        %s1775 = smul.addr %s1774, 4
        %s1776 = scalar_lea.vmem %s43, %s1775
        %p1777 = scmp.lt.s32.totalorder %s101, 1
        %s1778 = scalar_select %p1777, %s101, 1
        %s1779 = scalar_lea.vmem %s45, %s1778
        %p1780 = scmp.lt.s32.totalorder %s101, 1
        %s1781 = scalar_select %p1780, %s101, 1
        %s1782 = smul.addr %s1781, 8
        %s1783 = scalar_lea.vmem %s47, %s1782
        %p1784 = scmp.lt.s32.totalorder %s101, 1
        %s1785 = scalar_select %p1784, %s101, 1
        %s1786 = scalar_lea.vmem %s49, %s1785
        %p1787 = scmp.lt.s32.totalorder %s101, 1
        %s1788 = scalar_select %p1787, %s101, 1
        %s1789 = scalar_lea.vmem %s51, %s1788
        %p1790 = scmp.lt.s32.totalorder %s101, 1
        %s1791 = scalar_select %p1790, %s101, 1
        %s1792 = scalar_lea.vmem %s53, %s1791
        %p1793 = scmp.lt.s32.totalorder %s101, 1
        %s1794 = scalar_select %p1793, %s101, 1
        %s1795 = scalar_lea.vmem %s55, %s1794
        %p1796 = scmp.lt.s32.totalorder %s101, 1
        %s1797 = scalar_select %p1796, %s101, 1
        %s1798 = scalar_lea.vmem %s57, %s1797
        %p1799 = scmp.lt.s32.totalorder %s101, 1
        %s1800 = scalar_select %p1799, %s101, 1
        %s1801 = smul.addr %s1800, 16
        %s1802 = smul.addr %s1801, 4
        %s1803 = scalar_lea.vmem %s59, %s1802
        %p1804 = scmp.lt.s32.totalorder %s101, 1
        %s1805 = scalar_select %p1804, %s101, 1
        %s1806 = scalar_lea.vmem %s61, %s1805
        %p1807 = scmp.lt.s32.totalorder %s101, 1
        %s1808 = scalar_select %p1807, %s101, 1
        %s1809 = scalar_lea.vmem %s63, %s1808
        %p1810 = scmp.lt.s32.totalorder %s101, 1
        %s1811 = scalar_select %p1810, %s101, 1
        %s1812 = scalar_lea.vmem %s65, %s1811
        %p1813 = scmp.lt.s32.totalorder %s101, 1
        %s1814 = scalar_select %p1813, %s101, 1
        %s1815 = smul.addr %s1814, 16
        %s1816 = smul.addr %s1815, 4
        %s1817 = scalar_lea.vmem %s67, %s1816
        %p1818 = scmp.lt.s32.totalorder %s101, 1
        %s1819 = scalar_select %p1818, %s101, 1
        %s1820 = scalar_lea.vmem %s69, %s1819
        %p1821 = scmp.lt.s32.totalorder %s101, 1
        %s1822 = scalar_select %p1821, %s101, 1
        %s1823 = smul.addr %s1822, 16
        %s1824 = smul.addr %s1823, 4
        %s1825 = scalar_lea.vmem %s71, %s1824
        %p1826 = scmp.lt.s32.totalorder %s101, 1
        %s1827 = scalar_select %p1826, %s101, 1
        %s1828 = scalar_lea.vmem %s73, %s1827
        %p1829 = scmp.lt.s32.totalorder %s100, 1
        %s1830 = scalar_select %p1829, %s100, 1
        %s1831 = smul.addr %s1830, 8
        %s1832 = scalar_lea.vmem %s79, %s1831
        %p1834 = scmp.eq.s32.totalorder %s101, 0
        // Predicated region
        $region185: #{_lambda_.8} parent=175 // pred_check
          %p1835 = pneg %p1834
        $region186: #{_lambda_.8} parent=175 // pred_check_branch
          %1837 = sbr.rel (%p1835) target = $region188
        $region187: #{_lambda_.8} parent=175 // pred_region
          %v1838 = vld [vmem:[%s1697] sm:$0xff]
          %1839 = vst [vmem:[%s1832] sm:$0xff] %v1838
        $region188: #{_lambda_.8} parent=175 // pred_fallthru
          _
        %v1840 = vld [vmem:[%s1832] sm:$0xff]
        %1841 = vadd.xlane.f32.xlu0 %v1840
        %v1842 = vpop.xlane.xlu0 %1841
        %v1843 = vmul.f32 %v1842, 0.03125
        %v1844 = vmul.f32 %v1840, %v1840
        %1845 = vadd.xlane.f32.xlu0 %v1844
        %v1846 = vpop.xlane.xlu0 %1845
        %v1847 = vmul.f32 %v1846, 0.03125
        %v1848 = vmul.f32 %v1843, %v1843
        %v1849 = vsub.f32 %v1847, %v1848
        %v1850 = vsub.f32 %v1840, %v1843
        %v1851 = vadd.f32 %v1849, 1e-05
        %v1852 = vrsqrt.pop %v1851
        %v1853 = vmul.f32 %v1852, %v1851
        %v1854 = vmul.f32 %v1853, %v1852
        %v1855 = vmul.f32 0.5, %v1854
        %v1856 = vsub.f32 1.5, %v1855
        %v1857 = vmul.f32 %v1852, %v1856
        %vm1858 = vweird.f32 %v1851
        %vm1859 = vweird.f32 %v1852
        %vm1860 = vmor %vm1858, %vm1859
        %v1861 = vsel %vm1860, %v1852, %v1857
        %v1862 = vmul.f32 %v1850, %v1861
        %v1863 = vld [vmem:[%s1700] sm:$0x1]
        %v1865 = vperm.slane %v1863, 0
        %v1867 = vmul.f32 %v1862, %v1865
        %v1868 = vld [vmem:[%s1703] sm:$0x1]
        %v1870 = vperm.slane %v1868, 0
        %v1872 = vadd.f32 %v1867, %v1870
        %v1873 = vpack.c.bf16 %v1872, %v1872
        %v1874 = vld [vmem:[%s1708] sm:$0xf]
        %v1875 = vld [vmem:[%s1708 + $0x4] sm:$0xf]
        %v1876 = vld [vmem:[%s1708 + $0x8] sm:$0xf]
        %v1877 = vld [vmem:[%s1708 + $0xc] sm:$0xf]
        %v1878 = vld [vmem:[%s1708 + $0x10] sm:$0xf]
        %v1879 = vld [vmem:[%s1708 + $0x14] sm:$0xf]
        %v1880 = vld [vmem:[%s1708 + $0x18] sm:$0xf]
        %v1881 = vld [vmem:[%s1708 + $0x1c] sm:$0xf]
        %v1882 = vld [vmem:[%s1708 + $0x20] sm:$0xf]
        %v1883 = vld [vmem:[%s1708 + $0x24] sm:$0xf]
        %v1884 = vld [vmem:[%s1708 + $0x28] sm:$0xf]
        %v1885 = vld [vmem:[%s1708 + $0x2c] sm:$0xf]
        %v1886 = vld [vmem:[%s1708 + $0x30] sm:$0xf]
        %v1887 = vld [vmem:[%s1708 + $0x34] sm:$0xf]
        %v1888 = vld [vmem:[%s1708 + $0x38] sm:$0xf]
        %v1889 = vld [vmem:[%s1708 + $0x3c] sm:$0xf]
        %v1890 = vld [vmem:[%s1711] sm:$0x1]
        %v1892 = vperm.slane %v1890, 0
        %v1910 = vunpack.c.l.b16 %v1874
        %v1911 = vunpack.c.l.b16 %v1875
        %v1912 = vunpack.c.l.b16 %v1876
        %v1913 = vunpack.c.l.b16 %v1877
        %v1914 = vunpack.c.l.b16 %v1878
        %v1915 = vunpack.c.l.b16 %v1879
        %v1916 = vunpack.c.l.b16 %v1880
        %v1917 = vunpack.c.l.b16 %v1881
        %v1918 = vunpack.c.l.b16 %v1882
        %v1919 = vunpack.c.l.b16 %v1883
        %v1920 = vunpack.c.l.b16 %v1884
        %v1921 = vunpack.c.l.b16 %v1885
        %v1922 = vunpack.c.l.b16 %v1886
        %v1923 = vunpack.c.l.b16 %v1887
        %v1924 = vunpack.c.l.b16 %v1888
        %v1925 = vunpack.c.l.b16 %v1889
        %v1926 = vpack.c.b16 %v1911, %v1910
        %v1927 = vpack.c.b16 %v1913, %v1912
        %v1928 = vpack.c.b16 %v1915, %v1914
        %v1929 = vpack.c.b16 %v1917, %v1916
        %v1930 = vpack.c.b16 %v1919, %v1918
        %v1931 = vpack.c.b16 %v1921, %v1920
        %v1932 = vpack.c.b16 %v1923, %v1922
        %v1933 = vpack.c.b16 %v1925, %v1924
        %1942 = vmatpush.bf16.msra.mxu0 %v1933
        %1943 = vmatpush.bf16.msra.mxu0 %v1932
        %1944 = vmatpush.bf16.msra.mxu0 %v1931
        %1945 = vmatpush.bf16.msra.mxu0 %v1930
        %1946 = vmatpush.bf16.msra.mxu0 %v1929
        %1947 = vmatpush.bf16.msra.mxu0 %v1928
        %1948 = vmatpush.bf16.msra.mxu0 %v1927
        %1949 = vmatpush.bf16.msra.mxu0 %v1926
        %1950 = vmatmul.bf16.gmra.mxu0 %v1873
        %v1951 = vpop.f32.mrf.mxu0
        %v1952 = vadd.f32 %v1892, %v1951
        %v1953 = vpop.f32.mrf.mxu0
        %1954 = vdwg.mxu0
        %v1955 = vxor.u32 %v1952, 2147483648
        %v1956 = vmul.f32 %v1955, 1.442695
        %v1957 = vpow.pop %v1956
        %v1958 = vadd.f32 %v1957, 1.0
        %v1959 = vrcp.pop %v1958
        %v1960 = vmul.f32 %v1958, %v1959
        %v1961 = vsub.f32 1.0, %v1960
        %v1962 = vmul.f32 %v1959, %v1961
        %v1963 = vadd.f32 %v1959, %v1962
        %vm1964 = vweird.f32 %v1958
        %vm1965 = vweird.f32 %v1959
        %vm1966 = vmor %vm1964, %vm1965
        %v1967 = vsel %vm1966, %v1959, %v1963
        %v1968 = vand.u32 2147483647, %v1958
        %vm1969 = vcmp.eq.f32.partialorder %v1968, 8.507059e+37
        %v1970 = vand.u32 %v1958, 2147483648
        %v1971 = vor.u32 1.1754944e-38, %v1970
        %v1972 = vsel %vm1969, %v1971, %v1967
        %v1973 = vmul.f32 1.0, %v1972
        %v1974 = vmul.f32 %v1952, %v1973
        %v1975 = vpack.c.bf16 %v1974, %v1974
        %v1976 = vld [vmem:[%s1716] sm:$0xf]
        %v1977 = vld [vmem:[%s1716 + $0x4] sm:$0xf]
        %v1978 = vld [vmem:[%s1716 + $0x8] sm:$0xf]
        %v1979 = vld [vmem:[%s1716 + $0xc] sm:$0xf]
        %v1980 = vld [vmem:[%s1716 + $0x10] sm:$0xf]
        %v1981 = vld [vmem:[%s1716 + $0x14] sm:$0xf]
        %v1982 = vld [vmem:[%s1716 + $0x18] sm:$0xf]
        %v1983 = vld [vmem:[%s1716 + $0x1c] sm:$0xf]
        %v1984 = vld [vmem:[%s1716 + $0x20] sm:$0xf]
        %v1985 = vld [vmem:[%s1716 + $0x24] sm:$0xf]
        %v1986 = vld [vmem:[%s1716 + $0x28] sm:$0xf]
        %v1987 = vld [vmem:[%s1716 + $0x2c] sm:$0xf]
        %v1988 = vld [vmem:[%s1716 + $0x30] sm:$0xf]
        %v1989 = vld [vmem:[%s1716 + $0x34] sm:$0xf]
        %v1990 = vld [vmem:[%s1716 + $0x38] sm:$0xf]
        %v1991 = vld [vmem:[%s1716 + $0x3c] sm:$0xf]
        %v1992 = vld [vmem:[%s1719] sm:$0x1]
        %v1994 = vperm.slane %v1992, 0
        %v2012 = vunpack.c.l.b16 %v1976
        %v2013 = vunpack.c.l.b16 %v1977
        %v2014 = vunpack.c.l.b16 %v1978
        %v2015 = vunpack.c.l.b16 %v1979
        %v2016 = vunpack.c.l.b16 %v1980
        %v2017 = vunpack.c.l.b16 %v1981
        %v2018 = vunpack.c.l.b16 %v1982
        %v2019 = vunpack.c.l.b16 %v1983
        %v2020 = vunpack.c.l.b16 %v1984
        %v2021 = vunpack.c.l.b16 %v1985
        %v2022 = vunpack.c.l.b16 %v1986
        %v2023 = vunpack.c.l.b16 %v1987
        %v2024 = vunpack.c.l.b16 %v1988
        %v2025 = vunpack.c.l.b16 %v1989
        %v2026 = vunpack.c.l.b16 %v1990
        %v2027 = vunpack.c.l.b16 %v1991
        %v2028 = vpack.c.b16 %v2013, %v2012
        %v2029 = vpack.c.b16 %v2015, %v2014
        %v2030 = vpack.c.b16 %v2017, %v2016
        %v2031 = vpack.c.b16 %v2019, %v2018
        %v2032 = vpack.c.b16 %v2021, %v2020
        %v2033 = vpack.c.b16 %v2023, %v2022
        %v2034 = vpack.c.b16 %v2025, %v2024
        %v2035 = vpack.c.b16 %v2027, %v2026
        %2044 = vmatpush.bf16.msra.mxu0 %v2035
        %2045 = vmatpush.bf16.msra.mxu0 %v2034
        %2046 = vmatpush.bf16.msra.mxu0 %v2033
        %2047 = vmatpush.bf16.msra.mxu0 %v2032
        %2048 = vmatpush.bf16.msra.mxu0 %v2031
        %2049 = vmatpush.bf16.msra.mxu0 %v2030
        %2050 = vmatpush.bf16.msra.mxu0 %v2029
        %2051 = vmatpush.bf16.msra.mxu0 %v2028
        %2052 = vmatmul.bf16.gmra.mxu0 %v1975
        %v2053 = vpop.f32.mrf.mxu0
        %v2054 = vadd.f32 %v1994, %v2053
        %v2055 = vpop.f32.mrf.mxu0
        %2056 = vdwg.mxu0
        %v2057 = vmul.f32 %v2054, 0.5
        %v2058 = vadd.f32 %v1840, %v2057
        %2059 = vadd.xlane.f32.xlu0 %v2058
        %v2060 = vpop.xlane.xlu0 %2059
        %v2061 = vmul.f32 %v2060, 0.03125
        %v2062 = vmul.f32 %v2058, %v2058
        %2063 = vadd.xlane.f32.xlu0 %v2062
        %v2064 = vpop.xlane.xlu0 %2063
        %v2065 = vmul.f32 %v2064, 0.03125
        %v2066 = vmul.f32 %v2061, %v2061
        %v2067 = vsub.f32 %v2065, %v2066
        %v2068 = vsub.f32 %v2058, %v2061
        %v2069 = vadd.f32 %v2067, 1e-05
        %v2070 = vrsqrt.pop %v2069
        %v2071 = vmul.f32 %v2070, %v2069
        %v2072 = vmul.f32 %v2071, %v2070
        %v2073 = vmul.f32 0.5, %v2072
        %v2074 = vsub.f32 1.5, %v2073
        %v2075 = vmul.f32 %v2070, %v2074
        %vm2076 = vweird.f32 %v2069
        %vm2077 = vweird.f32 %v2070
        %vm2078 = vmor %vm2076, %vm2077
        %v2079 = vsel %vm2078, %v2070, %v2075
        %v2080 = vmul.f32 %v2068, %v2079
        %v2081 = vld [vmem:[%s1722] sm:$0x1]
        %v2083 = vperm.slane %v2081, 0
        %v2085 = vmul.f32 %v2080, %v2083
        %v2086 = vld [vmem:[%s1725] sm:$0x1]
        %v2088 = vperm.slane %v2086, 0
        %v2090 = vadd.f32 %v2085, %v2088
        %v2091 = vpack.c.bf16 %v2090, %v2090
        %v2092 = vld [vmem:[%s1730] sm:$0xf]
        %v2093 = vld [vmem:[%s1730 + $0x4] sm:$0xf]
        %v2094 = vld [vmem:[%s1730 + $0x8] sm:$0xf]
        %v2095 = vld [vmem:[%s1730 + $0xc] sm:$0xf]
        %v2096 = vld [vmem:[%s1730 + $0x10] sm:$0xf]
        %v2097 = vld [vmem:[%s1730 + $0x14] sm:$0xf]
        %v2098 = vld [vmem:[%s1730 + $0x18] sm:$0xf]
        %v2099 = vld [vmem:[%s1730 + $0x1c] sm:$0xf]
        %v2100 = vld [vmem:[%s1730 + $0x20] sm:$0xf]
        %v2101 = vld [vmem:[%s1730 + $0x24] sm:$0xf]
        %v2102 = vld [vmem:[%s1730 + $0x28] sm:$0xf]
        %v2103 = vld [vmem:[%s1730 + $0x2c] sm:$0xf]
        %v2104 = vld [vmem:[%s1730 + $0x30] sm:$0xf]
        %v2105 = vld [vmem:[%s1730 + $0x34] sm:$0xf]
        %v2106 = vld [vmem:[%s1730 + $0x38] sm:$0xf]
        %v2107 = vld [vmem:[%s1730 + $0x3c] sm:$0xf]
        %v2108 = vld [vmem:[%s1733] sm:$0x1]
        %v2110 = vperm.slane %v2108, 0
        %v2128 = vunpack.c.l.b16 %v2092
        %v2129 = vunpack.c.l.b16 %v2093
        %v2130 = vunpack.c.l.b16 %v2094
        %v2131 = vunpack.c.l.b16 %v2095
        %v2132 = vunpack.c.l.b16 %v2096
        %v2133 = vunpack.c.l.b16 %v2097
        %v2134 = vunpack.c.l.b16 %v2098
        %v2135 = vunpack.c.l.b16 %v2099
        %v2136 = vunpack.c.l.b16 %v2100
        %v2137 = vunpack.c.l.b16 %v2101
        %v2138 = vunpack.c.l.b16 %v2102
        %v2139 = vunpack.c.l.b16 %v2103
        %v2140 = vunpack.c.l.b16 %v2104
        %v2141 = vunpack.c.l.b16 %v2105
        %v2142 = vunpack.c.l.b16 %v2106
        %v2143 = vunpack.c.l.b16 %v2107
        %v2144 = vpack.c.b16 %v2129, %v2128
        %v2145 = vpack.c.b16 %v2131, %v2130
        %v2146 = vpack.c.b16 %v2133, %v2132
        %v2147 = vpack.c.b16 %v2135, %v2134
        %v2148 = vpack.c.b16 %v2137, %v2136
        %v2149 = vpack.c.b16 %v2139, %v2138
        %v2150 = vpack.c.b16 %v2141, %v2140
        %v2151 = vpack.c.b16 %v2143, %v2142
        %2160 = vmatpush.bf16.msra.mxu0 %v2151
        %2161 = vmatpush.bf16.msra.mxu0 %v2150
        %2162 = vmatpush.bf16.msra.mxu0 %v2149
        %2163 = vmatpush.bf16.msra.mxu0 %v2148
        %2164 = vmatpush.bf16.msra.mxu0 %v2147
        %2165 = vmatpush.bf16.msra.mxu0 %v2146
        %2166 = vmatpush.bf16.msra.mxu0 %v2145
        %2167 = vmatpush.bf16.msra.mxu0 %v2144
        %2168 = vmatmul.bf16.gmra.mxu0 %v2091
        %v2169 = vpop.f32.mrf.mxu0
        %v2170 = vadd.f32 %v2110, %v2169
        %v2171 = vpop.f32.mrf.mxu0
        %2172 = vdwg.mxu0
        %v2173 = vld [vmem:[%s1738] sm:$0xf]
        %v2174 = vld [vmem:[%s1738 + $0x4] sm:$0xf]
        %v2175 = vld [vmem:[%s1738 + $0x8] sm:$0xf]
        %v2176 = vld [vmem:[%s1738 + $0xc] sm:$0xf]
        %v2177 = vld [vmem:[%s1738 + $0x10] sm:$0xf]
        %v2178 = vld [vmem:[%s1738 + $0x14] sm:$0xf]
        %v2179 = vld [vmem:[%s1738 + $0x18] sm:$0xf]
        %v2180 = vld [vmem:[%s1738 + $0x1c] sm:$0xf]
        %v2181 = vld [vmem:[%s1738 + $0x20] sm:$0xf]
        %v2182 = vld [vmem:[%s1738 + $0x24] sm:$0xf]
        %v2183 = vld [vmem:[%s1738 + $0x28] sm:$0xf]
        %v2184 = vld [vmem:[%s1738 + $0x2c] sm:$0xf]
        %v2185 = vld [vmem:[%s1738 + $0x30] sm:$0xf]
        %v2186 = vld [vmem:[%s1738 + $0x34] sm:$0xf]
        %v2187 = vld [vmem:[%s1738 + $0x38] sm:$0xf]
        %v2188 = vld [vmem:[%s1738 + $0x3c] sm:$0xf]
        %v2189 = vld [vmem:[%s1741] sm:$0x1]
        %v2191 = vperm.slane %v2189, 0
        %v2209 = vunpack.c.l.b16 %v2173
        %v2210 = vunpack.c.l.b16 %v2174
        %v2211 = vunpack.c.l.b16 %v2175
        %v2212 = vunpack.c.l.b16 %v2176
        %v2213 = vunpack.c.l.b16 %v2177
        %v2214 = vunpack.c.l.b16 %v2178
        %v2215 = vunpack.c.l.b16 %v2179
        %v2216 = vunpack.c.l.b16 %v2180
        %v2217 = vunpack.c.l.b16 %v2181
        %v2218 = vunpack.c.l.b16 %v2182
        %v2219 = vunpack.c.l.b16 %v2183
        %v2220 = vunpack.c.l.b16 %v2184
        %v2221 = vunpack.c.l.b16 %v2185
        %v2222 = vunpack.c.l.b16 %v2186
        %v2223 = vunpack.c.l.b16 %v2187
        %v2224 = vunpack.c.l.b16 %v2188
        %v2225 = vpack.c.b16 %v2210, %v2209
        %v2226 = vpack.c.b16 %v2212, %v2211
        %v2227 = vpack.c.b16 %v2214, %v2213
        %v2228 = vpack.c.b16 %v2216, %v2215
        %v2229 = vpack.c.b16 %v2218, %v2217
        %v2230 = vpack.c.b16 %v2220, %v2219
        %v2231 = vpack.c.b16 %v2222, %v2221
        %v2232 = vpack.c.b16 %v2224, %v2223
        %2241 = vmatpush.bf16.msra.mxu0 %v2232
        %2242 = vmatpush.bf16.msra.mxu0 %v2231
        %2243 = vmatpush.bf16.msra.mxu0 %v2230
        %2244 = vmatpush.bf16.msra.mxu0 %v2229
        %2245 = vmatpush.bf16.msra.mxu0 %v2228
        %2246 = vmatpush.bf16.msra.mxu0 %v2227
        %2247 = vmatpush.bf16.msra.mxu0 %v2226
        %2248 = vmatpush.bf16.msra.mxu0 %v2225
        %2249 = vmatmul.bf16.gmra.mxu0 %v2091
        %v2250 = vpop.f32.mrf.mxu0
        %v2251 = vadd.f32 %v2191, %v2250
        %v2252 = vpop.f32.mrf.mxu0
        %2253 = vdwg.mxu0
        %v2254 = vld [vmem:[%s1746] sm:$0xf]
        %v2255 = vld [vmem:[%s1746 + $0x4] sm:$0xf]
        %v2256 = vld [vmem:[%s1746 + $0x8] sm:$0xf]
        %v2257 = vld [vmem:[%s1746 + $0xc] sm:$0xf]
        %v2258 = vld [vmem:[%s1746 + $0x10] sm:$0xf]
        %v2259 = vld [vmem:[%s1746 + $0x14] sm:$0xf]
        %v2260 = vld [vmem:[%s1746 + $0x18] sm:$0xf]
        %v2261 = vld [vmem:[%s1746 + $0x1c] sm:$0xf]
        %v2262 = vld [vmem:[%s1746 + $0x20] sm:$0xf]
        %v2263 = vld [vmem:[%s1746 + $0x24] sm:$0xf]
        %v2264 = vld [vmem:[%s1746 + $0x28] sm:$0xf]
        %v2265 = vld [vmem:[%s1746 + $0x2c] sm:$0xf]
        %v2266 = vld [vmem:[%s1746 + $0x30] sm:$0xf]
        %v2267 = vld [vmem:[%s1746 + $0x34] sm:$0xf]
        %v2268 = vld [vmem:[%s1746 + $0x38] sm:$0xf]
        %v2269 = vld [vmem:[%s1746 + $0x3c] sm:$0xf]
        %v2270 = vld [vmem:[%s1749] sm:$0x1]
        %v2272 = vperm.slane %v2270, 0
        %v2290 = vunpack.c.l.b16 %v2254
        %v2291 = vunpack.c.l.b16 %v2255
        %v2292 = vunpack.c.l.b16 %v2256
        %v2293 = vunpack.c.l.b16 %v2257
        %v2294 = vunpack.c.l.b16 %v2258
        %v2295 = vunpack.c.l.b16 %v2259
        %v2296 = vunpack.c.l.b16 %v2260
        %v2297 = vunpack.c.l.b16 %v2261
        %v2298 = vunpack.c.l.b16 %v2262
        %v2299 = vunpack.c.l.b16 %v2263
        %v2300 = vunpack.c.l.b16 %v2264
        %v2301 = vunpack.c.l.b16 %v2265
        %v2302 = vunpack.c.l.b16 %v2266
        %v2303 = vunpack.c.l.b16 %v2267
        %v2304 = vunpack.c.l.b16 %v2268
        %v2305 = vunpack.c.l.b16 %v2269
        %v2306 = vpack.c.b16 %v2291, %v2290
        %v2307 = vpack.c.b16 %v2293, %v2292
        %v2308 = vpack.c.b16 %v2295, %v2294
        %v2309 = vpack.c.b16 %v2297, %v2296
        %v2310 = vpack.c.b16 %v2299, %v2298
        %v2311 = vpack.c.b16 %v2301, %v2300
        %v2312 = vpack.c.b16 %v2303, %v2302
        %v2313 = vpack.c.b16 %v2305, %v2304
        %2322 = vmatpush.bf16.msra.mxu0 %v2313
        %2323 = vmatpush.bf16.msra.mxu0 %v2312
        %2324 = vmatpush.bf16.msra.mxu0 %v2311
        %2325 = vmatpush.bf16.msra.mxu0 %v2310
        %2326 = vmatpush.bf16.msra.mxu0 %v2309
        %2327 = vmatpush.bf16.msra.mxu0 %v2308
        %2328 = vmatpush.bf16.msra.mxu0 %v2307
        %2329 = vmatpush.bf16.msra.mxu0 %v2306
        %2330 = vmatmul.bf16.gmra.mxu0 %v2091
        %v2331 = vpop.f32.mrf.mxu0
        %v2332 = vadd.f32 %v2272, %v2331
        %v2333 = vpop.f32.mrf.mxu0
        %2334 = vdwg.mxu0
        %v2335 = vlaneseq
        %v2336 = vand.u32 %v2335, 127
        %vm2337 = vcmp.lt.s32.totalorder %v2336, 7
        %v2338 = vsel %vm2337, 0.0, -1e+09
        %v2339 = vpack.c.bf16 %v2170, %v2170
        %v2340 = vpack.c.bf16 %v2251, %v2251
        %v2341 = vpack.c.bf16 %v2332, %v2332
        %vm2342 = vcmask 261120
        %v2344 = vsel %vm2342, %v2339, 0
        %v2347 = vsel %vm2342, %v2340, 0
        %2349 = vmatpush.bf16.xpose.msra.mxu0 0
        %2350 = vmatpush.bf16.xpose.msra.mxu0 0
        %2351 = vmatpush.bf16.xpose.msra.mxu0 0
        %2352 = vmatpush.bf16.xpose.msra.mxu0 0
        %2353 = vmatpush.bf16.xpose.msra.mxu0 0
        %2354 = vmatpush.bf16.xpose.msra.mxu0 0
        %2355 = vmatpush.bf16.xpose.msra.mxu0 0
        %2356 = vmatpush.bf16.xpose.msra.mxu0 %v2347
        %2357 = vmatmul.bf16.gmra.mxu0 %v2344
        %v2358 = vpop.f32.mrf.mxu0
        %v2359 = vadd.f32 0.0, %v2358
        %v2360 = vpop.f32.mrf.mxu0
        %2361 = vdwg.mxu0
        %v2362 = vmul.f32 %v2359, 0.35355338
        %v2363 = vadd.f32 %v2362, %v2338
        %vm2364 = vcmask 64512
        %v2365 = vsel %vm2364, %v2363, -inf
        %2366 = vmax.xlane.f32.xlu0 %v2365
        %v2367 = vpop.xlane.xlu0 %2366
        %v2368 = vsub.f32 %v2363, %v2367
        %v2369 = vmul.f32 %v2368, 1.442695
        %v2370 = vpow.pop %v2369
        %v2371 = vsel %vm2364, %v2370, 0.0
        %2372 = vadd.xlane.f32.xlu0 %v2371
        %v2373 = vpop.xlane.xlu0 %2372
        %v2374 = vrcp.pop %v2373
        %v2375 = vmul.f32 %v2370, %v2374
        %v2376 = vpack.c.bf16 %v2375, %v2375
        %v2378 = vsel %vm2364, %v2376, 0
        %vm2380 = vcmask 1043456
        %v2382 = vsel %vm2380, %v2341, 0
        %2384 = vmatpush.bf16.msra.mxu0 0
        %2385 = vmatpush.bf16.msra.mxu0 0
        %2386 = vmatpush.bf16.msra.mxu0 0
        %2387 = vmatpush.bf16.msra.mxu0 0
        %2388 = vmatpush.bf16.msra.mxu0 0
        %2389 = vmatpush.bf16.msra.mxu0 0
        %2390 = vmatpush.bf16.msra.mxu0 0
        %2391 = vmatpush.bf16.msra.mxu0 %v2382
        %2392 = vmatmul.bf16.gmra.mxu0 %v2378
        %v2393 = vpop.f32.mrf.mxu0
        %v2394 = vadd.f32 0.0, %v2393
        %v2395 = vpop.f32.mrf.mxu0
        %2396 = vdwg.mxu0
        %2398 = vrot.lane.b32.xlu0 %v2339, 96
        %v2399 = vpop.permute.xlu0 %2398
        %2401 = vrot.lane.b32.xlu0 %v2340, 96
        %v2402 = vpop.permute.xlu0 %2401
        %v2404 = vsel %vm2342, %v2399, 0
        %v2407 = vsel %vm2342, %v2402, 0
        %2409 = vmatpush.bf16.xpose.msra.mxu0 0
        %2410 = vmatpush.bf16.xpose.msra.mxu0 0
        %2411 = vmatpush.bf16.xpose.msra.mxu0 0
        %2412 = vmatpush.bf16.xpose.msra.mxu0 0
        %2413 = vmatpush.bf16.xpose.msra.mxu0 0
        %2414 = vmatpush.bf16.xpose.msra.mxu0 0
        %2415 = vmatpush.bf16.xpose.msra.mxu0 0
        %2416 = vmatpush.bf16.xpose.msra.mxu0 %v2407
        %2417 = vmatmul.bf16.gmra.mxu0 %v2404
        %v2418 = vpop.f32.mrf.mxu0
        %v2419 = vadd.f32 0.0, %v2418
        %v2420 = vpop.f32.mrf.mxu0
        %2421 = vdwg.mxu0
        %v2422 = vmul.f32 %v2419, 0.35355338
        %v2423 = vadd.f32 %v2422, %v2338
        %v2424 = vsel %vm2364, %v2423, -inf
        %2425 = vmax.xlane.f32.xlu0 %v2424
        %v2426 = vpop.xlane.xlu0 %2425
        %v2427 = vsub.f32 %v2423, %v2426
        %v2428 = vmul.f32 %v2427, 1.442695
        %v2429 = vpow.pop %v2428
        %v2430 = vsel %vm2364, %v2429, 0.0
        %2431 = vadd.xlane.f32.xlu0 %v2430
        %v2432 = vpop.xlane.xlu0 %2431
        %v2433 = vrcp.pop %v2432
        %v2434 = vmul.f32 %v2429, %v2433
        %v2435 = vpack.c.bf16 %v2434, %v2434
        %2437 = vrot.lane.b32.xlu0 %v2341, 96
        %v2438 = vpop.permute.xlu0 %2437
        %v2440 = vsel %vm2364, %v2435, 0
        %v2443 = vsel %vm2380, %v2438, 0
        %2445 = vmatpush.bf16.msra.mxu0 0
        %2446 = vmatpush.bf16.msra.mxu0 0
        %2447 = vmatpush.bf16.msra.mxu0 0
        %2448 = vmatpush.bf16.msra.mxu0 0
        %2449 = vmatpush.bf16.msra.mxu0 0
        %2450 = vmatpush.bf16.msra.mxu0 0
        %2451 = vmatpush.bf16.msra.mxu0 0
        %2452 = vmatpush.bf16.msra.mxu0 %v2443
        %2453 = vmatmul.bf16.gmra.mxu0 %v2440
        %v2454 = vpop.f32.mrf.mxu0
        %v2455 = vadd.f32 0.0, %v2454
        %v2456 = vpop.f32.mrf.mxu0
        %2457 = vdwg.mxu0
        %2458 = vrot.lane.b32.xlu0 %v2339, 64
        %v2459 = vpop.permute.xlu0 %2458
        %2460 = vrot.lane.b32.xlu0 %v2340, 64
        %v2461 = vpop.permute.xlu0 %2460
        %v2463 = vsel %vm2342, %v2459, 0
        %v2466 = vsel %vm2342, %v2461, 0
        %2468 = vmatpush.bf16.xpose.msra.mxu0 0
        %2469 = vmatpush.bf16.xpose.msra.mxu0 0
        %2470 = vmatpush.bf16.xpose.msra.mxu0 0
        %2471 = vmatpush.bf16.xpose.msra.mxu0 0
        %2472 = vmatpush.bf16.xpose.msra.mxu0 0
        %2473 = vmatpush.bf16.xpose.msra.mxu0 0
        %2474 = vmatpush.bf16.xpose.msra.mxu0 0
        %2475 = vmatpush.bf16.xpose.msra.mxu0 %v2466
        %2476 = vmatmul.bf16.gmra.mxu0 %v2463
        %v2477 = vpop.f32.mrf.mxu0
        %v2478 = vadd.f32 0.0, %v2477
        %v2479 = vpop.f32.mrf.mxu0
        %2480 = vdwg.mxu0
        %v2481 = vmul.f32 %v2478, 0.35355338
        %v2482 = vadd.f32 %v2481, %v2338
        %v2483 = vsel %vm2364, %v2482, -inf
        %2484 = vmax.xlane.f32.xlu0 %v2483
        %v2485 = vpop.xlane.xlu0 %2484
        %v2486 = vsub.f32 %v2482, %v2485
        %v2487 = vmul.f32 %v2486, 1.442695
        %v2488 = vpow.pop %v2487
        %v2489 = vsel %vm2364, %v2488, 0.0
        %2490 = vadd.xlane.f32.xlu0 %v2489
        %v2491 = vpop.xlane.xlu0 %2490
        %v2492 = vrcp.pop %v2491
        %v2493 = vmul.f32 %v2488, %v2492
        %v2494 = vpack.c.bf16 %v2493, %v2493
        %2495 = vrot.lane.b32.xlu0 %v2341, 64
        %v2496 = vpop.permute.xlu0 %2495
        %v2498 = vsel %vm2364, %v2494, 0
        %v2501 = vsel %vm2380, %v2496, 0
        %2503 = vmatpush.bf16.msra.mxu0 0
        %2504 = vmatpush.bf16.msra.mxu0 0
        %2505 = vmatpush.bf16.msra.mxu0 0
        %2506 = vmatpush.bf16.msra.mxu0 0
        %2507 = vmatpush.bf16.msra.mxu0 0
        %2508 = vmatpush.bf16.msra.mxu0 0
        %2509 = vmatpush.bf16.msra.mxu0 0
        %2510 = vmatpush.bf16.msra.mxu0 %v2501
        %2511 = vmatmul.bf16.gmra.mxu0 %v2498
        %v2512 = vpop.f32.mrf.mxu0
        %v2513 = vadd.f32 0.0, %v2512
        %v2514 = vpop.f32.mrf.mxu0
        %2515 = vdwg.mxu0
        %2516 = vrot.lane.b32.xlu0 %v2339, 32
        %v2517 = vpop.permute.xlu0 %2516
        %2518 = vrot.lane.b32.xlu0 %v2340, 32
        %v2519 = vpop.permute.xlu0 %2518
        %v2521 = vsel %vm2342, %v2517, 0
        %v2524 = vsel %vm2342, %v2519, 0
        %2526 = vmatpush.bf16.xpose.msra.mxu0 0
        %2527 = vmatpush.bf16.xpose.msra.mxu0 0
        %2528 = vmatpush.bf16.xpose.msra.mxu0 0
        %2529 = vmatpush.bf16.xpose.msra.mxu0 0
        %2530 = vmatpush.bf16.xpose.msra.mxu0 0
        %2531 = vmatpush.bf16.xpose.msra.mxu0 0
        %2532 = vmatpush.bf16.xpose.msra.mxu0 0
        %2533 = vmatpush.bf16.xpose.msra.mxu0 %v2524
        %2534 = vmatmul.bf16.gmra.mxu0 %v2521
        %v2535 = vpop.f32.mrf.mxu0
        %v2536 = vadd.f32 0.0, %v2535
        %v2537 = vpop.f32.mrf.mxu0
        %2538 = vdwg.mxu0
        %v2539 = vmul.f32 %v2536, 0.35355338
        %v2540 = vadd.f32 %v2539, %v2338
        %v2541 = vsel %vm2364, %v2540, -inf
        %2542 = vmax.xlane.f32.xlu0 %v2541
        %v2543 = vpop.xlane.xlu0 %2542
        %v2544 = vsub.f32 %v2540, %v2543
        %v2545 = vmul.f32 %v2544, 1.442695
        %v2546 = vpow.pop %v2545
        %v2547 = vsel %vm2364, %v2546, 0.0
        %2548 = vadd.xlane.f32.xlu0 %v2547
        %v2549 = vpop.xlane.xlu0 %2548
        %v2550 = vrcp.pop %v2549
        %v2551 = vmul.f32 %v2546, %v2550
        %v2552 = vpack.c.bf16 %v2551, %v2551
        %2553 = vrot.lane.b32.xlu0 %v2341, 32
        %v2554 = vpop.permute.xlu0 %2553
        %v2556 = vsel %vm2364, %v2552, 0
        %v2559 = vsel %vm2380, %v2554, 0
        %2561 = vmatpush.bf16.msra.mxu0 0
        %2562 = vmatpush.bf16.msra.mxu0 0
        %2563 = vmatpush.bf16.msra.mxu0 0
        %2564 = vmatpush.bf16.msra.mxu0 0
        %2565 = vmatpush.bf16.msra.mxu0 0
        %2566 = vmatpush.bf16.msra.mxu0 0
        %2567 = vmatpush.bf16.msra.mxu0 0
        %2568 = vmatpush.bf16.msra.mxu0 %v2559
        %2569 = vmatmul.bf16.gmra.mxu0 %v2556
        %v2570 = vpop.f32.mrf.mxu0
        %v2571 = vadd.f32 0.0, %v2570
        %v2572 = vpop.f32.mrf.mxu0
        %2573 = vdwg.mxu0
        %2575 = vrot.lane.b32.xlu0 %v2455, 32
        %v2576 = vpop.permute.xlu0 %2575
        %2579 = vrot.lane.b32.xlu0 %v2513, 64
        %v2580 = vpop.permute.xlu0 %2579
        %2583 = vrot.lane.b32.xlu0 %v2571, 96
        %v2584 = vpop.permute.xlu0 %2583
        %v2586 = vsel %vm2342, %v2394, %v2576
        %vm2587 = vcmask 523264
        %v2588 = vsel %vm2587, %v2586, %v2580
        %vm2589 = vcmask 785408
        %v2590 = vsel %vm2589, %v2588, %v2584
        %v2591 = vpack.c.bf16 %v2590, %v2590
        %v2592 = vld [vmem:[%s1754] sm:$0xf]
        %v2593 = vld [vmem:[%s1754 + $0x4] sm:$0xf]
        %v2594 = vld [vmem:[%s1754 + $0x8] sm:$0xf]
        %v2595 = vld [vmem:[%s1754 + $0xc] sm:$0xf]
        %v2596 = vld [vmem:[%s1754 + $0x10] sm:$0xf]
        %v2597 = vld [vmem:[%s1754 + $0x14] sm:$0xf]
        %v2598 = vld [vmem:[%s1754 + $0x18] sm:$0xf]
        %v2599 = vld [vmem:[%s1754 + $0x1c] sm:$0xf]
        %v2600 = vld [vmem:[%s1754 + $0x20] sm:$0xf]
        %v2601 = vld [vmem:[%s1754 + $0x24] sm:$0xf]
        %v2602 = vld [vmem:[%s1754 + $0x28] sm:$0xf]
        %v2603 = vld [vmem:[%s1754 + $0x2c] sm:$0xf]
        %v2604 = vld [vmem:[%s1754 + $0x30] sm:$0xf]
        %v2605 = vld [vmem:[%s1754 + $0x34] sm:$0xf]
        %v2606 = vld [vmem:[%s1754 + $0x38] sm:$0xf]
        %v2607 = vld [vmem:[%s1754 + $0x3c] sm:$0xf]
        %v2608 = vld [vmem:[%s1757] sm:$0x1]
        %v2610 = vperm.slane %v2608, 0
        %v2628 = vunpack.c.l.b16 %v2592
        %v2629 = vunpack.c.l.b16 %v2593
        %v2630 = vunpack.c.l.b16 %v2594
        %v2631 = vunpack.c.l.b16 %v2595
        %v2632 = vunpack.c.l.b16 %v2596
        %v2633 = vunpack.c.l.b16 %v2597
        %v2634 = vunpack.c.l.b16 %v2598
        %v2635 = vunpack.c.l.b16 %v2599
        %v2636 = vunpack.c.l.b16 %v2600
        %v2637 = vunpack.c.l.b16 %v2601
        %v2638 = vunpack.c.l.b16 %v2602
        %v2639 = vunpack.c.l.b16 %v2603
        %v2640 = vunpack.c.l.b16 %v2604
        %v2641 = vunpack.c.l.b16 %v2605
        %v2642 = vunpack.c.l.b16 %v2606
        %v2643 = vunpack.c.l.b16 %v2607
        %v2644 = vpack.c.b16 %v2629, %v2628
        %v2645 = vpack.c.b16 %v2631, %v2630
        %v2646 = vpack.c.b16 %v2633, %v2632
        %v2647 = vpack.c.b16 %v2635, %v2634
        %v2648 = vpack.c.b16 %v2637, %v2636
        %v2649 = vpack.c.b16 %v2639, %v2638
        %v2650 = vpack.c.b16 %v2641, %v2640
        %v2651 = vpack.c.b16 %v2643, %v2642
        %2660 = vmatpush.bf16.msra.mxu0 %v2651
        %2661 = vmatpush.bf16.msra.mxu0 %v2650
        %2662 = vmatpush.bf16.msra.mxu0 %v2649
        %2663 = vmatpush.bf16.msra.mxu0 %v2648
        %2664 = vmatpush.bf16.msra.mxu0 %v2647
        %2665 = vmatpush.bf16.msra.mxu0 %v2646
        %2666 = vmatpush.bf16.msra.mxu0 %v2645
        %2667 = vmatpush.bf16.msra.mxu0 %v2644
        %2668 = vmatmul.bf16.gmra.mxu0 %v2591
        %v2669 = vpop.f32.mrf.mxu0
        %v2670 = vadd.f32 %v2610, %v2669
        %v2671 = vpop.f32.mrf.mxu0
        %2672 = vdwg.mxu0
        %v2673 = vadd.f32 %v2058, %v2670
        %2674 = vadd.xlane.f32.xlu0 %v2673
        %v2675 = vpop.xlane.xlu0 %2674
        %v2676 = vmul.f32 %v2675, 0.03125
        %v2677 = vmul.f32 %v2673, %v2673
        %2678 = vadd.xlane.f32.xlu0 %v2677
        %v2679 = vpop.xlane.xlu0 %2678
        %v2680 = vmul.f32 %v2679, 0.03125
        %v2681 = vmul.f32 %v2676, %v2676
        %v2682 = vsub.f32 %v2680, %v2681
        %v2683 = vsub.f32 %v2673, %v2676
        %v2684 = vadd.f32 %v2682, 1e-05
        %v2685 = vrsqrt.pop %v2684
        %v2686 = vmul.f32 %v2685, %v2684
        %v2687 = vmul.f32 %v2686, %v2685
        %v2688 = vmul.f32 0.5, %v2687
        %v2689 = vsub.f32 1.5, %v2688
        %v2690 = vmul.f32 %v2685, %v2689
        %vm2691 = vweird.f32 %v2684
        %vm2692 = vweird.f32 %v2685
        %vm2693 = vmor %vm2691, %vm2692
        %v2694 = vsel %vm2693, %v2685, %v2690
        %v2695 = vmul.f32 %v2683, %v2694
        %v2696 = vld [vmem:[%s1760] sm:$0x1]
        %v2698 = vperm.slane %v2696, 0
        %v2700 = vmul.f32 %v2695, %v2698
        %v2701 = vld [vmem:[%s1763] sm:$0x1]
        %v2703 = vperm.slane %v2701, 0
        %v2705 = vadd.f32 %v2700, %v2703
        %v2706 = vpack.c.bf16 %v2705, %v2705
        %v2707 = vld [vmem:[%s1768] sm:$0xf]
        %v2708 = vld [vmem:[%s1768 + $0x4] sm:$0xf]
        %v2709 = vld [vmem:[%s1768 + $0x8] sm:$0xf]
        %v2710 = vld [vmem:[%s1768 + $0xc] sm:$0xf]
        %v2711 = vld [vmem:[%s1768 + $0x10] sm:$0xf]
        %v2712 = vld [vmem:[%s1768 + $0x14] sm:$0xf]
        %v2713 = vld [vmem:[%s1768 + $0x18] sm:$0xf]
        %v2714 = vld [vmem:[%s1768 + $0x1c] sm:$0xf]
        %v2715 = vld [vmem:[%s1768 + $0x20] sm:$0xf]
        %v2716 = vld [vmem:[%s1768 + $0x24] sm:$0xf]
        %v2717 = vld [vmem:[%s1768 + $0x28] sm:$0xf]
        %v2718 = vld [vmem:[%s1768 + $0x2c] sm:$0xf]
        %v2719 = vld [vmem:[%s1768 + $0x30] sm:$0xf]
        %v2720 = vld [vmem:[%s1768 + $0x34] sm:$0xf]
        %v2721 = vld [vmem:[%s1768 + $0x38] sm:$0xf]
        %v2722 = vld [vmem:[%s1768 + $0x3c] sm:$0xf]
        %v2723 = vld [vmem:[%s1771] sm:$0x1]
        %v2725 = vperm.slane %v2723, 0
        %v2743 = vunpack.c.l.b16 %v2707
        %v2744 = vunpack.c.l.b16 %v2708
        %v2745 = vunpack.c.l.b16 %v2709
        %v2746 = vunpack.c.l.b16 %v2710
        %v2747 = vunpack.c.l.b16 %v2711
        %v2748 = vunpack.c.l.b16 %v2712
        %v2749 = vunpack.c.l.b16 %v2713
        %v2750 = vunpack.c.l.b16 %v2714
        %v2751 = vunpack.c.l.b16 %v2715
        %v2752 = vunpack.c.l.b16 %v2716
        %v2753 = vunpack.c.l.b16 %v2717
        %v2754 = vunpack.c.l.b16 %v2718
        %v2755 = vunpack.c.l.b16 %v2719
        %v2756 = vunpack.c.l.b16 %v2720
        %v2757 = vunpack.c.l.b16 %v2721
        %v2758 = vunpack.c.l.b16 %v2722
        %v2759 = vpack.c.b16 %v2744, %v2743
        %v2760 = vpack.c.b16 %v2746, %v2745
        %v2761 = vpack.c.b16 %v2748, %v2747
        %v2762 = vpack.c.b16 %v2750, %v2749
        %v2763 = vpack.c.b16 %v2752, %v2751
        %v2764 = vpack.c.b16 %v2754, %v2753
        %v2765 = vpack.c.b16 %v2756, %v2755
        %v2766 = vpack.c.b16 %v2758, %v2757
        %2775 = vmatpush.bf16.msra.mxu0 %v2766
        %2776 = vmatpush.bf16.msra.mxu0 %v2765
        %2777 = vmatpush.bf16.msra.mxu0 %v2764
        %2778 = vmatpush.bf16.msra.mxu0 %v2763
        %2779 = vmatpush.bf16.msra.mxu0 %v2762
        %2780 = vmatpush.bf16.msra.mxu0 %v2761
        %2781 = vmatpush.bf16.msra.mxu0 %v2760
        %2782 = vmatpush.bf16.msra.mxu0 %v2759
        %2783 = vmatmul.bf16.gmra.mxu0 %v2706
        %v2784 = vpop.f32.mrf.mxu0
        %v2785 = vadd.f32 %v2725, %v2784
        %v2786 = vpop.f32.mrf.mxu0
        %2787 = vdwg.mxu0
        %v2788 = vld [vmem:[%s1776] sm:$0xf]
        %v2789 = vld [vmem:[%s1776 + $0x4] sm:$0xf]
        %v2790 = vld [vmem:[%s1776 + $0x8] sm:$0xf]
        %v2791 = vld [vmem:[%s1776 + $0xc] sm:$0xf]
        %v2792 = vld [vmem:[%s1776 + $0x10] sm:$0xf]
        %v2793 = vld [vmem:[%s1776 + $0x14] sm:$0xf]
        %v2794 = vld [vmem:[%s1776 + $0x18] sm:$0xf]
        %v2795 = vld [vmem:[%s1776 + $0x1c] sm:$0xf]
        %v2796 = vld [vmem:[%s1776 + $0x20] sm:$0xf]
        %v2797 = vld [vmem:[%s1776 + $0x24] sm:$0xf]
        %v2798 = vld [vmem:[%s1776 + $0x28] sm:$0xf]
        %v2799 = vld [vmem:[%s1776 + $0x2c] sm:$0xf]
        %v2800 = vld [vmem:[%s1776 + $0x30] sm:$0xf]
        %v2801 = vld [vmem:[%s1776 + $0x34] sm:$0xf]
        %v2802 = vld [vmem:[%s1776 + $0x38] sm:$0xf]
        %v2803 = vld [vmem:[%s1776 + $0x3c] sm:$0xf]
        %v2804 = vld [vmem:[%s1779] sm:$0x1]
        %v2806 = vperm.slane %v2804, 0
        %v2824 = vunpack.c.l.b16 %v2788
        %v2825 = vunpack.c.l.b16 %v2789
        %v2826 = vunpack.c.l.b16 %v2790
        %v2827 = vunpack.c.l.b16 %v2791
        %v2828 = vunpack.c.l.b16 %v2792
        %v2829 = vunpack.c.l.b16 %v2793
        %v2830 = vunpack.c.l.b16 %v2794
        %v2831 = vunpack.c.l.b16 %v2795
        %v2832 = vunpack.c.l.b16 %v2796
        %v2833 = vunpack.c.l.b16 %v2797
        %v2834 = vunpack.c.l.b16 %v2798
        %v2835 = vunpack.c.l.b16 %v2799
        %v2836 = vunpack.c.l.b16 %v2800
        %v2837 = vunpack.c.l.b16 %v2801
        %v2838 = vunpack.c.l.b16 %v2802
        %v2839 = vunpack.c.l.b16 %v2803
        %v2840 = vpack.c.b16 %v2825, %v2824
        %v2841 = vpack.c.b16 %v2827, %v2826
        %v2842 = vpack.c.b16 %v2829, %v2828
        %v2843 = vpack.c.b16 %v2831, %v2830
        %v2844 = vpack.c.b16 %v2833, %v2832
        %v2845 = vpack.c.b16 %v2835, %v2834
        %v2846 = vpack.c.b16 %v2837, %v2836
        %v2847 = vpack.c.b16 %v2839, %v2838
        %2856 = vmatpush.bf16.msra.mxu0 %v2847
        %2857 = vmatpush.bf16.msra.mxu0 %v2846
        %2858 = vmatpush.bf16.msra.mxu0 %v2845
        %2859 = vmatpush.bf16.msra.mxu0 %v2844
        %2860 = vmatpush.bf16.msra.mxu0 %v2843
        %2861 = vmatpush.bf16.msra.mxu0 %v2842
        %2862 = vmatpush.bf16.msra.mxu0 %v2841
        %2863 = vmatpush.bf16.msra.mxu0 %v2840
        %2864 = vmatmul.bf16.gmra.mxu0 %v2706
        %v2865 = vpop.f32.mrf.mxu0
        %v2866 = vadd.f32 %v2806, %v2865
        %v2867 = vpop.f32.mrf.mxu0
        %2868 = vdwg.mxu0
        %v2869 = vxor.u32 %v2866, 2147483648
        %v2870 = vmul.f32 %v2869, 1.442695
        %v2871 = vpow.pop %v2870
        %v2872 = vadd.f32 %v2871, 1.0
        %v2873 = vrcp.pop %v2872
        %v2874 = vmul.f32 %v2872, %v2873
        %v2875 = vsub.f32 1.0, %v2874
        %v2876 = vmul.f32 %v2873, %v2875
        %v2877 = vadd.f32 %v2873, %v2876
        %vm2878 = vweird.f32 %v2872
        %vm2879 = vweird.f32 %v2873
        %vm2880 = vmor %vm2878, %vm2879
        %v2881 = vsel %vm2880, %v2873, %v2877
        %v2882 = vand.u32 2147483647, %v2872
        %vm2883 = vcmp.eq.f32.partialorder %v2882, 8.507059e+37
        %v2884 = vand.u32 %v2872, 2147483648
        %v2885 = vor.u32 1.1754944e-38, %v2884
        %v2886 = vsel %vm2883, %v2885, %v2881
        %v2887 = vmul.f32 1.0, %v2886
        %v2888 = vmul.f32 %v2785, %v2887
        %v2889 = vlaneseq
        %v2890 = vshrl.u32 %v2889, 7
        %v2891 = vld [vmem:[%s1783] sm:$0x7f]
        %v2892 = vld [vmem:[%s1786] sm:$0x1]
        %v2894 = vperm.slane %v2892, 0
        %v2896 = vadd.f32 %v2894, 0.0
        %v2897 = vrot.slane %v2888, 5
        %v2898 = vadd.s32 %v2890, 4294967293
        %vm2899 = vcmp.ge.s32.totalorder %v2898, 0
        %vm2900 = vcmp.lt.s32.totalorder %v2898, 7
        %vm2901 = vmand %vm2899, %vm2900
        %v2902 = vsel %vm2901, %v2897, 0.0
        %v2903 = vperm.slane %v2891, 0
        %v2904 = vmul.f32 %v2902, %v2903
        %v2905 = vadd.f32 %v2896, %v2904
        %v2906 = vrot.slane %v2888, 6
        %v2907 = vadd.s32 %v2890, 4294967294
        %vm2908 = vcmp.ge.s32.totalorder %v2907, 0
        %vm2909 = vcmp.lt.s32.totalorder %v2907, 7
        %vm2910 = vmand %vm2908, %vm2909
        %v2911 = vsel %vm2910, %v2906, 0.0
        %v2912 = vperm.slane %v2891, 1
        %v2913 = vmul.f32 %v2911, %v2912
        %v2914 = vadd.f32 %v2905, %v2913
        %v2915 = vrot.slane %v2888, 7
        %v2916 = vadd.s32 %v2890, 4294967295
        %vm2917 = vcmp.ge.s32.totalorder %v2916, 0
        %vm2918 = vcmp.lt.s32.totalorder %v2916, 7
        %vm2919 = vmand %vm2917, %vm2918
        %v2920 = vsel %vm2919, %v2915, 0.0
        %v2921 = vperm.slane %v2891, 2
        %v2922 = vmul.f32 %v2920, %v2921
        %v2923 = vadd.f32 %v2914, %v2922
        %v2924 = vperm.slane %v2891, 3
        %v2925 = vmul.f32 %v2888, %v2924
        %v2926 = vadd.f32 %v2923, %v2925
        %v2927 = vrot.slane %v2888, 1
        %v2928 = vadd.s32 %v2890, 1
        %vm2929 = vcmp.ge.s32.totalorder %v2928, 0
        %vm2930 = vcmp.lt.s32.totalorder %v2928, 7
        %vm2931 = vmand %vm2929, %vm2930
        %v2932 = vsel %vm2931, %v2927, 0.0
        %v2933 = vperm.slane %v2891, 4
        %v2934 = vmul.f32 %v2932, %v2933
        %v2935 = vadd.f32 %v2926, %v2934
        %v2936 = vrot.slane %v2888, 2
        %v2937 = vadd.s32 %v2890, 2
        %vm2938 = vcmp.ge.s32.totalorder %v2937, 0
        %vm2939 = vcmp.lt.s32.totalorder %v2937, 7
        %vm2940 = vmand %vm2938, %vm2939
        %v2941 = vsel %vm2940, %v2936, 0.0
        %v2942 = vperm.slane %v2891, 5
        %v2943 = vmul.f32 %v2941, %v2942
        %v2944 = vadd.f32 %v2935, %v2943
        %v2945 = vrot.slane %v2888, 3
        %v2946 = vadd.s32 %v2890, 3
        %vm2947 = vcmp.ge.s32.totalorder %v2946, 0
        %vm2948 = vcmp.lt.s32.totalorder %v2946, 7
        %vm2949 = vmand %vm2947, %vm2948
        %v2950 = vsel %vm2949, %v2945, 0.0
        %v2951 = vperm.slane %v2891, 6
        %v2952 = vmul.f32 %v2950, %v2951
        %v2953 = vadd.f32 %v2944, %v2952
        %v2954 = vld [vmem:[%s1795] sm:$0x1]
        %v2956 = vperm.slane %v2954, 0
        %v2958 = vsub.f32 %v2953, %v2956
        %v2959 = vld [vmem:[%s1798] sm:$0x1]
        %v2960 = vadd.f32 %v2959, 1e-05
        %v2961 = vrsqrt.pop %v2960
        %v2962 = vmul.f32 %v2961, %v2960
        %v2963 = vmul.f32 %v2962, %v2961
        %v2964 = vmul.f32 0.5, %v2963
        %v2965 = vsub.f32 1.5, %v2964
        %v2966 = vmul.f32 %v2961, %v2965
        %vm2967 = vweird.f32 %v2960
        %vm2968 = vweird.f32 %v2961
        %vm2969 = vmor %vm2967, %vm2968
        %v2970 = vsel %vm2969, %v2961, %v2966
        %v2972 = vperm.slane %v2970, 0
        %v2974 = vmul.f32 %v2958, %v2972
        %v2975 = vld [vmem:[%s1789] sm:$0x1]
        %v2977 = vperm.slane %v2975, 0
        %v2979 = vmul.f32 %v2974, %v2977
        %v2980 = vld [vmem:[%s1792] sm:$0x1]
        %v2982 = vperm.slane %v2980, 0
        %v2984 = vadd.f32 %v2979, %v2982
        %v2985 = vxor.u32 %v2984, 2147483648
        %v2986 = vmul.f32 %v2985, 1.442695
        %v2987 = vpow.pop %v2986
        %v2988 = vadd.f32 %v2987, 1.0
        %v2989 = vrcp.pop %v2988
        %v2990 = vmul.f32 %v2988, %v2989
        %v2991 = vsub.f32 1.0, %v2990
        %v2992 = vmul.f32 %v2989, %v2991
        %v2993 = vadd.f32 %v2989, %v2992
        %vm2994 = vweird.f32 %v2988
        %vm2995 = vweird.f32 %v2989
        %vm2996 = vmor %vm2994, %vm2995
        %v2997 = vsel %vm2996, %v2989, %v2993
        %v2998 = vand.u32 2147483647, %v2988
        %vm2999 = vcmp.eq.f32.partialorder %v2998, 8.507059e+37
        %v3000 = vand.u32 %v2988, 2147483648
        %v3001 = vor.u32 1.1754944e-38, %v3000
        %v3002 = vsel %vm2999, %v3001, %v2997
        %v3003 = vmul.f32 1.0, %v3002
        %v3004 = vmul.f32 %v2984, %v3003
        %v3005 = vpack.c.bf16 %v3004, %v3004
        %v3006 = vld [vmem:[%s1803] sm:$0xf]
        %v3007 = vld [vmem:[%s1803 + $0x4] sm:$0xf]
        %v3008 = vld [vmem:[%s1803 + $0x8] sm:$0xf]
        %v3009 = vld [vmem:[%s1803 + $0xc] sm:$0xf]
        %v3010 = vld [vmem:[%s1803 + $0x10] sm:$0xf]
        %v3011 = vld [vmem:[%s1803 + $0x14] sm:$0xf]
        %v3012 = vld [vmem:[%s1803 + $0x18] sm:$0xf]
        %v3013 = vld [vmem:[%s1803 + $0x1c] sm:$0xf]
        %v3014 = vld [vmem:[%s1803 + $0x20] sm:$0xf]
        %v3015 = vld [vmem:[%s1803 + $0x24] sm:$0xf]
        %v3016 = vld [vmem:[%s1803 + $0x28] sm:$0xf]
        %v3017 = vld [vmem:[%s1803 + $0x2c] sm:$0xf]
        %v3018 = vld [vmem:[%s1803 + $0x30] sm:$0xf]
        %v3019 = vld [vmem:[%s1803 + $0x34] sm:$0xf]
        %v3020 = vld [vmem:[%s1803 + $0x38] sm:$0xf]
        %v3021 = vld [vmem:[%s1803 + $0x3c] sm:$0xf]
        %v3022 = vld [vmem:[%s1806] sm:$0x1]
        %v3024 = vperm.slane %v3022, 0
        %v3042 = vunpack.c.l.b16 %v3006
        %v3043 = vunpack.c.l.b16 %v3007
        %v3044 = vunpack.c.l.b16 %v3008
        %v3045 = vunpack.c.l.b16 %v3009
        %v3046 = vunpack.c.l.b16 %v3010
        %v3047 = vunpack.c.l.b16 %v3011
        %v3048 = vunpack.c.l.b16 %v3012
        %v3049 = vunpack.c.l.b16 %v3013
        %v3050 = vunpack.c.l.b16 %v3014
        %v3051 = vunpack.c.l.b16 %v3015
        %v3052 = vunpack.c.l.b16 %v3016
        %v3053 = vunpack.c.l.b16 %v3017
        %v3054 = vunpack.c.l.b16 %v3018
        %v3055 = vunpack.c.l.b16 %v3019
        %v3056 = vunpack.c.l.b16 %v3020
        %v3057 = vunpack.c.l.b16 %v3021
        %v3058 = vpack.c.b16 %v3043, %v3042
        %v3059 = vpack.c.b16 %v3045, %v3044
        %v3060 = vpack.c.b16 %v3047, %v3046
        %v3061 = vpack.c.b16 %v3049, %v3048
        %v3062 = vpack.c.b16 %v3051, %v3050
        %v3063 = vpack.c.b16 %v3053, %v3052
        %v3064 = vpack.c.b16 %v3055, %v3054
        %v3065 = vpack.c.b16 %v3057, %v3056
        %3074 = vmatpush.bf16.msra.mxu0 %v3065
        %3075 = vmatpush.bf16.msra.mxu0 %v3064
        %3076 = vmatpush.bf16.msra.mxu0 %v3063
        %3077 = vmatpush.bf16.msra.mxu0 %v3062
        %3078 = vmatpush.bf16.msra.mxu0 %v3061
        %3079 = vmatpush.bf16.msra.mxu0 %v3060
        %3080 = vmatpush.bf16.msra.mxu0 %v3059
        %3081 = vmatpush.bf16.msra.mxu0 %v3058
        %3082 = vmatmul.bf16.gmra.mxu0 %v3005
        %v3083 = vpop.f32.mrf.mxu0
        %v3084 = vadd.f32 %v3024, %v3083
        %v3085 = vpop.f32.mrf.mxu0
        %3086 = vdwg.mxu0
        %v3087 = vadd.f32 %v2673, %v3084
        %3088 = vadd.xlane.f32.xlu0 %v3087
        %v3089 = vpop.xlane.xlu0 %3088
        %v3090 = vmul.f32 %v3089, 0.03125
        %v3091 = vmul.f32 %v3087, %v3087
        %3092 = vadd.xlane.f32.xlu0 %v3091
        %v3093 = vpop.xlane.xlu0 %3092
        %v3094 = vmul.f32 %v3093, 0.03125
        %v3095 = vmul.f32 %v3090, %v3090
        %v3096 = vsub.f32 %v3094, %v3095
        %v3097 = vsub.f32 %v3087, %v3090
        %v3098 = vadd.f32 %v3096, 1e-05
        %v3099 = vrsqrt.pop %v3098
        %v3100 = vmul.f32 %v3099, %v3098
        %v3101 = vmul.f32 %v3100, %v3099
        %v3102 = vmul.f32 0.5, %v3101
        %v3103 = vsub.f32 1.5, %v3102
        %v3104 = vmul.f32 %v3099, %v3103
        %vm3105 = vweird.f32 %v3098
        %vm3106 = vweird.f32 %v3099
        %vm3107 = vmor %vm3105, %vm3106
        %v3108 = vsel %vm3107, %v3099, %v3104
        %v3109 = vmul.f32 %v3097, %v3108
        %v3110 = vld [vmem:[%s1809] sm:$0x1]
        %v3112 = vperm.slane %v3110, 0
        %v3114 = vmul.f32 %v3109, %v3112
        %v3115 = vld [vmem:[%s1812] sm:$0x1]
        %v3117 = vperm.slane %v3115, 0
        %v3119 = vadd.f32 %v3114, %v3117
        %v3120 = vpack.c.bf16 %v3119, %v3119
        %v3121 = vld [vmem:[%s1817] sm:$0xf]
        %v3122 = vld [vmem:[%s1817 + $0x4] sm:$0xf]
        %v3123 = vld [vmem:[%s1817 + $0x8] sm:$0xf]
        %v3124 = vld [vmem:[%s1817 + $0xc] sm:$0xf]
        %v3125 = vld [vmem:[%s1817 + $0x10] sm:$0xf]
        %v3126 = vld [vmem:[%s1817 + $0x14] sm:$0xf]
        %v3127 = vld [vmem:[%s1817 + $0x18] sm:$0xf]
        %v3128 = vld [vmem:[%s1817 + $0x1c] sm:$0xf]
        %v3129 = vld [vmem:[%s1817 + $0x20] sm:$0xf]
        %v3130 = vld [vmem:[%s1817 + $0x24] sm:$0xf]
        %v3131 = vld [vmem:[%s1817 + $0x28] sm:$0xf]
        %v3132 = vld [vmem:[%s1817 + $0x2c] sm:$0xf]
        %v3133 = vld [vmem:[%s1817 + $0x30] sm:$0xf]
        %v3134 = vld [vmem:[%s1817 + $0x34] sm:$0xf]
        %v3135 = vld [vmem:[%s1817 + $0x38] sm:$0xf]
        %v3136 = vld [vmem:[%s1817 + $0x3c] sm:$0xf]
        %v3137 = vld [vmem:[%s1820] sm:$0x1]
        %v3139 = vperm.slane %v3137, 0
        %v3157 = vunpack.c.l.b16 %v3121
        %v3158 = vunpack.c.l.b16 %v3122
        %v3159 = vunpack.c.l.b16 %v3123
        %v3160 = vunpack.c.l.b16 %v3124
        %v3161 = vunpack.c.l.b16 %v3125
        %v3162 = vunpack.c.l.b16 %v3126
        %v3163 = vunpack.c.l.b16 %v3127
        %v3164 = vunpack.c.l.b16 %v3128
        %v3165 = vunpack.c.l.b16 %v3129
        %v3166 = vunpack.c.l.b16 %v3130
        %v3167 = vunpack.c.l.b16 %v3131
        %v3168 = vunpack.c.l.b16 %v3132
        %v3169 = vunpack.c.l.b16 %v3133
        %v3170 = vunpack.c.l.b16 %v3134
        %v3171 = vunpack.c.l.b16 %v3135
        %v3172 = vunpack.c.l.b16 %v3136
        %v3173 = vpack.c.b16 %v3158, %v3157
        %v3174 = vpack.c.b16 %v3160, %v3159
        %v3175 = vpack.c.b16 %v3162, %v3161
        %v3176 = vpack.c.b16 %v3164, %v3163
        %v3177 = vpack.c.b16 %v3166, %v3165
        %v3178 = vpack.c.b16 %v3168, %v3167
        %v3179 = vpack.c.b16 %v3170, %v3169
        %v3180 = vpack.c.b16 %v3172, %v3171
        %3189 = vmatpush.bf16.msra.mxu0 %v3180
        %3190 = vmatpush.bf16.msra.mxu0 %v3179
        %3191 = vmatpush.bf16.msra.mxu0 %v3178
        %3192 = vmatpush.bf16.msra.mxu0 %v3177
        %3193 = vmatpush.bf16.msra.mxu0 %v3176
        %3194 = vmatpush.bf16.msra.mxu0 %v3175
        %3195 = vmatpush.bf16.msra.mxu0 %v3174
        %3196 = vmatpush.bf16.msra.mxu0 %v3173
        %3197 = vmatmul.bf16.gmra.mxu0 %v3120
        %v3198 = vpop.f32.mrf.mxu0
        %v3199 = vadd.f32 %v3139, %v3198
        %v3200 = vpop.f32.mrf.mxu0
        %3201 = vdwg.mxu0
        %v3202 = vxor.u32 %v3199, 2147483648
        %v3203 = vmul.f32 %v3202, 1.442695
        %v3204 = vpow.pop %v3203
        %v3205 = vadd.f32 %v3204, 1.0
        %v3206 = vrcp.pop %v3205
        %v3207 = vmul.f32 %v3205, %v3206
        %v3208 = vsub.f32 1.0, %v3207
        %v3209 = vmul.f32 %v3206, %v3208
        %v3210 = vadd.f32 %v3206, %v3209
        %vm3211 = vweird.f32 %v3205
        %vm3212 = vweird.f32 %v3206
        %vm3213 = vmor %vm3211, %vm3212
        %v3214 = vsel %vm3213, %v3206, %v3210
        %v3215 = vand.u32 2147483647, %v3205
        %vm3216 = vcmp.eq.f32.partialorder %v3215, 8.507059e+37
        %v3217 = vand.u32 %v3205, 2147483648
        %v3218 = vor.u32 1.1754944e-38, %v3217
        %v3219 = vsel %vm3216, %v3218, %v3214
        %v3220 = vmul.f32 1.0, %v3219
        %v3221 = vmul.f32 %v3199, %v3220
        %v3222 = vpack.c.bf16 %v3221, %v3221
        %v3223 = vld [vmem:[%s1825] sm:$0xf]
        %v3224 = vld [vmem:[%s1825 + $0x4] sm:$0xf]
        %v3225 = vld [vmem:[%s1825 + $0x8] sm:$0xf]
        %v3226 = vld [vmem:[%s1825 + $0xc] sm:$0xf]
        %v3227 = vld [vmem:[%s1825 + $0x10] sm:$0xf]
        %v3228 = vld [vmem:[%s1825 + $0x14] sm:$0xf]
        %v3229 = vld [vmem:[%s1825 + $0x18] sm:$0xf]
        %v3230 = vld [vmem:[%s1825 + $0x1c] sm:$0xf]
        %v3231 = vld [vmem:[%s1825 + $0x20] sm:$0xf]
        %v3232 = vld [vmem:[%s1825 + $0x24] sm:$0xf]
        %v3233 = vld [vmem:[%s1825 + $0x28] sm:$0xf]
        %v3234 = vld [vmem:[%s1825 + $0x2c] sm:$0xf]
        %v3235 = vld [vmem:[%s1825 + $0x30] sm:$0xf]
        %v3236 = vld [vmem:[%s1825 + $0x34] sm:$0xf]
        %v3237 = vld [vmem:[%s1825 + $0x38] sm:$0xf]
        %v3238 = vld [vmem:[%s1825 + $0x3c] sm:$0xf]
        %v3239 = vld [vmem:[%s1828] sm:$0x1]
        %v3241 = vperm.slane %v3239, 0
        %v3259 = vunpack.c.l.b16 %v3223
        %v3260 = vunpack.c.l.b16 %v3224
        %v3261 = vunpack.c.l.b16 %v3225
        %v3262 = vunpack.c.l.b16 %v3226
        %v3263 = vunpack.c.l.b16 %v3227
        %v3264 = vunpack.c.l.b16 %v3228
        %v3265 = vunpack.c.l.b16 %v3229
        %v3266 = vunpack.c.l.b16 %v3230
        %v3267 = vunpack.c.l.b16 %v3231
        %v3268 = vunpack.c.l.b16 %v3232
        %v3269 = vunpack.c.l.b16 %v3233
        %v3270 = vunpack.c.l.b16 %v3234
        %v3271 = vunpack.c.l.b16 %v3235
        %v3272 = vunpack.c.l.b16 %v3236
        %v3273 = vunpack.c.l.b16 %v3237
        %v3274 = vunpack.c.l.b16 %v3238
        %v3275 = vpack.c.b16 %v3260, %v3259
        %v3276 = vpack.c.b16 %v3262, %v3261
        %v3277 = vpack.c.b16 %v3264, %v3263
        %v3278 = vpack.c.b16 %v3266, %v3265
        %v3279 = vpack.c.b16 %v3268, %v3267
        %v3280 = vpack.c.b16 %v3270, %v3269
        %v3281 = vpack.c.b16 %v3272, %v3271
        %v3282 = vpack.c.b16 %v3274, %v3273
        %3291 = vmatpush.bf16.msra.mxu0 %v3282
        %3292 = vmatpush.bf16.msra.mxu0 %v3281
        %3293 = vmatpush.bf16.msra.mxu0 %v3280
        %3294 = vmatpush.bf16.msra.mxu0 %v3279
        %3295 = vmatpush.bf16.msra.mxu0 %v3278
        %3296 = vmatpush.bf16.msra.mxu0 %v3277
        %3297 = vmatpush.bf16.msra.mxu0 %v3276
        %3298 = vmatpush.bf16.msra.mxu0 %v3275
        %3299 = vmatmul.bf16.gmra.mxu0 %v3222
        %v3300 = vpop.f32.mrf.mxu0
        %v3301 = vadd.f32 %v3241, %v3300
        %v3302 = vpop.f32.mrf.mxu0
        %3303 = vdwg.mxu0
        %v3304 = vmul.f32 %v3301, 0.5
        %v3305 = vadd.f32 %v3087, %v3304
        %3306 = vadd.xlane.f32.xlu0 %v3305
        %v3307 = vpop.xlane.xlu0 %3306
        %v3308 = vmul.f32 %v3307, 0.03125
        %v3309 = vmul.f32 %v3305, %v3305
        %3310 = vadd.xlane.f32.xlu0 %v3309
        %v3311 = vpop.xlane.xlu0 %3310
        %v3312 = vmul.f32 %v3311, 0.03125
        %v3313 = vmul.f32 %v3308, %v3308
        %v3314 = vsub.f32 %v3312, %v3313
        %v3315 = vsub.f32 %v3305, %v3308
        %v3316 = vadd.f32 %v3314, 1e-05
        %v3317 = vrsqrt.pop %v3316
        %v3318 = vmul.f32 %v3317, %v3316
        %v3319 = vmul.f32 %v3318, %v3317
        %v3320 = vmul.f32 0.5, %v3319
        %v3321 = vsub.f32 1.5, %v3320
        %v3322 = vmul.f32 %v3317, %v3321
        %vm3323 = vweird.f32 %v3316
        %vm3324 = vweird.f32 %v3317
        %vm3325 = vmor %vm3323, %vm3324
        %v3326 = vsel %vm3325, %v3317, %v3322
        %v3327 = vmul.f32 %v3315, %v3326
        %v3328 = vld [vmem:[%s1452] sm:$0x1]
        %v3330 = vperm.slane %v3328, 0
        %v3332 = vmul.f32 %v3327, %v3330
        %v3333 = vld [vmem:[%s1461] sm:$0x1]
        %v3335 = vperm.slane %v3333, 0
        %v3337 = vadd.f32 %v3332, %v3335
        %3338 = vst [vmem:[%s1832] sm:$0xff] %v3337
        %p3339 = scmp.lt.s32.totalorder %s100, 1
        %s3340 = scalar_select %p3339, %s100, 1
        %s3341 = smul.addr %s3340, 8
        %s3342 = scalar_lea.vmem %s79, %s3341
        // Predicated region
        $region189: #{_lambda_.8} parent=175 // pred_check
          %p3343 = pneg %p1140
        $region190: #{_lambda_.8} parent=175 // pred_check_branch
          %3345 = sbr.rel (%p3343) target = $region192
        $region191: #{_lambda_.8} parent=175 // pred_region
          _
        $region192: #{_lambda_.8} parent=175 // pred_fallthru
          _
      $region176: #{_lambda_.8} parent=5 // pred_fallthru
        _
      %p3346 = scmp.le.s32.totalorder 2, %s91
      // Predicated region
      $region193: #{_lambda_.8} parent=5 // pred_check
        %p3347 = pneg %p3346
      $region194: #{_lambda_.8} parent=5 // pred_check_branch
        %3349 = sbr.rel (%p3347) target = $region196
      $region195: #{_lambda_.8} parent=5 // pred_region
        %s3350 = ssub.s32 %s91, 2
        // Predicated region
        $region197: #{_lambda_.8} parent=195 // pred_check
          %p3351 = pneg %p1146
        $region198: #{_lambda_.8} parent=195 // pred_check_branch
          %3353 = sbr.rel (%p3351) target = $region200
        $region199: #{_lambda_.8} parent=195 // pred_region
          %p3354 = scmp.lt.s32.totalorder %s102, 1
          %s3355 = scalar_select %p3354, %s102, 1
          %s3356 = smul.addr %s3355, 8
          %s3357 = scalar_lea.vmem %s79, %s3356
        $region200: #{_lambda_.8} parent=195 // pred_fallthru
          _
      $region196: #{_lambda_.8} parent=5 // pred_fallthru
        _
    $region6: #{_lambda_.8} parent=1 // loop_footer
      %s95 = sadd.s32 1, %s91
    $region7: #{_lambda_.8} parent=1 // loop_footer_branch
      %90 = sbr.rel target = $region3
    $region8: #{_lambda_.8} parent=1 // loop_exit
      _
    %3358 = vsyncpa [#allocation3], 1
    %s3359 = scalar_lea.sflag [#allocation3], 1
    %3360 = vsyncpa %s3359, 1
    %3361 = vsyncpa [#allocation5], 1
    %s3362 = scalar_lea.sflag [#allocation5], 1
    %3363 = vsyncpa %s3362, 1

</llo_original>
